<compile_context>
chip_gen: v7x
topology: tpu7x:2x2x1
jax: 0.10.0
libtpu: 0.0.40
codegen_flags: <defaults>
</compile_context>

<pallas_src>
import functools

import jax
import jax.numpy as jnp
from jax.experimental import pallas as pl
from jax.experimental.pallas import tpu as pltpu


# ----------------------------- fused kernel -----------------------------

def _fused_vae_kernel(
    x_ref,        # (1, 40, 842)  flat 28x28 spatial, zero guard (29) both ends
    eps_ref,      # (1, 1, LATENT)
    w1g_ref,      # (3, 24, 120)  conv1 weights, taps fused over kh: [kw, co, kh*ci]
    b1_ref,       # (24, 1)
    m1_ref,       # (2, 784)      W-edge masks (left, right), f32
    p1_ref,       # (755, 226)    pool1 selection (bf16, 15-col guard each side)
    w2g_ref,      # (3, 8, 72)
    b2_ref,       # (8, 1)
    m2_ref,       # (2, 196)
    p2_ref,       # (181, 49)     pool2 selection (bf16)
    wenc_ref,     # (8, 49, 2*LATENT)
    benc_ref,     # (1, 2*LATENT)
    wdec_ref,     # (8, LATENT, 296)  decoder FC weights in dilated 17x17 layout
    bdec_ref,     # (8, 296)
    wt1_ref,      # (9, 24, 8)    convT1 flipped-kernel per-tap [t, co, ci]
    bt1_ref,      # (24, 1)
    wt2_ref,      # (4, 40, 24)   convT2 per-phase [t=di*2+dj, co, ci]
    bt2_ref,      # (40, 1)
    recon_ref,    # (1, 40, 1024) 4 phases x 256 (row-padded 15x17 + 1 junk)
    mu_ref,       # (1, 1, LATENT)
    logvar_ref,   # (1, 1, LATENT)
    *, latent_dim):
  f32 = jnp.float32
  bf16 = jnp.bfloat16

  # ------------- encoder conv1 (40->24, 3x3, pad 1) + ReLU -------------
  H1 = W1 = 28
  HW1 = H1 * W1                       # 784
  G1 = W1 + 1                         # 29
  C1 = 24
  ximg = x_ref.at[0]                  # (40, 842) ref view

  acc1 = jnp.zeros((C1, HW1), f32)
  for dj in range(3):                 # taps fused along K over kh (same mask)
    cols = []
    for di in range(3):
      o = (di - 1) * W1 + (dj - 1)
      cols.append(ximg[:, G1 + o: G1 + o + HW1])   # (40, 784)
    xs = jnp.concatenate(cols, axis=0)             # (120, 784)
    if dj == 0:
      xs = xs * m1_ref[0:1, :]
    elif dj == 2:
      xs = xs * m1_ref[1:2, :]
    acc1 += jnp.dot(w1g_ref[dj], xs, preferred_element_type=f32)
  y1 = jnp.maximum(acc1 + b1_ref[...], 0.0)        # (24, 784)

  # ------------- maxpool 2x2 -> (24, 226): 15-col guard each side -------
  t1 = jnp.maximum(y1[:, :HW1 - 1], y1[:, 1:])                  # (24, 783)
  t2 = jnp.maximum(t1[:, :HW1 - W1 - 1], t1[:, W1:])            # (24, 755)
  pool1 = jnp.dot(t2.astype(bf16), p1_ref[...],
                  preferred_element_type=f32)                   # (24, 226)

  # ------------- conv2 (24->8, 3x3, pad 1) + ReLU -------------
  H2 = W2 = 14
  HW2 = H2 * W2                       # 196
  G2 = W2 + 1                         # 15
  C2 = 8

  acc2 = jnp.zeros((C2, HW2), f32)
  for dj in range(3):
    cols = []
    for di in range(3):
      o = (di - 1) * W2 + (dj - 1)
      cols.append(pool1[:, G2 + o: G2 + o + HW2])  # (24, 196)
    xs = jnp.concatenate(cols, axis=0)             # (72, 196)
    if dj == 0:
      xs = xs * m2_ref[0:1, :]
    elif dj == 2:
      xs = xs * m2_ref[1:2, :]
    acc2 += jnp.dot(w2g_ref[dj], xs, preferred_element_type=f32)
  y2 = jnp.maximum(acc2 + b2_ref[...], 0.0)        # (8, 196)

  # ------------- maxpool 2x2 -> (8, 49) -------------
  t1b = jnp.maximum(y2[:, :HW2 - 1], y2[:, 1:])                  # (8, 195)
  t2b = jnp.maximum(t1b[:, :HW2 - W2 - 1], t1b[:, W2:])          # (8, 181)
  pool2 = jnp.dot(t2b.astype(bf16), p2_ref[...],
                  preferred_element_type=f32)                    # (8, 49)

  # ------------- encoder FC (392 -> 2*latent) + reparameterize ----------
  enc = benc_ref[...]                               # (1, 2*latent)
  for c in range(C2):
    enc = enc + jnp.dot(pool2[c:c + 1, :], wenc_ref[c],
                        preferred_element_type=f32)
  mu = enc[:, :latent_dim]                          # (1, latent)
  logvar = enc[:, latent_dim:]                      # (1, latent)
  z = mu + eps_ref[0] * jnp.exp(0.5 * logvar)       # (1, latent)

  mu_ref[0] = mu
  logvar_ref[0] = logvar

  # ------------- decoder FC (latent -> 392) + ReLU -----------------------
  # Emitted directly into the zero-dilated, 2-padded 17x17 flat layout that
  # ConvTranspose2d(8->24, k=3, s=2) needs; dilation holes stay 0 (ReLU(0)=0).
  DL = wdec_ref.shape[2]                            # 296
  rows = [jnp.dot(z, wdec_ref[c], preferred_element_type=f32)    # (1, DL)
          for c in range(C2)]
  ddil = jnp.maximum(jnp.concatenate(rows, axis=0) + bdec_ref[...], 0.0)  # (8, DL)

  # ------------- ConvTranspose2d(8->24, k=3, s=2) + ReLU --------------
  # 9 shifted channel matmuls on the dilated image; output kept in a
  # row-padded layout (15 rows x 17-wide, cols 15/16 of each row = junk).
  PW = 256                                          # 15*17 = 255 (+1 junk)
  D1 = 24
  acc3 = jnp.zeros((D1, PW), f32)
  for ki in range(3):
    for kj in range(3):
      off = ki * 17 + kj
      acc3 += jnp.dot(wt1_ref[ki * 3 + kj], ddil[:, off:off + PW],
                      preferred_element_type=f32)
  y3 = jnp.maximum(acc3 + bt1_ref[...], 0.0)        # (24, 256)

  # ------------- ConvTranspose2d(24->40, k=2, s=2) + Sigmoid ----------
  # k == stride: each output pixel belongs to exactly one tap (phase).
  phases = [jnp.dot(wt2_ref[t], y3, preferred_element_type=f32) + bt2_ref[...]
            for t in range(4)]                      # 4 x (40, 256)
  y4 = jnp.concatenate(phases, axis=1)              # (40, 1024), lane-dense
  recon_ref[0] = pl.reciprocal(1.0 + jnp.exp(-y4), approx=True)


# ----------------------------- parameter / constant prep -----------------------------

def prepare_params(params, latent_dim=10):
  """Rearranges torch-layout weights + builds the small constant selection /
  mask matrices consumed by the fused kernel.  Run once; tiny arrays."""
  f32 = jnp.float32
  bf16 = jnp.bfloat16
  L = latent_dim

  def pool_select(side, out_pad, dtype):
    wout = side // 2
    q = jnp.arange(wout * wout)
    tgt = 2 * (q // wout) * side + 2 * (q % wout)                # (Q,)
    rows = side * side - side - 1
    sel = (jnp.arange(rows)[:, None] == tgt[None, :]).astype(dtype)
    if out_pad:
      z = jnp.zeros((rows, out_pad), dtype)
      sel = jnp.concatenate([z, sel, z], axis=1)
    return sel

  def edge_masks(side):
    j = jnp.arange(side * side) % side
    return jnp.stack([(j != 0), (j != side - 1)]).astype(f32)    # (2, side*side)

  def conv_group_weights(w):
    # torch (co, ci, kh, kw) -> (kw, co, kh*ci), matching the kh-stacked input.
    co, ci, kh, kw = w.shape
    return w.transpose(3, 0, 2, 1).reshape(kw, co, kh * ci)

  # decoder FC -> zero-dilated, 2-padded 17x17 flat layout (flat length 296).
  DL = 296
  Wd = params["dec_fc_w"]                     # (392, L) torch (out, in)
  bd = params["dec_fc_b"]                     # (392,)
  ii = 2 * jnp.arange(7) + 2
  pos = (ii[:, None] * 17 + ii[None, :]).reshape(-1)             # (49,)
  wdec_dil = jnp.zeros((8, L, DL), f32).at[:, :, pos].set(
      Wd.reshape(8, 49, L).transpose(0, 2, 1))
  bdec_dil = jnp.zeros((8, DL), f32).at[:, pos].set(bd.reshape(8, 49))

  # convT1: flipped-kernel per-tap channel matrices [t=ki*3+kj, co, ci].
  wt1f = jnp.flip(params["dec_ct1_w"], axis=(2, 3)).transpose(2, 3, 1, 0)
  wt1f = wt1f.reshape(9, 24, 8)

  return dict(
      w1g=conv_group_weights(params["enc_conv1_w"]),   # (3, 24, 120)
      b1=params["enc_conv1_b"].reshape(24, 1),
      m1=edge_masks(28),
      p1=pool_select(28, 15, bf16),                    # (755, 226) bf16
      w2g=conv_group_weights(params["enc_conv2_w"]),   # (3, 8, 72)
      b2=params["enc_conv2_b"].reshape(8, 1),
      m2=edge_masks(14),
      p2=pool_select(14, 0, bf16),                     # (181, 49) bf16
      wenc=params["enc_fc_w"].T.reshape(8, 49, 2 * L),
      benc=params["enc_fc_b"].reshape(1, 2 * L),
      wdec=wdec_dil,                                   # (8, L, 296)
      bdec=bdec_dil,                                   # (8, 296)
      wt1=wt1f,                                        # (9, 24, 8)
      bt1=params["dec_ct1_b"].reshape(24, 1),
      wt2=params["dec_ct2_w"].transpose(2, 3, 1, 0).reshape(4, 40, 24),
      bt2=params["dec_ct2_b"].reshape(40, 1),
  )


# ----------------------------- forward -----------------------------

@functools.partial(jax.jit, static_argnames=("latent_dim",))
def autoencoder_charge_forward(prep, x, eps, latent_dim=10):
  n, cin, h, w = x.shape
  assert (cin, h, w) == (40, 28, 28), "Linear(392) in the module implies 40x28x28 input"
  hw = h * w
  guard = w + 1
  xflat = jnp.pad(x.reshape(n, cin, hw), ((0, 0), (0, 0), (guard, guard)))
  eps3 = eps.reshape(n, 1, latent_dim)

  kernel = functools.partial(_fused_vae_kernel, latent_dim=latent_dim)

  def const_spec(a):
    nd = a.ndim
    return pl.BlockSpec(a.shape, lambda i, _nd=nd: (0,) * _nd)

  consts = (prep["w1g"], prep["b1"], prep["m1"], prep["p1"],
            prep["w2g"], prep["b2"], prep["m2"], prep["p2"],
            prep["wenc"], prep["benc"], prep["wdec"], prep["bdec"],
            prep["wt1"], prep["bt1"], prep["wt2"], prep["bt2"])

  in_specs = [
      pl.BlockSpec((1, cin, hw + 2 * guard), lambda i: (i, 0, 0)),
      pl.BlockSpec((1, 1, latent_dim), lambda i: (i, 0, 0)),
  ] + [const_spec(a) for a in consts]

  out_shape = (
      jax.ShapeDtypeStruct((n, 40, 1024), jnp.float32),
      jax.ShapeDtypeStruct((n, 1, latent_dim), jnp.float32),
      jax.ShapeDtypeStruct((n, 1, latent_dim), jnp.float32),
  )
  out_specs = (
      pl.BlockSpec((1, 40, 1024), lambda i: (i, 0, 0)),
      pl.BlockSpec((1, 1, latent_dim), lambda i: (i, 0, 0)),
      pl.BlockSpec((1, 1, latent_dim), lambda i: (i, 0, 0)),
  )

  recon_ph, mu, logvar = pl.pallas_call(
      kernel,
      out_shape=out_shape,
      grid=(n,),
      in_specs=in_specs,
      out_specs=out_specs,
      compiler_params=pltpu.CompilerParams(dimension_semantics=("parallel",)),
  )(xflat, eps3, *consts)

  # Un-phase / un-pad the decoder output: (n, 40, 4*256) -> (n, 40, 30, 30).
  r = recon_ph.reshape(n, 40, 2, 2, 256)[..., :255]        # drop junk lane
  r = r.reshape(n, 40, 2, 2, 15, 17)[..., :15]             # drop per-row junk
  recon = r.transpose(0, 1, 4, 2, 5, 3).reshape(n, 40, 30, 30)

  return (recon,
          mu.reshape(n, latent_dim),
          logvar.reshape(n, latent_dim))


# ----------------------------- parameters -----------------------------

def init_params(key, latent_dim=10):
  keys = jax.random.split(key, 12)

  def u(k, shape, fan_in):
    bound = 1.0 / jnp.sqrt(float(fan_in))
    return jax.random.uniform(k, shape, jnp.float32, -bound, bound)

  return {
      # encoder
      "enc_conv1_w": u(keys[0], (24, 40, 3, 3), 40 * 9),
      "enc_conv1_b": u(keys[1], (24,), 40 * 9),
      "enc_conv2_w": u(keys[2], (8, 24, 3, 3), 24 * 9),
      "enc_conv2_b": u(keys[3], (8,), 24 * 9),
      "enc_fc_w": u(keys[4], (latent_dim * 2, 392), 392),     # torch (out, in)
      "enc_fc_b": u(keys[5], (latent_dim * 2,), 392),
      # decoder
      "dec_fc_w": u(keys[6], (392, latent_dim), latent_dim),
      "dec_fc_b": u(keys[7], (392,), latent_dim),
      "dec_ct1_w": u(keys[8], (8, 24, 3, 3), 8 * 9),          # ConvTranspose2d(8,24,3,s=2)
      "dec_ct1_b": u(keys[9], (24,), 8 * 9),
      "dec_ct2_w": u(keys[10], (24, 40, 2, 2), 24 * 4),       # ConvTranspose2d(24,40,2,s=2)
      "dec_ct2_b": u(keys[11], (40,), 24 * 4),
  }


# ----------------------------- pure-JAX reference (for validation) -----------------------------

def reference_forward(params, x, eps, latent_dim=10):
  dn = ("NCHW", "OIHW", "NCHW")
  h = jax.lax.conv_general_dilated(x, params["enc_conv1_w"], (1, 1),
                                   ((1, 1), (1, 1)), dimension_numbers=dn)
  h = jax.nn.relu(h + params["enc_conv1_b"][None, :, None, None])
  h = jax.lax.reduce_window(h, -jnp.inf, jax.lax.max, (1, 1, 2, 2), (1, 1, 2, 2), "VALID")
  h = jax.lax.conv_general_dilated(h, params["enc_conv2_w"], (1, 1),
                                   ((1, 1), (1, 1)), dimension_numbers=dn)
  h = jax.nn.relu(h + params["enc_conv2_b"][None, :, None, None])
  h = jax.lax.reduce_window(h, -jnp.inf, jax.lax.max, (1, 1, 2, 2), (1, 1, 2, 2), "VALID")
  h = h.reshape(x.shape[0], -1)
  h = h @ params["enc_fc_w"].T + params["enc_fc_b"]
  mu, logvar = h[:, :latent_dim], h[:, latent_dim:]
  z = mu + eps * jnp.exp(0.5 * logvar)
  d = jax.nn.relu(z @ params["dec_fc_w"].T + params["dec_fc_b"])
  d = d.reshape(x.shape[0], 8, 7, 7)

  def convt(x_, w_iokk, b, stride, k):
    w_conv = jnp.flip(w_iokk, (2, 3)).transpose(1, 0, 2, 3)   # (Cout, Cin, k, k)
    y = jax.lax.conv_general_dilated(
        x_, w_conv, (1, 1), ((k - 1, k - 1), (k - 1, k - 1)),
        lhs_dilation=(stride, stride), dimension_numbers=dn)
    return y + b[None, :, None, None]

  d = jax.nn.relu(convt(d, params["dec_ct1_w"], params["dec_ct1_b"], 2, 3))
  d = jax.nn.sigmoid(convt(d, params["dec_ct2_w"], params["dec_ct2_b"], 2, 2))
  return d, mu, logvar


if __name__ == "__main__":
  latent_dim = 10
  key = jax.random.PRNGKey(0)
  kx, keps, kparam = jax.random.split(key, 3)

  params = init_params(kparam, latent_dim=latent_dim)
  x = jax.random.normal(kx, (2, 40, 28, 28), dtype=jnp.float32)
  eps = jax.random.normal(keps, (2, latent_dim), dtype=jnp.float32)

  prep = prepare_params(params, latent_dim=latent_dim)
  recon, mu, logvar = autoencoder_charge_forward(prep, x, eps, latent_dim=latent_dim)
  jax.block_until_ready((recon, mu, logvar))

  # shape / sanity checks
  assert recon.shape == (2, 40, 30, 30), recon.shape
  assert mu.shape == (2, latent_dim) and logvar.shape == (2, latent_dim)
  assert bool(jnp.all(jnp.isfinite(recon)))
  # sigmoid output (small slack for the approximate EUP reciprocal)
  assert bool(jnp.all((recon >= -1e-4) & (recon <= 1.0 + 1e-3)))

  # numerical check against a pure-JAX (XLA) reference
  recon_r, mu_r, logvar_r = reference_forward(params, x, eps, latent_dim)
  assert bool(jnp.allclose(mu, mu_r, atol=3e-2, rtol=3e-2)), \
      float(jnp.max(jnp.abs(mu - mu_r)))
  assert bool(jnp.allclose(logvar, logvar_r, atol=3e-2, rtol=3e-2)), \
      float(jnp.max(jnp.abs(logvar - logvar_r)))
  assert bool(jnp.allclose(recon, recon_r, atol=3e-2, rtol=3e-2)), \
      float(jnp.max(jnp.abs(recon - recon_r)))

  print("KERNEL_OK")
</pallas_src>

<mosaic_0001>
module attributes {stable_mosaic.version = 11 : i64} {
  func.func @_fused_vae_kernel(%arg0: i32, %arg1: memref<1x40x842xf32, #tpu.memory_space<vmem>>, %arg2: memref<1x1x10xf32, #tpu.memory_space<vmem>>, %arg3: memref<3x24x120xf32, #tpu.memory_space<vmem>>, %arg4: memref<24x1xf32, #tpu.memory_space<vmem>>, %arg5: memref<2x784xf32, #tpu.memory_space<vmem>>, %arg6: memref<755x226xbf16, #tpu.memory_space<vmem>>, %arg7: memref<3x8x72xf32, #tpu.memory_space<vmem>>, %arg8: memref<8x1xf32, #tpu.memory_space<vmem>>, %arg9: memref<2x196xf32, #tpu.memory_space<vmem>>, %arg10: memref<181x49xbf16, #tpu.memory_space<vmem>>, %arg11: memref<8x49x20xf32, #tpu.memory_space<vmem>>, %arg12: memref<1x20xf32, #tpu.memory_space<vmem>>, %arg13: memref<8x10x296xf32, #tpu.memory_space<vmem>>, %arg14: memref<8x296xf32, #tpu.memory_space<vmem>>, %arg15: memref<9x24x8xf32, #tpu.memory_space<vmem>>, %arg16: memref<24x1xf32, #tpu.memory_space<vmem>>, %arg17: memref<4x40x24xf32, #tpu.memory_space<vmem>>, %arg18: memref<40x1xf32, #tpu.memory_space<vmem>>, %arg19: memref<1x40x1024xf32, #tpu.memory_space<vmem>>, %arg20: memref<1x1x10xf32, #tpu.memory_space<vmem>>, %arg21: memref<1x1x10xf32, #tpu.memory_space<vmem>>) attributes {dimension_semantics = [#tpu.dimension_semantics<parallel>], iteration_bounds = array<i64: 2>, scalar_prefetch = 0 : i64, scratch_operands = 0 : i64, tpu.core_type = #tpu.core_type<tc>, window_params = [{transform_indices = @transform_0, window_bounds = array<i64: 1, 40, 842>}, {transform_indices = @transform_1, window_bounds = array<i64: 1, 1, 10>}, {pipeline_mode = #tpu.pipeline_mode<synchronous>, transform_indices = @transform_2, window_bounds = array<i64: 3, 24, 120>}, {pipeline_mode = #tpu.pipeline_mode<synchronous>, transform_indices = @transform_3, window_bounds = array<i64: 24, 1>}, {pipeline_mode = #tpu.pipeline_mode<synchronous>, transform_indices = @transform_4, window_bounds = array<i64: 2, 784>}, {pipeline_mode = #tpu.pipeline_mode<synchronous>, transform_indices = @transform_5, window_bounds = array<i64: 755, 226>}, {pipeline_mode = #tpu.pipeline_mode<synchronous>, transform_indices = @transform_6, window_bounds = array<i64: 3, 8, 72>}, {pipeline_mode = #tpu.pipeline_mode<synchronous>, transform_indices = @transform_7, window_bounds = array<i64: 8, 1>}, {pipeline_mode = #tpu.pipeline_mode<synchronous>, transform_indices = @transform_8, window_bounds = array<i64: 2, 196>}, {pipeline_mode = #tpu.pipeline_mode<synchronous>, transform_indices = @transform_9, window_bounds = array<i64: 181, 49>}, {pipeline_mode = #tpu.pipeline_mode<synchronous>, transform_indices = @transform_10, window_bounds = array<i64: 8, 49, 20>}, {pipeline_mode = #tpu.pipeline_mode<synchronous>, transform_indices = @transform_11, window_bounds = array<i64: 1, 20>}, {pipeline_mode = #tpu.pipeline_mode<synchronous>, transform_indices = @transform_12, window_bounds = array<i64: 8, 10, 296>}, {pipeline_mode = #tpu.pipeline_mode<synchronous>, transform_indices = @transform_13, window_bounds = array<i64: 8, 296>}, {pipeline_mode = #tpu.pipeline_mode<synchronous>, transform_indices = @transform_14, window_bounds = array<i64: 9, 24, 8>}, {pipeline_mode = #tpu.pipeline_mode<synchronous>, transform_indices = @transform_15, window_bounds = array<i64: 24, 1>}, {pipeline_mode = #tpu.pipeline_mode<synchronous>, transform_indices = @transform_16, window_bounds = array<i64: 4, 40, 24>}, {pipeline_mode = #tpu.pipeline_mode<synchronous>, transform_indices = @transform_17, window_bounds = array<i64: 40, 1>}, {transform_indices = @transform_18, window_bounds = array<i64: 1, 40, 1024>}, {transform_indices = @transform_19, window_bounds = array<i64: 1, 1, 10>}, {transform_indices = @transform_20, window_bounds = array<i64: 1, 1, 10>}]} {
    %cst = arith.constant 0.000000e+00 : f32
    %0 = vector.broadcast %cst : f32 to vector<24x784xf32>
    %c0_i32 = arith.constant 0 : i32
    %c0_i32_0 = arith.constant 0 : i32
    %c0_i32_1 = arith.constant 0 : i32
    %1 = tpu.memref_slice %arg1[%c0_i32, %c0_i32_0, %c0_i32_1] : memref<1x40x842xf32, #tpu.memory_space<vmem>> -> memref<1x40x842xf32, #tpu.memory_space<vmem>>
    %2 = tpu.memref_squeeze %1 : memref<1x40x842xf32, #tpu.memory_space<vmem>> -> memref<40x842xf32, #tpu.memory_space<vmem>>
    %c0 = arith.constant 0 : index
    %c0_2 = arith.constant 0 : index
    %3 = vector.load %2[%c0, %c0_2] : memref<40x842xf32, #tpu.memory_space<vmem>>, vector<40x784xf32>
    %c0_i32_3 = arith.constant 0 : i32
    %c0_i32_4 = arith.constant 0 : i32
    %c0_i32_5 = arith.constant 0 : i32
    %4 = tpu.memref_slice %arg1[%c0_i32_3, %c0_i32_4, %c0_i32_5] : memref<1x40x842xf32, #tpu.memory_space<vmem>> -> memref<1x40x842xf32, #tpu.memory_space<vmem>>
    %5 = tpu.memref_squeeze %4 : memref<1x40x842xf32, #tpu.memory_space<vmem>> -> memref<40x842xf32, #tpu.memory_space<vmem>>
    %c0_6 = arith.constant 0 : index
    %c28 = arith.constant 28 : index
    %6 = vector.load %5[%c0_6, %c28] : memref<40x842xf32, #tpu.memory_space<vmem>>, vector<40x784xf32>
    %c0_i32_7 = arith.constant 0 : i32
    %c0_i32_8 = arith.constant 0 : i32
    %c0_i32_9 = arith.constant 0 : i32
    %7 = tpu.memref_slice %arg1[%c0_i32_7, %c0_i32_8, %c0_i32_9] : memref<1x40x842xf32, #tpu.memory_space<vmem>> -> memref<1x40x842xf32, #tpu.memory_space<vmem>>
    %8 = tpu.memref_squeeze %7 : memref<1x40x842xf32, #tpu.memory_space<vmem>> -> memref<40x842xf32, #tpu.memory_space<vmem>>
    %c0_10 = arith.constant 0 : index
    %c56 = arith.constant 56 : index
    %9 = vector.load %8[%c0_10, %c56] : memref<40x842xf32, #tpu.memory_space<vmem>>, vector<40x784xf32>
    %10 = tpu.concatenate %3, %6, %9 in 0 : vector<40x784xf32>, vector<40x784xf32>, vector<40x784xf32> -> vector<120x784xf32>
    %c0_11 = arith.constant 0 : index
    %c0_12 = arith.constant 0 : index
    %11 = vector.load %arg5[%c0_11, %c0_12] : memref<2x784xf32, #tpu.memory_space<vmem>>, vector<1x784xf32>
    %12 = vector.broadcast %11 : vector<1x784xf32> to vector<120x784xf32>
    %13 = arith.mulf %10, %12 : vector<120x784xf32>
    %c0_13 = arith.constant 0 : index
    %c0_14 = arith.constant 0 : index
    %c0_15 = arith.constant 0 : index
    %14 = vector.load %arg3[%c0_13, %c0_14, %c0_15] : memref<3x24x120xf32, #tpu.memory_space<vmem>>, vector<1x24x120xf32>
    %15 = vector.shape_cast %14 : vector<1x24x120xf32> to vector<24x120xf32>
    %cst_16 = arith.constant dense<0.000000e+00> : vector<24x784xf32>
    %16 = tpu.matmul %15, %13, %cst_16 {dimension_numbers = #tpu.dot_dimension_numbers<[1], [0], [0], [1], [0, 0, 1, 1], [], []>} : vector<24x120xf32>, vector<120x784xf32>, vector<24x784xf32> -> vector<24x784xf32>
    %17 = arith.addf %0, %16 : vector<24x784xf32>
    %c0_i32_17 = arith.constant 0 : i32
    %c0_i32_18 = arith.constant 0 : i32
    %c0_i32_19 = arith.constant 0 : i32
    %18 = tpu.memref_slice %arg1[%c0_i32_17, %c0_i32_18, %c0_i32_19] : memref<1x40x842xf32, #tpu.memory_space<vmem>> -> memref<1x40x842xf32, #tpu.memory_space<vmem>>
    %19 = tpu.memref_squeeze %18 : memref<1x40x842xf32, #tpu.memory_space<vmem>> -> memref<40x842xf32, #tpu.memory_space<vmem>>
    %c0_20 = arith.constant 0 : index
    %c1 = arith.constant 1 : index
    %20 = vector.load %19[%c0_20, %c1] : memref<40x842xf32, #tpu.memory_space<vmem>>, vector<40x784xf32>
    %c0_i32_21 = arith.constant 0 : i32
    %c0_i32_22 = arith.constant 0 : i32
    %c0_i32_23 = arith.constant 0 : i32
    %21 = tpu.memref_slice %arg1[%c0_i32_21, %c0_i32_22, %c0_i32_23] : memref<1x40x842xf32, #tpu.memory_space<vmem>> -> memref<1x40x842xf32, #tpu.memory_space<vmem>>
    %22 = tpu.memref_squeeze %21 : memref<1x40x842xf32, #tpu.memory_space<vmem>> -> memref<40x842xf32, #tpu.memory_space<vmem>>
    %c0_24 = arith.constant 0 : index
    %c29 = arith.constant 29 : index
    %23 = vector.load %22[%c0_24, %c29] : memref<40x842xf32, #tpu.memory_space<vmem>>, vector<40x784xf32>
    %c0_i32_25 = arith.constant 0 : i32
    %c0_i32_26 = arith.constant 0 : i32
    %c0_i32_27 = arith.constant 0 : i32
    %24 = tpu.memref_slice %arg1[%c0_i32_25, %c0_i32_26, %c0_i32_27] : memref<1x40x842xf32, #tpu.memory_space<vmem>> -> memref<1x40x842xf32, #tpu.memory_space<vmem>>
    %25 = tpu.memref_squeeze %24 : memref<1x40x842xf32, #tpu.memory_space<vmem>> -> memref<40x842xf32, #tpu.memory_space<vmem>>
    %c0_28 = arith.constant 0 : index
    %c57 = arith.constant 57 : index
    %26 = vector.load %25[%c0_28, %c57] : memref<40x842xf32, #tpu.memory_space<vmem>>, vector<40x784xf32>
    %27 = tpu.concatenate %20, %23, %26 in 0 : vector<40x784xf32>, vector<40x784xf32>, vector<40x784xf32> -> vector<120x784xf32>
    %c1_29 = arith.constant 1 : index
    %c0_30 = arith.constant 0 : index
    %c0_31 = arith.constant 0 : index
    %28 = vector.load %arg3[%c1_29, %c0_30, %c0_31] : memref<3x24x120xf32, #tpu.memory_space<vmem>>, vector<1x24x120xf32>
    %29 = vector.shape_cast %28 : vector<1x24x120xf32> to vector<24x120xf32>
    %cst_32 = arith.constant dense<0.000000e+00> : vector<24x784xf32>
    %30 = tpu.matmul %29, %27, %cst_32 {dimension_numbers = #tpu.dot_dimension_numbers<[1], [0], [0], [1], [0, 0, 1, 1], [], []>} : vector<24x120xf32>, vector<120x784xf32>, vector<24x784xf32> -> vector<24x784xf32>
    %31 = arith.addf %17, %30 : vector<24x784xf32>
    %c0_i32_33 = arith.constant 0 : i32
    %c0_i32_34 = arith.constant 0 : i32
    %c0_i32_35 = arith.constant 0 : i32
    %32 = tpu.memref_slice %arg1[%c0_i32_33, %c0_i32_34, %c0_i32_35] : memref<1x40x842xf32, #tpu.memory_space<vmem>> -> memref<1x40x842xf32, #tpu.memory_space<vmem>>
    %33 = tpu.memref_squeeze %32 : memref<1x40x842xf32, #tpu.memory_space<vmem>> -> memref<40x842xf32, #tpu.memory_space<vmem>>
    %c0_36 = arith.constant 0 : index
    %c2 = arith.constant 2 : index
    %34 = vector.load %33[%c0_36, %c2] : memref<40x842xf32, #tpu.memory_space<vmem>>, vector<40x784xf32>
    %c0_i32_37 = arith.constant 0 : i32
    %c0_i32_38 = arith.constant 0 : i32
    %c0_i32_39 = arith.constant 0 : i32
    %35 = tpu.memref_slice %arg1[%c0_i32_37, %c0_i32_38, %c0_i32_39] : memref<1x40x842xf32, #tpu.memory_space<vmem>> -> memref<1x40x842xf32, #tpu.memory_space<vmem>>
    %36 = tpu.memref_squeeze %35 : memref<1x40x842xf32, #tpu.memory_space<vmem>> -> memref<40x842xf32, #tpu.memory_space<vmem>>
    %c0_40 = arith.constant 0 : index
    %c30 = arith.constant 30 : index
    %37 = vector.load %36[%c0_40, %c30] : memref<40x842xf32, #tpu.memory_space<vmem>>, vector<40x784xf32>
    %c0_i32_41 = arith.constant 0 : i32
    %c0_i32_42 = arith.constant 0 : i32
    %c0_i32_43 = arith.constant 0 : i32
    %38 = tpu.memref_slice %arg1[%c0_i32_41, %c0_i32_42, %c0_i32_43] : memref<1x40x842xf32, #tpu.memory_space<vmem>> -> memref<1x40x842xf32, #tpu.memory_space<vmem>>
    %39 = tpu.memref_squeeze %38 : memref<1x40x842xf32, #tpu.memory_space<vmem>> -> memref<40x842xf32, #tpu.memory_space<vmem>>
    %c0_44 = arith.constant 0 : index
    %c58 = arith.constant 58 : index
    %40 = vector.load %39[%c0_44, %c58] : memref<40x842xf32, #tpu.memory_space<vmem>>, vector<40x784xf32>
    %41 = tpu.concatenate %34, %37, %40 in 0 : vector<40x784xf32>, vector<40x784xf32>, vector<40x784xf32> -> vector<120x784xf32>
    %c1_45 = arith.constant 1 : index
    %c0_46 = arith.constant 0 : index
    %42 = vector.load %arg5[%c1_45, %c0_46] : memref<2x784xf32, #tpu.memory_space<vmem>>, vector<1x784xf32>
    %43 = vector.broadcast %42 : vector<1x784xf32> to vector<120x784xf32>
    %44 = arith.mulf %41, %43 : vector<120x784xf32>
    %c2_47 = arith.constant 2 : index
    %c0_48 = arith.constant 0 : index
    %c0_49 = arith.constant 0 : index
    %45 = vector.load %arg3[%c2_47, %c0_48, %c0_49] : memref<3x24x120xf32, #tpu.memory_space<vmem>>, vector<1x24x120xf32>
    %46 = vector.shape_cast %45 : vector<1x24x120xf32> to vector<24x120xf32>
    %cst_50 = arith.constant dense<0.000000e+00> : vector<24x784xf32>
    %47 = tpu.matmul %46, %44, %cst_50 {dimension_numbers = #tpu.dot_dimension_numbers<[1], [0], [0], [1], [0, 0, 1, 1], [], []>} : vector<24x120xf32>, vector<120x784xf32>, vector<24x784xf32> -> vector<24x784xf32>
    %48 = arith.addf %31, %47 : vector<24x784xf32>
    %c0_51 = arith.constant 0 : index
    %c0_52 = arith.constant 0 : index
    %49 = vector.load %arg4[%c0_51, %c0_52] : memref<24x1xf32, #tpu.memory_space<vmem>>, vector<24x1xf32>
    %50 = vector.broadcast %49 : vector<24x1xf32> to vector<24x784xf32>
    %51 = arith.addf %48, %50 : vector<24x784xf32>
    %cst_53 = arith.constant 0.000000e+00 : f32
    %52 = vector.broadcast %cst_53 : f32 to vector<24x784xf32>
    %53 = arith.maximumf %51, %52 : vector<24x784xf32>
    %54 = vector.extract_strided_slice %53 {offsets = [0, 0], sizes = [24, 783], strides = [1, 1]} : vector<24x784xf32> to vector<24x783xf32>
    %55 = vector.extract_strided_slice %53 {offsets = [0, 1], sizes = [24, 783], strides = [1, 1]} : vector<24x784xf32> to vector<24x783xf32>
    %56 = arith.maximumf %54, %55 : vector<24x783xf32>
    %57 = vector.extract_strided_slice %56 {offsets = [0, 0], sizes = [24, 755], strides = [1, 1]} : vector<24x783xf32> to vector<24x755xf32>
    %58 = vector.extract_strided_slice %56 {offsets = [0, 28], sizes = [24, 755], strides = [1, 1]} : vector<24x783xf32> to vector<24x755xf32>
    %59 = arith.maximumf %57, %58 : vector<24x755xf32>
    %60 = arith.truncf %59 : vector<24x755xf32> to vector<24x755xbf16>
    %c0_54 = arith.constant 0 : index
    %c0_55 = arith.constant 0 : index
    %61 = vector.load %arg6[%c0_54, %c0_55] : memref<755x226xbf16, #tpu.memory_space<vmem>>, vector<755x226xbf16>
    %cst_56 = arith.constant dense<0.000000e+00> : vector<24x226xf32>
    %62 = tpu.matmul %60, %61, %cst_56 {dimension_numbers = #tpu.dot_dimension_numbers<[1], [0], [0], [1], [0, 0, 1, 1], [], []>} : vector<24x755xbf16>, vector<755x226xbf16>, vector<24x226xf32> -> vector<24x226xf32>
    %cst_57 = arith.constant 0.000000e+00 : f32
    %63 = vector.broadcast %cst_57 : f32 to vector<8x196xf32>
    %64 = vector.extract_strided_slice %62 {offsets = [0, 0], sizes = [24, 196], strides = [1, 1]} : vector<24x226xf32> to vector<24x196xf32>
    %65 = vector.extract_strided_slice %62 {offsets = [0, 14], sizes = [24, 196], strides = [1, 1]} : vector<24x226xf32> to vector<24x196xf32>
    %66 = vector.extract_strided_slice %62 {offsets = [0, 28], sizes = [24, 196], strides = [1, 1]} : vector<24x226xf32> to vector<24x196xf32>
    %67 = tpu.concatenate %64, %65, %66 in 0 : vector<24x196xf32>, vector<24x196xf32>, vector<24x196xf32> -> vector<72x196xf32>
    %c0_58 = arith.constant 0 : index
    %c0_59 = arith.constant 0 : index
    %68 = vector.load %arg9[%c0_58, %c0_59] : memref<2x196xf32, #tpu.memory_space<vmem>>, vector<1x196xf32>
    %69 = vector.broadcast %68 : vector<1x196xf32> to vector<72x196xf32>
    %70 = arith.mulf %67, %69 : vector<72x196xf32>
    %c0_60 = arith.constant 0 : index
    %c0_61 = arith.constant 0 : index
    %c0_62 = arith.constant 0 : index
    %71 = vector.load %arg7[%c0_60, %c0_61, %c0_62] : memref<3x8x72xf32, #tpu.memory_space<vmem>>, vector<1x8x72xf32>
    %72 = vector.shape_cast %71 : vector<1x8x72xf32> to vector<8x72xf32>
    %cst_63 = arith.constant dense<0.000000e+00> : vector<8x196xf32>
    %73 = tpu.matmul %72, %70, %cst_63 {dimension_numbers = #tpu.dot_dimension_numbers<[1], [0], [0], [1], [0, 0, 1, 1], [], []>} : vector<8x72xf32>, vector<72x196xf32>, vector<8x196xf32> -> vector<8x196xf32>
    %74 = arith.addf %63, %73 : vector<8x196xf32>
    %75 = vector.extract_strided_slice %62 {offsets = [0, 1], sizes = [24, 196], strides = [1, 1]} : vector<24x226xf32> to vector<24x196xf32>
    %76 = vector.extract_strided_slice %62 {offsets = [0, 15], sizes = [24, 196], strides = [1, 1]} : vector<24x226xf32> to vector<24x196xf32>
    %77 = vector.extract_strided_slice %62 {offsets = [0, 29], sizes = [24, 196], strides = [1, 1]} : vector<24x226xf32> to vector<24x196xf32>
    %78 = tpu.concatenate %75, %76, %77 in 0 : vector<24x196xf32>, vector<24x196xf32>, vector<24x196xf32> -> vector<72x196xf32>
    %c1_64 = arith.constant 1 : index
    %c0_65 = arith.constant 0 : index
    %c0_66 = arith.constant 0 : index
    %79 = vector.load %arg7[%c1_64, %c0_65, %c0_66] : memref<3x8x72xf32, #tpu.memory_space<vmem>>, vector<1x8x72xf32>
    %80 = vector.shape_cast %79 : vector<1x8x72xf32> to vector<8x72xf32>
    %cst_67 = arith.constant dense<0.000000e+00> : vector<8x196xf32>
    %81 = tpu.matmul %80, %78, %cst_67 {dimension_numbers = #tpu.dot_dimension_numbers<[1], [0], [0], [1], [0, 0, 1, 1], [], []>} : vector<8x72xf32>, vector<72x196xf32>, vector<8x196xf32> -> vector<8x196xf32>
    %82 = arith.addf %74, %81 : vector<8x196xf32>
    %83 = vector.extract_strided_slice %62 {offsets = [0, 2], sizes = [24, 196], strides = [1, 1]} : vector<24x226xf32> to vector<24x196xf32>
    %84 = vector.extract_strided_slice %62 {offsets = [0, 16], sizes = [24, 196], strides = [1, 1]} : vector<24x226xf32> to vector<24x196xf32>
    %85 = vector.extract_strided_slice %62 {offsets = [0, 30], sizes = [24, 196], strides = [1, 1]} : vector<24x226xf32> to vector<24x196xf32>
    %86 = tpu.concatenate %83, %84, %85 in 0 : vector<24x196xf32>, vector<24x196xf32>, vector<24x196xf32> -> vector<72x196xf32>
    %c1_68 = arith.constant 1 : index
    %c0_69 = arith.constant 0 : index
    %87 = vector.load %arg9[%c1_68, %c0_69] : memref<2x196xf32, #tpu.memory_space<vmem>>, vector<1x196xf32>
    %88 = vector.broadcast %87 : vector<1x196xf32> to vector<72x196xf32>
    %89 = arith.mulf %86, %88 : vector<72x196xf32>
    %c2_70 = arith.constant 2 : index
    %c0_71 = arith.constant 0 : index
    %c0_72 = arith.constant 0 : index
    %90 = vector.load %arg7[%c2_70, %c0_71, %c0_72] : memref<3x8x72xf32, #tpu.memory_space<vmem>>, vector<1x8x72xf32>
    %91 = vector.shape_cast %90 : vector<1x8x72xf32> to vector<8x72xf32>
    %cst_73 = arith.constant dense<0.000000e+00> : vector<8x196xf32>
    %92 = tpu.matmul %91, %89, %cst_73 {dimension_numbers = #tpu.dot_dimension_numbers<[1], [0], [0], [1], [0, 0, 1, 1], [], []>} : vector<8x72xf32>, vector<72x196xf32>, vector<8x196xf32> -> vector<8x196xf32>
    %93 = arith.addf %82, %92 : vector<8x196xf32>
    %c0_74 = arith.constant 0 : index
    %c0_75 = arith.constant 0 : index
    %94 = vector.load %arg8[%c0_74, %c0_75] : memref<8x1xf32, #tpu.memory_space<vmem>>, vector<8x1xf32>
    %95 = vector.broadcast %94 : vector<8x1xf32> to vector<8x196xf32>
    %96 = arith.addf %93, %95 : vector<8x196xf32>
    %cst_76 = arith.constant 0.000000e+00 : f32
    %97 = vector.broadcast %cst_76 : f32 to vector<8x196xf32>
    %98 = arith.maximumf %96, %97 : vector<8x196xf32>
    %99 = vector.extract_strided_slice %98 {offsets = [0, 0], sizes = [8, 195], strides = [1, 1]} : vector<8x196xf32> to vector<8x195xf32>
    %100 = vector.extract_strided_slice %98 {offsets = [0, 1], sizes = [8, 195], strides = [1, 1]} : vector<8x196xf32> to vector<8x195xf32>
    %101 = arith.maximumf %99, %100 : vector<8x195xf32>
    %102 = vector.extract_strided_slice %101 {offsets = [0, 0], sizes = [8, 181], strides = [1, 1]} : vector<8x195xf32> to vector<8x181xf32>
    %103 = vector.extract_strided_slice %101 {offsets = [0, 14], sizes = [8, 181], strides = [1, 1]} : vector<8x195xf32> to vector<8x181xf32>
    %104 = arith.maximumf %102, %103 : vector<8x181xf32>
    %105 = arith.truncf %104 : vector<8x181xf32> to vector<8x181xbf16>
    %c0_77 = arith.constant 0 : index
    %c0_78 = arith.constant 0 : index
    %106 = vector.load %arg10[%c0_77, %c0_78] : memref<181x49xbf16, #tpu.memory_space<vmem>>, vector<181x49xbf16>
    %cst_79 = arith.constant dense<0.000000e+00> : vector<8x49xf32>
    %107 = tpu.matmul %105, %106, %cst_79 {dimension_numbers = #tpu.dot_dimension_numbers<[1], [0], [0], [1], [0, 0, 1, 1], [], []>} : vector<8x181xbf16>, vector<181x49xbf16>, vector<8x49xf32> -> vector<8x49xf32>
    %c0_80 = arith.constant 0 : index
    %c0_81 = arith.constant 0 : index
    %108 = vector.load %arg12[%c0_80, %c0_81] : memref<1x20xf32, #tpu.memory_space<vmem>>, vector<1x20xf32>
    %109 = vector.extract_strided_slice %107 {offsets = [0, 0], sizes = [1, 49], strides = [1, 1]} : vector<8x49xf32> to vector<1x49xf32>
    %c0_82 = arith.constant 0 : index
    %c0_83 = arith.constant 0 : index
    %c0_84 = arith.constant 0 : index
    %110 = vector.load %arg11[%c0_82, %c0_83, %c0_84] : memref<8x49x20xf32, #tpu.memory_space<vmem>>, vector<1x49x20xf32>
    %111 = vector.shape_cast %110 : vector<1x49x20xf32> to vector<49x20xf32>
    %cst_85 = arith.constant dense<0.000000e+00> : vector<1x20xf32>
    %112 = tpu.matmul %109, %111, %cst_85 {dimension_numbers = #tpu.dot_dimension_numbers<[1], [0], [0], [1], [0, 0, 1, 1], [], []>} : vector<1x49xf32>, vector<49x20xf32>, vector<1x20xf32> -> vector<1x20xf32>
    %113 = arith.addf %108, %112 : vector<1x20xf32>
    %114 = vector.extract_strided_slice %107 {offsets = [1, 0], sizes = [1, 49], strides = [1, 1]} : vector<8x49xf32> to vector<1x49xf32>
    %c1_86 = arith.constant 1 : index
    %c0_87 = arith.constant 0 : index
    %c0_88 = arith.constant 0 : index
    %115 = vector.load %arg11[%c1_86, %c0_87, %c0_88] : memref<8x49x20xf32, #tpu.memory_space<vmem>>, vector<1x49x20xf32>
    %116 = vector.shape_cast %115 : vector<1x49x20xf32> to vector<49x20xf32>
    %cst_89 = arith.constant dense<0.000000e+00> : vector<1x20xf32>
    %117 = tpu.matmul %114, %116, %cst_89 {dimension_numbers = #tpu.dot_dimension_numbers<[1], [0], [0], [1], [0, 0, 1, 1], [], []>} : vector<1x49xf32>, vector<49x20xf32>, vector<1x20xf32> -> vector<1x20xf32>
    %118 = arith.addf %113, %117 : vector<1x20xf32>
    %119 = vector.extract_strided_slice %107 {offsets = [2, 0], sizes = [1, 49], strides = [1, 1]} : vector<8x49xf32> to vector<1x49xf32>
    %c2_90 = arith.constant 2 : index
    %c0_91 = arith.constant 0 : index
    %c0_92 = arith.constant 0 : index
    %120 = vector.load %arg11[%c2_90, %c0_91, %c0_92] : memref<8x49x20xf32, #tpu.memory_space<vmem>>, vector<1x49x20xf32>
    %121 = vector.shape_cast %120 : vector<1x49x20xf32> to vector<49x20xf32>
    %cst_93 = arith.constant dense<0.000000e+00> : vector<1x20xf32>
    %122 = tpu.matmul %119, %121, %cst_93 {dimension_numbers = #tpu.dot_dimension_numbers<[1], [0], [0], [1], [0, 0, 1, 1], [], []>} : vector<1x49xf32>, vector<49x20xf32>, vector<1x20xf32> -> vector<1x20xf32>
    %123 = arith.addf %118, %122 : vector<1x20xf32>
    %124 = vector.extract_strided_slice %107 {offsets = [3, 0], sizes = [1, 49], strides = [1, 1]} : vector<8x49xf32> to vector<1x49xf32>
    %c3 = arith.constant 3 : index
    %c0_94 = arith.constant 0 : index
    %c0_95 = arith.constant 0 : index
    %125 = vector.load %arg11[%c3, %c0_94, %c0_95] : memref<8x49x20xf32, #tpu.memory_space<vmem>>, vector<1x49x20xf32>
    %126 = vector.shape_cast %125 : vector<1x49x20xf32> to vector<49x20xf32>
    %cst_96 = arith.constant dense<0.000000e+00> : vector<1x20xf32>
    %127 = tpu.matmul %124, %126, %cst_96 {dimension_numbers = #tpu.dot_dimension_numbers<[1], [0], [0], [1], [0, 0, 1, 1], [], []>} : vector<1x49xf32>, vector<49x20xf32>, vector<1x20xf32> -> vector<1x20xf32>
    %128 = arith.addf %123, %127 : vector<1x20xf32>
    %129 = vector.extract_strided_slice %107 {offsets = [4, 0], sizes = [1, 49], strides = [1, 1]} : vector<8x49xf32> to vector<1x49xf32>
    %c4 = arith.constant 4 : index
    %c0_97 = arith.constant 0 : index
    %c0_98 = arith.constant 0 : index
    %130 = vector.load %arg11[%c4, %c0_97, %c0_98] : memref<8x49x20xf32, #tpu.memory_space<vmem>>, vector<1x49x20xf32>
    %131 = vector.shape_cast %130 : vector<1x49x20xf32> to vector<49x20xf32>
    %cst_99 = arith.constant dense<0.000000e+00> : vector<1x20xf32>
    %132 = tpu.matmul %129, %131, %cst_99 {dimension_numbers = #tpu.dot_dimension_numbers<[1], [0], [0], [1], [0, 0, 1, 1], [], []>} : vector<1x49xf32>, vector<49x20xf32>, vector<1x20xf32> -> vector<1x20xf32>
    %133 = arith.addf %128, %132 : vector<1x20xf32>
    %134 = vector.extract_strided_slice %107 {offsets = [5, 0], sizes = [1, 49], strides = [1, 1]} : vector<8x49xf32> to vector<1x49xf32>
    %c5 = arith.constant 5 : index
    %c0_100 = arith.constant 0 : index
    %c0_101 = arith.constant 0 : index
    %135 = vector.load %arg11[%c5, %c0_100, %c0_101] : memref<8x49x20xf32, #tpu.memory_space<vmem>>, vector<1x49x20xf32>
    %136 = vector.shape_cast %135 : vector<1x49x20xf32> to vector<49x20xf32>
    %cst_102 = arith.constant dense<0.000000e+00> : vector<1x20xf32>
    %137 = tpu.matmul %134, %136, %cst_102 {dimension_numbers = #tpu.dot_dimension_numbers<[1], [0], [0], [1], [0, 0, 1, 1], [], []>} : vector<1x49xf32>, vector<49x20xf32>, vector<1x20xf32> -> vector<1x20xf32>
    %138 = arith.addf %133, %137 : vector<1x20xf32>
    %139 = vector.extract_strided_slice %107 {offsets = [6, 0], sizes = [1, 49], strides = [1, 1]} : vector<8x49xf32> to vector<1x49xf32>
    %c6 = arith.constant 6 : index
    %c0_103 = arith.constant 0 : index
    %c0_104 = arith.constant 0 : index
    %140 = vector.load %arg11[%c6, %c0_103, %c0_104] : memref<8x49x20xf32, #tpu.memory_space<vmem>>, vector<1x49x20xf32>
    %141 = vector.shape_cast %140 : vector<1x49x20xf32> to vector<49x20xf32>
    %cst_105 = arith.constant dense<0.000000e+00> : vector<1x20xf32>
    %142 = tpu.matmul %139, %141, %cst_105 {dimension_numbers = #tpu.dot_dimension_numbers<[1], [0], [0], [1], [0, 0, 1, 1], [], []>} : vector<1x49xf32>, vector<49x20xf32>, vector<1x20xf32> -> vector<1x20xf32>
    %143 = arith.addf %138, %142 : vector<1x20xf32>
    %144 = vector.extract_strided_slice %107 {offsets = [7, 0], sizes = [1, 49], strides = [1, 1]} : vector<8x49xf32> to vector<1x49xf32>
    %c7 = arith.constant 7 : index
    %c0_106 = arith.constant 0 : index
    %c0_107 = arith.constant 0 : index
    %145 = vector.load %arg11[%c7, %c0_106, %c0_107] : memref<8x49x20xf32, #tpu.memory_space<vmem>>, vector<1x49x20xf32>
    %146 = vector.shape_cast %145 : vector<1x49x20xf32> to vector<49x20xf32>
    %cst_108 = arith.constant dense<0.000000e+00> : vector<1x20xf32>
    %147 = tpu.matmul %144, %146, %cst_108 {dimension_numbers = #tpu.dot_dimension_numbers<[1], [0], [0], [1], [0, 0, 1, 1], [], []>} : vector<1x49xf32>, vector<49x20xf32>, vector<1x20xf32> -> vector<1x20xf32>
    %148 = arith.addf %143, %147 : vector<1x20xf32>
    %149 = vector.extract_strided_slice %148 {offsets = [0, 0], sizes = [1, 10], strides = [1, 1]} : vector<1x20xf32> to vector<1x10xf32>
    %150 = vector.extract_strided_slice %148 {offsets = [0, 10], sizes = [1, 10], strides = [1, 1]} : vector<1x20xf32> to vector<1x10xf32>
    %c0_109 = arith.constant 0 : index
    %c0_110 = arith.constant 0 : index
    %c0_111 = arith.constant 0 : index
    %151 = vector.load %arg2[%c0_109, %c0_110, %c0_111] : memref<1x1x10xf32, #tpu.memory_space<vmem>>, vector<1x1x10xf32>
    %152 = vector.shape_cast %151 : vector<1x1x10xf32> to vector<1x10xf32>
    %cst_112 = arith.constant 5.000000e-01 : f32
    %153 = vector.broadcast %cst_112 : f32 to vector<1x10xf32>
    %154 = arith.mulf %153, %150 : vector<1x10xf32>
    %155 = math.exp %154 : vector<1x10xf32>
    %156 = arith.mulf %152, %155 : vector<1x10xf32>
    %157 = arith.addf %149, %156 : vector<1x10xf32>
    %c0_113 = arith.constant 0 : index
    %c0_114 = arith.constant 0 : index
    %c0_115 = arith.constant 0 : index
    %158 = vector.load %arg20[%c0_113, %c0_114, %c0_115] : memref<1x1x10xf32, #tpu.memory_space<vmem>>, vector<1x1x10xf32>
    %159 = vector.shape_cast %158 : vector<1x1x10xf32> to vector<1x10xf32>
    %160 = vector.shape_cast %149 : vector<1x10xf32> to vector<1x1x10xf32>
    tpu.vector_store %arg20[%c0_113, %c0_114, %c0_115], %160 {strides = array<i32>} : memref<1x1x10xf32, #tpu.memory_space<vmem>>, vector<1x1x10xf32>,
    %c0_116 = arith.constant 0 : index
    %c0_117 = arith.constant 0 : index
    %c0_118 = arith.constant 0 : index
    %161 = vector.load %arg21[%c0_116, %c0_117, %c0_118] : memref<1x1x10xf32, #tpu.memory_space<vmem>>, vector<1x1x10xf32>
    %162 = vector.shape_cast %161 : vector<1x1x10xf32> to vector<1x10xf32>
    %163 = vector.shape_cast %150 : vector<1x10xf32> to vector<1x1x10xf32>
    tpu.vector_store %arg21[%c0_116, %c0_117, %c0_118], %163 {strides = array<i32>} : memref<1x1x10xf32, #tpu.memory_space<vmem>>, vector<1x1x10xf32>,
    %c0_119 = arith.constant 0 : index
    %c0_120 = arith.constant 0 : index
    %c0_121 = arith.constant 0 : index
    %164 = vector.load %arg13[%c0_119, %c0_120, %c0_121] : memref<8x10x296xf32, #tpu.memory_space<vmem>>, vector<1x10x296xf32>
    %165 = vector.shape_cast %164 : vector<1x10x296xf32> to vector<10x296xf32>
    %cst_122 = arith.constant dense<0.000000e+00> : vector<1x296xf32>
    %166 = tpu.matmul %157, %165, %cst_122 {dimension_numbers = #tpu.dot_dimension_numbers<[1], [0], [0], [1], [0, 0, 1, 1], [], []>} : vector<1x10xf32>, vector<10x296xf32>, vector<1x296xf32> -> vector<1x296xf32>
    %c1_123 = arith.constant 1 : index
    %c0_124 = arith.constant 0 : index
    %c0_125 = arith.constant 0 : index
    %167 = vector.load %arg13[%c1_123, %c0_124, %c0_125] : memref<8x10x296xf32, #tpu.memory_space<vmem>>, vector<1x10x296xf32>
    %168 = vector.shape_cast %167 : vector<1x10x296xf32> to vector<10x296xf32>
    %cst_126 = arith.constant dense<0.000000e+00> : vector<1x296xf32>
    %169 = tpu.matmul %157, %168, %cst_126 {dimension_numbers = #tpu.dot_dimension_numbers<[1], [0], [0], [1], [0, 0, 1, 1], [], []>} : vector<1x10xf32>, vector<10x296xf32>, vector<1x296xf32> -> vector<1x296xf32>
    %c2_127 = arith.constant 2 : index
    %c0_128 = arith.constant 0 : index
    %c0_129 = arith.constant 0 : index
    %170 = vector.load %arg13[%c2_127, %c0_128, %c0_129] : memref<8x10x296xf32, #tpu.memory_space<vmem>>, vector<1x10x296xf32>
    %171 = vector.shape_cast %170 : vector<1x10x296xf32> to vector<10x296xf32>
    %cst_130 = arith.constant dense<0.000000e+00> : vector<1x296xf32>
    %172 = tpu.matmul %157, %171, %cst_130 {dimension_numbers = #tpu.dot_dimension_numbers<[1], [0], [0], [1], [0, 0, 1, 1], [], []>} : vector<1x10xf32>, vector<10x296xf32>, vector<1x296xf32> -> vector<1x296xf32>
    %c3_131 = arith.constant 3 : index
    %c0_132 = arith.constant 0 : index
    %c0_133 = arith.constant 0 : index
    %173 = vector.load %arg13[%c3_131, %c0_132, %c0_133] : memref<8x10x296xf32, #tpu.memory_space<vmem>>, vector<1x10x296xf32>
    %174 = vector.shape_cast %173 : vector<1x10x296xf32> to vector<10x296xf32>
    %cst_134 = arith.constant dense<0.000000e+00> : vector<1x296xf32>
    %175 = tpu.matmul %157, %174, %cst_134 {dimension_numbers = #tpu.dot_dimension_numbers<[1], [0], [0], [1], [0, 0, 1, 1], [], []>} : vector<1x10xf32>, vector<10x296xf32>, vector<1x296xf32> -> vector<1x296xf32>
    %c4_135 = arith.constant 4 : index
    %c0_136 = arith.constant 0 : index
    %c0_137 = arith.constant 0 : index
    %176 = vector.load %arg13[%c4_135, %c0_136, %c0_137] : memref<8x10x296xf32, #tpu.memory_space<vmem>>, vector<1x10x296xf32>
    %177 = vector.shape_cast %176 : vector<1x10x296xf32> to vector<10x296xf32>
    %cst_138 = arith.constant dense<0.000000e+00> : vector<1x296xf32>
    %178 = tpu.matmul %157, %177, %cst_138 {dimension_numbers = #tpu.dot_dimension_numbers<[1], [0], [0], [1], [0, 0, 1, 1], [], []>} : vector<1x10xf32>, vector<10x296xf32>, vector<1x296xf32> -> vector<1x296xf32>
    %c5_139 = arith.constant 5 : index
    %c0_140 = arith.constant 0 : index
    %c0_141 = arith.constant 0 : index
    %179 = vector.load %arg13[%c5_139, %c0_140, %c0_141] : memref<8x10x296xf32, #tpu.memory_space<vmem>>, vector<1x10x296xf32>
    %180 = vector.shape_cast %179 : vector<1x10x296xf32> to vector<10x296xf32>
    %cst_142 = arith.constant dense<0.000000e+00> : vector<1x296xf32>
    %181 = tpu.matmul %157, %180, %cst_142 {dimension_numbers = #tpu.dot_dimension_numbers<[1], [0], [0], [1], [0, 0, 1, 1], [], []>} : vector<1x10xf32>, vector<10x296xf32>, vector<1x296xf32> -> vector<1x296xf32>
    %c6_143 = arith.constant 6 : index
    %c0_144 = arith.constant 0 : index
    %c0_145 = arith.constant 0 : index
    %182 = vector.load %arg13[%c6_143, %c0_144, %c0_145] : memref<8x10x296xf32, #tpu.memory_space<vmem>>, vector<1x10x296xf32>
    %183 = vector.shape_cast %182 : vector<1x10x296xf32> to vector<10x296xf32>
    %cst_146 = arith.constant dense<0.000000e+00> : vector<1x296xf32>
    %184 = tpu.matmul %157, %183, %cst_146 {dimension_numbers = #tpu.dot_dimension_numbers<[1], [0], [0], [1], [0, 0, 1, 1], [], []>} : vector<1x10xf32>, vector<10x296xf32>, vector<1x296xf32> -> vector<1x296xf32>
    %c7_147 = arith.constant 7 : index
    %c0_148 = arith.constant 0 : index
    %c0_149 = arith.constant 0 : index
    %185 = vector.load %arg13[%c7_147, %c0_148, %c0_149] : memref<8x10x296xf32, #tpu.memory_space<vmem>>, vector<1x10x296xf32>
    %186 = vector.shape_cast %185 : vector<1x10x296xf32> to vector<10x296xf32>
    %cst_150 = arith.constant dense<0.000000e+00> : vector<1x296xf32>
    %187 = tpu.matmul %157, %186, %cst_150 {dimension_numbers = #tpu.dot_dimension_numbers<[1], [0], [0], [1], [0, 0, 1, 1], [], []>} : vector<1x10xf32>, vector<10x296xf32>, vector<1x296xf32> -> vector<1x296xf32>
    %188 = tpu.concatenate %166, %169, %172, %175, %178, %181, %184, %187 in 0 : vector<1x296xf32>, vector<1x296xf32>, vector<1x296xf32>, vector<1x296xf32>, vector<1x296xf32>, vector<1x296xf32>, vector<1x296xf32>, vector<1x296xf32> -> vector<8x296xf32>
    %c0_151 = arith.constant 0 : index
    %c0_152 = arith.constant 0 : index
    %189 = vector.load %arg14[%c0_151, %c0_152] : memref<8x296xf32, #tpu.memory_space<vmem>>, vector<8x296xf32>
    %190 = arith.addf %188, %189 : vector<8x296xf32>
    %cst_153 = arith.constant 0.000000e+00 : f32
    %191 = vector.broadcast %cst_153 : f32 to vector<8x296xf32>
    %192 = arith.maximumf %190, %191 : vector<8x296xf32>
    %cst_154 = arith.constant 0.000000e+00 : f32
    %193 = vector.broadcast %cst_154 : f32 to vector<24x256xf32>
    %c0_155 = arith.constant 0 : index
    %c0_156 = arith.constant 0 : index
    %c0_157 = arith.constant 0 : index
    %194 = vector.load %arg15[%c0_155, %c0_156, %c0_157] : memref<9x24x8xf32, #tpu.memory_space<vmem>>, vector<1x24x8xf32>
    %195 = vector.shape_cast %194 : vector<1x24x8xf32> to vector<24x8xf32>
    %196 = vector.extract_strided_slice %192 {offsets = [0, 0], sizes = [8, 256], strides = [1, 1]} : vector<8x296xf32> to vector<8x256xf32>
    %cst_158 = arith.constant dense<0.000000e+00> : vector<24x256xf32>
    %197 = tpu.matmul %195, %196, %cst_158 {dimension_numbers = #tpu.dot_dimension_numbers<[1], [0], [0], [1], [0, 0, 1, 1], [], []>} : vector<24x8xf32>, vector<8x256xf32>, vector<24x256xf32> -> vector<24x256xf32>
    %198 = arith.addf %193, %197 : vector<24x256xf32>
    %c1_159 = arith.constant 1 : index
    %c0_160 = arith.constant 0 : index
    %c0_161 = arith.constant 0 : index
    %199 = vector.load %arg15[%c1_159, %c0_160, %c0_161] : memref<9x24x8xf32, #tpu.memory_space<vmem>>, vector<1x24x8xf32>
    %200 = vector.shape_cast %199 : vector<1x24x8xf32> to vector<24x8xf32>
    %201 = vector.extract_strided_slice %192 {offsets = [0, 1], sizes = [8, 256], strides = [1, 1]} : vector<8x296xf32> to vector<8x256xf32>
    %cst_162 = arith.constant dense<0.000000e+00> : vector<24x256xf32>
    %202 = tpu.matmul %200, %201, %cst_162 {dimension_numbers = #tpu.dot_dimension_numbers<[1], [0], [0], [1], [0, 0, 1, 1], [], []>} : vector<24x8xf32>, vector<8x256xf32>, vector<24x256xf32> -> vector<24x256xf32>
    %203 = arith.addf %198, %202 : vector<24x256xf32>
    %c2_163 = arith.constant 2 : index
    %c0_164 = arith.constant 0 : index
    %c0_165 = arith.constant 0 : index
    %204 = vector.load %arg15[%c2_163, %c0_164, %c0_165] : memref<9x24x8xf32, #tpu.memory_space<vmem>>, vector<1x24x8xf32>
    %205 = vector.shape_cast %204 : vector<1x24x8xf32> to vector<24x8xf32>
    %206 = vector.extract_strided_slice %192 {offsets = [0, 2], sizes = [8, 256], strides = [1, 1]} : vector<8x296xf32> to vector<8x256xf32>
    %cst_166 = arith.constant dense<0.000000e+00> : vector<24x256xf32>
    %207 = tpu.matmul %205, %206, %cst_166 {dimension_numbers = #tpu.dot_dimension_numbers<[1], [0], [0], [1], [0, 0, 1, 1], [], []>} : vector<24x8xf32>, vector<8x256xf32>, vector<24x256xf32> -> vector<24x256xf32>
    %208 = arith.addf %203, %207 : vector<24x256xf32>
    %c3_167 = arith.constant 3 : index
    %c0_168 = arith.constant 0 : index
    %c0_169 = arith.constant 0 : index
    %209 = vector.load %arg15[%c3_167, %c0_168, %c0_169] : memref<9x24x8xf32, #tpu.memory_space<vmem>>, vector<1x24x8xf32>
    %210 = vector.shape_cast %209 : vector<1x24x8xf32> to vector<24x8xf32>
    %211 = vector.extract_strided_slice %192 {offsets = [0, 17], sizes = [8, 256], strides = [1, 1]} : vector<8x296xf32> to vector<8x256xf32>
    %cst_170 = arith.constant dense<0.000000e+00> : vector<24x256xf32>
    %212 = tpu.matmul %210, %211, %cst_170 {dimension_numbers = #tpu.dot_dimension_numbers<[1], [0], [0], [1], [0, 0, 1, 1], [], []>} : vector<24x8xf32>, vector<8x256xf32>, vector<24x256xf32> -> vector<24x256xf32>
    %213 = arith.addf %208, %212 : vector<24x256xf32>
    %c4_171 = arith.constant 4 : index
    %c0_172 = arith.constant 0 : index
    %c0_173 = arith.constant 0 : index
    %214 = vector.load %arg15[%c4_171, %c0_172, %c0_173] : memref<9x24x8xf32, #tpu.memory_space<vmem>>, vector<1x24x8xf32>
    %215 = vector.shape_cast %214 : vector<1x24x8xf32> to vector<24x8xf32>
    %216 = vector.extract_strided_slice %192 {offsets = [0, 18], sizes = [8, 256], strides = [1, 1]} : vector<8x296xf32> to vector<8x256xf32>
    %cst_174 = arith.constant dense<0.000000e+00> : vector<24x256xf32>
    %217 = tpu.matmul %215, %216, %cst_174 {dimension_numbers = #tpu.dot_dimension_numbers<[1], [0], [0], [1], [0, 0, 1, 1], [], []>} : vector<24x8xf32>, vector<8x256xf32>, vector<24x256xf32> -> vector<24x256xf32>
    %218 = arith.addf %213, %217 : vector<24x256xf32>
    %c5_175 = arith.constant 5 : index
    %c0_176 = arith.constant 0 : index
    %c0_177 = arith.constant 0 : index
    %219 = vector.load %arg15[%c5_175, %c0_176, %c0_177] : memref<9x24x8xf32, #tpu.memory_space<vmem>>, vector<1x24x8xf32>
    %220 = vector.shape_cast %219 : vector<1x24x8xf32> to vector<24x8xf32>
    %221 = vector.extract_strided_slice %192 {offsets = [0, 19], sizes = [8, 256], strides = [1, 1]} : vector<8x296xf32> to vector<8x256xf32>
    %cst_178 = arith.constant dense<0.000000e+00> : vector<24x256xf32>
    %222 = tpu.matmul %220, %221, %cst_178 {dimension_numbers = #tpu.dot_dimension_numbers<[1], [0], [0], [1], [0, 0, 1, 1], [], []>} : vector<24x8xf32>, vector<8x256xf32>, vector<24x256xf32> -> vector<24x256xf32>
    %223 = arith.addf %218, %222 : vector<24x256xf32>
    %c6_179 = arith.constant 6 : index
    %c0_180 = arith.constant 0 : index
    %c0_181 = arith.constant 0 : index
    %224 = vector.load %arg15[%c6_179, %c0_180, %c0_181] : memref<9x24x8xf32, #tpu.memory_space<vmem>>, vector<1x24x8xf32>
    %225 = vector.shape_cast %224 : vector<1x24x8xf32> to vector<24x8xf32>
    %226 = vector.extract_strided_slice %192 {offsets = [0, 34], sizes = [8, 256], strides = [1, 1]} : vector<8x296xf32> to vector<8x256xf32>
    %cst_182 = arith.constant dense<0.000000e+00> : vector<24x256xf32>
    %227 = tpu.matmul %225, %226, %cst_182 {dimension_numbers = #tpu.dot_dimension_numbers<[1], [0], [0], [1], [0, 0, 1, 1], [], []>} : vector<24x8xf32>, vector<8x256xf32>, vector<24x256xf32> -> vector<24x256xf32>
    %228 = arith.addf %223, %227 : vector<24x256xf32>
    %c7_183 = arith.constant 7 : index
    %c0_184 = arith.constant 0 : index
    %c0_185 = arith.constant 0 : index
    %229 = vector.load %arg15[%c7_183, %c0_184, %c0_185] : memref<9x24x8xf32, #tpu.memory_space<vmem>>, vector<1x24x8xf32>
    %230 = vector.shape_cast %229 : vector<1x24x8xf32> to vector<24x8xf32>
    %231 = vector.extract_strided_slice %192 {offsets = [0, 35], sizes = [8, 256], strides = [1, 1]} : vector<8x296xf32> to vector<8x256xf32>
    %cst_186 = arith.constant dense<0.000000e+00> : vector<24x256xf32>
    %232 = tpu.matmul %230, %231, %cst_186 {dimension_numbers = #tpu.dot_dimension_numbers<[1], [0], [0], [1], [0, 0, 1, 1], [], []>} : vector<24x8xf32>, vector<8x256xf32>, vector<24x256xf32> -> vector<24x256xf32>
    %233 = arith.addf %228, %232 : vector<24x256xf32>
    %c8 = arith.constant 8 : index
    %c0_187 = arith.constant 0 : index
    %c0_188 = arith.constant 0 : index
    %234 = vector.load %arg15[%c8, %c0_187, %c0_188] : memref<9x24x8xf32, #tpu.memory_space<vmem>>, vector<1x24x8xf32>
    %235 = vector.shape_cast %234 : vector<1x24x8xf32> to vector<24x8xf32>
    %236 = vector.extract_strided_slice %192 {offsets = [0, 36], sizes = [8, 256], strides = [1, 1]} : vector<8x296xf32> to vector<8x256xf32>
    %cst_189 = arith.constant dense<0.000000e+00> : vector<24x256xf32>
    %237 = tpu.matmul %235, %236, %cst_189 {dimension_numbers = #tpu.dot_dimension_numbers<[1], [0], [0], [1], [0, 0, 1, 1], [], []>} : vector<24x8xf32>, vector<8x256xf32>, vector<24x256xf32> -> vector<24x256xf32>
    %238 = arith.addf %233, %237 : vector<24x256xf32>
    %c0_190 = arith.constant 0 : index
    %c0_191 = arith.constant 0 : index
    %239 = vector.load %arg16[%c0_190, %c0_191] : memref<24x1xf32, #tpu.memory_space<vmem>>, vector<24x1xf32>
    %240 = vector.broadcast %239 : vector<24x1xf32> to vector<24x256xf32>
    %241 = arith.addf %238, %240 : vector<24x256xf32>
    %cst_192 = arith.constant 0.000000e+00 : f32
    %242 = vector.broadcast %cst_192 : f32 to vector<24x256xf32>
    %243 = arith.maximumf %241, %242 : vector<24x256xf32>
    %c0_193 = arith.constant 0 : index
    %c0_194 = arith.constant 0 : index
    %c0_195 = arith.constant 0 : index
    %244 = vector.load %arg17[%c0_193, %c0_194, %c0_195] : memref<4x40x24xf32, #tpu.memory_space<vmem>>, vector<1x40x24xf32>
    %245 = vector.shape_cast %244 : vector<1x40x24xf32> to vector<40x24xf32>
    %cst_196 = arith.constant dense<0.000000e+00> : vector<40x256xf32>
    %246 = tpu.matmul %245, %243, %cst_196 {dimension_numbers = #tpu.dot_dimension_numbers<[1], [0], [0], [1], [0, 0, 1, 1], [], []>} : vector<40x24xf32>, vector<24x256xf32>, vector<40x256xf32> -> vector<40x256xf32>
    %c0_197 = arith.constant 0 : index
    %c0_198 = arith.constant 0 : index
    %247 = vector.load %arg18[%c0_197, %c0_198] : memref<40x1xf32, #tpu.memory_space<vmem>>, vector<40x1xf32>
    %248 = vector.broadcast %247 : vector<40x1xf32> to vector<40x256xf32>
    %249 = arith.addf %246, %248 : vector<40x256xf32>
    %c1_199 = arith.constant 1 : index
    %c0_200 = arith.constant 0 : index
    %c0_201 = arith.constant 0 : index
    %250 = vector.load %arg17[%c1_199, %c0_200, %c0_201] : memref<4x40x24xf32, #tpu.memory_space<vmem>>, vector<1x40x24xf32>
    %251 = vector.shape_cast %250 : vector<1x40x24xf32> to vector<40x24xf32>
    %cst_202 = arith.constant dense<0.000000e+00> : vector<40x256xf32>
    %252 = tpu.matmul %251, %243, %cst_202 {dimension_numbers = #tpu.dot_dimension_numbers<[1], [0], [0], [1], [0, 0, 1, 1], [], []>} : vector<40x24xf32>, vector<24x256xf32>, vector<40x256xf32> -> vector<40x256xf32>
    %c0_203 = arith.constant 0 : index
    %c0_204 = arith.constant 0 : index
    %253 = vector.load %arg18[%c0_203, %c0_204] : memref<40x1xf32, #tpu.memory_space<vmem>>, vector<40x1xf32>
    %254 = vector.broadcast %253 : vector<40x1xf32> to vector<40x256xf32>
    %255 = arith.addf %252, %254 : vector<40x256xf32>
    %c2_205 = arith.constant 2 : index
    %c0_206 = arith.constant 0 : index
    %c0_207 = arith.constant 0 : index
    %256 = vector.load %arg17[%c2_205, %c0_206, %c0_207] : memref<4x40x24xf32, #tpu.memory_space<vmem>>, vector<1x40x24xf32>
    %257 = vector.shape_cast %256 : vector<1x40x24xf32> to vector<40x24xf32>
    %cst_208 = arith.constant dense<0.000000e+00> : vector<40x256xf32>
    %258 = tpu.matmul %257, %243, %cst_208 {dimension_numbers = #tpu.dot_dimension_numbers<[1], [0], [0], [1], [0, 0, 1, 1], [], []>} : vector<40x24xf32>, vector<24x256xf32>, vector<40x256xf32> -> vector<40x256xf32>
    %c0_209 = arith.constant 0 : index
    %c0_210 = arith.constant 0 : index
    %259 = vector.load %arg18[%c0_209, %c0_210] : memref<40x1xf32, #tpu.memory_space<vmem>>, vector<40x1xf32>
    %260 = vector.broadcast %259 : vector<40x1xf32> to vector<40x256xf32>
    %261 = arith.addf %258, %260 : vector<40x256xf32>
    %c3_211 = arith.constant 3 : index
    %c0_212 = arith.constant 0 : index
    %c0_213 = arith.constant 0 : index
    %262 = vector.load %arg17[%c3_211, %c0_212, %c0_213] : memref<4x40x24xf32, #tpu.memory_space<vmem>>, vector<1x40x24xf32>
    %263 = vector.shape_cast %262 : vector<1x40x24xf32> to vector<40x24xf32>
    %cst_214 = arith.constant dense<0.000000e+00> : vector<40x256xf32>
    %264 = tpu.matmul %263, %243, %cst_214 {dimension_numbers = #tpu.dot_dimension_numbers<[1], [0], [0], [1], [0, 0, 1, 1], [], []>} : vector<40x24xf32>, vector<24x256xf32>, vector<40x256xf32> -> vector<40x256xf32>
    %c0_215 = arith.constant 0 : index
    %c0_216 = arith.constant 0 : index
    %265 = vector.load %arg18[%c0_215, %c0_216] : memref<40x1xf32, #tpu.memory_space<vmem>>, vector<40x1xf32>
    %266 = vector.broadcast %265 : vector<40x1xf32> to vector<40x256xf32>
    %267 = arith.addf %264, %266 : vector<40x256xf32>
    %268 = tpu.concatenate %249, %255, %261, %267 in 1 : vector<40x256xf32>, vector<40x256xf32>, vector<40x256xf32>, vector<40x256xf32> -> vector<40x1024xf32>
    %cst_217 = arith.constant 0.000000e+00 : f32
    %269 = vector.broadcast %cst_217 : f32 to vector<40x1024xf32>
    %270 = arith.subf %269, %268 : vector<40x1024xf32>
    %271 = math.exp %270 : vector<40x1024xf32>
    %cst_218 = arith.constant 1.000000e+00 : f32
    %272 = vector.broadcast %cst_218 : f32 to vector<40x1024xf32>
    %273 = arith.addf %272, %271 : vector<40x1024xf32>
    %274 = tpu.reciprocal %273 {approx = true} : vector<40x1024xf32> -> vector<40x1024xf32>
    %c0_219 = arith.constant 0 : index
    %c0_220 = arith.constant 0 : index
    %c0_221 = arith.constant 0 : index
    %275 = vector.load %arg19[%c0_219, %c0_220, %c0_221] : memref<1x40x1024xf32, #tpu.memory_space<vmem>>, vector<1x40x1024xf32>
    %276 = vector.shape_cast %275 : vector<1x40x1024xf32> to vector<40x1024xf32>
    %277 = vector.shape_cast %274 : vector<40x1024xf32> to vector<1x40x1024xf32>
    tpu.vector_store %arg19[%c0_219, %c0_220, %c0_221], %277 {strides = array<i32>} : memref<1x40x1024xf32, #tpu.memory_space<vmem>>, vector<1x40x1024xf32>,
    return
  }
  func.func @transform_0(%arg0: i32) -> (i32, i32, i32) {
    %c0_i32 = arith.constant 0 : i32
    %c0_i32_0 = arith.constant 0 : i32
    %c0_i32_1 = arith.constant 0 : i32
    return %arg0, %c0_i32, %c0_i32_0 : i32, i32, i32
  }
  func.func @transform_1(%arg0: i32) -> (i32, i32, i32) {
    %c0_i32 = arith.constant 0 : i32
    %c0_i32_0 = arith.constant 0 : i32
    %c0_i32_1 = arith.constant 0 : i32
    return %arg0, %c0_i32, %c0_i32_0 : i32, i32, i32
  }
  func.func @transform_2(%arg0: i32) -> (i32, i32, i32) {
    %c0_i32 = arith.constant 0 : i32
    %c0_i32_0 = arith.constant 0 : i32
    %c0_i32_1 = arith.constant 0 : i32
    %c0_i32_2 = arith.constant 0 : i32
    return %c0_i32, %c0_i32_0, %c0_i32_1 : i32, i32, i32
  }
  func.func @transform_3(%arg0: i32) -> (i32, i32) {
    %c0_i32 = arith.constant 0 : i32
    %c0_i32_0 = arith.constant 0 : i32
    %c0_i32_1 = arith.constant 0 : i32
    return %c0_i32, %c0_i32_0 : i32, i32
  }
  func.func @transform_4(%arg0: i32) -> (i32, i32) {
    %c0_i32 = arith.constant 0 : i32
    %c0_i32_0 = arith.constant 0 : i32
    %c0_i32_1 = arith.constant 0 : i32
    return %c0_i32, %c0_i32_0 : i32, i32
  }
  func.func @transform_5(%arg0: i32) -> (i32, i32) {
    %c0_i32 = arith.constant 0 : i32
    %c0_i32_0 = arith.constant 0 : i32
    %c0_i32_1 = arith.constant 0 : i32
    return %c0_i32, %c0_i32_0 : i32, i32
  }
  func.func @transform_6(%arg0: i32) -> (i32, i32, i32) {
    %c0_i32 = arith.constant 0 : i32
    %c0_i32_0 = arith.constant 0 : i32
    %c0_i32_1 = arith.constant 0 : i32
    %c0_i32_2 = arith.constant 0 : i32
    return %c0_i32, %c0_i32_0, %c0_i32_1 : i32, i32, i32
  }
  func.func @transform_7(%arg0: i32) -> (i32, i32) {
    %c0_i32 = arith.constant 0 : i32
    %c0_i32_0 = arith.constant 0 : i32
    %c0_i32_1 = arith.constant 0 : i32
    return %c0_i32, %c0_i32_0 : i32, i32
  }
  func.func @transform_8(%arg0: i32) -> (i32, i32) {
    %c0_i32 = arith.constant 0 : i32
    %c0_i32_0 = arith.constant 0 : i32
    %c0_i32_1 = arith.constant 0 : i32
    return %c0_i32, %c0_i32_0 : i32, i32
  }
  func.func @transform_9(%arg0: i32) -> (i32, i32) {
    %c0_i32 = arith.constant 0 : i32
    %c0_i32_0 = arith.constant 0 : i32
    %c0_i32_1 = arith.constant 0 : i32
    return %c0_i32, %c0_i32_0 : i32, i32
  }
  func.func @transform_10(%arg0: i32) -> (i32, i32, i32) {
    %c0_i32 = arith.constant 0 : i32
    %c0_i32_0 = arith.constant 0 : i32
    %c0_i32_1 = arith.constant 0 : i32
    %c0_i32_2 = arith.constant 0 : i32
    return %c0_i32, %c0_i32_0, %c0_i32_1 : i32, i32, i32
  }
  func.func @transform_11(%arg0: i32) -> (i32, i32) {
    %c0_i32 = arith.constant 0 : i32
    %c0_i32_0 = arith.constant 0 : i32
    %c0_i32_1 = arith.constant 0 : i32
    return %c0_i32, %c0_i32_0 : i32, i32
  }
  func.func @transform_12(%arg0: i32) -> (i32, i32, i32) {
    %c0_i32 = arith.constant 0 : i32
    %c0_i32_0 = arith.constant 0 : i32
    %c0_i32_1 = arith.constant 0 : i32
    %c0_i32_2 = arith.constant 0 : i32
    return %c0_i32, %c0_i32_0, %c0_i32_1 : i32, i32, i32
  }
  func.func @transform_13(%arg0: i32) -> (i32, i32) {
    %c0_i32 = arith.constant 0 : i32
    %c0_i32_0 = arith.constant 0 : i32
    %c0_i32_1 = arith.constant 0 : i32
    return %c0_i32, %c0_i32_0 : i32, i32
  }
  func.func @transform_14(%arg0: i32) -> (i32, i32, i32) {
    %c0_i32 = arith.constant 0 : i32
    %c0_i32_0 = arith.constant 0 : i32
    %c0_i32_1 = arith.constant 0 : i32
    %c0_i32_2 = arith.constant 0 : i32
    return %c0_i32, %c0_i32_0, %c0_i32_1 : i32, i32, i32
  }
  func.func @transform_15(%arg0: i32) -> (i32, i32) {
    %c0_i32 = arith.constant 0 : i32
    %c0_i32_0 = arith.constant 0 : i32
    %c0_i32_1 = arith.constant 0 : i32
    return %c0_i32, %c0_i32_0 : i32, i32
  }
  func.func @transform_16(%arg0: i32) -> (i32, i32, i32) {
    %c0_i32 = arith.constant 0 : i32
    %c0_i32_0 = arith.constant 0 : i32
    %c0_i32_1 = arith.constant 0 : i32
    %c0_i32_2 = arith.constant 0 : i32
    return %c0_i32, %c0_i32_0, %c0_i32_1 : i32, i32, i32
  }
  func.func @transform_17(%arg0: i32) -> (i32, i32) {
    %c0_i32 = arith.constant 0 : i32
    %c0_i32_0 = arith.constant 0 : i32
    %c0_i32_1 = arith.constant 0 : i32
    return %c0_i32, %c0_i32_0 : i32, i32
  }
  func.func @transform_18(%arg0: i32) -> (i32, i32, i32) {
    %c0_i32 = arith.constant 0 : i32
    %c0_i32_0 = arith.constant 0 : i32
    %c0_i32_1 = arith.constant 0 : i32
    return %arg0, %c0_i32, %c0_i32_0 : i32, i32, i32
  }
  func.func @transform_19(%arg0: i32) -> (i32, i32, i32) {
    %c0_i32 = arith.constant 0 : i32
    %c0_i32_0 = arith.constant 0 : i32
    %c0_i32_1 = arith.constant 0 : i32
    return %arg0, %c0_i32, %c0_i32_0 : i32, i32, i32
  }
  func.func @transform_20(%arg0: i32) -> (i32, i32, i32) {
    %c0_i32 = arith.constant 0 : i32
    %c0_i32_0 = arith.constant 0 : i32
    %c0_i32_1 = arith.constant 0 : i32
    return %arg0, %c0_i32, %c0_i32_0 : i32, i32, i32
  }
}

</mosaic_0001>

<llo_original>
// kernel: autoencoder_charge_forward.1
$region0: #{autoencoder_charge_forward.1}
  #allocation0 [shape = 'u32[]', space=smem, size = 0x4, offset = 0x4, fixed_abs, tag = 'smem constant byte address 0x4 - core index']
  #allocation1 [shape = 'u32[144,128]{1,0:T(1,128)}', space=vmem, size = 0x12000, scoped, tag = 'internal scratch']
  %s0 = inlined_call_operand.vmem [shape: f32[2,40,842], index: 0, kind: input, shape index: {}]
  %s1 = inlined_call_operand.vmem [shape: f32[2,1,10], index: 1, kind: input, shape index: {}]
  %s2 = inlined_call_operand.vmem [shape: f32[3,24,120], index: 2, kind: input, shape index: {}]
  %s3 = inlined_call_operand.vmem [shape: f32[24,1], index: 3, kind: input, shape index: {}]
  %s4 = inlined_call_operand.vmem [shape: f32[2,784], index: 4, kind: input, shape index: {}]
  %s5 = inlined_call_operand.vmem [shape: bf16[755,226], index: 5, kind: input, shape index: {}]
  %s6 = inlined_call_operand.vmem [shape: f32[3,8,72], index: 6, kind: input, shape index: {}]
  %s7 = inlined_call_operand.vmem [shape: f32[8,1], index: 7, kind: input, shape index: {}]
  %s8 = inlined_call_operand.vmem [shape: f32[2,196], index: 8, kind: input, shape index: {}]
  %s9 = inlined_call_operand.vmem [shape: bf16[181,49], index: 9, kind: input, shape index: {}]
  %s10 = inlined_call_operand.vmem [shape: f32[8,49,20], index: 10, kind: input, shape index: {}]
  %s11 = inlined_call_operand.vmem [shape: f32[1,20], index: 11, kind: input, shape index: {}]
  %s12 = inlined_call_operand.vmem [shape: f32[8,10,296], index: 12, kind: input, shape index: {}]
  %s13 = inlined_call_operand.vmem [shape: f32[8,296], index: 13, kind: input, shape index: {}]
  %s14 = inlined_call_operand.vmem [shape: f32[9,24,8], index: 14, kind: input, shape index: {}]
  %s15 = inlined_call_operand.vmem [shape: f32[24,1], index: 15, kind: input, shape index: {}]
  %s16 = inlined_call_operand.vmem [shape: f32[4,40,24], index: 16, kind: input, shape index: {}]
  %s17 = inlined_call_operand.vmem [shape: f32[40,1], index: 17, kind: input, shape index: {}]
  %s18 = inlined_call_operand.vmem [shape: f32[2,40,1024], index: 18, kind: output, shape index: {0}]
  %s19 = inlined_call_operand.hbm [shape: f32[2,1,10], index: 19, kind: output, shape index: {1}]
  %s20 = inlined_call_operand.hbm [shape: f32[2,1,10], index: 20, kind: output, shape index: {2}]
  %21 = xla_tuple %s18, %s19, %s20
  %s22 = sld [smem:[#allocation0]]
  $region121: #{autoencoder_charge_forward.1} parent=0
    _
  %s24 = ssub.s32 1, %s22
  %s25 = scalar_select 0, %s24, %s22
  $region1: #{autoencoder_charge_forward.1} parent=0
    #allocation2 [shape = 'u8[1024]{0}', space=vmem, size = 0x400, scoped, tag = 'output window, operand 1']
    #allocation3 [shape = 's32[2]{0}', space=sflag, size = 0x8, scoped, tag = 'scoped memory for autoencoder_charge_forward.1']
    #allocation4 [shape = 'u8[1024]{0}', space=vmem, size = 0x400, scoped, tag = 'output window, operand 2']
    #allocation5 [shape = 's32[2]{0}', space=sflag, size = 0x8, scoped, tag = 'scoped memory for autoencoder_charge_forward.1']
    %26 = vsyncpa [#allocation3], 0
    %s27 = scalar_lea.sflag [#allocation3], 1
    %28 = vsyncpa %s27, 0
    %29 = vsyncpa [#allocation5], 0
    %s30 = scalar_lea.sflag [#allocation5], 1
    %31 = vsyncpa %s30, 0
    loop: start=0, step=1, limit=4
    $region2: #{autoencoder_charge_forward.1} parent=1 // loop_pre_header
      _
    $region3: #{autoencoder_charge_forward.1} parent=1 // loop_header
      %s33 = sphi 0, %s37
      %p34 = scmp.ge.s32.totalorder %s33, 4
      %s43 = sphi 0, %s45
      %s46 = sphi 0, %s43
      %s47 = sphi 0, %s46
      %s63 = sphi 0, %s47
      %s69 = sphi 0, %s71
      %s72 = sphi 0, %s69
      %s73 = sphi 0, %s72
      %s89 = sphi 0, %s73
      %s93 = sphi 0, %s93
      %s95 = sphi 0, %s93
      %s96 = sphi 0, %s95
      %s110 = sphi 0, %s96
      %s114 = sphi 0, %s114
      %s116 = sphi 0, %s114
      %s117 = sphi 0, %s116
      %s131 = sphi 0, %s117
      %s135 = sphi 0, %s135
      %s137 = sphi 0, %s135
      %s138 = sphi 0, %s137
      %s152 = sphi 0, %s138
      %s156 = sphi 0, %s156
      %s158 = sphi 0, %s156
      %s159 = sphi 0, %s158
      %s173 = sphi 0, %s159
      %s177 = sphi 0, %s177
      %s179 = sphi 0, %s177
      %s180 = sphi 0, %s179
      %s194 = sphi 0, %s180
      %s198 = sphi 0, %s198
      %s200 = sphi 0, %s198
      %s201 = sphi 0, %s200
      %s215 = sphi 0, %s201
      %s219 = sphi 0, %s219
      %s221 = sphi 0, %s219
      %s222 = sphi 0, %s221
      %s236 = sphi 0, %s222
      %s240 = sphi 0, %s240
      %s242 = sphi 0, %s240
      %s243 = sphi 0, %s242
      %s257 = sphi 0, %s243
      %s261 = sphi 0, %s261
      %s263 = sphi 0, %s261
      %s264 = sphi 0, %s263
      %s278 = sphi 0, %s264
      %s282 = sphi 0, %s282
      %s284 = sphi 0, %s282
      %s285 = sphi 0, %s284
      %s299 = sphi 0, %s285
      %s303 = sphi 0, %s303
      %s305 = sphi 0, %s303
      %s306 = sphi 0, %s305
      %s320 = sphi 0, %s306
      %s324 = sphi 0, %s324
      %s326 = sphi 0, %s324
      %s327 = sphi 0, %s326
      %s341 = sphi 0, %s327
      %s345 = sphi 0, %s345
      %s347 = sphi 0, %s345
      %s348 = sphi 0, %s347
      %s362 = sphi 0, %s348
      %s366 = sphi 0, %s366
      %s368 = sphi 0, %s366
      %s369 = sphi 0, %s368
      %s383 = sphi 0, %s369
      %s387 = sphi 0, %s387
      %s389 = sphi 0, %s387
      %s390 = sphi 0, %s389
      %s404 = sphi 0, %s390
      %s408 = sphi 0, %s408
      %s410 = sphi 0, %s408
      %s411 = sphi 0, %s410
      %s425 = sphi 0, %s411
      %s431 = sphi 0, %s433
      %s434 = sphi 0, %s431
      %s435 = sphi 0, %s434
      %s451 = sphi 0, %s435
      %s457 = sphi 0, %s459
      %s460 = sphi 0, %s457
      %s461 = sphi 0, %s460
      %s477 = sphi 0, %s461
      %s483 = sphi 0, %s485
      %s486 = sphi 0, %s483
      %s487 = sphi 0, %s486
      %s503 = sphi 0, %s487
    $region4: #{autoencoder_charge_forward.1} parent=1 // loop_header_branch
      %36 = sbr.rel (%p34) target = $region8
    $region5: #{autoencoder_charge_forward.1} parent=1 // loop_body
      %s38 = ssub.s32 %s33, 1
      %s39 = ssub.s32 %s33, 2
      %s40 = sadd.s32 %s33, 1
      %s41 = ssub.s32 %s33, %s40
      %p42 = scmp.eq.s32.totalorder %s41, 0
      %s44 = sadd.s32 %s43, 1
      %s45 = scalar_select %p42, %s43, %s44
      %p48 = pneg %p42
      %p49 = scmp.eq.s32.totalorder %s33, 1
      %p50 = por %p48, %p49
      %p51 = scmp.ne.s32.totalorder %s43, %s46
      %p52 = scmp.eq.s32.totalorder %s33, 0
      %p53 = por %p51, %p52
      %p54 = scmp.ne.s32.totalorder %s43, %s46
      %p55 = scmp.eq.s32.totalorder %s38, 1
      %p56 = por %p54, %p55
      %p57 = scmp.ne.s32.totalorder %s46, %s47
      %p58 = scmp.eq.s32.totalorder %s38, 0
      %p59 = por %p57, %p58
      %p60 = scmp.ne.s32.totalorder %s46, %s47
      %p61 = scmp.eq.s32.totalorder %s39, 1
      %p62 = por %p60, %p61
      %p64 = scmp.ne.s32.totalorder %s47, %s63
      %p65 = scmp.eq.s32.totalorder %s39, 0
      %p66 = por %p64, %p65
      %s67 = ssub.s32 %s33, %s40
      %p68 = scmp.eq.s32.totalorder %s67, 0
      %s70 = sadd.s32 %s69, 1
      %s71 = scalar_select %p68, %s69, %s70
      %p74 = pneg %p68
      %p75 = scmp.eq.s32.totalorder %s33, 1
      %p76 = por %p74, %p75
      %p77 = scmp.ne.s32.totalorder %s69, %s72
      %p78 = scmp.eq.s32.totalorder %s33, 0
      %p79 = por %p77, %p78
      %p80 = scmp.ne.s32.totalorder %s69, %s72
      %p81 = scmp.eq.s32.totalorder %s38, 1
      %p82 = por %p80, %p81
      %p83 = scmp.ne.s32.totalorder %s72, %s73
      %p84 = scmp.eq.s32.totalorder %s38, 0
      %p85 = por %p83, %p84
      %p86 = scmp.ne.s32.totalorder %s72, %s73
      %p87 = scmp.eq.s32.totalorder %s39, 1
      %p88 = por %p86, %p87
      %p90 = scmp.ne.s32.totalorder %s73, %s89
      %p91 = scmp.eq.s32.totalorder %s39, 0
      %p92 = por %p90, %p91
      %s94 = sadd.s32 %s93, 1
      %p97 = scmp.eq.s32.totalorder %s33, 1
      %p98 = scmp.ne.s32.totalorder %s93, %s95
      %p99 = scmp.eq.s32.totalorder %s33, 0
      %p100 = por %p98, %p99
      %p101 = scmp.ne.s32.totalorder %s93, %s95
      %p102 = scmp.eq.s32.totalorder %s38, 1
      %p103 = por %p101, %p102
      %p104 = scmp.ne.s32.totalorder %s95, %s96
      %p105 = scmp.eq.s32.totalorder %s38, 0
      %p106 = por %p104, %p105
      %p107 = scmp.ne.s32.totalorder %s95, %s96
      %p108 = scmp.eq.s32.totalorder %s39, 1
      %p109 = por %p107, %p108
      %p111 = scmp.ne.s32.totalorder %s96, %s110
      %p112 = scmp.eq.s32.totalorder %s39, 0
      %p113 = por %p111, %p112
      %s115 = sadd.s32 %s114, 1
      %p118 = scmp.eq.s32.totalorder %s33, 1
      %p119 = scmp.ne.s32.totalorder %s114, %s116
      %p120 = scmp.eq.s32.totalorder %s33, 0
      %p121 = por %p119, %p120
      %p122 = scmp.ne.s32.totalorder %s114, %s116
      %p123 = scmp.eq.s32.totalorder %s38, 1
      %p124 = por %p122, %p123
      %p125 = scmp.ne.s32.totalorder %s116, %s117
      %p126 = scmp.eq.s32.totalorder %s38, 0
      %p127 = por %p125, %p126
      %p128 = scmp.ne.s32.totalorder %s116, %s117
      %p129 = scmp.eq.s32.totalorder %s39, 1
      %p130 = por %p128, %p129
      %p132 = scmp.ne.s32.totalorder %s117, %s131
      %p133 = scmp.eq.s32.totalorder %s39, 0
      %p134 = por %p132, %p133
      %s136 = sadd.s32 %s135, 1
      %p139 = scmp.eq.s32.totalorder %s33, 1
      %p140 = scmp.ne.s32.totalorder %s135, %s137
      %p141 = scmp.eq.s32.totalorder %s33, 0
      %p142 = por %p140, %p141
      %p143 = scmp.ne.s32.totalorder %s135, %s137
      %p144 = scmp.eq.s32.totalorder %s38, 1
      %p145 = por %p143, %p144
      %p146 = scmp.ne.s32.totalorder %s137, %s138
      %p147 = scmp.eq.s32.totalorder %s38, 0
      %p148 = por %p146, %p147
      %p149 = scmp.ne.s32.totalorder %s137, %s138
      %p150 = scmp.eq.s32.totalorder %s39, 1
      %p151 = por %p149, %p150
      %p153 = scmp.ne.s32.totalorder %s138, %s152
      %p154 = scmp.eq.s32.totalorder %s39, 0
      %p155 = por %p153, %p154
      %s157 = sadd.s32 %s156, 1
      %p160 = scmp.eq.s32.totalorder %s33, 1
      %p161 = scmp.ne.s32.totalorder %s156, %s158
      %p162 = scmp.eq.s32.totalorder %s33, 0
      %p163 = por %p161, %p162
      %p164 = scmp.ne.s32.totalorder %s156, %s158
      %p165 = scmp.eq.s32.totalorder %s38, 1
      %p166 = por %p164, %p165
      %p167 = scmp.ne.s32.totalorder %s158, %s159
      %p168 = scmp.eq.s32.totalorder %s38, 0
      %p169 = por %p167, %p168
      %p170 = scmp.ne.s32.totalorder %s158, %s159
      %p171 = scmp.eq.s32.totalorder %s39, 1
      %p172 = por %p170, %p171
      %p174 = scmp.ne.s32.totalorder %s159, %s173
      %p175 = scmp.eq.s32.totalorder %s39, 0
      %p176 = por %p174, %p175
      %s178 = sadd.s32 %s177, 1
      %p181 = scmp.eq.s32.totalorder %s33, 1
      %p182 = scmp.ne.s32.totalorder %s177, %s179
      %p183 = scmp.eq.s32.totalorder %s33, 0
      %p184 = por %p182, %p183
      %p185 = scmp.ne.s32.totalorder %s177, %s179
      %p186 = scmp.eq.s32.totalorder %s38, 1
      %p187 = por %p185, %p186
      %p188 = scmp.ne.s32.totalorder %s179, %s180
      %p189 = scmp.eq.s32.totalorder %s38, 0
      %p190 = por %p188, %p189
      %p191 = scmp.ne.s32.totalorder %s179, %s180
      %p192 = scmp.eq.s32.totalorder %s39, 1
      %p193 = por %p191, %p192
      %p195 = scmp.ne.s32.totalorder %s180, %s194
      %p196 = scmp.eq.s32.totalorder %s39, 0
      %p197 = por %p195, %p196
      %s199 = sadd.s32 %s198, 1
      %p202 = scmp.eq.s32.totalorder %s33, 1
      %p203 = scmp.ne.s32.totalorder %s198, %s200
      %p204 = scmp.eq.s32.totalorder %s33, 0
      %p205 = por %p203, %p204
      %p206 = scmp.ne.s32.totalorder %s198, %s200
      %p207 = scmp.eq.s32.totalorder %s38, 1
      %p208 = por %p206, %p207
      %p209 = scmp.ne.s32.totalorder %s200, %s201
      %p210 = scmp.eq.s32.totalorder %s38, 0
      %p211 = por %p209, %p210
      %p212 = scmp.ne.s32.totalorder %s200, %s201
      %p213 = scmp.eq.s32.totalorder %s39, 1
      %p214 = por %p212, %p213
      %p216 = scmp.ne.s32.totalorder %s201, %s215
      %p217 = scmp.eq.s32.totalorder %s39, 0
      %p218 = por %p216, %p217
      %s220 = sadd.s32 %s219, 1
      %p223 = scmp.eq.s32.totalorder %s33, 1
      %p224 = scmp.ne.s32.totalorder %s219, %s221
      %p225 = scmp.eq.s32.totalorder %s33, 0
      %p226 = por %p224, %p225
      %p227 = scmp.ne.s32.totalorder %s219, %s221
      %p228 = scmp.eq.s32.totalorder %s38, 1
      %p229 = por %p227, %p228
      %p230 = scmp.ne.s32.totalorder %s221, %s222
      %p231 = scmp.eq.s32.totalorder %s38, 0
      %p232 = por %p230, %p231
      %p233 = scmp.ne.s32.totalorder %s221, %s222
      %p234 = scmp.eq.s32.totalorder %s39, 1
      %p235 = por %p233, %p234
      %p237 = scmp.ne.s32.totalorder %s222, %s236
      %p238 = scmp.eq.s32.totalorder %s39, 0
      %p239 = por %p237, %p238
      %s241 = sadd.s32 %s240, 1
      %p244 = scmp.eq.s32.totalorder %s33, 1
      %p245 = scmp.ne.s32.totalorder %s240, %s242
      %p246 = scmp.eq.s32.totalorder %s33, 0
      %p247 = por %p245, %p246
      %p248 = scmp.ne.s32.totalorder %s240, %s242
      %p249 = scmp.eq.s32.totalorder %s38, 1
      %p250 = por %p248, %p249
      %p251 = scmp.ne.s32.totalorder %s242, %s243
      %p252 = scmp.eq.s32.totalorder %s38, 0
      %p253 = por %p251, %p252
      %p254 = scmp.ne.s32.totalorder %s242, %s243
      %p255 = scmp.eq.s32.totalorder %s39, 1
      %p256 = por %p254, %p255
      %p258 = scmp.ne.s32.totalorder %s243, %s257
      %p259 = scmp.eq.s32.totalorder %s39, 0
      %p260 = por %p258, %p259
      %s262 = sadd.s32 %s261, 1
      %p265 = scmp.eq.s32.totalorder %s33, 1
      %p266 = scmp.ne.s32.totalorder %s261, %s263
      %p267 = scmp.eq.s32.totalorder %s33, 0
      %p268 = por %p266, %p267
      %p269 = scmp.ne.s32.totalorder %s261, %s263
      %p270 = scmp.eq.s32.totalorder %s38, 1
      %p271 = por %p269, %p270
      %p272 = scmp.ne.s32.totalorder %s263, %s264
      %p273 = scmp.eq.s32.totalorder %s38, 0
      %p274 = por %p272, %p273
      %p275 = scmp.ne.s32.totalorder %s263, %s264
      %p276 = scmp.eq.s32.totalorder %s39, 1
      %p277 = por %p275, %p276
      %p279 = scmp.ne.s32.totalorder %s264, %s278
      %p280 = scmp.eq.s32.totalorder %s39, 0
      %p281 = por %p279, %p280
      %s283 = sadd.s32 %s282, 1
      %p286 = scmp.eq.s32.totalorder %s33, 1
      %p287 = scmp.ne.s32.totalorder %s282, %s284
      %p288 = scmp.eq.s32.totalorder %s33, 0
      %p289 = por %p287, %p288
      %p290 = scmp.ne.s32.totalorder %s282, %s284
      %p291 = scmp.eq.s32.totalorder %s38, 1
      %p292 = por %p290, %p291
      %p293 = scmp.ne.s32.totalorder %s284, %s285
      %p294 = scmp.eq.s32.totalorder %s38, 0
      %p295 = por %p293, %p294
      %p296 = scmp.ne.s32.totalorder %s284, %s285
      %p297 = scmp.eq.s32.totalorder %s39, 1
      %p298 = por %p296, %p297
      %p300 = scmp.ne.s32.totalorder %s285, %s299
      %p301 = scmp.eq.s32.totalorder %s39, 0
      %p302 = por %p300, %p301
      %s304 = sadd.s32 %s303, 1
      %p307 = scmp.eq.s32.totalorder %s33, 1
      %p308 = scmp.ne.s32.totalorder %s303, %s305
      %p309 = scmp.eq.s32.totalorder %s33, 0
      %p310 = por %p308, %p309
      %p311 = scmp.ne.s32.totalorder %s303, %s305
      %p312 = scmp.eq.s32.totalorder %s38, 1
      %p313 = por %p311, %p312
      %p314 = scmp.ne.s32.totalorder %s305, %s306
      %p315 = scmp.eq.s32.totalorder %s38, 0
      %p316 = por %p314, %p315
      %p317 = scmp.ne.s32.totalorder %s305, %s306
      %p318 = scmp.eq.s32.totalorder %s39, 1
      %p319 = por %p317, %p318
      %p321 = scmp.ne.s32.totalorder %s306, %s320
      %p322 = scmp.eq.s32.totalorder %s39, 0
      %p323 = por %p321, %p322
      %s325 = sadd.s32 %s324, 1
      %p328 = scmp.eq.s32.totalorder %s33, 1
      %p329 = scmp.ne.s32.totalorder %s324, %s326
      %p330 = scmp.eq.s32.totalorder %s33, 0
      %p331 = por %p329, %p330
      %p332 = scmp.ne.s32.totalorder %s324, %s326
      %p333 = scmp.eq.s32.totalorder %s38, 1
      %p334 = por %p332, %p333
      %p335 = scmp.ne.s32.totalorder %s326, %s327
      %p336 = scmp.eq.s32.totalorder %s38, 0
      %p337 = por %p335, %p336
      %p338 = scmp.ne.s32.totalorder %s326, %s327
      %p339 = scmp.eq.s32.totalorder %s39, 1
      %p340 = por %p338, %p339
      %p342 = scmp.ne.s32.totalorder %s327, %s341
      %p343 = scmp.eq.s32.totalorder %s39, 0
      %p344 = por %p342, %p343
      %s346 = sadd.s32 %s345, 1
      %p349 = scmp.eq.s32.totalorder %s33, 1
      %p350 = scmp.ne.s32.totalorder %s345, %s347
      %p351 = scmp.eq.s32.totalorder %s33, 0
      %p352 = por %p350, %p351
      %p353 = scmp.ne.s32.totalorder %s345, %s347
      %p354 = scmp.eq.s32.totalorder %s38, 1
      %p355 = por %p353, %p354
      %p356 = scmp.ne.s32.totalorder %s347, %s348
      %p357 = scmp.eq.s32.totalorder %s38, 0
      %p358 = por %p356, %p357
      %p359 = scmp.ne.s32.totalorder %s347, %s348
      %p360 = scmp.eq.s32.totalorder %s39, 1
      %p361 = por %p359, %p360
      %p363 = scmp.ne.s32.totalorder %s348, %s362
      %p364 = scmp.eq.s32.totalorder %s39, 0
      %p365 = por %p363, %p364
      %s367 = sadd.s32 %s366, 1
      %p370 = scmp.eq.s32.totalorder %s33, 1
      %p371 = scmp.ne.s32.totalorder %s366, %s368
      %p372 = scmp.eq.s32.totalorder %s33, 0
      %p373 = por %p371, %p372
      %p374 = scmp.ne.s32.totalorder %s366, %s368
      %p375 = scmp.eq.s32.totalorder %s38, 1
      %p376 = por %p374, %p375
      %p377 = scmp.ne.s32.totalorder %s368, %s369
      %p378 = scmp.eq.s32.totalorder %s38, 0
      %p379 = por %p377, %p378
      %p380 = scmp.ne.s32.totalorder %s368, %s369
      %p381 = scmp.eq.s32.totalorder %s39, 1
      %p382 = por %p380, %p381
      %p384 = scmp.ne.s32.totalorder %s369, %s383
      %p385 = scmp.eq.s32.totalorder %s39, 0
      %p386 = por %p384, %p385
      %s388 = sadd.s32 %s387, 1
      %p391 = scmp.eq.s32.totalorder %s33, 1
      %p392 = scmp.ne.s32.totalorder %s387, %s389
      %p393 = scmp.eq.s32.totalorder %s33, 0
      %p394 = por %p392, %p393
      %p395 = scmp.ne.s32.totalorder %s387, %s389
      %p396 = scmp.eq.s32.totalorder %s38, 1
      %p397 = por %p395, %p396
      %p398 = scmp.ne.s32.totalorder %s389, %s390
      %p399 = scmp.eq.s32.totalorder %s38, 0
      %p400 = por %p398, %p399
      %p401 = scmp.ne.s32.totalorder %s389, %s390
      %p402 = scmp.eq.s32.totalorder %s39, 1
      %p403 = por %p401, %p402
      %p405 = scmp.ne.s32.totalorder %s390, %s404
      %p406 = scmp.eq.s32.totalorder %s39, 0
      %p407 = por %p405, %p406
      %s409 = sadd.s32 %s408, 1
      %p412 = scmp.eq.s32.totalorder %s33, 1
      %p413 = scmp.ne.s32.totalorder %s408, %s410
      %p414 = scmp.eq.s32.totalorder %s33, 0
      %p415 = por %p413, %p414
      %p416 = scmp.ne.s32.totalorder %s408, %s410
      %p417 = scmp.eq.s32.totalorder %s38, 1
      %p418 = por %p416, %p417
      %p419 = scmp.ne.s32.totalorder %s410, %s411
      %p420 = scmp.eq.s32.totalorder %s38, 0
      %p421 = por %p419, %p420
      %p422 = scmp.ne.s32.totalorder %s410, %s411
      %p423 = scmp.eq.s32.totalorder %s39, 1
      %p424 = por %p422, %p423
      %p426 = scmp.ne.s32.totalorder %s411, %s425
      %p427 = scmp.eq.s32.totalorder %s39, 0
      %p428 = por %p426, %p427
      %s429 = ssub.s32 %s33, %s40
      %p430 = scmp.eq.s32.totalorder %s429, 0
      %s432 = sadd.s32 %s431, 1
      %s433 = scalar_select %p430, %s431, %s432
      %p436 = pneg %p430
      %p437 = scmp.eq.s32.totalorder %s33, 1
      %p438 = por %p436, %p437
      %p439 = scmp.ne.s32.totalorder %s431, %s434
      %p440 = scmp.eq.s32.totalorder %s33, 0
      %p441 = por %p439, %p440
      %p442 = scmp.ne.s32.totalorder %s431, %s434
      %p443 = scmp.eq.s32.totalorder %s38, 1
      %p444 = por %p442, %p443
      %p445 = scmp.ne.s32.totalorder %s434, %s435
      %p446 = scmp.eq.s32.totalorder %s38, 0
      %p447 = por %p445, %p446
      %p448 = scmp.ne.s32.totalorder %s434, %s435
      %p449 = scmp.eq.s32.totalorder %s39, 1
      %p450 = por %p448, %p449
      %p452 = scmp.ne.s32.totalorder %s435, %s451
      %p453 = scmp.eq.s32.totalorder %s39, 0
      %p454 = por %p452, %p453
      %s455 = ssub.s32 %s33, %s40
      %p456 = scmp.eq.s32.totalorder %s455, 0
      %s458 = sadd.s32 %s457, 1
      %s459 = scalar_select %p456, %s457, %s458
      %p462 = pneg %p456
      %p463 = scmp.eq.s32.totalorder %s33, 1
      %p464 = por %p462, %p463
      %p465 = scmp.ne.s32.totalorder %s457, %s460
      %p466 = scmp.eq.s32.totalorder %s33, 0
      %p467 = por %p465, %p466
      %p468 = scmp.ne.s32.totalorder %s457, %s460
      %p469 = scmp.eq.s32.totalorder %s38, 1
      %p470 = por %p468, %p469
      %p471 = scmp.ne.s32.totalorder %s460, %s461
      %p472 = scmp.eq.s32.totalorder %s38, 0
      %p473 = por %p471, %p472
      %p474 = scmp.ne.s32.totalorder %s460, %s461
      %p475 = scmp.eq.s32.totalorder %s39, 1
      %p476 = por %p474, %p475
      %p478 = scmp.ne.s32.totalorder %s461, %s477
      %p479 = scmp.eq.s32.totalorder %s39, 0
      %p480 = por %p478, %p479
      %s481 = ssub.s32 %s33, %s40
      %p482 = scmp.eq.s32.totalorder %s481, 0
      %s484 = sadd.s32 %s483, 1
      %s485 = scalar_select %p482, %s483, %s484
      %p488 = pneg %p482
      %p489 = scmp.eq.s32.totalorder %s33, 1
      %p490 = por %p488, %p489
      %p491 = scmp.ne.s32.totalorder %s483, %s486
      %p492 = scmp.eq.s32.totalorder %s33, 0
      %p493 = por %p491, %p492
      %p494 = scmp.ne.s32.totalorder %s483, %s486
      %p495 = scmp.eq.s32.totalorder %s38, 1
      %p496 = por %p494, %p495
      %p497 = scmp.ne.s32.totalorder %s486, %s487
      %p498 = scmp.eq.s32.totalorder %s38, 0
      %p499 = por %p497, %p498
      %p500 = scmp.ne.s32.totalorder %s486, %s487
      %p501 = scmp.eq.s32.totalorder %s39, 1
      %p502 = por %p500, %p501
      %p504 = scmp.ne.s32.totalorder %s487, %s503
      %p505 = scmp.eq.s32.totalorder %s39, 0
      %p506 = por %p504, %p505
      %p507 = scmp.le.s32.totalorder 1, %s33
      %p508 = scmp.lt.s32.totalorder %s33, 3
      %p509 = pnand %p507, %p508
      %p510 = pneg %p509
      // Predicated region
      $region9: #{autoencoder_charge_forward.1} parent=5 // pred_check
        _
      $region10: #{autoencoder_charge_forward.1} parent=5 // pred_check_branch
        %512 = sbr.rel (%p509) target = $region12
      $region11: #{autoencoder_charge_forward.1} parent=5 // pred_region
        %s513 = ssub.s32 %s33, 1
        // Predicated region
        $region13: #{autoencoder_charge_forward.1} parent=11 // pred_check
          %p514 = pneg %p106
        $region14: #{autoencoder_charge_forward.1} parent=11 // pred_check_branch
          %516 = sbr.rel (%p514) target = $region16
        $region15: #{autoencoder_charge_forward.1} parent=11 // pred_region
          _
        $region16: #{autoencoder_charge_forward.1} parent=11 // pred_fallthru
          _
        // Predicated region
        $region17: #{autoencoder_charge_forward.1} parent=11 // pred_check
          %p517 = pneg %p127
        $region18: #{autoencoder_charge_forward.1} parent=11 // pred_check_branch
          %519 = sbr.rel (%p517) target = $region20
        $region19: #{autoencoder_charge_forward.1} parent=11 // pred_region
          _
        $region20: #{autoencoder_charge_forward.1} parent=11 // pred_fallthru
          _
        // Predicated region
        $region21: #{autoencoder_charge_forward.1} parent=11 // pred_check
          %p520 = pneg %p148
        $region22: #{autoencoder_charge_forward.1} parent=11 // pred_check_branch
          %522 = sbr.rel (%p520) target = $region24
        $region23: #{autoencoder_charge_forward.1} parent=11 // pred_region
          _
        $region24: #{autoencoder_charge_forward.1} parent=11 // pred_fallthru
          _
        // Predicated region
        $region25: #{autoencoder_charge_forward.1} parent=11 // pred_check
          %p523 = pneg %p169
        $region26: #{autoencoder_charge_forward.1} parent=11 // pred_check_branch
          %525 = sbr.rel (%p523) target = $region28
        $region27: #{autoencoder_charge_forward.1} parent=11 // pred_region
          _
        $region28: #{autoencoder_charge_forward.1} parent=11 // pred_fallthru
          _
        // Predicated region
        $region29: #{autoencoder_charge_forward.1} parent=11 // pred_check
          %p526 = pneg %p190
        $region30: #{autoencoder_charge_forward.1} parent=11 // pred_check_branch
          %528 = sbr.rel (%p526) target = $region32
        $region31: #{autoencoder_charge_forward.1} parent=11 // pred_region
          _
        $region32: #{autoencoder_charge_forward.1} parent=11 // pred_fallthru
          _
        // Predicated region
        $region33: #{autoencoder_charge_forward.1} parent=11 // pred_check
          %p529 = pneg %p211
        $region34: #{autoencoder_charge_forward.1} parent=11 // pred_check_branch
          %531 = sbr.rel (%p529) target = $region36
        $region35: #{autoencoder_charge_forward.1} parent=11 // pred_region
          _
        $region36: #{autoencoder_charge_forward.1} parent=11 // pred_fallthru
          _
        // Predicated region
        $region37: #{autoencoder_charge_forward.1} parent=11 // pred_check
          %p532 = pneg %p232
        $region38: #{autoencoder_charge_forward.1} parent=11 // pred_check_branch
          %534 = sbr.rel (%p532) target = $region40
        $region39: #{autoencoder_charge_forward.1} parent=11 // pred_region
          _
        $region40: #{autoencoder_charge_forward.1} parent=11 // pred_fallthru
          _
        // Predicated region
        $region41: #{autoencoder_charge_forward.1} parent=11 // pred_check
          %p535 = pneg %p253
        $region42: #{autoencoder_charge_forward.1} parent=11 // pred_check_branch
          %537 = sbr.rel (%p535) target = $region44
        $region43: #{autoencoder_charge_forward.1} parent=11 // pred_region
          _
        $region44: #{autoencoder_charge_forward.1} parent=11 // pred_fallthru
          _
        // Predicated region
        $region45: #{autoencoder_charge_forward.1} parent=11 // pred_check
          %p538 = pneg %p274
        $region46: #{autoencoder_charge_forward.1} parent=11 // pred_check_branch
          %540 = sbr.rel (%p538) target = $region48
        $region47: #{autoencoder_charge_forward.1} parent=11 // pred_region
          _
        $region48: #{autoencoder_charge_forward.1} parent=11 // pred_fallthru
          _
        // Predicated region
        $region49: #{autoencoder_charge_forward.1} parent=11 // pred_check
          %p541 = pneg %p295
        $region50: #{autoencoder_charge_forward.1} parent=11 // pred_check_branch
          %543 = sbr.rel (%p541) target = $region52
        $region51: #{autoencoder_charge_forward.1} parent=11 // pred_region
          _
        $region52: #{autoencoder_charge_forward.1} parent=11 // pred_fallthru
          _
        // Predicated region
        $region53: #{autoencoder_charge_forward.1} parent=11 // pred_check
          %p544 = pneg %p316
        $region54: #{autoencoder_charge_forward.1} parent=11 // pred_check_branch
          %546 = sbr.rel (%p544) target = $region56
        $region55: #{autoencoder_charge_forward.1} parent=11 // pred_region
          _
        $region56: #{autoencoder_charge_forward.1} parent=11 // pred_fallthru
          _
        // Predicated region
        $region57: #{autoencoder_charge_forward.1} parent=11 // pred_check
          %p547 = pneg %p337
        $region58: #{autoencoder_charge_forward.1} parent=11 // pred_check_branch
          %549 = sbr.rel (%p547) target = $region60
        $region59: #{autoencoder_charge_forward.1} parent=11 // pred_region
          _
        $region60: #{autoencoder_charge_forward.1} parent=11 // pred_fallthru
          _
        // Predicated region
        $region61: #{autoencoder_charge_forward.1} parent=11 // pred_check
          %p550 = pneg %p358
        $region62: #{autoencoder_charge_forward.1} parent=11 // pred_check_branch
          %552 = sbr.rel (%p550) target = $region64
        $region63: #{autoencoder_charge_forward.1} parent=11 // pred_region
          _
        $region64: #{autoencoder_charge_forward.1} parent=11 // pred_fallthru
          _
        // Predicated region
        $region65: #{autoencoder_charge_forward.1} parent=11 // pred_check
          %p553 = pneg %p379
        $region66: #{autoencoder_charge_forward.1} parent=11 // pred_check_branch
          %555 = sbr.rel (%p553) target = $region68
        $region67: #{autoencoder_charge_forward.1} parent=11 // pred_region
          _
        $region68: #{autoencoder_charge_forward.1} parent=11 // pred_fallthru
          _
        // Predicated region
        $region69: #{autoencoder_charge_forward.1} parent=11 // pred_check
          %p556 = pneg %p400
        $region70: #{autoencoder_charge_forward.1} parent=11 // pred_check_branch
          %558 = sbr.rel (%p556) target = $region72
        $region71: #{autoencoder_charge_forward.1} parent=11 // pred_region
          _
        $region72: #{autoencoder_charge_forward.1} parent=11 // pred_fallthru
          _
        // Predicated region
        $region73: #{autoencoder_charge_forward.1} parent=11 // pred_check
          %p559 = pneg %p421
        $region74: #{autoencoder_charge_forward.1} parent=11 // pred_check_branch
          %561 = sbr.rel (%p559) target = $region76
        $region75: #{autoencoder_charge_forward.1} parent=11 // pred_region
          _
        $region76: #{autoencoder_charge_forward.1} parent=11 // pred_fallthru
          _
      $region12: #{autoencoder_charge_forward.1} parent=5 // pred_fallthru
        _
      %p562 = scmp.lt.s32.totalorder %s33, 2
      // Predicated region
      $region77: #{autoencoder_charge_forward.1} parent=5 // pred_check
        %p563 = pneg %p562
      $region78: #{autoencoder_charge_forward.1} parent=5 // pred_check_branch
        %565 = sbr.rel (%p563) target = $region80
      $region79: #{autoencoder_charge_forward.1} parent=5 // pred_region
        // Predicated region
        $region81: #{autoencoder_charge_forward.1} parent=79 // pred_check
          %p566 = pneg %p53
        $region82: #{autoencoder_charge_forward.1} parent=79 // pred_check_branch
          %568 = sbr.rel (%p566) target = $region84
        $region83: #{autoencoder_charge_forward.1} parent=79 // pred_region
          %p569 = scmp.lt.s32.totalorder %s33, 1
          %s570 = scalar_select %p569, %s33, 1
          %s571 = smul.addr %s570, 35
          %s572 = smul.addr %s571, 8
          %s573 = scalar_lea.vmem %s0, %s572
        $region84: #{autoencoder_charge_forward.1} parent=79 // pred_fallthru
          _
        // Predicated region
        $region85: #{autoencoder_charge_forward.1} parent=79 // pred_check
          %p574 = pneg %p79
        $region86: #{autoencoder_charge_forward.1} parent=79 // pred_check_branch
          %576 = sbr.rel (%p574) target = $region88
        $region87: #{autoencoder_charge_forward.1} parent=79 // pred_region
          %p577 = scmp.lt.s32.totalorder %s33, 1
          %s578 = scalar_select %p577, %s33, 1
          %s579 = scalar_lea.vmem %s1, %s578
        $region88: #{autoencoder_charge_forward.1} parent=79 // pred_fallthru
          _
      $region80: #{autoencoder_charge_forward.1} parent=5 // pred_fallthru
        _
      %p580 = scmp.le.s32.totalorder 1, %s33
      %p581 = scmp.lt.s32.totalorder %s33, 3
      %p582 = pnand %p580, %p581
      %p583 = pneg %p582
      // Predicated region
      $region89: #{autoencoder_charge_forward.1} parent=5 // pred_check
        _
      $region90: #{autoencoder_charge_forward.1} parent=5 // pred_check_branch
        %585 = sbr.rel (%p582) target = $region92
      $region91: #{autoencoder_charge_forward.1} parent=5 // pred_region
        %s586 = ssub.s32 %s33, 1
        %p587 = scmp.lt.s32.totalorder %s38, 1
        %s588 = scalar_select %p587, %s38, 1
        %s589 = smul.addr %s588, 35
        %s590 = smul.addr %s589, 8
        %s591 = scalar_lea.vmem %s0, %s590
        %p592 = pneg %p59
        %p593 = pneg %p56
        %p594 = scmp.lt.s32.totalorder %s38, 1
        %s595 = scalar_select %p594, %s38, 1
        %s596 = scalar_lea.vmem %s1, %s595
        %p597 = pneg %p85
        %p598 = pneg %p82
        %p599 = pneg %p106
        %p600 = pneg %p103
        %p601 = pneg %p127
        %p602 = pneg %p124
        %p603 = pneg %p148
        %p604 = pneg %p145
        %p605 = pneg %p169
        %p606 = pneg %p166
        %p607 = pneg %p190
        %p608 = pneg %p187
        %p609 = pneg %p211
        %p610 = pneg %p208
        %p611 = pneg %p232
        %p612 = pneg %p229
        %p613 = pneg %p253
        %p614 = pneg %p250
        %p615 = pneg %p274
        %p616 = pneg %p271
        %p617 = pneg %p295
        %p618 = pneg %p292
        %p619 = pneg %p316
        %p620 = pneg %p313
        %p621 = pneg %p337
        %p622 = pneg %p334
        %p623 = pneg %p358
        %p624 = pneg %p355
        %p625 = pneg %p379
        %p626 = pneg %p376
        %p627 = pneg %p400
        %p628 = pneg %p397
        %p629 = pneg %p421
        %p630 = pneg %p418
        %p631 = pneg %p447
        %p632 = pneg %p444
        %p633 = scmp.lt.s32.totalorder %s38, 1
        %s634 = scalar_select %p633, %s38, 1
        %s635 = smul.addr %s634, 40
        %s636 = smul.addr %s635, 8
        %s637 = scalar_lea.vmem %s18, %s636
        %p638 = pneg %p473
        %p639 = pneg %p470
        %s640 = sand.u32 %s460, 1
        %s641 = scalar_lea.sflag [#allocation3], %s640
        %s642 = sand.u32 %s460, 1
        %s643 = scalar_lea.vmem [#allocation2], %s642
        %p644 = pneg %p499
        %p645 = pneg %p496
        %s646 = sand.u32 %s486, 1
        %s647 = scalar_lea.sflag [#allocation5], %s646
        %s648 = sand.u32 %s486, 1
        %s649 = scalar_lea.vmem [#allocation4], %s648
        %p650 = scmp.lt.s32.totalorder %s38, 1
        %s651 = scalar_select %p650, %s38, 1
        %s652 = smul.addr %s651, 35
        %s653 = smul.addr %s652, 8
        %s654 = scalar_lea.vmem %s0, %s653
        %p655 = scmp.lt.s32.totalorder %s38, 1
        %s656 = scalar_select %p655, %s38, 1
        %s657 = scalar_lea.vmem %s1, %s656
        %p658 = scmp.lt.s32.totalorder %s38, 1
        %s659 = scalar_select %p658, %s38, 1
        %s660 = smul.addr %s659, 40
        %s661 = smul.addr %s660, 8
        %s662 = scalar_lea.vmem %s18, %s661
        %v664 = vld [vmem:[%s654] sm:$0xff]
        %v665 = vld [vmem:[%s654 + $0x8] sm:$0xff]
        %v666 = vld [vmem:[%s654 + $0x10] sm:$0xff]
        %v667 = vld [vmem:[%s654 + $0x18] sm:$0xff]
        %v668 = vld [vmem:[%s654 + $0x20] sm:$0xff]
        %v669 = vld [vmem:[%s654 + $0x28] sm:$0xff]
        %v670 = vld [vmem:[%s654 + $0x30] sm:$0xff]
        %v671 = vld [vmem:[%s654 + $0x38] sm:$0xff]
        %v672 = vld [vmem:[%s654 + $0x40] sm:$0xff]
        %v673 = vld [vmem:[%s654 + $0x48] sm:$0xff]
        %v674 = vld [vmem:[%s654 + $0x50] sm:$0xff]
        %v675 = vld [vmem:[%s654 + $0x58] sm:$0xff]
        %v676 = vld [vmem:[%s654 + $0x60] sm:$0xff]
        %v677 = vld [vmem:[%s654 + $0x68] sm:$0xff]
        %v678 = vld [vmem:[%s654 + $0x70] sm:$0xff]
        %v679 = vld [vmem:[%s654 + $0x78] sm:$0xff]
        %v680 = vld [vmem:[%s654 + $0x80] sm:$0xff]
        %v681 = vld [vmem:[%s654 + $0x88] sm:$0xff]
        %v682 = vld [vmem:[%s654 + $0x90] sm:$0xff]
        %v683 = vld [vmem:[%s654 + $0x98] sm:$0xff]
        %v684 = vld [vmem:[%s654 + $0xa0] sm:$0xff]
        %v685 = vld [vmem:[%s654 + $0xa8] sm:$0xff]
        %v686 = vld [vmem:[%s654 + $0xb0] sm:$0xff]
        %v687 = vld [vmem:[%s654 + $0xb8] sm:$0xff]
        %v688 = vld [vmem:[%s654 + $0xc0] sm:$0xff]
        %v689 = vld [vmem:[%s654 + $0xc8] sm:$0xff]
        %v690 = vld [vmem:[%s654 + $0xd0] sm:$0xff]
        %v691 = vld [vmem:[%s654 + $0xd8] sm:$0xff]
        %v692 = vld [vmem:[%s654 + $0xe0] sm:$0xff]
        %v693 = vld [vmem:[%s654 + $0xe8] sm:$0xff]
        %v694 = vld [vmem:[%s654 + $0xf0] sm:$0xff]
        %v695 = vld [vmem:[%s654 + $0xf8] sm:$0xff]
        %v696 = vld [vmem:[%s654 + $0x100] sm:$0xff]
        %v697 = vld [vmem:[%s654 + $0x108] sm:$0xff]
        %v698 = vld [vmem:[%s654 + $0x110] sm:$0xff]
        %734 = vrot.lane.b32.xlu0 %v664, 100
        %v735 = vpop.permute.xlu0 %734
        %736 = vrot.lane.b32.xlu0 %v665, 100
        %v737 = vpop.permute.xlu0 %736
        %738 = vrot.lane.b32.xlu0 %v666, 100
        %v739 = vpop.permute.xlu0 %738
        %740 = vrot.lane.b32.xlu0 %v667, 100
        %v741 = vpop.permute.xlu0 %740
        %742 = vrot.lane.b32.xlu0 %v668, 100
        %v743 = vpop.permute.xlu0 %742
        %744 = vrot.lane.b32.xlu0 %v669, 100
        %v745 = vpop.permute.xlu0 %744
        %746 = vrot.lane.b32.xlu0 %v670, 100
        %v747 = vpop.permute.xlu0 %746
        %748 = vrot.lane.b32.xlu0 %v671, 100
        %v749 = vpop.permute.xlu0 %748
        %750 = vrot.lane.b32.xlu0 %v672, 100
        %v751 = vpop.permute.xlu0 %750
        %752 = vrot.lane.b32.xlu0 %v673, 100
        %v753 = vpop.permute.xlu0 %752
        %754 = vrot.lane.b32.xlu0 %v674, 100
        %v755 = vpop.permute.xlu0 %754
        %756 = vrot.lane.b32.xlu0 %v675, 100
        %v757 = vpop.permute.xlu0 %756
        %758 = vrot.lane.b32.xlu0 %v676, 100
        %v759 = vpop.permute.xlu0 %758
        %760 = vrot.lane.b32.xlu0 %v677, 100
        %v761 = vpop.permute.xlu0 %760
        %762 = vrot.lane.b32.xlu0 %v678, 100
        %v763 = vpop.permute.xlu0 %762
        %764 = vrot.lane.b32.xlu0 %v679, 100
        %v765 = vpop.permute.xlu0 %764
        %766 = vrot.lane.b32.xlu0 %v680, 100
        %v767 = vpop.permute.xlu0 %766
        %768 = vrot.lane.b32.xlu0 %v681, 100
        %v769 = vpop.permute.xlu0 %768
        %770 = vrot.lane.b32.xlu0 %v682, 100
        %v771 = vpop.permute.xlu0 %770
        %772 = vrot.lane.b32.xlu0 %v683, 100
        %v773 = vpop.permute.xlu0 %772
        %774 = vrot.lane.b32.xlu0 %v684, 100
        %v775 = vpop.permute.xlu0 %774
        %776 = vrot.lane.b32.xlu0 %v685, 100
        %v777 = vpop.permute.xlu0 %776
        %778 = vrot.lane.b32.xlu0 %v686, 100
        %v779 = vpop.permute.xlu0 %778
        %780 = vrot.lane.b32.xlu0 %v687, 100
        %v781 = vpop.permute.xlu0 %780
        %782 = vrot.lane.b32.xlu0 %v688, 100
        %v783 = vpop.permute.xlu0 %782
        %784 = vrot.lane.b32.xlu0 %v689, 100
        %v785 = vpop.permute.xlu0 %784
        %786 = vrot.lane.b32.xlu0 %v690, 100
        %v787 = vpop.permute.xlu0 %786
        %788 = vrot.lane.b32.xlu0 %v691, 100
        %v789 = vpop.permute.xlu0 %788
        %790 = vrot.lane.b32.xlu0 %v692, 100
        %v791 = vpop.permute.xlu0 %790
        %792 = vrot.lane.b32.xlu0 %v693, 100
        %v793 = vpop.permute.xlu0 %792
        %794 = vrot.lane.b32.xlu0 %v694, 100
        %v795 = vpop.permute.xlu0 %794
        %796 = vrot.lane.b32.xlu0 %v695, 100
        %v797 = vpop.permute.xlu0 %796
        %798 = vrot.lane.b32.xlu0 %v696, 100
        %v799 = vpop.permute.xlu0 %798
        %800 = vrot.lane.b32.xlu0 %v697, 100
        %v801 = vpop.permute.xlu0 %800
        %802 = vrot.lane.b32.xlu0 %v698, 100
        %v803 = vpop.permute.xlu0 %802
        %vm804 = vcmask 818176
        %v805 = vsel %vm804, %v735, %v737
        %v806 = vsel %vm804, %v737, %v739
        %v807 = vsel %vm804, %v739, %v741
        %v808 = vsel %vm804, %v741, %v743
        %v809 = vsel %vm804, %v743, %v745
        %v810 = vsel %vm804, %v745, %v747
        %v811 = vsel %vm804, %v749, %v751
        %v812 = vsel %vm804, %v751, %v753
        %v813 = vsel %vm804, %v753, %v755
        %v814 = vsel %vm804, %v755, %v757
        %v815 = vsel %vm804, %v757, %v759
        %v816 = vsel %vm804, %v759, %v761
        %v817 = vsel %vm804, %v763, %v765
        %v818 = vsel %vm804, %v765, %v767
        %v819 = vsel %vm804, %v767, %v769
        %v820 = vsel %vm804, %v769, %v771
        %v821 = vsel %vm804, %v771, %v773
        %v822 = vsel %vm804, %v773, %v775
        %v823 = vsel %vm804, %v777, %v779
        %v824 = vsel %vm804, %v779, %v781
        %v825 = vsel %vm804, %v781, %v783
        %v826 = vsel %vm804, %v783, %v785
        %v827 = vsel %vm804, %v785, %v787
        %v828 = vsel %vm804, %v787, %v789
        %v829 = vsel %vm804, %v791, %v793
        %v830 = vsel %vm804, %v793, %v795
        %v831 = vsel %vm804, %v795, %v797
        %v832 = vsel %vm804, %v797, %v799
        %v833 = vsel %vm804, %v799, %v801
        %v834 = vsel %vm804, %v801, %v803
        %870 = vrot.lane.b32.xlu0 %v664, 72
        %v871 = vpop.permute.xlu0 %870
        %872 = vrot.lane.b32.xlu0 %v665, 72
        %v873 = vpop.permute.xlu0 %872
        %874 = vrot.lane.b32.xlu0 %v666, 72
        %v875 = vpop.permute.xlu0 %874
        %876 = vrot.lane.b32.xlu0 %v667, 72
        %v877 = vpop.permute.xlu0 %876
        %878 = vrot.lane.b32.xlu0 %v668, 72
        %v879 = vpop.permute.xlu0 %878
        %880 = vrot.lane.b32.xlu0 %v669, 72
        %v881 = vpop.permute.xlu0 %880
        %882 = vrot.lane.b32.xlu0 %v670, 72
        %v883 = vpop.permute.xlu0 %882
        %884 = vrot.lane.b32.xlu0 %v671, 72
        %v885 = vpop.permute.xlu0 %884
        %886 = vrot.lane.b32.xlu0 %v672, 72
        %v887 = vpop.permute.xlu0 %886
        %888 = vrot.lane.b32.xlu0 %v673, 72
        %v889 = vpop.permute.xlu0 %888
        %890 = vrot.lane.b32.xlu0 %v674, 72
        %v891 = vpop.permute.xlu0 %890
        %892 = vrot.lane.b32.xlu0 %v675, 72
        %v893 = vpop.permute.xlu0 %892
        %894 = vrot.lane.b32.xlu0 %v676, 72
        %v895 = vpop.permute.xlu0 %894
        %896 = vrot.lane.b32.xlu0 %v677, 72
        %v897 = vpop.permute.xlu0 %896
        %898 = vrot.lane.b32.xlu0 %v678, 72
        %v899 = vpop.permute.xlu0 %898
        %900 = vrot.lane.b32.xlu0 %v679, 72
        %v901 = vpop.permute.xlu0 %900
        %902 = vrot.lane.b32.xlu0 %v680, 72
        %v903 = vpop.permute.xlu0 %902
        %904 = vrot.lane.b32.xlu0 %v681, 72
        %v905 = vpop.permute.xlu0 %904
        %906 = vrot.lane.b32.xlu0 %v682, 72
        %v907 = vpop.permute.xlu0 %906
        %908 = vrot.lane.b32.xlu0 %v683, 72
        %v909 = vpop.permute.xlu0 %908
        %910 = vrot.lane.b32.xlu0 %v684, 72
        %v911 = vpop.permute.xlu0 %910
        %912 = vrot.lane.b32.xlu0 %v685, 72
        %v913 = vpop.permute.xlu0 %912
        %914 = vrot.lane.b32.xlu0 %v686, 72
        %v915 = vpop.permute.xlu0 %914
        %916 = vrot.lane.b32.xlu0 %v687, 72
        %v917 = vpop.permute.xlu0 %916
        %918 = vrot.lane.b32.xlu0 %v688, 72
        %v919 = vpop.permute.xlu0 %918
        %920 = vrot.lane.b32.xlu0 %v689, 72
        %v921 = vpop.permute.xlu0 %920
        %922 = vrot.lane.b32.xlu0 %v690, 72
        %v923 = vpop.permute.xlu0 %922
        %924 = vrot.lane.b32.xlu0 %v691, 72
        %v925 = vpop.permute.xlu0 %924
        %926 = vrot.lane.b32.xlu0 %v692, 72
        %v927 = vpop.permute.xlu0 %926
        %928 = vrot.lane.b32.xlu0 %v693, 72
        %v929 = vpop.permute.xlu0 %928
        %930 = vrot.lane.b32.xlu0 %v694, 72
        %v931 = vpop.permute.xlu0 %930
        %932 = vrot.lane.b32.xlu0 %v695, 72
        %v933 = vpop.permute.xlu0 %932
        %934 = vrot.lane.b32.xlu0 %v696, 72
        %v935 = vpop.permute.xlu0 %934
        %936 = vrot.lane.b32.xlu0 %v697, 72
        %v937 = vpop.permute.xlu0 %936
        %938 = vrot.lane.b32.xlu0 %v698, 72
        %v939 = vpop.permute.xlu0 %938
        %vm940 = vcmask 588800
        %v941 = vsel %vm940, %v871, %v873
        %v942 = vsel %vm940, %v873, %v875
        %v943 = vsel %vm940, %v875, %v877
        %v944 = vsel %vm940, %v877, %v879
        %v945 = vsel %vm940, %v879, %v881
        %v946 = vsel %vm940, %v881, %v883
        %v947 = vsel %vm940, %v885, %v887
        %v948 = vsel %vm940, %v887, %v889
        %v949 = vsel %vm940, %v889, %v891
        %v950 = vsel %vm940, %v891, %v893
        %v951 = vsel %vm940, %v893, %v895
        %v952 = vsel %vm940, %v895, %v897
        %v953 = vsel %vm940, %v899, %v901
        %v954 = vsel %vm940, %v901, %v903
        %v955 = vsel %vm940, %v903, %v905
        %v956 = vsel %vm940, %v905, %v907
        %v957 = vsel %vm940, %v907, %v909
        %v958 = vsel %vm940, %v909, %v911
        %v959 = vsel %vm940, %v913, %v915
        %v960 = vsel %vm940, %v915, %v917
        %v961 = vsel %vm940, %v917, %v919
        %v962 = vsel %vm940, %v919, %v921
        %v963 = vsel %vm940, %v921, %v923
        %v964 = vsel %vm940, %v923, %v925
        %v965 = vsel %vm940, %v927, %v929
        %v966 = vsel %vm940, %v929, %v931
        %v967 = vsel %vm940, %v931, %v933
        %v968 = vsel %vm940, %v933, %v935
        %v969 = vsel %vm940, %v935, %v937
        %v970 = vsel %vm940, %v937, %v939
        %v1006 = vld [vmem:[%s4] ss:$2 sm:$0x7f]
        %v1008 = vlaneseq
        %v1009 = vshrl.u32 %v1008, 7
        %v1010 = vsub.s32 0, %v1009
        %v1011 = vrot.slane %v1006, %v1010
        %v1012 = vlaneseq
        %v1013 = vshrl.u32 %v1012, 7
        %v1014 = vsub.s32 1, %v1013
        %v1015 = vrot.slane %v1006, %v1014
        %v1016 = vlaneseq
        %v1017 = vshrl.u32 %v1016, 7
        %v1018 = vsub.s32 2, %v1017
        %v1019 = vrot.slane %v1006, %v1018
        %v1020 = vlaneseq
        %v1021 = vshrl.u32 %v1020, 7
        %v1022 = vsub.s32 3, %v1021
        %v1023 = vrot.slane %v1006, %v1022
        %v1024 = vlaneseq
        %v1025 = vshrl.u32 %v1024, 7
        %v1026 = vsub.s32 4, %v1025
        %v1027 = vrot.slane %v1006, %v1026
        %v1028 = vlaneseq
        %v1029 = vshrl.u32 %v1028, 7
        %v1030 = vsub.s32 5, %v1029
        %v1031 = vrot.slane %v1006, %v1030
        %v1032 = vlaneseq
        %v1033 = vshrl.u32 %v1032, 7
        %v1034 = vsub.s32 6, %v1033
        %v1035 = vrot.slane %v1006, %v1034
        %v1043 = vmul.f32 %v664, %v1011
        %v1044 = vmul.f32 %v665, %v1015
        %v1045 = vmul.f32 %v666, %v1019
        %v1046 = vmul.f32 %v667, %v1023
        %v1047 = vmul.f32 %v668, %v1027
        %v1048 = vmul.f32 %v669, %v1031
        %v1049 = vmul.f32 %v670, %v1035
        %v1050 = vmul.f32 %v671, %v1011
        %v1051 = vmul.f32 %v672, %v1015
        %v1052 = vmul.f32 %v673, %v1019
        %v1053 = vmul.f32 %v674, %v1023
        %v1054 = vmul.f32 %v675, %v1027
        %v1055 = vmul.f32 %v676, %v1031
        %v1056 = vmul.f32 %v677, %v1035
        %v1057 = vmul.f32 %v678, %v1011
        %v1058 = vmul.f32 %v679, %v1015
        %v1059 = vmul.f32 %v680, %v1019
        %v1060 = vmul.f32 %v681, %v1023
        %v1061 = vmul.f32 %v682, %v1027
        %v1062 = vmul.f32 %v683, %v1031
        %v1063 = vmul.f32 %v684, %v1035
        %v1064 = vmul.f32 %v685, %v1011
        %v1065 = vmul.f32 %v686, %v1015
        %v1066 = vmul.f32 %v687, %v1019
        %v1067 = vmul.f32 %v688, %v1023
        %v1068 = vmul.f32 %v689, %v1027
        %v1069 = vmul.f32 %v690, %v1031
        %v1070 = vmul.f32 %v691, %v1035
        %v1071 = vmul.f32 %v692, %v1011
        %v1072 = vmul.f32 %v693, %v1015
        %v1073 = vmul.f32 %v694, %v1019
        %v1074 = vmul.f32 %v695, %v1023
        %v1075 = vmul.f32 %v696, %v1027
        %v1076 = vmul.f32 %v697, %v1031
        %v1077 = vmul.f32 %v698, %v1035
        %v1078 = vmul.f32 %v805, %v1011
        %v1079 = vmul.f32 %v806, %v1015
        %v1080 = vmul.f32 %v807, %v1019
        %v1081 = vmul.f32 %v808, %v1023
        %v1082 = vmul.f32 %v809, %v1027
        %v1083 = vmul.f32 %v810, %v1031
        %v1084 = vmul.f32 %v747, %v1035
        %v1085 = vmul.f32 %v811, %v1011
        %v1086 = vmul.f32 %v812, %v1015
        %v1087 = vmul.f32 %v813, %v1019
        %v1088 = vmul.f32 %v814, %v1023
        %v1089 = vmul.f32 %v815, %v1027
        %v1090 = vmul.f32 %v816, %v1031
        %v1091 = vmul.f32 %v761, %v1035
        %v1092 = vmul.f32 %v817, %v1011
        %v1093 = vmul.f32 %v818, %v1015
        %v1094 = vmul.f32 %v819, %v1019
        %v1095 = vmul.f32 %v820, %v1023
        %v1096 = vmul.f32 %v821, %v1027
        %v1097 = vmul.f32 %v822, %v1031
        %v1098 = vmul.f32 %v775, %v1035
        %v1099 = vmul.f32 %v823, %v1011
        %v1100 = vmul.f32 %v824, %v1015
        %v1101 = vmul.f32 %v825, %v1019
        %v1102 = vmul.f32 %v826, %v1023
        %v1103 = vmul.f32 %v827, %v1027
        %v1104 = vmul.f32 %v828, %v1031
        %v1105 = vmul.f32 %v789, %v1035
        %v1106 = vmul.f32 %v829, %v1011
        %v1107 = vmul.f32 %v830, %v1015
        %v1108 = vmul.f32 %v831, %v1019
        %v1109 = vmul.f32 %v832, %v1023
        %v1110 = vmul.f32 %v833, %v1027
        %v1111 = vmul.f32 %v834, %v1031
        %v1112 = vmul.f32 %v803, %v1035
        %v1113 = vmul.f32 %v941, %v1011
        %v1114 = vmul.f32 %v942, %v1015
        %v1115 = vmul.f32 %v943, %v1019
        %v1116 = vmul.f32 %v944, %v1023
        %v1117 = vmul.f32 %v945, %v1027
        %v1118 = vmul.f32 %v946, %v1031
        %v1119 = vmul.f32 %v883, %v1035
        %v1120 = vmul.f32 %v947, %v1011
        %v1121 = vmul.f32 %v948, %v1015
        %v1122 = vmul.f32 %v949, %v1019
        %v1123 = vmul.f32 %v950, %v1023
        %v1124 = vmul.f32 %v951, %v1027
        %v1125 = vmul.f32 %v952, %v1031
        %v1126 = vmul.f32 %v897, %v1035
        %v1127 = vmul.f32 %v953, %v1011
        %v1128 = vmul.f32 %v954, %v1015
        %v1129 = vmul.f32 %v955, %v1019
        %v1130 = vmul.f32 %v956, %v1023
        %v1131 = vmul.f32 %v957, %v1027
        %v1132 = vmul.f32 %v958, %v1031
        %v1133 = vmul.f32 %v911, %v1035
        %v1134 = vmul.f32 %v959, %v1011
        %v1135 = vmul.f32 %v960, %v1015
        %v1136 = vmul.f32 %v961, %v1019
        %v1137 = vmul.f32 %v962, %v1023
        %v1138 = vmul.f32 %v963, %v1027
        %v1139 = vmul.f32 %v964, %v1031
        %v1140 = vmul.f32 %v925, %v1035
        %v1141 = vmul.f32 %v965, %v1011
        %v1142 = vmul.f32 %v966, %v1015
        %v1143 = vmul.f32 %v967, %v1019
        %v1144 = vmul.f32 %v968, %v1023
        %v1145 = vmul.f32 %v969, %v1027
        %v1146 = vmul.f32 %v970, %v1031
        %v1147 = vmul.f32 %v939, %v1035
        %v1148 = vld [vmem:[%s2] sm:$0xff]
        %v1149 = vld [vmem:[%s2 + $0x8] sm:$0xff]
        %v1150 = vld [vmem:[%s2 + $0x10] sm:$0xff]
        %s1151 = scalar_lea.vmem %s2, 24
        %v1152 = vld [vmem:[%s1151] sm:$0xff]
        %v1153 = vld [vmem:[%s1151 + $0x8] sm:$0xff]
        %v1154 = vld [vmem:[%s1151 + $0x10] sm:$0xff]
        %1155 = vrot.lane.b32.xlu0 %v664, 127
        %v1156 = vpop.permute.xlu0 %1155
        %1157 = vrot.lane.b32.xlu0 %v665, 127
        %v1158 = vpop.permute.xlu0 %1157
        %1159 = vrot.lane.b32.xlu0 %v666, 127
        %v1160 = vpop.permute.xlu0 %1159
        %1161 = vrot.lane.b32.xlu0 %v667, 127
        %v1162 = vpop.permute.xlu0 %1161
        %1163 = vrot.lane.b32.xlu0 %v668, 127
        %v1164 = vpop.permute.xlu0 %1163
        %1165 = vrot.lane.b32.xlu0 %v669, 127
        %v1166 = vpop.permute.xlu0 %1165
        %1167 = vrot.lane.b32.xlu0 %v670, 127
        %v1168 = vpop.permute.xlu0 %1167
        %1169 = vrot.lane.b32.xlu0 %v671, 127
        %v1170 = vpop.permute.xlu0 %1169
        %1171 = vrot.lane.b32.xlu0 %v672, 127
        %v1172 = vpop.permute.xlu0 %1171
        %1173 = vrot.lane.b32.xlu0 %v673, 127
        %v1174 = vpop.permute.xlu0 %1173
        %1175 = vrot.lane.b32.xlu0 %v674, 127
        %v1176 = vpop.permute.xlu0 %1175
        %1177 = vrot.lane.b32.xlu0 %v675, 127
        %v1178 = vpop.permute.xlu0 %1177
        %1179 = vrot.lane.b32.xlu0 %v676, 127
        %v1180 = vpop.permute.xlu0 %1179
        %1181 = vrot.lane.b32.xlu0 %v677, 127
        %v1182 = vpop.permute.xlu0 %1181
        %1183 = vrot.lane.b32.xlu0 %v678, 127
        %v1184 = vpop.permute.xlu0 %1183
        %1185 = vrot.lane.b32.xlu0 %v679, 127
        %v1186 = vpop.permute.xlu0 %1185
        %1187 = vrot.lane.b32.xlu0 %v680, 127
        %v1188 = vpop.permute.xlu0 %1187
        %1189 = vrot.lane.b32.xlu0 %v681, 127
        %v1190 = vpop.permute.xlu0 %1189
        %1191 = vrot.lane.b32.xlu0 %v682, 127
        %v1192 = vpop.permute.xlu0 %1191
        %1193 = vrot.lane.b32.xlu0 %v683, 127
        %v1194 = vpop.permute.xlu0 %1193
        %1195 = vrot.lane.b32.xlu0 %v684, 127
        %v1196 = vpop.permute.xlu0 %1195
        %1197 = vrot.lane.b32.xlu0 %v685, 127
        %v1198 = vpop.permute.xlu0 %1197
        %1199 = vrot.lane.b32.xlu0 %v686, 127
        %v1200 = vpop.permute.xlu0 %1199
        %1201 = vrot.lane.b32.xlu0 %v687, 127
        %v1202 = vpop.permute.xlu0 %1201
        %1203 = vrot.lane.b32.xlu0 %v688, 127
        %v1204 = vpop.permute.xlu0 %1203
        %1205 = vrot.lane.b32.xlu0 %v689, 127
        %v1206 = vpop.permute.xlu0 %1205
        %1207 = vrot.lane.b32.xlu0 %v690, 127
        %v1208 = vpop.permute.xlu0 %1207
        %1209 = vrot.lane.b32.xlu0 %v691, 127
        %v1210 = vpop.permute.xlu0 %1209
        %1211 = vrot.lane.b32.xlu0 %v692, 127
        %v1212 = vpop.permute.xlu0 %1211
        %1213 = vrot.lane.b32.xlu0 %v693, 127
        %v1214 = vpop.permute.xlu0 %1213
        %1215 = vrot.lane.b32.xlu0 %v694, 127
        %v1216 = vpop.permute.xlu0 %1215
        %1217 = vrot.lane.b32.xlu0 %v695, 127
        %v1218 = vpop.permute.xlu0 %1217
        %1219 = vrot.lane.b32.xlu0 %v696, 127
        %v1220 = vpop.permute.xlu0 %1219
        %1221 = vrot.lane.b32.xlu0 %v697, 127
        %v1222 = vpop.permute.xlu0 %1221
        %1223 = vrot.lane.b32.xlu0 %v698, 127
        %v1224 = vpop.permute.xlu0 %1223
        %1225 = vrot.lane.b32.xlu0 %v805, 127
        %v1226 = vpop.permute.xlu0 %1225
        %1227 = vrot.lane.b32.xlu0 %v806, 127
        %v1228 = vpop.permute.xlu0 %1227
        %1229 = vrot.lane.b32.xlu0 %v807, 127
        %v1230 = vpop.permute.xlu0 %1229
        %1231 = vrot.lane.b32.xlu0 %v808, 127
        %v1232 = vpop.permute.xlu0 %1231
        %1233 = vrot.lane.b32.xlu0 %v809, 127
        %v1234 = vpop.permute.xlu0 %1233
        %1235 = vrot.lane.b32.xlu0 %v810, 127
        %v1236 = vpop.permute.xlu0 %1235
        %1237 = vrot.lane.b32.xlu0 %v747, 127
        %v1238 = vpop.permute.xlu0 %1237
        %1239 = vrot.lane.b32.xlu0 %v811, 127
        %v1240 = vpop.permute.xlu0 %1239
        %1241 = vrot.lane.b32.xlu0 %v812, 127
        %v1242 = vpop.permute.xlu0 %1241
        %1243 = vrot.lane.b32.xlu0 %v813, 127
        %v1244 = vpop.permute.xlu0 %1243
        %1245 = vrot.lane.b32.xlu0 %v814, 127
        %v1246 = vpop.permute.xlu0 %1245
        %1247 = vrot.lane.b32.xlu0 %v815, 127
        %v1248 = vpop.permute.xlu0 %1247
        %1249 = vrot.lane.b32.xlu0 %v816, 127
        %v1250 = vpop.permute.xlu0 %1249
        %1251 = vrot.lane.b32.xlu0 %v761, 127
        %v1252 = vpop.permute.xlu0 %1251
        %1253 = vrot.lane.b32.xlu0 %v817, 127
        %v1254 = vpop.permute.xlu0 %1253
        %1255 = vrot.lane.b32.xlu0 %v818, 127
        %v1256 = vpop.permute.xlu0 %1255
        %1257 = vrot.lane.b32.xlu0 %v819, 127
        %v1258 = vpop.permute.xlu0 %1257
        %1259 = vrot.lane.b32.xlu0 %v820, 127
        %v1260 = vpop.permute.xlu0 %1259
        %1261 = vrot.lane.b32.xlu0 %v821, 127
        %v1262 = vpop.permute.xlu0 %1261
        %1263 = vrot.lane.b32.xlu0 %v822, 127
        %v1264 = vpop.permute.xlu0 %1263
        %1265 = vrot.lane.b32.xlu0 %v775, 127
        %v1266 = vpop.permute.xlu0 %1265
        %1267 = vrot.lane.b32.xlu0 %v823, 127
        %v1268 = vpop.permute.xlu0 %1267
        %1269 = vrot.lane.b32.xlu0 %v824, 127
        %v1270 = vpop.permute.xlu0 %1269
        %1271 = vrot.lane.b32.xlu0 %v825, 127
        %v1272 = vpop.permute.xlu0 %1271
        %1273 = vrot.lane.b32.xlu0 %v826, 127
        %v1274 = vpop.permute.xlu0 %1273
        %1275 = vrot.lane.b32.xlu0 %v827, 127
        %v1276 = vpop.permute.xlu0 %1275
        %1277 = vrot.lane.b32.xlu0 %v828, 127
        %v1278 = vpop.permute.xlu0 %1277
        %1279 = vrot.lane.b32.xlu0 %v789, 127
        %v1280 = vpop.permute.xlu0 %1279
        %1281 = vrot.lane.b32.xlu0 %v829, 127
        %v1282 = vpop.permute.xlu0 %1281
        %1283 = vrot.lane.b32.xlu0 %v830, 127
        %v1284 = vpop.permute.xlu0 %1283
        %1285 = vrot.lane.b32.xlu0 %v831, 127
        %v1286 = vpop.permute.xlu0 %1285
        %1287 = vrot.lane.b32.xlu0 %v832, 127
        %v1288 = vpop.permute.xlu0 %1287
        %1289 = vrot.lane.b32.xlu0 %v833, 127
        %v1290 = vpop.permute.xlu0 %1289
        %1291 = vrot.lane.b32.xlu0 %v834, 127
        %v1292 = vpop.permute.xlu0 %1291
        %1293 = vrot.lane.b32.xlu0 %v803, 127
        %v1294 = vpop.permute.xlu0 %1293
        %1295 = vrot.lane.b32.xlu0 %v941, 127
        %v1296 = vpop.permute.xlu0 %1295
        %1297 = vrot.lane.b32.xlu0 %v942, 127
        %v1298 = vpop.permute.xlu0 %1297
        %1299 = vrot.lane.b32.xlu0 %v943, 127
        %v1300 = vpop.permute.xlu0 %1299
        %1301 = vrot.lane.b32.xlu0 %v944, 127
        %v1302 = vpop.permute.xlu0 %1301
        %1303 = vrot.lane.b32.xlu0 %v945, 127
        %v1304 = vpop.permute.xlu0 %1303
        %1305 = vrot.lane.b32.xlu0 %v946, 127
        %v1306 = vpop.permute.xlu0 %1305
        %1307 = vrot.lane.b32.xlu0 %v883, 127
        %v1308 = vpop.permute.xlu0 %1307
        %1309 = vrot.lane.b32.xlu0 %v947, 127
        %v1310 = vpop.permute.xlu0 %1309
        %1311 = vrot.lane.b32.xlu0 %v948, 127
        %v1312 = vpop.permute.xlu0 %1311
        %1313 = vrot.lane.b32.xlu0 %v949, 127
        %v1314 = vpop.permute.xlu0 %1313
        %1315 = vrot.lane.b32.xlu0 %v950, 127
        %v1316 = vpop.permute.xlu0 %1315
        %1317 = vrot.lane.b32.xlu0 %v951, 127
        %v1318 = vpop.permute.xlu0 %1317
        %1319 = vrot.lane.b32.xlu0 %v952, 127
        %v1320 = vpop.permute.xlu0 %1319
        %1321 = vrot.lane.b32.xlu0 %v897, 127
        %v1322 = vpop.permute.xlu0 %1321
        %1323 = vrot.lane.b32.xlu0 %v953, 127
        %v1324 = vpop.permute.xlu0 %1323
        %1325 = vrot.lane.b32.xlu0 %v954, 127
        %v1326 = vpop.permute.xlu0 %1325
        %1327 = vrot.lane.b32.xlu0 %v955, 127
        %v1328 = vpop.permute.xlu0 %1327
        %1329 = vrot.lane.b32.xlu0 %v956, 127
        %v1330 = vpop.permute.xlu0 %1329
        %1331 = vrot.lane.b32.xlu0 %v957, 127
        %v1332 = vpop.permute.xlu0 %1331
        %1333 = vrot.lane.b32.xlu0 %v958, 127
        %v1334 = vpop.permute.xlu0 %1333
        %1335 = vrot.lane.b32.xlu0 %v911, 127
        %v1336 = vpop.permute.xlu0 %1335
        %1337 = vrot.lane.b32.xlu0 %v959, 127
        %v1338 = vpop.permute.xlu0 %1337
        %1339 = vrot.lane.b32.xlu0 %v960, 127
        %v1340 = vpop.permute.xlu0 %1339
        %1341 = vrot.lane.b32.xlu0 %v961, 127
        %v1342 = vpop.permute.xlu0 %1341
        %1343 = vrot.lane.b32.xlu0 %v962, 127
        %v1344 = vpop.permute.xlu0 %1343
        %1345 = vrot.lane.b32.xlu0 %v963, 127
        %v1346 = vpop.permute.xlu0 %1345
        %1347 = vrot.lane.b32.xlu0 %v964, 127
        %v1348 = vpop.permute.xlu0 %1347
        %1349 = vrot.lane.b32.xlu0 %v925, 127
        %v1350 = vpop.permute.xlu0 %1349
        %1351 = vrot.lane.b32.xlu0 %v965, 127
        %v1352 = vpop.permute.xlu0 %1351
        %1353 = vrot.lane.b32.xlu0 %v966, 127
        %v1354 = vpop.permute.xlu0 %1353
        %1355 = vrot.lane.b32.xlu0 %v967, 127
        %v1356 = vpop.permute.xlu0 %1355
        %1357 = vrot.lane.b32.xlu0 %v968, 127
        %v1358 = vpop.permute.xlu0 %1357
        %1359 = vrot.lane.b32.xlu0 %v969, 127
        %v1360 = vpop.permute.xlu0 %1359
        %1361 = vrot.lane.b32.xlu0 %v970, 127
        %v1362 = vpop.permute.xlu0 %1361
        %1363 = vrot.lane.b32.xlu0 %v939, 127
        %v1364 = vpop.permute.xlu0 %1363
        %vm1365 = vcmask 1039360
        %v1366 = vsel %vm1365, %v1156, %v1158
        %v1367 = vsel %vm1365, %v1158, %v1160
        %v1368 = vsel %vm1365, %v1160, %v1162
        %v1369 = vsel %vm1365, %v1162, %v1164
        %v1370 = vsel %vm1365, %v1164, %v1166
        %v1371 = vsel %vm1365, %v1166, %v1168
        %v1372 = vsel %vm1365, %v1170, %v1172
        %v1373 = vsel %vm1365, %v1172, %v1174
        %v1374 = vsel %vm1365, %v1174, %v1176
        %v1375 = vsel %vm1365, %v1176, %v1178
        %v1376 = vsel %vm1365, %v1178, %v1180
        %v1377 = vsel %vm1365, %v1180, %v1182
        %v1378 = vsel %vm1365, %v1184, %v1186
        %v1379 = vsel %vm1365, %v1186, %v1188
        %v1380 = vsel %vm1365, %v1188, %v1190
        %v1381 = vsel %vm1365, %v1190, %v1192
        %v1382 = vsel %vm1365, %v1192, %v1194
        %v1383 = vsel %vm1365, %v1194, %v1196
        %v1384 = vsel %vm1365, %v1198, %v1200
        %v1385 = vsel %vm1365, %v1200, %v1202
        %v1386 = vsel %vm1365, %v1202, %v1204
        %v1387 = vsel %vm1365, %v1204, %v1206
        %v1388 = vsel %vm1365, %v1206, %v1208
        %v1389 = vsel %vm1365, %v1208, %v1210
        %v1390 = vsel %vm1365, %v1212, %v1214
        %v1391 = vsel %vm1365, %v1214, %v1216
        %v1392 = vsel %vm1365, %v1216, %v1218
        %v1393 = vsel %vm1365, %v1218, %v1220
        %v1394 = vsel %vm1365, %v1220, %v1222
        %v1395 = vsel %vm1365, %v1222, %v1224
        %v1396 = vsel %vm1365, %v1226, %v1228
        %v1397 = vsel %vm1365, %v1228, %v1230
        %v1398 = vsel %vm1365, %v1230, %v1232
        %v1399 = vsel %vm1365, %v1232, %v1234
        %v1400 = vsel %vm1365, %v1234, %v1236
        %v1401 = vsel %vm1365, %v1236, %v1238
        %v1402 = vsel %vm1365, %v1240, %v1242
        %v1403 = vsel %vm1365, %v1242, %v1244
        %v1404 = vsel %vm1365, %v1244, %v1246
        %v1405 = vsel %vm1365, %v1246, %v1248
        %v1406 = vsel %vm1365, %v1248, %v1250
        %v1407 = vsel %vm1365, %v1250, %v1252
        %v1408 = vsel %vm1365, %v1254, %v1256
        %v1409 = vsel %vm1365, %v1256, %v1258
        %v1410 = vsel %vm1365, %v1258, %v1260
        %v1411 = vsel %vm1365, %v1260, %v1262
        %v1412 = vsel %vm1365, %v1262, %v1264
        %v1413 = vsel %vm1365, %v1264, %v1266
        %v1414 = vsel %vm1365, %v1268, %v1270
        %v1415 = vsel %vm1365, %v1270, %v1272
        %v1416 = vsel %vm1365, %v1272, %v1274
        %v1417 = vsel %vm1365, %v1274, %v1276
        %v1418 = vsel %vm1365, %v1276, %v1278
        %v1419 = vsel %vm1365, %v1278, %v1280
        %v1420 = vsel %vm1365, %v1282, %v1284
        %v1421 = vsel %vm1365, %v1284, %v1286
        %v1422 = vsel %vm1365, %v1286, %v1288
        %v1423 = vsel %vm1365, %v1288, %v1290
        %v1424 = vsel %vm1365, %v1290, %v1292
        %v1425 = vsel %vm1365, %v1292, %v1294
        %v1426 = vsel %vm1365, %v1296, %v1298
        %v1427 = vsel %vm1365, %v1298, %v1300
        %v1428 = vsel %vm1365, %v1300, %v1302
        %v1429 = vsel %vm1365, %v1302, %v1304
        %v1430 = vsel %vm1365, %v1304, %v1306
        %v1431 = vsel %vm1365, %v1306, %v1308
        %v1432 = vsel %vm1365, %v1310, %v1312
        %v1433 = vsel %vm1365, %v1312, %v1314
        %v1434 = vsel %vm1365, %v1314, %v1316
        %v1435 = vsel %vm1365, %v1316, %v1318
        %v1436 = vsel %vm1365, %v1318, %v1320
        %v1437 = vsel %vm1365, %v1320, %v1322
        %v1438 = vsel %vm1365, %v1324, %v1326
        %v1439 = vsel %vm1365, %v1326, %v1328
        %v1440 = vsel %vm1365, %v1328, %v1330
        %v1441 = vsel %vm1365, %v1330, %v1332
        %v1442 = vsel %vm1365, %v1332, %v1334
        %v1443 = vsel %vm1365, %v1334, %v1336
        %v1444 = vsel %vm1365, %v1338, %v1340
        %v1445 = vsel %vm1365, %v1340, %v1342
        %v1446 = vsel %vm1365, %v1342, %v1344
        %v1447 = vsel %vm1365, %v1344, %v1346
        %v1448 = vsel %vm1365, %v1346, %v1348
        %v1449 = vsel %vm1365, %v1348, %v1350
        %v1450 = vsel %vm1365, %v1352, %v1354
        %v1451 = vsel %vm1365, %v1354, %v1356
        %v1452 = vsel %vm1365, %v1356, %v1358
        %v1453 = vsel %vm1365, %v1358, %v1360
        %v1454 = vsel %vm1365, %v1360, %v1362
        %v1455 = vsel %vm1365, %v1362, %v1364
        %vm1561 = vcmask 982016
        %v1563 = vsel %vm1561, %v1152, 0
        %v1566 = vsel %vm1561, %v1153, 0
        %v1569 = vsel %vm1561, %v1154, 0
        %1571 = vmatprep.subr.mxu0 %v1367
        %1572 = vmatpush1.msra.mxu0 %v1366
        %1573 = vmatprep.subr.mxu0 %v1373
        %1574 = vmatpush1.msra.mxu0 %v1372
        %1575 = vmatprep.subr.mxu0 %v1379
        %1576 = vmatpush1.msra.mxu0 %v1378
        %1577 = vmatprep.subr.mxu0 %v1385
        %1578 = vmatpush1.msra.mxu0 %v1384
        %1579 = vmatprep.subr.mxu0 %v1391
        %1580 = vmatpush1.msra.mxu0 %v1390
        %1581 = vmatprep.subr.mxu0 %v1397
        %1582 = vmatpush1.msra.mxu0 %v1396
        %1583 = vmatprep.subr.mxu0 %v1403
        %1584 = vmatpush1.msra.mxu0 %v1402
        %1585 = vmatprep.subr.mxu0 %v1409
        %1586 = vmatpush1.msra.mxu0 %v1408
        %1587 = vmatprep.subr.mxu0 %v1415
        %1588 = vmatpush1.msra.mxu0 %v1414
        %1589 = vmatprep.subr.mxu0 %v1421
        %1590 = vmatpush1.msra.mxu0 %v1420
        %1591 = vmatprep.subr.mxu0 %v1427
        %1592 = vmatpush1.msra.mxu0 %v1426
        %1593 = vmatprep.subr.mxu0 %v1433
        %1594 = vmatpush1.msra.mxu0 %v1432
        %1595 = vmatprep.subr.mxu0 %v1439
        %1596 = vmatpush1.msra.mxu0 %v1438
        %1597 = vmatprep.subr.mxu0 %v1445
        %1598 = vmatpush1.msra.mxu0 %v1444
        %1599 = vmatprep.subr.mxu0 %v1451
        %1600 = vmatpush1.msra.mxu0 %v1450
        %1601 = vmatprep.subr.mxu0 0.0
        %1602 = vmatpush1.msra.mxu0 0.0
        %1603 = vmatprep.subr.mxu0 0.0
        %1604 = vmatpush1.msra.mxu0 0.0
        %1605 = vmatprep.subr.mxu0 0.0
        %1606 = vmatpush1.msra.mxu0 0.0
        %1607 = vmatprep.subr.mxu0 0.0
        %1608 = vmatpush1.msra.mxu0 0.0
        %1609 = vmatprep.subr.mxu0 0.0
        %1610 = vmatpush1.msra.mxu0 0.0
        %1611 = vmatprep.subr.mxu0 0.0
        %1612 = vmatpush1.msra.mxu0 0.0
        %1613 = vmatprep.subr.mxu0 0.0
        %1614 = vmatpush1.msra.mxu0 0.0
        %1615 = vmatprep.subr.mxu0 0.0
        %1616 = vmatpush1.msra.mxu0 0.0
        %1617 = vmatprep.subr.mxu0 0.0
        %1618 = vmatpush1.msra.mxu0 0.0
        %1619 = vmatprep.subr.mxu0 0.0
        %1620 = vmatpush1.msra.mxu0 0.0
        %1621 = vmatprep.subr.mxu0 0.0
        %1622 = vmatpush1.msra.mxu0 0.0
        %1623 = vmatprep.subr.mxu0 0.0
        %1624 = vmatpush1.msra.mxu0 0.0
        %1625 = vmatprep.subr.mxu0 0.0
        %1626 = vmatpush1.msra.mxu0 0.0
        %1627 = vmatprep.subr.mxu0 0.0
        %1628 = vmatpush1.msra.mxu0 0.0
        %1629 = vmatprep.subr.mxu0 0.0
        %1630 = vmatpush1.msra.mxu0 0.0
        %1631 = vmatprep.subr.mxu0 0.0
        %1632 = vmatpush1.msra.mxu0 0.0
        %1633 = vmatprep.subr.mxu0 0.0
        %1634 = vmatpush1.msra.mxu0 0.0
        %1635 = vmatprep.mubr.f32.mxu0 0.0
        %1636 = vmatmul.mubr.f32.gmra.mrb[0].mxu0 %v1563
        %v1637 = vpop.f32.mrb[0].mxu0
        %v1638 = vadd.f32 0.0, %v1637
        %v1639 = vpop.f32.mrb[0].mxu0
        %v1640 = vadd.f32 0.0, %v1639
        %1641 = vmatprep.mubr.f32.mxu0 0.0
        %1642 = vmatmul.mubr.f32.gmra.mrb[0].mxu0 %v1566
        %v1643 = vpop.f32.mrb[0].mxu0
        %v1644 = vadd.f32 0.0, %v1643
        %v1645 = vpop.f32.mrb[0].mxu0
        %v1646 = vadd.f32 0.0, %v1645
        %1647 = vmatprep.mubr.f32.mxu0 0.0
        %1648 = vmatmul.mubr.f32.gmra.mrb[0].mxu0 %v1569
        %v1649 = vpop.f32.mrb[0].mxu0
        %v1650 = vadd.f32 0.0, %v1649
        %v1651 = vpop.f32.mrb[0].mxu0
        %v1652 = vadd.f32 0.0, %v1651
        %1653 = vdwg.mxu0
        %1654 = vmatprep.subr.mxu0 %v1369
        %1655 = vmatpush1.msra.mxu0 %v1368
        %1656 = vmatprep.subr.mxu0 %v1375
        %1657 = vmatpush1.msra.mxu0 %v1374
        %1658 = vmatprep.subr.mxu0 %v1381
        %1659 = vmatpush1.msra.mxu0 %v1380
        %1660 = vmatprep.subr.mxu0 %v1387
        %1661 = vmatpush1.msra.mxu0 %v1386
        %1662 = vmatprep.subr.mxu0 %v1393
        %1663 = vmatpush1.msra.mxu0 %v1392
        %1664 = vmatprep.subr.mxu0 %v1399
        %1665 = vmatpush1.msra.mxu0 %v1398
        %1666 = vmatprep.subr.mxu0 %v1405
        %1667 = vmatpush1.msra.mxu0 %v1404
        %1668 = vmatprep.subr.mxu0 %v1411
        %1669 = vmatpush1.msra.mxu0 %v1410
        %1670 = vmatprep.subr.mxu0 %v1417
        %1671 = vmatpush1.msra.mxu0 %v1416
        %1672 = vmatprep.subr.mxu0 %v1423
        %1673 = vmatpush1.msra.mxu0 %v1422
        %1674 = vmatprep.subr.mxu0 %v1429
        %1675 = vmatpush1.msra.mxu0 %v1428
        %1676 = vmatprep.subr.mxu0 %v1435
        %1677 = vmatpush1.msra.mxu0 %v1434
        %1678 = vmatprep.subr.mxu0 %v1441
        %1679 = vmatpush1.msra.mxu0 %v1440
        %1680 = vmatprep.subr.mxu0 %v1447
        %1681 = vmatpush1.msra.mxu0 %v1446
        %1682 = vmatprep.subr.mxu0 %v1453
        %1683 = vmatpush1.msra.mxu0 %v1452
        %1684 = vmatprep.subr.mxu0 0.0
        %1685 = vmatpush1.msra.mxu0 0.0
        %1686 = vmatprep.subr.mxu0 0.0
        %1687 = vmatpush1.msra.mxu0 0.0
        %1688 = vmatprep.subr.mxu0 0.0
        %1689 = vmatpush1.msra.mxu0 0.0
        %1690 = vmatprep.subr.mxu0 0.0
        %1691 = vmatpush1.msra.mxu0 0.0
        %1692 = vmatprep.subr.mxu0 0.0
        %1693 = vmatpush1.msra.mxu0 0.0
        %1694 = vmatprep.subr.mxu0 0.0
        %1695 = vmatpush1.msra.mxu0 0.0
        %1696 = vmatprep.subr.mxu0 0.0
        %1697 = vmatpush1.msra.mxu0 0.0
        %1698 = vmatprep.subr.mxu0 0.0
        %1699 = vmatpush1.msra.mxu0 0.0
        %1700 = vmatprep.subr.mxu0 0.0
        %1701 = vmatpush1.msra.mxu0 0.0
        %1702 = vmatprep.subr.mxu0 0.0
        %1703 = vmatpush1.msra.mxu0 0.0
        %1704 = vmatprep.subr.mxu0 0.0
        %1705 = vmatpush1.msra.mxu0 0.0
        %1706 = vmatprep.subr.mxu0 0.0
        %1707 = vmatpush1.msra.mxu0 0.0
        %1708 = vmatprep.subr.mxu0 0.0
        %1709 = vmatpush1.msra.mxu0 0.0
        %1710 = vmatprep.subr.mxu0 0.0
        %1711 = vmatpush1.msra.mxu0 0.0
        %1712 = vmatprep.subr.mxu0 0.0
        %1713 = vmatpush1.msra.mxu0 0.0
        %1714 = vmatprep.subr.mxu0 0.0
        %1715 = vmatpush1.msra.mxu0 0.0
        %1716 = vmatprep.subr.mxu0 0.0
        %1717 = vmatpush1.msra.mxu0 0.0
        %1718 = vmatprep.mubr.f32.mxu0 0.0
        %1719 = vmatmul.mubr.f32.gmra.mrb[0].mxu0 %v1563
        %v1720 = vpop.f32.mrb[0].mxu0
        %v1721 = vadd.f32 0.0, %v1720
        %v1722 = vpop.f32.mrb[0].mxu0
        %v1723 = vadd.f32 0.0, %v1722
        %1724 = vmatprep.mubr.f32.mxu0 0.0
        %1725 = vmatmul.mubr.f32.gmra.mrb[0].mxu0 %v1566
        %v1726 = vpop.f32.mrb[0].mxu0
        %v1727 = vadd.f32 0.0, %v1726
        %v1728 = vpop.f32.mrb[0].mxu0
        %v1729 = vadd.f32 0.0, %v1728
        %1730 = vmatprep.mubr.f32.mxu0 0.0
        %1731 = vmatmul.mubr.f32.gmra.mrb[0].mxu0 %v1569
        %v1732 = vpop.f32.mrb[0].mxu0
        %v1733 = vadd.f32 0.0, %v1732
        %v1734 = vpop.f32.mrb[0].mxu0
        %v1735 = vadd.f32 0.0, %v1734
        %1736 = vdwg.mxu0
        %1737 = vmatprep.subr.mxu0 %v1371
        %1738 = vmatpush1.msra.mxu0 %v1370
        %1739 = vmatprep.subr.mxu0 %v1377
        %1740 = vmatpush1.msra.mxu0 %v1376
        %1741 = vmatprep.subr.mxu0 %v1383
        %1742 = vmatpush1.msra.mxu0 %v1382
        %1743 = vmatprep.subr.mxu0 %v1389
        %1744 = vmatpush1.msra.mxu0 %v1388
        %1745 = vmatprep.subr.mxu0 %v1395
        %1746 = vmatpush1.msra.mxu0 %v1394
        %1747 = vmatprep.subr.mxu0 %v1401
        %1748 = vmatpush1.msra.mxu0 %v1400
        %1749 = vmatprep.subr.mxu0 %v1407
        %1750 = vmatpush1.msra.mxu0 %v1406
        %1751 = vmatprep.subr.mxu0 %v1413
        %1752 = vmatpush1.msra.mxu0 %v1412
        %1753 = vmatprep.subr.mxu0 %v1419
        %1754 = vmatpush1.msra.mxu0 %v1418
        %1755 = vmatprep.subr.mxu0 %v1425
        %1756 = vmatpush1.msra.mxu0 %v1424
        %1757 = vmatprep.subr.mxu0 %v1431
        %1758 = vmatpush1.msra.mxu0 %v1430
        %1759 = vmatprep.subr.mxu0 %v1437
        %1760 = vmatpush1.msra.mxu0 %v1436
        %1761 = vmatprep.subr.mxu0 %v1443
        %1762 = vmatpush1.msra.mxu0 %v1442
        %1763 = vmatprep.subr.mxu0 %v1449
        %1764 = vmatpush1.msra.mxu0 %v1448
        %1765 = vmatprep.subr.mxu0 %v1455
        %1766 = vmatpush1.msra.mxu0 %v1454
        %1767 = vmatprep.subr.mxu0 0.0
        %1768 = vmatpush1.msra.mxu0 0.0
        %1769 = vmatprep.subr.mxu0 0.0
        %1770 = vmatpush1.msra.mxu0 0.0
        %1771 = vmatprep.subr.mxu0 0.0
        %1772 = vmatpush1.msra.mxu0 0.0
        %1773 = vmatprep.subr.mxu0 0.0
        %1774 = vmatpush1.msra.mxu0 0.0
        %1775 = vmatprep.subr.mxu0 0.0
        %1776 = vmatpush1.msra.mxu0 0.0
        %1777 = vmatprep.subr.mxu0 0.0
        %1778 = vmatpush1.msra.mxu0 0.0
        %1779 = vmatprep.subr.mxu0 0.0
        %1780 = vmatpush1.msra.mxu0 0.0
        %1781 = vmatprep.subr.mxu0 0.0
        %1782 = vmatpush1.msra.mxu0 0.0
        %1783 = vmatprep.subr.mxu0 0.0
        %1784 = vmatpush1.msra.mxu0 0.0
        %1785 = vmatprep.subr.mxu0 0.0
        %1786 = vmatpush1.msra.mxu0 0.0
        %1787 = vmatprep.subr.mxu0 0.0
        %1788 = vmatpush1.msra.mxu0 0.0
        %1789 = vmatprep.subr.mxu0 0.0
        %1790 = vmatpush1.msra.mxu0 0.0
        %1791 = vmatprep.subr.mxu0 0.0
        %1792 = vmatpush1.msra.mxu0 0.0
        %1793 = vmatprep.subr.mxu0 0.0
        %1794 = vmatpush1.msra.mxu0 0.0
        %1795 = vmatprep.subr.mxu0 0.0
        %1796 = vmatpush1.msra.mxu0 0.0
        %1797 = vmatprep.subr.mxu0 0.0
        %1798 = vmatpush1.msra.mxu0 0.0
        %1799 = vmatprep.subr.mxu0 0.0
        %1800 = vmatpush1.msra.mxu0 0.0
        %1801 = vmatprep.mubr.f32.mxu0 0.0
        %1802 = vmatmul.mubr.f32.gmra.mrb[0].mxu0 %v1563
        %v1803 = vpop.f32.mrb[0].mxu0
        %v1804 = vadd.f32 0.0, %v1803
        %v1805 = vpop.f32.mrb[0].mxu0
        %v1806 = vadd.f32 0.0, %v1805
        %1807 = vmatprep.mubr.f32.mxu0 0.0
        %1808 = vmatmul.mubr.f32.gmra.mrb[0].mxu0 %v1566
        %v1809 = vpop.f32.mrb[0].mxu0
        %v1810 = vadd.f32 0.0, %v1809
        %v1811 = vpop.f32.mrb[0].mxu0
        %v1812 = vadd.f32 0.0, %v1811
        %1813 = vmatprep.mubr.f32.mxu0 0.0
        %1814 = vmatmul.mubr.f32.gmra.mrb[0].mxu0 %v1569
        %v1815 = vpop.f32.mrb[0].mxu0
        %v1816 = vadd.f32 0.0, %v1815
        %v1817 = vpop.f32.mrb[0].mxu0
        %v1818 = vadd.f32 0.0, %v1817
        %1819 = vdwg.mxu0
        %1820 = vmatprep.subr.mxu0 0.0
        %1821 = vmatpush1.msra.mxu0 %v1168
        %1822 = vmatprep.subr.mxu0 0.0
        %1823 = vmatpush1.msra.mxu0 %v1182
        %1824 = vmatprep.subr.mxu0 0.0
        %1825 = vmatpush1.msra.mxu0 %v1196
        %1826 = vmatprep.subr.mxu0 0.0
        %1827 = vmatpush1.msra.mxu0 %v1210
        %1828 = vmatprep.subr.mxu0 0.0
        %1829 = vmatpush1.msra.mxu0 %v1224
        %1830 = vmatprep.subr.mxu0 0.0
        %1831 = vmatpush1.msra.mxu0 %v1238
        %1832 = vmatprep.subr.mxu0 0.0
        %1833 = vmatpush1.msra.mxu0 %v1252
        %1834 = vmatprep.subr.mxu0 0.0
        %1835 = vmatpush1.msra.mxu0 %v1266
        %1836 = vmatprep.subr.mxu0 0.0
        %1837 = vmatpush1.msra.mxu0 %v1280
        %1838 = vmatprep.subr.mxu0 0.0
        %1839 = vmatpush1.msra.mxu0 %v1294
        %1840 = vmatprep.subr.mxu0 0.0
        %1841 = vmatpush1.msra.mxu0 %v1308
        %1842 = vmatprep.subr.mxu0 0.0
        %1843 = vmatpush1.msra.mxu0 %v1322
        %1844 = vmatprep.subr.mxu0 0.0
        %1845 = vmatpush1.msra.mxu0 %v1336
        %1846 = vmatprep.subr.mxu0 0.0
        %1847 = vmatpush1.msra.mxu0 %v1350
        %1848 = vmatprep.subr.mxu0 0.0
        %1849 = vmatpush1.msra.mxu0 %v1364
        %1850 = vmatprep.subr.mxu0 0.0
        %1851 = vmatpush1.msra.mxu0 0.0
        %1852 = vmatprep.subr.mxu0 0.0
        %1853 = vmatpush1.msra.mxu0 0.0
        %1854 = vmatprep.subr.mxu0 0.0
        %1855 = vmatpush1.msra.mxu0 0.0
        %1856 = vmatprep.subr.mxu0 0.0
        %1857 = vmatpush1.msra.mxu0 0.0
        %1858 = vmatprep.subr.mxu0 0.0
        %1859 = vmatpush1.msra.mxu0 0.0
        %1860 = vmatprep.subr.mxu0 0.0
        %1861 = vmatpush1.msra.mxu0 0.0
        %1862 = vmatprep.subr.mxu0 0.0
        %1863 = vmatpush1.msra.mxu0 0.0
        %1864 = vmatprep.subr.mxu0 0.0
        %1865 = vmatpush1.msra.mxu0 0.0
        %1866 = vmatprep.subr.mxu0 0.0
        %1867 = vmatpush1.msra.mxu0 0.0
        %1868 = vmatprep.subr.mxu0 0.0
        %1869 = vmatpush1.msra.mxu0 0.0
        %1870 = vmatprep.subr.mxu0 0.0
        %1871 = vmatpush1.msra.mxu0 0.0
        %1872 = vmatprep.subr.mxu0 0.0
        %1873 = vmatpush1.msra.mxu0 0.0
        %1874 = vmatprep.subr.mxu0 0.0
        %1875 = vmatpush1.msra.mxu0 0.0
        %1876 = vmatprep.subr.mxu0 0.0
        %1877 = vmatpush1.msra.mxu0 0.0
        %1878 = vmatprep.subr.mxu0 0.0
        %1879 = vmatpush1.msra.mxu0 0.0
        %1880 = vmatprep.subr.mxu0 0.0
        %1881 = vmatpush1.msra.mxu0 0.0
        %1882 = vmatprep.subr.mxu0 0.0
        %1883 = vmatpush1.msra.mxu0 0.0
        %1884 = vmatprep.mubr.f32.mxu0 0.0
        %1885 = vmatmul.mubr.f32.gmra.mrb[0].mxu0 %v1563
        %v1886 = vpop.f32.mrb[0].mxu0
        %v1887 = vadd.f32 0.0, %v1886
        %v1888 = vpop.f32.mrb[0].mxu0
        %1889 = vmatprep.mubr.f32.mxu0 0.0
        %1890 = vmatmul.mubr.f32.gmra.mrb[0].mxu0 %v1566
        %v1891 = vpop.f32.mrb[0].mxu0
        %v1892 = vadd.f32 0.0, %v1891
        %v1893 = vpop.f32.mrb[0].mxu0
        %1894 = vmatprep.mubr.f32.mxu0 0.0
        %1895 = vmatmul.mubr.f32.gmra.mrb[0].mxu0 %v1569
        %v1896 = vpop.f32.mrb[0].mxu0
        %v1897 = vadd.f32 0.0, %v1896
        %v1898 = vpop.f32.mrb[0].mxu0
        %1899 = vdwg.mxu0
        %v1901 = vsel %vm1561, %v1148, 0
        %v1904 = vsel %vm1561, %v1149, 0
        %v1907 = vsel %vm1561, %v1150, 0
        %1909 = vmatprep.subr.mxu0 %v1044
        %1910 = vmatpush1.msra.mxu0 %v1043
        %1911 = vmatprep.subr.mxu0 %v1051
        %1912 = vmatpush1.msra.mxu0 %v1050
        %1913 = vmatprep.subr.mxu0 %v1058
        %1914 = vmatpush1.msra.mxu0 %v1057
        %1915 = vmatprep.subr.mxu0 %v1065
        %1916 = vmatpush1.msra.mxu0 %v1064
        %1917 = vmatprep.subr.mxu0 %v1072
        %1918 = vmatpush1.msra.mxu0 %v1071
        %1919 = vmatprep.subr.mxu0 %v1079
        %1920 = vmatpush1.msra.mxu0 %v1078
        %1921 = vmatprep.subr.mxu0 %v1086
        %1922 = vmatpush1.msra.mxu0 %v1085
        %1923 = vmatprep.subr.mxu0 %v1093
        %1924 = vmatpush1.msra.mxu0 %v1092
        %1925 = vmatprep.subr.mxu0 %v1100
        %1926 = vmatpush1.msra.mxu0 %v1099
        %1927 = vmatprep.subr.mxu0 %v1107
        %1928 = vmatpush1.msra.mxu0 %v1106
        %1929 = vmatprep.subr.mxu0 %v1114
        %1930 = vmatpush1.msra.mxu0 %v1113
        %1931 = vmatprep.subr.mxu0 %v1121
        %1932 = vmatpush1.msra.mxu0 %v1120
        %1933 = vmatprep.subr.mxu0 %v1128
        %1934 = vmatpush1.msra.mxu0 %v1127
        %1935 = vmatprep.subr.mxu0 %v1135
        %1936 = vmatpush1.msra.mxu0 %v1134
        %1937 = vmatprep.subr.mxu0 %v1142
        %1938 = vmatpush1.msra.mxu0 %v1141
        %1939 = vmatprep.subr.mxu0 0.0
        %1940 = vmatpush1.msra.mxu0 0.0
        %1941 = vmatprep.subr.mxu0 0.0
        %1942 = vmatpush1.msra.mxu0 0.0
        %1943 = vmatprep.subr.mxu0 0.0
        %1944 = vmatpush1.msra.mxu0 0.0
        %1945 = vmatprep.subr.mxu0 0.0
        %1946 = vmatpush1.msra.mxu0 0.0
        %1947 = vmatprep.subr.mxu0 0.0
        %1948 = vmatpush1.msra.mxu0 0.0
        %1949 = vmatprep.subr.mxu0 0.0
        %1950 = vmatpush1.msra.mxu0 0.0
        %1951 = vmatprep.subr.mxu0 0.0
        %1952 = vmatpush1.msra.mxu0 0.0
        %1953 = vmatprep.subr.mxu0 0.0
        %1954 = vmatpush1.msra.mxu0 0.0
        %1955 = vmatprep.subr.mxu0 0.0
        %1956 = vmatpush1.msra.mxu0 0.0
        %1957 = vmatprep.subr.mxu0 0.0
        %1958 = vmatpush1.msra.mxu0 0.0
        %1959 = vmatprep.subr.mxu0 0.0
        %1960 = vmatpush1.msra.mxu0 0.0
        %1961 = vmatprep.subr.mxu0 0.0
        %1962 = vmatpush1.msra.mxu0 0.0
        %1963 = vmatprep.subr.mxu0 0.0
        %1964 = vmatpush1.msra.mxu0 0.0
        %1965 = vmatprep.subr.mxu0 0.0
        %1966 = vmatpush1.msra.mxu0 0.0
        %1967 = vmatprep.subr.mxu0 0.0
        %1968 = vmatpush1.msra.mxu0 0.0
        %1969 = vmatprep.subr.mxu0 0.0
        %1970 = vmatpush1.msra.mxu0 0.0
        %1971 = vmatprep.subr.mxu0 0.0
        %1972 = vmatpush1.msra.mxu0 0.0
        %1973 = vmatprep.mubr.f32.mxu0 0.0
        %1974 = vmatmul.mubr.f32.gmra.mrb[0].mxu0 %v1901
        %v1975 = vpop.f32.mrb[0].mxu0
        %v1976 = vadd.f32 %v1638, %v1975
        %v1977 = vpop.f32.mrb[0].mxu0
        %v1978 = vadd.f32 %v1640, %v1977
        %1979 = vmatprep.mubr.f32.mxu0 0.0
        %1980 = vmatmul.mubr.f32.gmra.mrb[0].mxu0 %v1904
        %v1981 = vpop.f32.mrb[0].mxu0
        %v1982 = vadd.f32 %v1644, %v1981
        %v1983 = vpop.f32.mrb[0].mxu0
        %v1984 = vadd.f32 %v1646, %v1983
        %1985 = vmatprep.mubr.f32.mxu0 0.0
        %1986 = vmatmul.mubr.f32.gmra.mrb[0].mxu0 %v1907
        %v1987 = vpop.f32.mrb[0].mxu0
        %v1988 = vadd.f32 %v1650, %v1987
        %v1989 = vpop.f32.mrb[0].mxu0
        %v1990 = vadd.f32 %v1652, %v1989
        %1991 = vdwg.mxu0
        %1992 = vmatprep.subr.mxu0 %v1046
        %1993 = vmatpush1.msra.mxu0 %v1045
        %1994 = vmatprep.subr.mxu0 %v1053
        %1995 = vmatpush1.msra.mxu0 %v1052
        %1996 = vmatprep.subr.mxu0 %v1060
        %1997 = vmatpush1.msra.mxu0 %v1059
        %1998 = vmatprep.subr.mxu0 %v1067
        %1999 = vmatpush1.msra.mxu0 %v1066
        %2000 = vmatprep.subr.mxu0 %v1074
        %2001 = vmatpush1.msra.mxu0 %v1073
        %2002 = vmatprep.subr.mxu0 %v1081
        %2003 = vmatpush1.msra.mxu0 %v1080
        %2004 = vmatprep.subr.mxu0 %v1088
        %2005 = vmatpush1.msra.mxu0 %v1087
        %2006 = vmatprep.subr.mxu0 %v1095
        %2007 = vmatpush1.msra.mxu0 %v1094
        %2008 = vmatprep.subr.mxu0 %v1102
        %2009 = vmatpush1.msra.mxu0 %v1101
        %2010 = vmatprep.subr.mxu0 %v1109
        %2011 = vmatpush1.msra.mxu0 %v1108
        %2012 = vmatprep.subr.mxu0 %v1116
        %2013 = vmatpush1.msra.mxu0 %v1115
        %2014 = vmatprep.subr.mxu0 %v1123
        %2015 = vmatpush1.msra.mxu0 %v1122
        %2016 = vmatprep.subr.mxu0 %v1130
        %2017 = vmatpush1.msra.mxu0 %v1129
        %2018 = vmatprep.subr.mxu0 %v1137
        %2019 = vmatpush1.msra.mxu0 %v1136
        %2020 = vmatprep.subr.mxu0 %v1144
        %2021 = vmatpush1.msra.mxu0 %v1143
        %2022 = vmatprep.subr.mxu0 0.0
        %2023 = vmatpush1.msra.mxu0 0.0
        %2024 = vmatprep.subr.mxu0 0.0
        %2025 = vmatpush1.msra.mxu0 0.0
        %2026 = vmatprep.subr.mxu0 0.0
        %2027 = vmatpush1.msra.mxu0 0.0
        %2028 = vmatprep.subr.mxu0 0.0
        %2029 = vmatpush1.msra.mxu0 0.0
        %2030 = vmatprep.subr.mxu0 0.0
        %2031 = vmatpush1.msra.mxu0 0.0
        %2032 = vmatprep.subr.mxu0 0.0
        %2033 = vmatpush1.msra.mxu0 0.0
        %2034 = vmatprep.subr.mxu0 0.0
        %2035 = vmatpush1.msra.mxu0 0.0
        %2036 = vmatprep.subr.mxu0 0.0
        %2037 = vmatpush1.msra.mxu0 0.0
        %2038 = vmatprep.subr.mxu0 0.0
        %2039 = vmatpush1.msra.mxu0 0.0
        %2040 = vmatprep.subr.mxu0 0.0
        %2041 = vmatpush1.msra.mxu0 0.0
        %2042 = vmatprep.subr.mxu0 0.0
        %2043 = vmatpush1.msra.mxu0 0.0
        %2044 = vmatprep.subr.mxu0 0.0
        %2045 = vmatpush1.msra.mxu0 0.0
        %2046 = vmatprep.subr.mxu0 0.0
        %2047 = vmatpush1.msra.mxu0 0.0
        %2048 = vmatprep.subr.mxu0 0.0
        %2049 = vmatpush1.msra.mxu0 0.0
        %2050 = vmatprep.subr.mxu0 0.0
        %2051 = vmatpush1.msra.mxu0 0.0
        %2052 = vmatprep.subr.mxu0 0.0
        %2053 = vmatpush1.msra.mxu0 0.0
        %2054 = vmatprep.subr.mxu0 0.0
        %2055 = vmatpush1.msra.mxu0 0.0
        %2056 = vmatprep.mubr.f32.mxu0 0.0
        %2057 = vmatmul.mubr.f32.gmra.mrb[0].mxu0 %v1901
        %v2058 = vpop.f32.mrb[0].mxu0
        %v2059 = vadd.f32 %v1721, %v2058
        %v2060 = vpop.f32.mrb[0].mxu0
        %v2061 = vadd.f32 %v1723, %v2060
        %2062 = vmatprep.mubr.f32.mxu0 0.0
        %2063 = vmatmul.mubr.f32.gmra.mrb[0].mxu0 %v1904
        %v2064 = vpop.f32.mrb[0].mxu0
        %v2065 = vadd.f32 %v1727, %v2064
        %v2066 = vpop.f32.mrb[0].mxu0
        %v2067 = vadd.f32 %v1729, %v2066
        %2068 = vmatprep.mubr.f32.mxu0 0.0
        %2069 = vmatmul.mubr.f32.gmra.mrb[0].mxu0 %v1907
        %v2070 = vpop.f32.mrb[0].mxu0
        %v2071 = vadd.f32 %v1733, %v2070
        %v2072 = vpop.f32.mrb[0].mxu0
        %v2073 = vadd.f32 %v1735, %v2072
        %2074 = vdwg.mxu0
        %2075 = vmatprep.subr.mxu0 %v1048
        %2076 = vmatpush1.msra.mxu0 %v1047
        %2077 = vmatprep.subr.mxu0 %v1055
        %2078 = vmatpush1.msra.mxu0 %v1054
        %2079 = vmatprep.subr.mxu0 %v1062
        %2080 = vmatpush1.msra.mxu0 %v1061
        %2081 = vmatprep.subr.mxu0 %v1069
        %2082 = vmatpush1.msra.mxu0 %v1068
        %2083 = vmatprep.subr.mxu0 %v1076
        %2084 = vmatpush1.msra.mxu0 %v1075
        %2085 = vmatprep.subr.mxu0 %v1083
        %2086 = vmatpush1.msra.mxu0 %v1082
        %2087 = vmatprep.subr.mxu0 %v1090
        %2088 = vmatpush1.msra.mxu0 %v1089
        %2089 = vmatprep.subr.mxu0 %v1097
        %2090 = vmatpush1.msra.mxu0 %v1096
        %2091 = vmatprep.subr.mxu0 %v1104
        %2092 = vmatpush1.msra.mxu0 %v1103
        %2093 = vmatprep.subr.mxu0 %v1111
        %2094 = vmatpush1.msra.mxu0 %v1110
        %2095 = vmatprep.subr.mxu0 %v1118
        %2096 = vmatpush1.msra.mxu0 %v1117
        %2097 = vmatprep.subr.mxu0 %v1125
        %2098 = vmatpush1.msra.mxu0 %v1124
        %2099 = vmatprep.subr.mxu0 %v1132
        %2100 = vmatpush1.msra.mxu0 %v1131
        %2101 = vmatprep.subr.mxu0 %v1139
        %2102 = vmatpush1.msra.mxu0 %v1138
        %2103 = vmatprep.subr.mxu0 %v1146
        %2104 = vmatpush1.msra.mxu0 %v1145
        %2105 = vmatprep.subr.mxu0 0.0
        %2106 = vmatpush1.msra.mxu0 0.0
        %2107 = vmatprep.subr.mxu0 0.0
        %2108 = vmatpush1.msra.mxu0 0.0
        %2109 = vmatprep.subr.mxu0 0.0
        %2110 = vmatpush1.msra.mxu0 0.0
        %2111 = vmatprep.subr.mxu0 0.0
        %2112 = vmatpush1.msra.mxu0 0.0
        %2113 = vmatprep.subr.mxu0 0.0
        %2114 = vmatpush1.msra.mxu0 0.0
        %2115 = vmatprep.subr.mxu0 0.0
        %2116 = vmatpush1.msra.mxu0 0.0
        %2117 = vmatprep.subr.mxu0 0.0
        %2118 = vmatpush1.msra.mxu0 0.0
        %2119 = vmatprep.subr.mxu0 0.0
        %2120 = vmatpush1.msra.mxu0 0.0
        %2121 = vmatprep.subr.mxu0 0.0
        %2122 = vmatpush1.msra.mxu0 0.0
        %2123 = vmatprep.subr.mxu0 0.0
        %2124 = vmatpush1.msra.mxu0 0.0
        %2125 = vmatprep.subr.mxu0 0.0
        %2126 = vmatpush1.msra.mxu0 0.0
        %2127 = vmatprep.subr.mxu0 0.0
        %2128 = vmatpush1.msra.mxu0 0.0
        %2129 = vmatprep.subr.mxu0 0.0
        %2130 = vmatpush1.msra.mxu0 0.0
        %2131 = vmatprep.subr.mxu0 0.0
        %2132 = vmatpush1.msra.mxu0 0.0
        %2133 = vmatprep.subr.mxu0 0.0
        %2134 = vmatpush1.msra.mxu0 0.0
        %2135 = vmatprep.subr.mxu0 0.0
        %2136 = vmatpush1.msra.mxu0 0.0
        %2137 = vmatprep.subr.mxu0 0.0
        %2138 = vmatpush1.msra.mxu0 0.0
        %2139 = vmatprep.mubr.f32.mxu0 0.0
        %2140 = vmatmul.mubr.f32.gmra.mrb[0].mxu0 %v1901
        %v2141 = vpop.f32.mrb[0].mxu0
        %v2142 = vadd.f32 %v1804, %v2141
        %v2143 = vpop.f32.mrb[0].mxu0
        %v2144 = vadd.f32 %v1806, %v2143
        %2145 = vmatprep.mubr.f32.mxu0 0.0
        %2146 = vmatmul.mubr.f32.gmra.mrb[0].mxu0 %v1904
        %v2147 = vpop.f32.mrb[0].mxu0
        %v2148 = vadd.f32 %v1810, %v2147
        %v2149 = vpop.f32.mrb[0].mxu0
        %v2150 = vadd.f32 %v1812, %v2149
        %2151 = vmatprep.mubr.f32.mxu0 0.0
        %2152 = vmatmul.mubr.f32.gmra.mrb[0].mxu0 %v1907
        %v2153 = vpop.f32.mrb[0].mxu0
        %v2154 = vadd.f32 %v1816, %v2153
        %v2155 = vpop.f32.mrb[0].mxu0
        %v2156 = vadd.f32 %v1818, %v2155
        %2157 = vdwg.mxu0
        %2158 = vmatprep.subr.mxu0 0.0
        %2159 = vmatpush1.msra.mxu0 %v1049
        %2160 = vmatprep.subr.mxu0 0.0
        %2161 = vmatpush1.msra.mxu0 %v1056
        %2162 = vmatprep.subr.mxu0 0.0
        %2163 = vmatpush1.msra.mxu0 %v1063
        %2164 = vmatprep.subr.mxu0 0.0
        %2165 = vmatpush1.msra.mxu0 %v1070
        %2166 = vmatprep.subr.mxu0 0.0
        %2167 = vmatpush1.msra.mxu0 %v1077
        %2168 = vmatprep.subr.mxu0 0.0
        %2169 = vmatpush1.msra.mxu0 %v1084
        %2170 = vmatprep.subr.mxu0 0.0
        %2171 = vmatpush1.msra.mxu0 %v1091
        %2172 = vmatprep.subr.mxu0 0.0
        %2173 = vmatpush1.msra.mxu0 %v1098
        %2174 = vmatprep.subr.mxu0 0.0
        %2175 = vmatpush1.msra.mxu0 %v1105
        %2176 = vmatprep.subr.mxu0 0.0
        %2177 = vmatpush1.msra.mxu0 %v1112
        %2178 = vmatprep.subr.mxu0 0.0
        %2179 = vmatpush1.msra.mxu0 %v1119
        %2180 = vmatprep.subr.mxu0 0.0
        %2181 = vmatpush1.msra.mxu0 %v1126
        %2182 = vmatprep.subr.mxu0 0.0
        %2183 = vmatpush1.msra.mxu0 %v1133
        %2184 = vmatprep.subr.mxu0 0.0
        %2185 = vmatpush1.msra.mxu0 %v1140
        %2186 = vmatprep.subr.mxu0 0.0
        %2187 = vmatpush1.msra.mxu0 %v1147
        %2188 = vmatprep.subr.mxu0 0.0
        %2189 = vmatpush1.msra.mxu0 0.0
        %2190 = vmatprep.subr.mxu0 0.0
        %2191 = vmatpush1.msra.mxu0 0.0
        %2192 = vmatprep.subr.mxu0 0.0
        %2193 = vmatpush1.msra.mxu0 0.0
        %2194 = vmatprep.subr.mxu0 0.0
        %2195 = vmatpush1.msra.mxu0 0.0
        %2196 = vmatprep.subr.mxu0 0.0
        %2197 = vmatpush1.msra.mxu0 0.0
        %2198 = vmatprep.subr.mxu0 0.0
        %2199 = vmatpush1.msra.mxu0 0.0
        %2200 = vmatprep.subr.mxu0 0.0
        %2201 = vmatpush1.msra.mxu0 0.0
        %2202 = vmatprep.subr.mxu0 0.0
        %2203 = vmatpush1.msra.mxu0 0.0
        %2204 = vmatprep.subr.mxu0 0.0
        %2205 = vmatpush1.msra.mxu0 0.0
        %2206 = vmatprep.subr.mxu0 0.0
        %2207 = vmatpush1.msra.mxu0 0.0
        %2208 = vmatprep.subr.mxu0 0.0
        %2209 = vmatpush1.msra.mxu0 0.0
        %2210 = vmatprep.subr.mxu0 0.0
        %2211 = vmatpush1.msra.mxu0 0.0
        %2212 = vmatprep.subr.mxu0 0.0
        %2213 = vmatpush1.msra.mxu0 0.0
        %2214 = vmatprep.subr.mxu0 0.0
        %2215 = vmatpush1.msra.mxu0 0.0
        %2216 = vmatprep.subr.mxu0 0.0
        %2217 = vmatpush1.msra.mxu0 0.0
        %2218 = vmatprep.subr.mxu0 0.0
        %2219 = vmatpush1.msra.mxu0 0.0
        %2220 = vmatprep.subr.mxu0 0.0
        %2221 = vmatpush1.msra.mxu0 0.0
        %2222 = vmatprep.mubr.f32.mxu0 0.0
        %2223 = vmatmul.mubr.f32.gmra.mrb[0].mxu0 %v1901
        %v2224 = vpop.f32.mrb[0].mxu0
        %v2225 = vadd.f32 %v1887, %v2224
        %v2226 = vpop.f32.mrb[0].mxu0
        %2227 = vmatprep.mubr.f32.mxu0 0.0
        %2228 = vmatmul.mubr.f32.gmra.mrb[0].mxu0 %v1904
        %v2229 = vpop.f32.mrb[0].mxu0
        %v2230 = vadd.f32 %v1892, %v2229
        %v2231 = vpop.f32.mrb[0].mxu0
        %2232 = vmatprep.mubr.f32.mxu0 0.0
        %2233 = vmatmul.mubr.f32.gmra.mrb[0].mxu0 %v1907
        %v2234 = vpop.f32.mrb[0].mxu0
        %v2235 = vadd.f32 %v1897, %v2234
        %v2236 = vpop.f32.mrb[0].mxu0
        %2237 = vdwg.mxu0
        %s2238 = scalar_lea.vmem %s4, 1
        %v2239 = vld [vmem:[%s2238] ss:$2 sm:$0x7f]
        %v2241 = vlaneseq
        %v2242 = vshrl.u32 %v2241, 7
        %v2243 = vsub.s32 0, %v2242
        %v2244 = vrot.slane %v2239, %v2243
        %v2245 = vlaneseq
        %v2246 = vshrl.u32 %v2245, 7
        %v2247 = vsub.s32 1, %v2246
        %v2248 = vrot.slane %v2239, %v2247
        %v2249 = vlaneseq
        %v2250 = vshrl.u32 %v2249, 7
        %v2251 = vsub.s32 2, %v2250
        %v2252 = vrot.slane %v2239, %v2251
        %v2253 = vlaneseq
        %v2254 = vshrl.u32 %v2253, 7
        %v2255 = vsub.s32 3, %v2254
        %v2256 = vrot.slane %v2239, %v2255
        %v2257 = vlaneseq
        %v2258 = vshrl.u32 %v2257, 7
        %v2259 = vsub.s32 4, %v2258
        %v2260 = vrot.slane %v2239, %v2259
        %v2261 = vlaneseq
        %v2262 = vshrl.u32 %v2261, 7
        %v2263 = vsub.s32 5, %v2262
        %v2264 = vrot.slane %v2239, %v2263
        %v2265 = vlaneseq
        %v2266 = vshrl.u32 %v2265, 7
        %v2267 = vsub.s32 6, %v2266
        %v2268 = vrot.slane %v2239, %v2267
        %2269 = vrot.lane.b32.xlu0 %v2244, 2
        %v2270 = vpop.permute.xlu0 %2269
        %2271 = vrot.lane.b32.xlu0 %v2248, 2
        %v2272 = vpop.permute.xlu0 %2271
        %2273 = vrot.lane.b32.xlu0 %v2252, 2
        %v2274 = vpop.permute.xlu0 %2273
        %2275 = vrot.lane.b32.xlu0 %v2256, 2
        %v2276 = vpop.permute.xlu0 %2275
        %2277 = vrot.lane.b32.xlu0 %v2260, 2
        %v2278 = vpop.permute.xlu0 %2277
        %2279 = vrot.lane.b32.xlu0 %v2264, 2
        %v2280 = vpop.permute.xlu0 %2279
        %2281 = vrot.lane.b32.xlu0 %v2268, 2
        %v2282 = vpop.permute.xlu0 %2281
        %vm2283 = vcmask 15360
        %v2284 = vsel %vm2283, %v2270, %v2272
        %v2285 = vsel %vm2283, %v2272, %v2274
        %v2286 = vsel %vm2283, %v2274, %v2276
        %v2287 = vsel %vm2283, %v2276, %v2278
        %v2288 = vsel %vm2283, %v2278, %v2280
        %v2289 = vsel %vm2283, %v2280, %v2282
        %v2297 = vmul.f32 %v664, %v2270
        %v2298 = vmul.f32 %v665, %v2284
        %v2299 = vmul.f32 %v666, %v2285
        %v2300 = vmul.f32 %v667, %v2286
        %v2301 = vmul.f32 %v668, %v2287
        %v2302 = vmul.f32 %v669, %v2288
        %v2303 = vmul.f32 %v670, %v2289
        %v2304 = vmul.f32 %v671, %v2270
        %v2305 = vmul.f32 %v672, %v2284
        %v2306 = vmul.f32 %v673, %v2285
        %v2307 = vmul.f32 %v674, %v2286
        %v2308 = vmul.f32 %v675, %v2287
        %v2309 = vmul.f32 %v676, %v2288
        %v2310 = vmul.f32 %v677, %v2289
        %v2311 = vmul.f32 %v678, %v2270
        %v2312 = vmul.f32 %v679, %v2284
        %v2313 = vmul.f32 %v680, %v2285
        %v2314 = vmul.f32 %v681, %v2286
        %v2315 = vmul.f32 %v682, %v2287
        %v2316 = vmul.f32 %v683, %v2288
        %v2317 = vmul.f32 %v684, %v2289
        %v2318 = vmul.f32 %v685, %v2270
        %v2319 = vmul.f32 %v686, %v2284
        %v2320 = vmul.f32 %v687, %v2285
        %v2321 = vmul.f32 %v688, %v2286
        %v2322 = vmul.f32 %v689, %v2287
        %v2323 = vmul.f32 %v690, %v2288
        %v2324 = vmul.f32 %v691, %v2289
        %v2325 = vmul.f32 %v692, %v2270
        %v2326 = vmul.f32 %v693, %v2284
        %v2327 = vmul.f32 %v694, %v2285
        %v2328 = vmul.f32 %v695, %v2286
        %v2329 = vmul.f32 %v696, %v2287
        %v2330 = vmul.f32 %v697, %v2288
        %v2331 = vmul.f32 %v698, %v2289
        %v2332 = vmul.f32 %v805, %v2270
        %v2333 = vmul.f32 %v806, %v2284
        %v2334 = vmul.f32 %v807, %v2285
        %v2335 = vmul.f32 %v808, %v2286
        %v2336 = vmul.f32 %v809, %v2287
        %v2337 = vmul.f32 %v810, %v2288
        %v2338 = vmul.f32 %v747, %v2289
        %v2339 = vmul.f32 %v811, %v2270
        %v2340 = vmul.f32 %v812, %v2284
        %v2341 = vmul.f32 %v813, %v2285
        %v2342 = vmul.f32 %v814, %v2286
        %v2343 = vmul.f32 %v815, %v2287
        %v2344 = vmul.f32 %v816, %v2288
        %v2345 = vmul.f32 %v761, %v2289
        %v2346 = vmul.f32 %v817, %v2270
        %v2347 = vmul.f32 %v818, %v2284
        %v2348 = vmul.f32 %v819, %v2285
        %v2349 = vmul.f32 %v820, %v2286
        %v2350 = vmul.f32 %v821, %v2287
        %v2351 = vmul.f32 %v822, %v2288
        %v2352 = vmul.f32 %v775, %v2289
        %v2353 = vmul.f32 %v823, %v2270
        %v2354 = vmul.f32 %v824, %v2284
        %v2355 = vmul.f32 %v825, %v2285
        %v2356 = vmul.f32 %v826, %v2286
        %v2357 = vmul.f32 %v827, %v2287
        %v2358 = vmul.f32 %v828, %v2288
        %v2359 = vmul.f32 %v789, %v2289
        %v2360 = vmul.f32 %v829, %v2270
        %v2361 = vmul.f32 %v830, %v2284
        %v2362 = vmul.f32 %v831, %v2285
        %v2363 = vmul.f32 %v832, %v2286
        %v2364 = vmul.f32 %v833, %v2287
        %v2365 = vmul.f32 %v834, %v2288
        %v2366 = vmul.f32 %v803, %v2289
        %v2367 = vmul.f32 %v941, %v2270
        %v2368 = vmul.f32 %v942, %v2284
        %v2369 = vmul.f32 %v943, %v2285
        %v2370 = vmul.f32 %v944, %v2286
        %v2371 = vmul.f32 %v945, %v2287
        %v2372 = vmul.f32 %v946, %v2288
        %v2373 = vmul.f32 %v883, %v2289
        %v2374 = vmul.f32 %v947, %v2270
        %v2375 = vmul.f32 %v948, %v2284
        %v2376 = vmul.f32 %v949, %v2285
        %v2377 = vmul.f32 %v950, %v2286
        %v2378 = vmul.f32 %v951, %v2287
        %v2379 = vmul.f32 %v952, %v2288
        %v2380 = vmul.f32 %v897, %v2289
        %v2381 = vmul.f32 %v953, %v2270
        %v2382 = vmul.f32 %v954, %v2284
        %v2383 = vmul.f32 %v955, %v2285
        %v2384 = vmul.f32 %v956, %v2286
        %v2385 = vmul.f32 %v957, %v2287
        %v2386 = vmul.f32 %v958, %v2288
        %v2387 = vmul.f32 %v911, %v2289
        %v2388 = vmul.f32 %v959, %v2270
        %v2389 = vmul.f32 %v960, %v2284
        %v2390 = vmul.f32 %v961, %v2285
        %v2391 = vmul.f32 %v962, %v2286
        %v2392 = vmul.f32 %v963, %v2287
        %v2393 = vmul.f32 %v964, %v2288
        %v2394 = vmul.f32 %v925, %v2289
        %v2395 = vmul.f32 %v965, %v2270
        %v2396 = vmul.f32 %v966, %v2284
        %v2397 = vmul.f32 %v967, %v2285
        %v2398 = vmul.f32 %v968, %v2286
        %v2399 = vmul.f32 %v969, %v2287
        %v2400 = vmul.f32 %v970, %v2288
        %v2401 = vmul.f32 %v939, %v2289
        %s2402 = scalar_lea.vmem %s2, 48
        %v2403 = vld [vmem:[%s2402] sm:$0xff]
        %v2404 = vld [vmem:[%s2402 + $0x8] sm:$0xff]
        %v2405 = vld [vmem:[%s2402 + $0x10] sm:$0xff]
        %2511 = vrot.lane.b32.xlu0 %v2297, 126
        %v2512 = vpop.permute.xlu0 %2511
        %2513 = vrot.lane.b32.xlu0 %v2298, 126
        %v2514 = vpop.permute.xlu0 %2513
        %2515 = vrot.lane.b32.xlu0 %v2299, 126
        %v2516 = vpop.permute.xlu0 %2515
        %2517 = vrot.lane.b32.xlu0 %v2300, 126
        %v2518 = vpop.permute.xlu0 %2517
        %2519 = vrot.lane.b32.xlu0 %v2301, 126
        %v2520 = vpop.permute.xlu0 %2519
        %2521 = vrot.lane.b32.xlu0 %v2302, 126
        %v2522 = vpop.permute.xlu0 %2521
        %2523 = vrot.lane.b32.xlu0 %v2303, 126
        %v2524 = vpop.permute.xlu0 %2523
        %2525 = vrot.lane.b32.xlu0 %v2304, 126
        %v2526 = vpop.permute.xlu0 %2525
        %2527 = vrot.lane.b32.xlu0 %v2305, 126
        %v2528 = vpop.permute.xlu0 %2527
        %2529 = vrot.lane.b32.xlu0 %v2306, 126
        %v2530 = vpop.permute.xlu0 %2529
        %2531 = vrot.lane.b32.xlu0 %v2307, 126
        %v2532 = vpop.permute.xlu0 %2531
        %2533 = vrot.lane.b32.xlu0 %v2308, 126
        %v2534 = vpop.permute.xlu0 %2533
        %2535 = vrot.lane.b32.xlu0 %v2309, 126
        %v2536 = vpop.permute.xlu0 %2535
        %2537 = vrot.lane.b32.xlu0 %v2310, 126
        %v2538 = vpop.permute.xlu0 %2537
        %2539 = vrot.lane.b32.xlu0 %v2311, 126
        %v2540 = vpop.permute.xlu0 %2539
        %2541 = vrot.lane.b32.xlu0 %v2312, 126
        %v2542 = vpop.permute.xlu0 %2541
        %2543 = vrot.lane.b32.xlu0 %v2313, 126
        %v2544 = vpop.permute.xlu0 %2543
        %2545 = vrot.lane.b32.xlu0 %v2314, 126
        %v2546 = vpop.permute.xlu0 %2545
        %2547 = vrot.lane.b32.xlu0 %v2315, 126
        %v2548 = vpop.permute.xlu0 %2547
        %2549 = vrot.lane.b32.xlu0 %v2316, 126
        %v2550 = vpop.permute.xlu0 %2549
        %2551 = vrot.lane.b32.xlu0 %v2317, 126
        %v2552 = vpop.permute.xlu0 %2551
        %2553 = vrot.lane.b32.xlu0 %v2318, 126
        %v2554 = vpop.permute.xlu0 %2553
        %2555 = vrot.lane.b32.xlu0 %v2319, 126
        %v2556 = vpop.permute.xlu0 %2555
        %2557 = vrot.lane.b32.xlu0 %v2320, 126
        %v2558 = vpop.permute.xlu0 %2557
        %2559 = vrot.lane.b32.xlu0 %v2321, 126
        %v2560 = vpop.permute.xlu0 %2559
        %2561 = vrot.lane.b32.xlu0 %v2322, 126
        %v2562 = vpop.permute.xlu0 %2561
        %2563 = vrot.lane.b32.xlu0 %v2323, 126
        %v2564 = vpop.permute.xlu0 %2563
        %2565 = vrot.lane.b32.xlu0 %v2324, 126
        %v2566 = vpop.permute.xlu0 %2565
        %2567 = vrot.lane.b32.xlu0 %v2325, 126
        %v2568 = vpop.permute.xlu0 %2567
        %2569 = vrot.lane.b32.xlu0 %v2326, 126
        %v2570 = vpop.permute.xlu0 %2569
        %2571 = vrot.lane.b32.xlu0 %v2327, 126
        %v2572 = vpop.permute.xlu0 %2571
        %2573 = vrot.lane.b32.xlu0 %v2328, 126
        %v2574 = vpop.permute.xlu0 %2573
        %2575 = vrot.lane.b32.xlu0 %v2329, 126
        %v2576 = vpop.permute.xlu0 %2575
        %2577 = vrot.lane.b32.xlu0 %v2330, 126
        %v2578 = vpop.permute.xlu0 %2577
        %2579 = vrot.lane.b32.xlu0 %v2331, 126
        %v2580 = vpop.permute.xlu0 %2579
        %2581 = vrot.lane.b32.xlu0 %v2332, 126
        %v2582 = vpop.permute.xlu0 %2581
        %2583 = vrot.lane.b32.xlu0 %v2333, 126
        %v2584 = vpop.permute.xlu0 %2583
        %2585 = vrot.lane.b32.xlu0 %v2334, 126
        %v2586 = vpop.permute.xlu0 %2585
        %2587 = vrot.lane.b32.xlu0 %v2335, 126
        %v2588 = vpop.permute.xlu0 %2587
        %2589 = vrot.lane.b32.xlu0 %v2336, 126
        %v2590 = vpop.permute.xlu0 %2589
        %2591 = vrot.lane.b32.xlu0 %v2337, 126
        %v2592 = vpop.permute.xlu0 %2591
        %2593 = vrot.lane.b32.xlu0 %v2338, 126
        %v2594 = vpop.permute.xlu0 %2593
        %2595 = vrot.lane.b32.xlu0 %v2339, 126
        %v2596 = vpop.permute.xlu0 %2595
        %2597 = vrot.lane.b32.xlu0 %v2340, 126
        %v2598 = vpop.permute.xlu0 %2597
        %2599 = vrot.lane.b32.xlu0 %v2341, 126
        %v2600 = vpop.permute.xlu0 %2599
        %2601 = vrot.lane.b32.xlu0 %v2342, 126
        %v2602 = vpop.permute.xlu0 %2601
        %2603 = vrot.lane.b32.xlu0 %v2343, 126
        %v2604 = vpop.permute.xlu0 %2603
        %2605 = vrot.lane.b32.xlu0 %v2344, 126
        %v2606 = vpop.permute.xlu0 %2605
        %2607 = vrot.lane.b32.xlu0 %v2345, 126
        %v2608 = vpop.permute.xlu0 %2607
        %2609 = vrot.lane.b32.xlu0 %v2346, 126
        %v2610 = vpop.permute.xlu0 %2609
        %2611 = vrot.lane.b32.xlu0 %v2347, 126
        %v2612 = vpop.permute.xlu0 %2611
        %2613 = vrot.lane.b32.xlu0 %v2348, 126
        %v2614 = vpop.permute.xlu0 %2613
        %2615 = vrot.lane.b32.xlu0 %v2349, 126
        %v2616 = vpop.permute.xlu0 %2615
        %2617 = vrot.lane.b32.xlu0 %v2350, 126
        %v2618 = vpop.permute.xlu0 %2617
        %2619 = vrot.lane.b32.xlu0 %v2351, 126
        %v2620 = vpop.permute.xlu0 %2619
        %2621 = vrot.lane.b32.xlu0 %v2352, 126
        %v2622 = vpop.permute.xlu0 %2621
        %2623 = vrot.lane.b32.xlu0 %v2353, 126
        %v2624 = vpop.permute.xlu0 %2623
        %2625 = vrot.lane.b32.xlu0 %v2354, 126
        %v2626 = vpop.permute.xlu0 %2625
        %2627 = vrot.lane.b32.xlu0 %v2355, 126
        %v2628 = vpop.permute.xlu0 %2627
        %2629 = vrot.lane.b32.xlu0 %v2356, 126
        %v2630 = vpop.permute.xlu0 %2629
        %2631 = vrot.lane.b32.xlu0 %v2357, 126
        %v2632 = vpop.permute.xlu0 %2631
        %2633 = vrot.lane.b32.xlu0 %v2358, 126
        %v2634 = vpop.permute.xlu0 %2633
        %2635 = vrot.lane.b32.xlu0 %v2359, 126
        %v2636 = vpop.permute.xlu0 %2635
        %2637 = vrot.lane.b32.xlu0 %v2360, 126
        %v2638 = vpop.permute.xlu0 %2637
        %2639 = vrot.lane.b32.xlu0 %v2361, 126
        %v2640 = vpop.permute.xlu0 %2639
        %2641 = vrot.lane.b32.xlu0 %v2362, 126
        %v2642 = vpop.permute.xlu0 %2641
        %2643 = vrot.lane.b32.xlu0 %v2363, 126
        %v2644 = vpop.permute.xlu0 %2643
        %2645 = vrot.lane.b32.xlu0 %v2364, 126
        %v2646 = vpop.permute.xlu0 %2645
        %2647 = vrot.lane.b32.xlu0 %v2365, 126
        %v2648 = vpop.permute.xlu0 %2647
        %2649 = vrot.lane.b32.xlu0 %v2366, 126
        %v2650 = vpop.permute.xlu0 %2649
        %2651 = vrot.lane.b32.xlu0 %v2367, 126
        %v2652 = vpop.permute.xlu0 %2651
        %2653 = vrot.lane.b32.xlu0 %v2368, 126
        %v2654 = vpop.permute.xlu0 %2653
        %2655 = vrot.lane.b32.xlu0 %v2369, 126
        %v2656 = vpop.permute.xlu0 %2655
        %2657 = vrot.lane.b32.xlu0 %v2370, 126
        %v2658 = vpop.permute.xlu0 %2657
        %2659 = vrot.lane.b32.xlu0 %v2371, 126
        %v2660 = vpop.permute.xlu0 %2659
        %2661 = vrot.lane.b32.xlu0 %v2372, 126
        %v2662 = vpop.permute.xlu0 %2661
        %2663 = vrot.lane.b32.xlu0 %v2373, 126
        %v2664 = vpop.permute.xlu0 %2663
        %2665 = vrot.lane.b32.xlu0 %v2374, 126
        %v2666 = vpop.permute.xlu0 %2665
        %2667 = vrot.lane.b32.xlu0 %v2375, 126
        %v2668 = vpop.permute.xlu0 %2667
        %2669 = vrot.lane.b32.xlu0 %v2376, 126
        %v2670 = vpop.permute.xlu0 %2669
        %2671 = vrot.lane.b32.xlu0 %v2377, 126
        %v2672 = vpop.permute.xlu0 %2671
        %2673 = vrot.lane.b32.xlu0 %v2378, 126
        %v2674 = vpop.permute.xlu0 %2673
        %2675 = vrot.lane.b32.xlu0 %v2379, 126
        %v2676 = vpop.permute.xlu0 %2675
        %2677 = vrot.lane.b32.xlu0 %v2380, 126
        %v2678 = vpop.permute.xlu0 %2677
        %2679 = vrot.lane.b32.xlu0 %v2381, 126
        %v2680 = vpop.permute.xlu0 %2679
        %2681 = vrot.lane.b32.xlu0 %v2382, 126
        %v2682 = vpop.permute.xlu0 %2681
        %2683 = vrot.lane.b32.xlu0 %v2383, 126
        %v2684 = vpop.permute.xlu0 %2683
        %2685 = vrot.lane.b32.xlu0 %v2384, 126
        %v2686 = vpop.permute.xlu0 %2685
        %2687 = vrot.lane.b32.xlu0 %v2385, 126
        %v2688 = vpop.permute.xlu0 %2687
        %2689 = vrot.lane.b32.xlu0 %v2386, 126
        %v2690 = vpop.permute.xlu0 %2689
        %2691 = vrot.lane.b32.xlu0 %v2387, 126
        %v2692 = vpop.permute.xlu0 %2691
        %2693 = vrot.lane.b32.xlu0 %v2388, 126
        %v2694 = vpop.permute.xlu0 %2693
        %2695 = vrot.lane.b32.xlu0 %v2389, 126
        %v2696 = vpop.permute.xlu0 %2695
        %2697 = vrot.lane.b32.xlu0 %v2390, 126
        %v2698 = vpop.permute.xlu0 %2697
        %2699 = vrot.lane.b32.xlu0 %v2391, 126
        %v2700 = vpop.permute.xlu0 %2699
        %2701 = vrot.lane.b32.xlu0 %v2392, 126
        %v2702 = vpop.permute.xlu0 %2701
        %2703 = vrot.lane.b32.xlu0 %v2393, 126
        %v2704 = vpop.permute.xlu0 %2703
        %2705 = vrot.lane.b32.xlu0 %v2394, 126
        %v2706 = vpop.permute.xlu0 %2705
        %2707 = vrot.lane.b32.xlu0 %v2395, 126
        %v2708 = vpop.permute.xlu0 %2707
        %2709 = vrot.lane.b32.xlu0 %v2396, 126
        %v2710 = vpop.permute.xlu0 %2709
        %2711 = vrot.lane.b32.xlu0 %v2397, 126
        %v2712 = vpop.permute.xlu0 %2711
        %2713 = vrot.lane.b32.xlu0 %v2398, 126
        %v2714 = vpop.permute.xlu0 %2713
        %2715 = vrot.lane.b32.xlu0 %v2399, 126
        %v2716 = vpop.permute.xlu0 %2715
        %2717 = vrot.lane.b32.xlu0 %v2400, 126
        %v2718 = vpop.permute.xlu0 %2717
        %2719 = vrot.lane.b32.xlu0 %v2401, 126
        %v2720 = vpop.permute.xlu0 %2719
        %vm2721 = vcmask 1031168
        %v2722 = vsel %vm2721, %v2512, %v2514
        %v2723 = vsel %vm2721, %v2514, %v2516
        %v2724 = vsel %vm2721, %v2516, %v2518
        %v2725 = vsel %vm2721, %v2518, %v2520
        %v2726 = vsel %vm2721, %v2520, %v2522
        %v2727 = vsel %vm2721, %v2522, %v2524
        %v2728 = vsel %vm2721, %v2526, %v2528
        %v2729 = vsel %vm2721, %v2528, %v2530
        %v2730 = vsel %vm2721, %v2530, %v2532
        %v2731 = vsel %vm2721, %v2532, %v2534
        %v2732 = vsel %vm2721, %v2534, %v2536
        %v2733 = vsel %vm2721, %v2536, %v2538
        %v2734 = vsel %vm2721, %v2540, %v2542
        %v2735 = vsel %vm2721, %v2542, %v2544
        %v2736 = vsel %vm2721, %v2544, %v2546
        %v2737 = vsel %vm2721, %v2546, %v2548
        %v2738 = vsel %vm2721, %v2548, %v2550
        %v2739 = vsel %vm2721, %v2550, %v2552
        %v2740 = vsel %vm2721, %v2554, %v2556
        %v2741 = vsel %vm2721, %v2556, %v2558
        %v2742 = vsel %vm2721, %v2558, %v2560
        %v2743 = vsel %vm2721, %v2560, %v2562
        %v2744 = vsel %vm2721, %v2562, %v2564
        %v2745 = vsel %vm2721, %v2564, %v2566
        %v2746 = vsel %vm2721, %v2568, %v2570
        %v2747 = vsel %vm2721, %v2570, %v2572
        %v2748 = vsel %vm2721, %v2572, %v2574
        %v2749 = vsel %vm2721, %v2574, %v2576
        %v2750 = vsel %vm2721, %v2576, %v2578
        %v2751 = vsel %vm2721, %v2578, %v2580
        %v2752 = vsel %vm2721, %v2582, %v2584
        %v2753 = vsel %vm2721, %v2584, %v2586
        %v2754 = vsel %vm2721, %v2586, %v2588
        %v2755 = vsel %vm2721, %v2588, %v2590
        %v2756 = vsel %vm2721, %v2590, %v2592
        %v2757 = vsel %vm2721, %v2592, %v2594
        %v2758 = vsel %vm2721, %v2596, %v2598
        %v2759 = vsel %vm2721, %v2598, %v2600
        %v2760 = vsel %vm2721, %v2600, %v2602
        %v2761 = vsel %vm2721, %v2602, %v2604
        %v2762 = vsel %vm2721, %v2604, %v2606
        %v2763 = vsel %vm2721, %v2606, %v2608
        %v2764 = vsel %vm2721, %v2610, %v2612
        %v2765 = vsel %vm2721, %v2612, %v2614
        %v2766 = vsel %vm2721, %v2614, %v2616
        %v2767 = vsel %vm2721, %v2616, %v2618
        %v2768 = vsel %vm2721, %v2618, %v2620
        %v2769 = vsel %vm2721, %v2620, %v2622
        %v2770 = vsel %vm2721, %v2624, %v2626
        %v2771 = vsel %vm2721, %v2626, %v2628
        %v2772 = vsel %vm2721, %v2628, %v2630
        %v2773 = vsel %vm2721, %v2630, %v2632
        %v2774 = vsel %vm2721, %v2632, %v2634
        %v2775 = vsel %vm2721, %v2634, %v2636
        %v2776 = vsel %vm2721, %v2638, %v2640
        %v2777 = vsel %vm2721, %v2640, %v2642
        %v2778 = vsel %vm2721, %v2642, %v2644
        %v2779 = vsel %vm2721, %v2644, %v2646
        %v2780 = vsel %vm2721, %v2646, %v2648
        %v2781 = vsel %vm2721, %v2648, %v2650
        %v2782 = vsel %vm2721, %v2652, %v2654
        %v2783 = vsel %vm2721, %v2654, %v2656
        %v2784 = vsel %vm2721, %v2656, %v2658
        %v2785 = vsel %vm2721, %v2658, %v2660
        %v2786 = vsel %vm2721, %v2660, %v2662
        %v2787 = vsel %vm2721, %v2662, %v2664
        %v2788 = vsel %vm2721, %v2666, %v2668
        %v2789 = vsel %vm2721, %v2668, %v2670
        %v2790 = vsel %vm2721, %v2670, %v2672
        %v2791 = vsel %vm2721, %v2672, %v2674
        %v2792 = vsel %vm2721, %v2674, %v2676
        %v2793 = vsel %vm2721, %v2676, %v2678
        %v2794 = vsel %vm2721, %v2680, %v2682
        %v2795 = vsel %vm2721, %v2682, %v2684
        %v2796 = vsel %vm2721, %v2684, %v2686
        %v2797 = vsel %vm2721, %v2686, %v2688
        %v2798 = vsel %vm2721, %v2688, %v2690
        %v2799 = vsel %vm2721, %v2690, %v2692
        %v2800 = vsel %vm2721, %v2694, %v2696
        %v2801 = vsel %vm2721, %v2696, %v2698
        %v2802 = vsel %vm2721, %v2698, %v2700
        %v2803 = vsel %vm2721, %v2700, %v2702
        %v2804 = vsel %vm2721, %v2702, %v2704
        %v2805 = vsel %vm2721, %v2704, %v2706
        %v2806 = vsel %vm2721, %v2708, %v2710
        %v2807 = vsel %vm2721, %v2710, %v2712
        %v2808 = vsel %vm2721, %v2712, %v2714
        %v2809 = vsel %vm2721, %v2714, %v2716
        %v2810 = vsel %vm2721, %v2716, %v2718
        %v2811 = vsel %vm2721, %v2718, %v2720
        %v2918 = vsel %vm1561, %v2403, 0
        %v2921 = vsel %vm1561, %v2404, 0
        %v2924 = vsel %vm1561, %v2405, 0
        %2926 = vmatprep.subr.mxu0 %v2723
        %2927 = vmatpush1.msra.mxu0 %v2722
        %2928 = vmatprep.subr.mxu0 %v2729
        %2929 = vmatpush1.msra.mxu0 %v2728
        %2930 = vmatprep.subr.mxu0 %v2735
        %2931 = vmatpush1.msra.mxu0 %v2734
        %2932 = vmatprep.subr.mxu0 %v2741
        %2933 = vmatpush1.msra.mxu0 %v2740
        %2934 = vmatprep.subr.mxu0 %v2747
        %2935 = vmatpush1.msra.mxu0 %v2746
        %2936 = vmatprep.subr.mxu0 %v2753
        %2937 = vmatpush1.msra.mxu0 %v2752
        %2938 = vmatprep.subr.mxu0 %v2759
        %2939 = vmatpush1.msra.mxu0 %v2758
        %2940 = vmatprep.subr.mxu0 %v2765
        %2941 = vmatpush1.msra.mxu0 %v2764
        %2942 = vmatprep.subr.mxu0 %v2771
        %2943 = vmatpush1.msra.mxu0 %v2770
        %2944 = vmatprep.subr.mxu0 %v2777
        %2945 = vmatpush1.msra.mxu0 %v2776
        %2946 = vmatprep.subr.mxu0 %v2783
        %2947 = vmatpush1.msra.mxu0 %v2782
        %2948 = vmatprep.subr.mxu0 %v2789
        %2949 = vmatpush1.msra.mxu0 %v2788
        %2950 = vmatprep.subr.mxu0 %v2795
        %2951 = vmatpush1.msra.mxu0 %v2794
        %2952 = vmatprep.subr.mxu0 %v2801
        %2953 = vmatpush1.msra.mxu0 %v2800
        %2954 = vmatprep.subr.mxu0 %v2807
        %2955 = vmatpush1.msra.mxu0 %v2806
        %2956 = vmatprep.subr.mxu0 0.0
        %2957 = vmatpush1.msra.mxu0 0.0
        %2958 = vmatprep.subr.mxu0 0.0
        %2959 = vmatpush1.msra.mxu0 0.0
        %2960 = vmatprep.subr.mxu0 0.0
        %2961 = vmatpush1.msra.mxu0 0.0
        %2962 = vmatprep.subr.mxu0 0.0
        %2963 = vmatpush1.msra.mxu0 0.0
        %2964 = vmatprep.subr.mxu0 0.0
        %2965 = vmatpush1.msra.mxu0 0.0
        %2966 = vmatprep.subr.mxu0 0.0
        %2967 = vmatpush1.msra.mxu0 0.0
        %2968 = vmatprep.subr.mxu0 0.0
        %2969 = vmatpush1.msra.mxu0 0.0
        %2970 = vmatprep.subr.mxu0 0.0
        %2971 = vmatpush1.msra.mxu0 0.0
        %2972 = vmatprep.subr.mxu0 0.0
        %2973 = vmatpush1.msra.mxu0 0.0
        %2974 = vmatprep.subr.mxu0 0.0
        %2975 = vmatpush1.msra.mxu0 0.0
        %2976 = vmatprep.subr.mxu0 0.0
        %2977 = vmatpush1.msra.mxu0 0.0
        %2978 = vmatprep.subr.mxu0 0.0
        %2979 = vmatpush1.msra.mxu0 0.0
        %2980 = vmatprep.subr.mxu0 0.0
        %2981 = vmatpush1.msra.mxu0 0.0
        %2982 = vmatprep.subr.mxu0 0.0
        %2983 = vmatpush1.msra.mxu0 0.0
        %2984 = vmatprep.subr.mxu0 0.0
        %2985 = vmatpush1.msra.mxu0 0.0
        %2986 = vmatprep.subr.mxu0 0.0
        %2987 = vmatpush1.msra.mxu0 0.0
        %2988 = vmatprep.subr.mxu0 0.0
        %2989 = vmatpush1.msra.mxu0 0.0
        %2990 = vmatprep.mubr.f32.mxu0 0.0
        %2991 = vmatmul.mubr.f32.gmra.mrb[0].mxu0 %v2918
        %v2992 = vpop.f32.mrb[0].mxu0
        %v2993 = vadd.f32 0.0, %v2992
        %v2994 = vpop.f32.mrb[0].mxu0
        %v2995 = vadd.f32 0.0, %v2994
        %2996 = vmatprep.mubr.f32.mxu0 0.0
        %2997 = vmatmul.mubr.f32.gmra.mrb[0].mxu0 %v2921
        %v2998 = vpop.f32.mrb[0].mxu0
        %v2999 = vadd.f32 0.0, %v2998
        %v3000 = vpop.f32.mrb[0].mxu0
        %v3001 = vadd.f32 0.0, %v3000
        %3002 = vmatprep.mubr.f32.mxu0 0.0
        %3003 = vmatmul.mubr.f32.gmra.mrb[0].mxu0 %v2924
        %v3004 = vpop.f32.mrb[0].mxu0
        %v3005 = vadd.f32 0.0, %v3004
        %v3006 = vpop.f32.mrb[0].mxu0
        %v3007 = vadd.f32 0.0, %v3006
        %3008 = vdwg.mxu0
        %3009 = vmatprep.subr.mxu0 %v2725
        %3010 = vmatpush1.msra.mxu0 %v2724
        %3011 = vmatprep.subr.mxu0 %v2731
        %3012 = vmatpush1.msra.mxu0 %v2730
        %3013 = vmatprep.subr.mxu0 %v2737
        %3014 = vmatpush1.msra.mxu0 %v2736
        %3015 = vmatprep.subr.mxu0 %v2743
        %3016 = vmatpush1.msra.mxu0 %v2742
        %3017 = vmatprep.subr.mxu0 %v2749
        %3018 = vmatpush1.msra.mxu0 %v2748
        %3019 = vmatprep.subr.mxu0 %v2755
        %3020 = vmatpush1.msra.mxu0 %v2754
        %3021 = vmatprep.subr.mxu0 %v2761
        %3022 = vmatpush1.msra.mxu0 %v2760
        %3023 = vmatprep.subr.mxu0 %v2767
        %3024 = vmatpush1.msra.mxu0 %v2766
        %3025 = vmatprep.subr.mxu0 %v2773
        %3026 = vmatpush1.msra.mxu0 %v2772
        %3027 = vmatprep.subr.mxu0 %v2779
        %3028 = vmatpush1.msra.mxu0 %v2778
        %3029 = vmatprep.subr.mxu0 %v2785
        %3030 = vmatpush1.msra.mxu0 %v2784
        %3031 = vmatprep.subr.mxu0 %v2791
        %3032 = vmatpush1.msra.mxu0 %v2790
        %3033 = vmatprep.subr.mxu0 %v2797
        %3034 = vmatpush1.msra.mxu0 %v2796
        %3035 = vmatprep.subr.mxu0 %v2803
        %3036 = vmatpush1.msra.mxu0 %v2802
        %3037 = vmatprep.subr.mxu0 %v2809
        %3038 = vmatpush1.msra.mxu0 %v2808
        %3039 = vmatprep.subr.mxu0 0.0
        %3040 = vmatpush1.msra.mxu0 0.0
        %3041 = vmatprep.subr.mxu0 0.0
        %3042 = vmatpush1.msra.mxu0 0.0
        %3043 = vmatprep.subr.mxu0 0.0
        %3044 = vmatpush1.msra.mxu0 0.0
        %3045 = vmatprep.subr.mxu0 0.0
        %3046 = vmatpush1.msra.mxu0 0.0
        %3047 = vmatprep.subr.mxu0 0.0
        %3048 = vmatpush1.msra.mxu0 0.0
        %3049 = vmatprep.subr.mxu0 0.0
        %3050 = vmatpush1.msra.mxu0 0.0
        %3051 = vmatprep.subr.mxu0 0.0
        %3052 = vmatpush1.msra.mxu0 0.0
        %3053 = vmatprep.subr.mxu0 0.0
        %3054 = vmatpush1.msra.mxu0 0.0
        %3055 = vmatprep.subr.mxu0 0.0
        %3056 = vmatpush1.msra.mxu0 0.0
        %3057 = vmatprep.subr.mxu0 0.0
        %3058 = vmatpush1.msra.mxu0 0.0
        %3059 = vmatprep.subr.mxu0 0.0
        %3060 = vmatpush1.msra.mxu0 0.0
        %3061 = vmatprep.subr.mxu0 0.0
        %3062 = vmatpush1.msra.mxu0 0.0
        %3063 = vmatprep.subr.mxu0 0.0
        %3064 = vmatpush1.msra.mxu0 0.0
        %3065 = vmatprep.subr.mxu0 0.0
        %3066 = vmatpush1.msra.mxu0 0.0
        %3067 = vmatprep.subr.mxu0 0.0
        %3068 = vmatpush1.msra.mxu0 0.0
        %3069 = vmatprep.subr.mxu0 0.0
        %3070 = vmatpush1.msra.mxu0 0.0
        %3071 = vmatprep.subr.mxu0 0.0
        %3072 = vmatpush1.msra.mxu0 0.0
        %3073 = vmatprep.mubr.f32.mxu0 0.0
        %3074 = vmatmul.mubr.f32.gmra.mrb[0].mxu0 %v2918
        %v3075 = vpop.f32.mrb[0].mxu0
        %v3076 = vadd.f32 0.0, %v3075
        %v3077 = vpop.f32.mrb[0].mxu0
        %v3078 = vadd.f32 0.0, %v3077
        %3079 = vmatprep.mubr.f32.mxu0 0.0
        %3080 = vmatmul.mubr.f32.gmra.mrb[0].mxu0 %v2921
        %v3081 = vpop.f32.mrb[0].mxu0
        %v3082 = vadd.f32 0.0, %v3081
        %v3083 = vpop.f32.mrb[0].mxu0
        %v3084 = vadd.f32 0.0, %v3083
        %3085 = vmatprep.mubr.f32.mxu0 0.0
        %3086 = vmatmul.mubr.f32.gmra.mrb[0].mxu0 %v2924
        %v3087 = vpop.f32.mrb[0].mxu0
        %v3088 = vadd.f32 0.0, %v3087
        %v3089 = vpop.f32.mrb[0].mxu0
        %v3090 = vadd.f32 0.0, %v3089
        %3091 = vdwg.mxu0
        %3092 = vmatprep.subr.mxu0 %v2727
        %3093 = vmatpush1.msra.mxu0 %v2726
        %3094 = vmatprep.subr.mxu0 %v2733
        %3095 = vmatpush1.msra.mxu0 %v2732
        %3096 = vmatprep.subr.mxu0 %v2739
        %3097 = vmatpush1.msra.mxu0 %v2738
        %3098 = vmatprep.subr.mxu0 %v2745
        %3099 = vmatpush1.msra.mxu0 %v2744
        %3100 = vmatprep.subr.mxu0 %v2751
        %3101 = vmatpush1.msra.mxu0 %v2750
        %3102 = vmatprep.subr.mxu0 %v2757
        %3103 = vmatpush1.msra.mxu0 %v2756
        %3104 = vmatprep.subr.mxu0 %v2763
        %3105 = vmatpush1.msra.mxu0 %v2762
        %3106 = vmatprep.subr.mxu0 %v2769
        %3107 = vmatpush1.msra.mxu0 %v2768
        %3108 = vmatprep.subr.mxu0 %v2775
        %3109 = vmatpush1.msra.mxu0 %v2774
        %3110 = vmatprep.subr.mxu0 %v2781
        %3111 = vmatpush1.msra.mxu0 %v2780
        %3112 = vmatprep.subr.mxu0 %v2787
        %3113 = vmatpush1.msra.mxu0 %v2786
        %3114 = vmatprep.subr.mxu0 %v2793
        %3115 = vmatpush1.msra.mxu0 %v2792
        %3116 = vmatprep.subr.mxu0 %v2799
        %3117 = vmatpush1.msra.mxu0 %v2798
        %3118 = vmatprep.subr.mxu0 %v2805
        %3119 = vmatpush1.msra.mxu0 %v2804
        %3120 = vmatprep.subr.mxu0 %v2811
        %3121 = vmatpush1.msra.mxu0 %v2810
        %3122 = vmatprep.subr.mxu0 0.0
        %3123 = vmatpush1.msra.mxu0 0.0
        %3124 = vmatprep.subr.mxu0 0.0
        %3125 = vmatpush1.msra.mxu0 0.0
        %3126 = vmatprep.subr.mxu0 0.0
        %3127 = vmatpush1.msra.mxu0 0.0
        %3128 = vmatprep.subr.mxu0 0.0
        %3129 = vmatpush1.msra.mxu0 0.0
        %3130 = vmatprep.subr.mxu0 0.0
        %3131 = vmatpush1.msra.mxu0 0.0
        %3132 = vmatprep.subr.mxu0 0.0
        %3133 = vmatpush1.msra.mxu0 0.0
        %3134 = vmatprep.subr.mxu0 0.0
        %3135 = vmatpush1.msra.mxu0 0.0
        %3136 = vmatprep.subr.mxu0 0.0
        %3137 = vmatpush1.msra.mxu0 0.0
        %3138 = vmatprep.subr.mxu0 0.0
        %3139 = vmatpush1.msra.mxu0 0.0
        %3140 = vmatprep.subr.mxu0 0.0
        %3141 = vmatpush1.msra.mxu0 0.0
        %3142 = vmatprep.subr.mxu0 0.0
        %3143 = vmatpush1.msra.mxu0 0.0
        %3144 = vmatprep.subr.mxu0 0.0
        %3145 = vmatpush1.msra.mxu0 0.0
        %3146 = vmatprep.subr.mxu0 0.0
        %3147 = vmatpush1.msra.mxu0 0.0
        %3148 = vmatprep.subr.mxu0 0.0
        %3149 = vmatpush1.msra.mxu0 0.0
        %3150 = vmatprep.subr.mxu0 0.0
        %3151 = vmatpush1.msra.mxu0 0.0
        %3152 = vmatprep.subr.mxu0 0.0
        %3153 = vmatpush1.msra.mxu0 0.0
        %3154 = vmatprep.subr.mxu0 0.0
        %3155 = vmatpush1.msra.mxu0 0.0
        %3156 = vmatprep.mubr.f32.mxu0 0.0
        %3157 = vmatmul.mubr.f32.gmra.mrb[0].mxu0 %v2918
        %v3158 = vpop.f32.mrb[0].mxu0
        %v3159 = vadd.f32 0.0, %v3158
        %v3160 = vpop.f32.mrb[0].mxu0
        %v3161 = vadd.f32 0.0, %v3160
        %3162 = vmatprep.mubr.f32.mxu0 0.0
        %3163 = vmatmul.mubr.f32.gmra.mrb[0].mxu0 %v2921
        %v3164 = vpop.f32.mrb[0].mxu0
        %v3165 = vadd.f32 0.0, %v3164
        %v3166 = vpop.f32.mrb[0].mxu0
        %v3167 = vadd.f32 0.0, %v3166
        %3168 = vmatprep.mubr.f32.mxu0 0.0
        %3169 = vmatmul.mubr.f32.gmra.mrb[0].mxu0 %v2924
        %v3170 = vpop.f32.mrb[0].mxu0
        %v3171 = vadd.f32 0.0, %v3170
        %v3172 = vpop.f32.mrb[0].mxu0
        %v3173 = vadd.f32 0.0, %v3172
        %3174 = vdwg.mxu0
        %3175 = vmatprep.subr.mxu0 0.0
        %3176 = vmatpush1.msra.mxu0 %v2524
        %3177 = vmatprep.subr.mxu0 0.0
        %3178 = vmatpush1.msra.mxu0 %v2538
        %3179 = vmatprep.subr.mxu0 0.0
        %3180 = vmatpush1.msra.mxu0 %v2552
        %3181 = vmatprep.subr.mxu0 0.0
        %3182 = vmatpush1.msra.mxu0 %v2566
        %3183 = vmatprep.subr.mxu0 0.0
        %3184 = vmatpush1.msra.mxu0 %v2580
        %3185 = vmatprep.subr.mxu0 0.0
        %3186 = vmatpush1.msra.mxu0 %v2594
        %3187 = vmatprep.subr.mxu0 0.0
        %3188 = vmatpush1.msra.mxu0 %v2608
        %3189 = vmatprep.subr.mxu0 0.0
        %3190 = vmatpush1.msra.mxu0 %v2622
        %3191 = vmatprep.subr.mxu0 0.0
        %3192 = vmatpush1.msra.mxu0 %v2636
        %3193 = vmatprep.subr.mxu0 0.0
        %3194 = vmatpush1.msra.mxu0 %v2650
        %3195 = vmatprep.subr.mxu0 0.0
        %3196 = vmatpush1.msra.mxu0 %v2664
        %3197 = vmatprep.subr.mxu0 0.0
        %3198 = vmatpush1.msra.mxu0 %v2678
        %3199 = vmatprep.subr.mxu0 0.0
        %3200 = vmatpush1.msra.mxu0 %v2692
        %3201 = vmatprep.subr.mxu0 0.0
        %3202 = vmatpush1.msra.mxu0 %v2706
        %3203 = vmatprep.subr.mxu0 0.0
        %3204 = vmatpush1.msra.mxu0 %v2720
        %3205 = vmatprep.subr.mxu0 0.0
        %3206 = vmatpush1.msra.mxu0 0.0
        %3207 = vmatprep.subr.mxu0 0.0
        %3208 = vmatpush1.msra.mxu0 0.0
        %3209 = vmatprep.subr.mxu0 0.0
        %3210 = vmatpush1.msra.mxu0 0.0
        %3211 = vmatprep.subr.mxu0 0.0
        %3212 = vmatpush1.msra.mxu0 0.0
        %3213 = vmatprep.subr.mxu0 0.0
        %3214 = vmatpush1.msra.mxu0 0.0
        %3215 = vmatprep.subr.mxu0 0.0
        %3216 = vmatpush1.msra.mxu0 0.0
        %3217 = vmatprep.subr.mxu0 0.0
        %3218 = vmatpush1.msra.mxu0 0.0
        %3219 = vmatprep.subr.mxu0 0.0
        %3220 = vmatpush1.msra.mxu0 0.0
        %3221 = vmatprep.subr.mxu0 0.0
        %3222 = vmatpush1.msra.mxu0 0.0
        %3223 = vmatprep.subr.mxu0 0.0
        %3224 = vmatpush1.msra.mxu0 0.0
        %3225 = vmatprep.subr.mxu0 0.0
        %3226 = vmatpush1.msra.mxu0 0.0
        %3227 = vmatprep.subr.mxu0 0.0
        %3228 = vmatpush1.msra.mxu0 0.0
        %3229 = vmatprep.subr.mxu0 0.0
        %3230 = vmatpush1.msra.mxu0 0.0
        %3231 = vmatprep.subr.mxu0 0.0
        %3232 = vmatpush1.msra.mxu0 0.0
        %3233 = vmatprep.subr.mxu0 0.0
        %3234 = vmatpush1.msra.mxu0 0.0
        %3235 = vmatprep.subr.mxu0 0.0
        %3236 = vmatpush1.msra.mxu0 0.0
        %3237 = vmatprep.subr.mxu0 0.0
        %3238 = vmatpush1.msra.mxu0 0.0
        %3239 = vmatprep.mubr.f32.mxu0 0.0
        %3240 = vmatmul.mubr.f32.gmra.mrb[0].mxu0 %v2918
        %v3241 = vpop.f32.mrb[0].mxu0
        %v3242 = vadd.f32 0.0, %v3241
        %v3243 = vpop.f32.mrb[0].mxu0
        %3244 = vmatprep.mubr.f32.mxu0 0.0
        %3245 = vmatmul.mubr.f32.gmra.mrb[0].mxu0 %v2921
        %v3246 = vpop.f32.mrb[0].mxu0
        %v3247 = vadd.f32 0.0, %v3246
        %v3248 = vpop.f32.mrb[0].mxu0
        %3249 = vmatprep.mubr.f32.mxu0 0.0
        %3250 = vmatmul.mubr.f32.gmra.mrb[0].mxu0 %v2924
        %v3251 = vpop.f32.mrb[0].mxu0
        %v3252 = vadd.f32 0.0, %v3251
        %v3253 = vpop.f32.mrb[0].mxu0
        %3254 = vdwg.mxu0
        %v3255 = vadd.f32 %v1976, %v2993
        %v3256 = vadd.f32 %v1978, %v2995
        %v3257 = vadd.f32 %v2059, %v3076
        %v3258 = vadd.f32 %v2061, %v3078
        %v3259 = vadd.f32 %v2142, %v3159
        %v3260 = vadd.f32 %v2144, %v3161
        %v3261 = vadd.f32 %v2225, %v3242
        %v3262 = vadd.f32 %v1982, %v2999
        %v3263 = vadd.f32 %v1984, %v3001
        %v3264 = vadd.f32 %v2065, %v3082
        %v3265 = vadd.f32 %v2067, %v3084
        %v3266 = vadd.f32 %v2148, %v3165
        %v3267 = vadd.f32 %v2150, %v3167
        %v3268 = vadd.f32 %v2230, %v3247
        %v3269 = vadd.f32 %v1988, %v3005
        %v3270 = vadd.f32 %v1990, %v3007
        %v3271 = vadd.f32 %v2071, %v3088
        %v3272 = vadd.f32 %v2073, %v3090
        %v3273 = vadd.f32 %v2154, %v3171
        %v3274 = vadd.f32 %v2156, %v3173
        %v3275 = vadd.f32 %v2235, %v3252
        %v3276 = vld [vmem:[%s3] sm:$0xff]
        %v3277 = vld [vmem:[%s3 + $0x8] sm:$0xff]
        %v3278 = vld [vmem:[%s3 + $0x10] sm:$0xff]
        %3280 = vset.pattern.permute.xlu0 0
        %3281 = vperm.xlu0 %3280, %v3276
        %v3282 = vpop.permute.xlu0 %3281
        %3285 = vset.pattern.permute.xlu0 0
        %3286 = vperm.xlu0 %3285, %v3277
        %v3287 = vpop.permute.xlu0 %3286
        %3290 = vset.pattern.permute.xlu0 0
        %3291 = vperm.xlu0 %3290, %v3278
        %v3292 = vpop.permute.xlu0 %3291
        %v3294 = vadd.f32 %v3255, %v3282
        %v3295 = vadd.f32 %v3256, %v3282
        %v3296 = vadd.f32 %v3257, %v3282
        %v3297 = vadd.f32 %v3258, %v3282
        %v3298 = vadd.f32 %v3259, %v3282
        %v3299 = vadd.f32 %v3260, %v3282
        %v3300 = vadd.f32 %v3261, %v3282
        %v3301 = vadd.f32 %v3262, %v3287
        %v3302 = vadd.f32 %v3263, %v3287
        %v3303 = vadd.f32 %v3264, %v3287
        %v3304 = vadd.f32 %v3265, %v3287
        %v3305 = vadd.f32 %v3266, %v3287
        %v3306 = vadd.f32 %v3267, %v3287
        %v3307 = vadd.f32 %v3268, %v3287
        %v3308 = vadd.f32 %v3269, %v3292
        %v3309 = vadd.f32 %v3270, %v3292
        %v3310 = vadd.f32 %v3271, %v3292
        %v3311 = vadd.f32 %v3272, %v3292
        %v3312 = vadd.f32 %v3273, %v3292
        %v3313 = vadd.f32 %v3274, %v3292
        %v3314 = vadd.f32 %v3275, %v3292
        %v3315 = vmax.f32 %v3294, 0.0
        %v3316 = vmax.f32 %v3295, 0.0
        %v3317 = vmax.f32 %v3296, 0.0
        %v3318 = vmax.f32 %v3297, 0.0
        %v3319 = vmax.f32 %v3298, 0.0
        %v3320 = vmax.f32 %v3299, 0.0
        %v3321 = vmax.f32 %v3300, 0.0
        %v3322 = vmax.f32 %v3301, 0.0
        %v3323 = vmax.f32 %v3302, 0.0
        %v3324 = vmax.f32 %v3303, 0.0
        %v3325 = vmax.f32 %v3304, 0.0
        %v3326 = vmax.f32 %v3305, 0.0
        %v3327 = vmax.f32 %v3306, 0.0
        %v3328 = vmax.f32 %v3307, 0.0
        %v3329 = vmax.f32 %v3308, 0.0
        %v3330 = vmax.f32 %v3309, 0.0
        %v3331 = vmax.f32 %v3310, 0.0
        %v3332 = vmax.f32 %v3311, 0.0
        %v3333 = vmax.f32 %v3312, 0.0
        %v3334 = vmax.f32 %v3313, 0.0
        %v3335 = vmax.f32 %v3314, 0.0
        %3357 = vrot.lane.b32.xlu0 %v3315, 127
        %v3358 = vpop.permute.xlu0 %3357
        %3359 = vrot.lane.b32.xlu0 %v3316, 127
        %v3360 = vpop.permute.xlu0 %3359
        %3361 = vrot.lane.b32.xlu0 %v3317, 127
        %v3362 = vpop.permute.xlu0 %3361
        %3363 = vrot.lane.b32.xlu0 %v3318, 127
        %v3364 = vpop.permute.xlu0 %3363
        %3365 = vrot.lane.b32.xlu0 %v3319, 127
        %v3366 = vpop.permute.xlu0 %3365
        %3367 = vrot.lane.b32.xlu0 %v3320, 127
        %v3368 = vpop.permute.xlu0 %3367
        %3369 = vrot.lane.b32.xlu0 %v3321, 127
        %v3370 = vpop.permute.xlu0 %3369
        %3371 = vrot.lane.b32.xlu0 %v3322, 127
        %v3372 = vpop.permute.xlu0 %3371
        %3373 = vrot.lane.b32.xlu0 %v3323, 127
        %v3374 = vpop.permute.xlu0 %3373
        %3375 = vrot.lane.b32.xlu0 %v3324, 127
        %v3376 = vpop.permute.xlu0 %3375
        %3377 = vrot.lane.b32.xlu0 %v3325, 127
        %v3378 = vpop.permute.xlu0 %3377
        %3379 = vrot.lane.b32.xlu0 %v3326, 127
        %v3380 = vpop.permute.xlu0 %3379
        %3381 = vrot.lane.b32.xlu0 %v3327, 127
        %v3382 = vpop.permute.xlu0 %3381
        %3383 = vrot.lane.b32.xlu0 %v3328, 127
        %v3384 = vpop.permute.xlu0 %3383
        %3385 = vrot.lane.b32.xlu0 %v3329, 127
        %v3386 = vpop.permute.xlu0 %3385
        %3387 = vrot.lane.b32.xlu0 %v3330, 127
        %v3388 = vpop.permute.xlu0 %3387
        %3389 = vrot.lane.b32.xlu0 %v3331, 127
        %v3390 = vpop.permute.xlu0 %3389
        %3391 = vrot.lane.b32.xlu0 %v3332, 127
        %v3392 = vpop.permute.xlu0 %3391
        %3393 = vrot.lane.b32.xlu0 %v3333, 127
        %v3394 = vpop.permute.xlu0 %3393
        %3395 = vrot.lane.b32.xlu0 %v3334, 127
        %v3396 = vpop.permute.xlu0 %3395
        %3397 = vrot.lane.b32.xlu0 %v3335, 127
        %v3398 = vpop.permute.xlu0 %3397
        %v3399 = vsel %vm1365, %v3358, %v3360
        %v3400 = vsel %vm1365, %v3360, %v3362
        %v3401 = vsel %vm1365, %v3362, %v3364
        %v3402 = vsel %vm1365, %v3364, %v3366
        %v3403 = vsel %vm1365, %v3366, %v3368
        %v3404 = vsel %vm1365, %v3368, %v3370
        %v3405 = vsel %vm1365, %v3372, %v3374
        %v3406 = vsel %vm1365, %v3374, %v3376
        %v3407 = vsel %vm1365, %v3376, %v3378
        %v3408 = vsel %vm1365, %v3378, %v3380
        %v3409 = vsel %vm1365, %v3380, %v3382
        %v3410 = vsel %vm1365, %v3382, %v3384
        %v3411 = vsel %vm1365, %v3386, %v3388
        %v3412 = vsel %vm1365, %v3388, %v3390
        %v3413 = vsel %vm1365, %v3390, %v3392
        %v3414 = vsel %vm1365, %v3392, %v3394
        %v3415 = vsel %vm1365, %v3394, %v3396
        %v3416 = vsel %vm1365, %v3396, %v3398
        %v3438 = vmax.f32 %v3315, %v3399
        %v3439 = vmax.f32 %v3316, %v3400
        %v3440 = vmax.f32 %v3317, %v3401
        %v3441 = vmax.f32 %v3318, %v3402
        %v3442 = vmax.f32 %v3319, %v3403
        %v3443 = vmax.f32 %v3320, %v3404
        %v3444 = vmax.f32 %v3321, %v3370
        %v3445 = vmax.f32 %v3322, %v3405
        %v3446 = vmax.f32 %v3323, %v3406
        %v3447 = vmax.f32 %v3324, %v3407
        %v3448 = vmax.f32 %v3325, %v3408
        %v3449 = vmax.f32 %v3326, %v3409
        %v3450 = vmax.f32 %v3327, %v3410
        %v3451 = vmax.f32 %v3328, %v3384
        %v3452 = vmax.f32 %v3329, %v3411
        %v3453 = vmax.f32 %v3330, %v3412
        %v3454 = vmax.f32 %v3331, %v3413
        %v3455 = vmax.f32 %v3332, %v3414
        %v3456 = vmax.f32 %v3333, %v3415
        %v3457 = vmax.f32 %v3334, %v3416
        %v3458 = vmax.f32 %v3335, %v3398
        %3480 = vrot.lane.b32.xlu0 %v3438, 100
        %v3481 = vpop.permute.xlu0 %3480
        %3482 = vrot.lane.b32.xlu0 %v3439, 100
        %v3483 = vpop.permute.xlu0 %3482
        %3484 = vrot.lane.b32.xlu0 %v3440, 100
        %v3485 = vpop.permute.xlu0 %3484
        %3486 = vrot.lane.b32.xlu0 %v3441, 100
        %v3487 = vpop.permute.xlu0 %3486
        %3488 = vrot.lane.b32.xlu0 %v3442, 100
        %v3489 = vpop.permute.xlu0 %3488
        %3490 = vrot.lane.b32.xlu0 %v3443, 100
        %v3491 = vpop.permute.xlu0 %3490
        %3492 = vrot.lane.b32.xlu0 %v3444, 100
        %v3493 = vpop.permute.xlu0 %3492
        %3494 = vrot.lane.b32.xlu0 %v3445, 100
        %v3495 = vpop.permute.xlu0 %3494
        %3496 = vrot.lane.b32.xlu0 %v3446, 100
        %v3497 = vpop.permute.xlu0 %3496
        %3498 = vrot.lane.b32.xlu0 %v3447, 100
        %v3499 = vpop.permute.xlu0 %3498
        %3500 = vrot.lane.b32.xlu0 %v3448, 100
        %v3501 = vpop.permute.xlu0 %3500
        %3502 = vrot.lane.b32.xlu0 %v3449, 100
        %v3503 = vpop.permute.xlu0 %3502
        %3504 = vrot.lane.b32.xlu0 %v3450, 100
        %v3505 = vpop.permute.xlu0 %3504
        %3506 = vrot.lane.b32.xlu0 %v3451, 100
        %v3507 = vpop.permute.xlu0 %3506
        %3508 = vrot.lane.b32.xlu0 %v3452, 100
        %v3509 = vpop.permute.xlu0 %3508
        %3510 = vrot.lane.b32.xlu0 %v3453, 100
        %v3511 = vpop.permute.xlu0 %3510
        %3512 = vrot.lane.b32.xlu0 %v3454, 100
        %v3513 = vpop.permute.xlu0 %3512
        %3514 = vrot.lane.b32.xlu0 %v3455, 100
        %v3515 = vpop.permute.xlu0 %3514
        %3516 = vrot.lane.b32.xlu0 %v3456, 100
        %v3517 = vpop.permute.xlu0 %3516
        %3518 = vrot.lane.b32.xlu0 %v3457, 100
        %v3519 = vpop.permute.xlu0 %3518
        %3520 = vrot.lane.b32.xlu0 %v3458, 100
        %v3521 = vpop.permute.xlu0 %3520
        %v3522 = vsel %vm804, %v3481, %v3483
        %v3523 = vsel %vm804, %v3483, %v3485
        %v3524 = vsel %vm804, %v3485, %v3487
        %v3525 = vsel %vm804, %v3487, %v3489
        %v3526 = vsel %vm804, %v3489, %v3491
        %v3527 = vsel %vm804, %v3491, %v3493
        %v3528 = vsel %vm804, %v3495, %v3497
        %v3529 = vsel %vm804, %v3497, %v3499
        %v3530 = vsel %vm804, %v3499, %v3501
        %v3531 = vsel %vm804, %v3501, %v3503
        %v3532 = vsel %vm804, %v3503, %v3505
        %v3533 = vsel %vm804, %v3505, %v3507
        %v3534 = vsel %vm804, %v3509, %v3511
        %v3535 = vsel %vm804, %v3511, %v3513
        %v3536 = vsel %vm804, %v3513, %v3515
        %v3537 = vsel %vm804, %v3515, %v3517
        %v3538 = vsel %vm804, %v3517, %v3519
        %v3539 = vsel %vm804, %v3519, %v3521
        %v3558 = vmax.f32 %v3438, %v3522
        %v3559 = vmax.f32 %v3439, %v3523
        %v3560 = vmax.f32 %v3440, %v3524
        %v3561 = vmax.f32 %v3441, %v3525
        %v3562 = vmax.f32 %v3442, %v3526
        %v3563 = vmax.f32 %v3443, %v3527
        %v3564 = vmax.f32 %v3445, %v3528
        %v3565 = vmax.f32 %v3446, %v3529
        %v3566 = vmax.f32 %v3447, %v3530
        %v3567 = vmax.f32 %v3448, %v3531
        %v3568 = vmax.f32 %v3449, %v3532
        %v3569 = vmax.f32 %v3450, %v3533
        %v3570 = vmax.f32 %v3452, %v3534
        %v3571 = vmax.f32 %v3453, %v3535
        %v3572 = vmax.f32 %v3454, %v3536
        %v3573 = vmax.f32 %v3455, %v3537
        %v3574 = vmax.f32 %v3456, %v3538
        %v3575 = vmax.f32 %v3457, %v3539
        %v3576 = vpack.c.bf16 %v3564, %v3558
        %v3577 = vpack.c.bf16 %v3565, %v3559
        %v3578 = vpack.c.bf16 %v3566, %v3560
        %v3579 = vpack.c.bf16 %v3567, %v3561
        %v3580 = vpack.c.bf16 %v3568, %v3562
        %v3581 = vpack.c.bf16 %v3569, %v3563
        %v3582 = vpack.c.bf16 %v3570, %v3570
        %v3583 = vpack.c.bf16 %v3571, %v3571
        %v3584 = vpack.c.bf16 %v3572, %v3572
        %v3585 = vpack.c.bf16 %v3573, %v3573
        %v3586 = vpack.c.bf16 %v3574, %v3574
        %v3587 = vpack.c.bf16 %v3575, %v3575
        %v3588 = vld [vmem:[%s5] sm:$0xff]
        %v3589 = vld [vmem:[%s5 + $0x8] sm:$0xff]
        %v3590 = vld [vmem:[%s5 + $0x10] sm:$0xff]
        %v3591 = vld [vmem:[%s5 + $0x18] sm:$0xff]
        %v3592 = vld [vmem:[%s5 + $0x20] sm:$0xff]
        %v3593 = vld [vmem:[%s5 + $0x28] sm:$0xff]
        %v3594 = vld [vmem:[%s5 + $0x30] sm:$0xff]
        %v3595 = vld [vmem:[%s5 + $0x38] sm:$0xff]
        %v3596 = vld [vmem:[%s5 + $0x40] sm:$0xff]
        %v3597 = vld [vmem:[%s5 + $0x48] sm:$0xff]
        %v3598 = vld [vmem:[%s5 + $0x50] sm:$0xff]
        %v3599 = vld [vmem:[%s5 + $0x58] sm:$0xff]
        %v3600 = vld [vmem:[%s5 + $0x60] sm:$0xff]
        %v3601 = vld [vmem:[%s5 + $0x68] sm:$0xff]
        %v3602 = vld [vmem:[%s5 + $0x70] sm:$0xff]
        %v3603 = vld [vmem:[%s5 + $0x78] sm:$0xff]
        %v3604 = vld [vmem:[%s5 + $0x80] sm:$0xff]
        %v3605 = vld [vmem:[%s5 + $0x88] sm:$0xff]
        %v3606 = vld [vmem:[%s5 + $0x90] sm:$0xff]
        %v3607 = vld [vmem:[%s5 + $0x98] sm:$0xff]
        %v3608 = vld [vmem:[%s5 + $0xa0] sm:$0xff]
        %v3609 = vld [vmem:[%s5 + $0xa8] sm:$0xff]
        %v3610 = vld [vmem:[%s5 + $0xb0] sm:$0xff]
        %v3611 = vld [vmem:[%s5 + $0xb8] sm:$0xff]
        %v3612 = vld [vmem:[%s5 + $0xc0] sm:$0xff]
        %v3613 = vld [vmem:[%s5 + $0xc8] sm:$0xff]
        %v3614 = vld [vmem:[%s5 + $0xd0] sm:$0xff]
        %v3615 = vld [vmem:[%s5 + $0xd8] sm:$0xff]
        %v3616 = vld [vmem:[%s5 + $0xe0] sm:$0xff]
        %v3617 = vld [vmem:[%s5 + $0xe8] sm:$0xff]
        %v3618 = vld [vmem:[%s5 + $0xf0] sm:$0xff]
        %v3619 = vld [vmem:[%s5 + $0xf8] sm:$0xff]
        %v3620 = vld [vmem:[%s5 + $0x100] sm:$0xff]
        %v3621 = vld [vmem:[%s5 + $0x108] sm:$0xff]
        %v3622 = vld [vmem:[%s5 + $0x110] sm:$0xff]
        %v3623 = vld [vmem:[%s5 + $0x118] sm:$0xff]
        %v3624 = vld [vmem:[%s5 + $0x120] sm:$0xff]
        %v3625 = vld [vmem:[%s5 + $0x128] sm:$0xff]
        %v3626 = vld [vmem:[%s5 + $0x130] sm:$0xff]
        %v3627 = vld [vmem:[%s5 + $0x138] sm:$0xff]
        %v3628 = vld [vmem:[%s5 + $0x140] sm:$0xff]
        %v3629 = vld [vmem:[%s5 + $0x148] sm:$0xff]
        %v3630 = vld [vmem:[%s5 + $0x150] sm:$0xff]
        %v3631 = vld [vmem:[%s5 + $0x158] sm:$0xff]
        %v3632 = vld [vmem:[%s5 + $0x160] sm:$0xff]
        %v3633 = vld [vmem:[%s5 + $0x168] sm:$0xff]
        %v3634 = vld [vmem:[%s5 + $0x170] sm:$0xff]
        %v3635 = vld [vmem:[%s5 + $0x178] sm:$0xff]
        %v3636 = vld [vmem:[%s5 + $0x180] sm:$0xff]
        %v3637 = vld [vmem:[%s5 + $0x188] sm:$0xff]
        %v3638 = vld [vmem:[%s5 + $0x190] sm:$0xff]
        %v3639 = vld [vmem:[%s5 + $0x198] sm:$0xff]
        %v3640 = vld [vmem:[%s5 + $0x1a0] sm:$0xff]
        %v3641 = vld [vmem:[%s5 + $0x1a8] sm:$0xff]
        %v3642 = vld [vmem:[%s5 + $0x1b0] sm:$0xff]
        %v3643 = vld [vmem:[%s5 + $0x1b8] sm:$0xff]
        %v3644 = vld [vmem:[%s5 + $0x1c0] sm:$0xff]
        %v3645 = vld [vmem:[%s5 + $0x1c8] sm:$0xff]
        %v3646 = vld [vmem:[%s5 + $0x1d0] sm:$0xff]
        %v3647 = vld [vmem:[%s5 + $0x1d8] sm:$0xff]
        %v3648 = vld [vmem:[%s5 + $0x1e0] sm:$0xff]
        %v3649 = vld [vmem:[%s5 + $0x1e8] sm:$0xff]
        %v3650 = vld [vmem:[%s5 + $0x1f0] sm:$0xff]
        %v3651 = vld [vmem:[%s5 + $0x1f8] sm:$0xff]
        %v3652 = vld [vmem:[%s5 + $0x200] sm:$0xff]
        %v3653 = vld [vmem:[%s5 + $0x208] sm:$0xff]
        %v3654 = vld [vmem:[%s5 + $0x210] sm:$0xff]
        %v3655 = vld [vmem:[%s5 + $0x218] sm:$0xff]
        %v3656 = vld [vmem:[%s5 + $0x220] sm:$0xff]
        %v3657 = vld [vmem:[%s5 + $0x228] sm:$0xff]
        %v3658 = vld [vmem:[%s5 + $0x230] sm:$0xff]
        %v3659 = vld [vmem:[%s5 + $0x238] sm:$0xff]
        %v3660 = vld [vmem:[%s5 + $0x240] sm:$0xff]
        %v3661 = vld [vmem:[%s5 + $0x248] sm:$0xff]
        %v3662 = vld [vmem:[%s5 + $0x250] sm:$0xff]
        %v3663 = vld [vmem:[%s5 + $0x258] sm:$0xff]
        %v3664 = vld [vmem:[%s5 + $0x260] sm:$0xff]
        %v3665 = vld [vmem:[%s5 + $0x268] sm:$0xff]
        %v3666 = vld [vmem:[%s5 + $0x270] sm:$0xff]
        %v3667 = vld [vmem:[%s5 + $0x278] sm:$0xff]
        %v3668 = vld [vmem:[%s5 + $0x280] sm:$0xff]
        %v3669 = vld [vmem:[%s5 + $0x288] sm:$0xff]
        %v3670 = vld [vmem:[%s5 + $0x290] sm:$0xff]
        %v3671 = vld [vmem:[%s5 + $0x298] sm:$0xff]
        %v3672 = vld [vmem:[%s5 + $0x2a0] sm:$0xff]
        %v3673 = vld [vmem:[%s5 + $0x2a8] sm:$0xff]
        %v3674 = vld [vmem:[%s5 + $0x2b0] sm:$0xff]
        %v3675 = vld [vmem:[%s5 + $0x2b8] sm:$0xff]
        %v3676 = vld [vmem:[%s5 + $0x2c0] sm:$0xff]
        %v3677 = vld [vmem:[%s5 + $0x2c8] sm:$0xff]
        %v3678 = vld [vmem:[%s5 + $0x2d0] sm:$0xff]
        %v3679 = vld [vmem:[%s5 + $0x2d8] sm:$0xff]
        %v3680 = vld [vmem:[%s5 + $0x2e0] sm:$0xff]
        %v3681 = vld [vmem:[%s5 + $0x2e8] sm:$0xff]
        %v3682 = vld [vmem:[%s5 + $0x2f0] sm:$0x33]
        %v3778 = vunpack.c.l.b16 %v3588
        %v3779 = vunpack.c.h.b16 %v3588
        %v3780 = vunpack.c.l.b16 %v3589
        %v3781 = vunpack.c.h.b16 %v3589
        %v3782 = vunpack.c.l.b16 %v3590
        %v3783 = vunpack.c.h.b16 %v3590
        %v3784 = vunpack.c.l.b16 %v3591
        %v3785 = vunpack.c.h.b16 %v3591
        %v3786 = vunpack.c.l.b16 %v3592
        %v3787 = vunpack.c.h.b16 %v3592
        %v3788 = vunpack.c.l.b16 %v3593
        %v3789 = vunpack.c.h.b16 %v3593
        %v3790 = vunpack.c.l.b16 %v3594
        %v3791 = vunpack.c.h.b16 %v3594
        %v3792 = vunpack.c.l.b16 %v3595
        %v3793 = vunpack.c.h.b16 %v3595
        %v3794 = vunpack.c.l.b16 %v3596
        %v3795 = vunpack.c.h.b16 %v3596
        %v3796 = vunpack.c.l.b16 %v3597
        %v3797 = vunpack.c.h.b16 %v3597
        %v3798 = vunpack.c.l.b16 %v3598
        %v3799 = vunpack.c.h.b16 %v3598
        %v3800 = vunpack.c.l.b16 %v3599
        %v3801 = vunpack.c.h.b16 %v3599
        %v3802 = vunpack.c.l.b16 %v3600
        %v3803 = vunpack.c.h.b16 %v3600
        %v3804 = vunpack.c.l.b16 %v3601
        %v3805 = vunpack.c.h.b16 %v3601
        %v3806 = vunpack.c.l.b16 %v3602
        %v3807 = vunpack.c.h.b16 %v3602
        %v3808 = vunpack.c.l.b16 %v3603
        %v3809 = vunpack.c.h.b16 %v3603
        %v3810 = vunpack.c.l.b16 %v3604
        %v3811 = vunpack.c.h.b16 %v3604
        %v3812 = vunpack.c.l.b16 %v3605
        %v3813 = vunpack.c.h.b16 %v3605
        %v3814 = vunpack.c.l.b16 %v3606
        %v3815 = vunpack.c.h.b16 %v3606
        %v3816 = vunpack.c.l.b16 %v3607
        %v3817 = vunpack.c.h.b16 %v3607
        %v3818 = vunpack.c.l.b16 %v3608
        %v3819 = vunpack.c.h.b16 %v3608
        %v3820 = vunpack.c.l.b16 %v3609
        %v3821 = vunpack.c.h.b16 %v3609
        %v3822 = vunpack.c.l.b16 %v3610
        %v3823 = vunpack.c.h.b16 %v3610
        %v3824 = vunpack.c.l.b16 %v3611
        %v3825 = vunpack.c.h.b16 %v3611
        %v3826 = vunpack.c.l.b16 %v3612
        %v3827 = vunpack.c.h.b16 %v3612
        %v3828 = vunpack.c.l.b16 %v3613
        %v3829 = vunpack.c.h.b16 %v3613
        %v3830 = vunpack.c.l.b16 %v3614
        %v3831 = vunpack.c.h.b16 %v3614
        %v3832 = vunpack.c.l.b16 %v3615
        %v3833 = vunpack.c.h.b16 %v3615
        %v3834 = vunpack.c.l.b16 %v3616
        %v3835 = vunpack.c.h.b16 %v3616
        %v3836 = vunpack.c.l.b16 %v3617
        %v3837 = vunpack.c.h.b16 %v3617
        %v3838 = vunpack.c.l.b16 %v3618
        %v3839 = vunpack.c.h.b16 %v3618
        %v3840 = vunpack.c.l.b16 %v3619
        %v3841 = vunpack.c.h.b16 %v3619
        %v3842 = vunpack.c.l.b16 %v3620
        %v3843 = vunpack.c.h.b16 %v3620
        %v3844 = vunpack.c.l.b16 %v3621
        %v3845 = vunpack.c.h.b16 %v3621
        %v3846 = vunpack.c.l.b16 %v3622
        %v3847 = vunpack.c.h.b16 %v3622
        %v3848 = vunpack.c.l.b16 %v3623
        %v3849 = vunpack.c.h.b16 %v3623
        %v3850 = vunpack.c.l.b16 %v3624
        %v3851 = vunpack.c.h.b16 %v3624
        %v3852 = vunpack.c.l.b16 %v3625
        %v3853 = vunpack.c.h.b16 %v3625
        %v3854 = vunpack.c.l.b16 %v3626
        %v3855 = vunpack.c.h.b16 %v3626
        %v3856 = vunpack.c.l.b16 %v3627
        %v3857 = vunpack.c.h.b16 %v3627
        %v3858 = vunpack.c.l.b16 %v3628
        %v3859 = vunpack.c.h.b16 %v3628
        %v3860 = vunpack.c.l.b16 %v3629
        %v3861 = vunpack.c.h.b16 %v3629
        %v3862 = vunpack.c.l.b16 %v3630
        %v3863 = vunpack.c.h.b16 %v3630
        %v3864 = vunpack.c.l.b16 %v3631
        %v3865 = vunpack.c.h.b16 %v3631
        %v3866 = vunpack.c.l.b16 %v3632
        %v3867 = vunpack.c.h.b16 %v3632
        %v3868 = vunpack.c.l.b16 %v3633
        %v3869 = vunpack.c.h.b16 %v3633
        %v3870 = vunpack.c.l.b16 %v3634
        %v3871 = vunpack.c.h.b16 %v3634
        %v3872 = vunpack.c.l.b16 %v3635
        %v3873 = vunpack.c.h.b16 %v3635
        %v3874 = vunpack.c.l.b16 %v3636
        %v3875 = vunpack.c.h.b16 %v3636
        %v3876 = vunpack.c.l.b16 %v3637
        %v3877 = vunpack.c.h.b16 %v3637
        %v3878 = vunpack.c.l.b16 %v3638
        %v3879 = vunpack.c.h.b16 %v3638
        %v3880 = vunpack.c.l.b16 %v3639
        %v3881 = vunpack.c.h.b16 %v3639
        %v3882 = vunpack.c.l.b16 %v3640
        %v3883 = vunpack.c.h.b16 %v3640
        %v3884 = vunpack.c.l.b16 %v3641
        %v3885 = vunpack.c.h.b16 %v3641
        %v3886 = vunpack.c.l.b16 %v3642
        %v3887 = vunpack.c.h.b16 %v3642
        %v3888 = vunpack.c.l.b16 %v3643
        %v3889 = vunpack.c.h.b16 %v3643
        %v3890 = vunpack.c.l.b16 %v3644
        %v3891 = vunpack.c.h.b16 %v3644
        %v3892 = vunpack.c.l.b16 %v3645
        %v3893 = vunpack.c.h.b16 %v3645
        %v3894 = vunpack.c.l.b16 %v3646
        %v3895 = vunpack.c.h.b16 %v3646
        %v3896 = vunpack.c.l.b16 %v3647
        %v3897 = vunpack.c.h.b16 %v3647
        %v3898 = vunpack.c.l.b16 %v3648
        %v3899 = vunpack.c.h.b16 %v3648
        %v3900 = vunpack.c.l.b16 %v3649
        %v3901 = vunpack.c.h.b16 %v3649
        %v3902 = vunpack.c.l.b16 %v3650
        %v3903 = vunpack.c.h.b16 %v3650
        %v3904 = vunpack.c.l.b16 %v3651
        %v3905 = vunpack.c.h.b16 %v3651
        %v3906 = vunpack.c.l.b16 %v3652
        %v3907 = vunpack.c.h.b16 %v3652
        %v3908 = vunpack.c.l.b16 %v3653
        %v3909 = vunpack.c.h.b16 %v3653
        %v3910 = vunpack.c.l.b16 %v3654
        %v3911 = vunpack.c.h.b16 %v3654
        %v3912 = vunpack.c.l.b16 %v3655
        %v3913 = vunpack.c.h.b16 %v3655
        %v3914 = vunpack.c.l.b16 %v3656
        %v3915 = vunpack.c.h.b16 %v3656
        %v3916 = vunpack.c.l.b16 %v3657
        %v3917 = vunpack.c.h.b16 %v3657
        %v3918 = vunpack.c.l.b16 %v3658
        %v3919 = vunpack.c.h.b16 %v3658
        %v3920 = vunpack.c.l.b16 %v3659
        %v3921 = vunpack.c.h.b16 %v3659
        %v3922 = vunpack.c.l.b16 %v3660
        %v3923 = vunpack.c.h.b16 %v3660
        %v3924 = vunpack.c.l.b16 %v3661
        %v3925 = vunpack.c.h.b16 %v3661
        %v3926 = vunpack.c.l.b16 %v3662
        %v3927 = vunpack.c.h.b16 %v3662
        %v3928 = vunpack.c.l.b16 %v3663
        %v3929 = vunpack.c.h.b16 %v3663
        %v3930 = vunpack.c.l.b16 %v3664
        %v3931 = vunpack.c.h.b16 %v3664
        %v3932 = vunpack.c.l.b16 %v3665
        %v3933 = vunpack.c.h.b16 %v3665
        %v3934 = vunpack.c.l.b16 %v3666
        %v3935 = vunpack.c.h.b16 %v3666
        %v3936 = vunpack.c.l.b16 %v3667
        %v3937 = vunpack.c.h.b16 %v3667
        %v3938 = vunpack.c.l.b16 %v3668
        %v3939 = vunpack.c.h.b16 %v3668
        %v3940 = vunpack.c.l.b16 %v3669
        %v3941 = vunpack.c.h.b16 %v3669
        %v3942 = vunpack.c.l.b16 %v3670
        %v3943 = vunpack.c.h.b16 %v3670
        %v3944 = vunpack.c.l.b16 %v3671
        %v3945 = vunpack.c.h.b16 %v3671
        %v3946 = vunpack.c.l.b16 %v3672
        %v3947 = vunpack.c.h.b16 %v3672
        %v3948 = vunpack.c.l.b16 %v3673
        %v3949 = vunpack.c.h.b16 %v3673
        %v3950 = vunpack.c.l.b16 %v3674
        %v3951 = vunpack.c.h.b16 %v3674
        %v3952 = vunpack.c.l.b16 %v3675
        %v3953 = vunpack.c.h.b16 %v3675
        %v3954 = vunpack.c.l.b16 %v3676
        %v3955 = vunpack.c.h.b16 %v3676
        %v3956 = vunpack.c.l.b16 %v3677
        %v3957 = vunpack.c.h.b16 %v3677
        %v3958 = vunpack.c.l.b16 %v3678
        %v3959 = vunpack.c.h.b16 %v3678
        %v3960 = vunpack.c.l.b16 %v3679
        %v3961 = vunpack.c.h.b16 %v3679
        %v3962 = vunpack.c.l.b16 %v3680
        %v3963 = vunpack.c.h.b16 %v3680
        %v3964 = vunpack.c.l.b16 %v3681
        %v3965 = vunpack.c.h.b16 %v3681
        %v3966 = vunpack.c.l.b16 %v3682
        %v3967 = vunpack.c.h.b16 %v3682
        %v3968 = vpack.c.b16 %v3780, %v3778
        %v3969 = vpack.c.b16 %v3781, %v3779
        %v3970 = vpack.c.b16 %v3784, %v3782
        %v3971 = vpack.c.b16 %v3785, %v3783
        %v3972 = vpack.c.b16 %v3788, %v3786
        %v3973 = vpack.c.b16 %v3789, %v3787
        %v3974 = vpack.c.b16 %v3792, %v3790
        %v3975 = vpack.c.b16 %v3793, %v3791
        %v3976 = vpack.c.b16 %v3796, %v3794
        %v3977 = vpack.c.b16 %v3797, %v3795
        %v3978 = vpack.c.b16 %v3800, %v3798
        %v3979 = vpack.c.b16 %v3801, %v3799
        %v3980 = vpack.c.b16 %v3804, %v3802
        %v3981 = vpack.c.b16 %v3805, %v3803
        %v3982 = vpack.c.b16 %v3808, %v3806
        %v3983 = vpack.c.b16 %v3809, %v3807
        %v3984 = vpack.c.b16 %v3812, %v3810
        %v3985 = vpack.c.b16 %v3813, %v3811
        %v3986 = vpack.c.b16 %v3816, %v3814
        %v3987 = vpack.c.b16 %v3817, %v3815
        %v3988 = vpack.c.b16 %v3820, %v3818
        %v3989 = vpack.c.b16 %v3821, %v3819
        %v3990 = vpack.c.b16 %v3824, %v3822
        %v3991 = vpack.c.b16 %v3825, %v3823
        %v3992 = vpack.c.b16 %v3828, %v3826
        %v3993 = vpack.c.b16 %v3829, %v3827
        %v3994 = vpack.c.b16 %v3832, %v3830
        %v3995 = vpack.c.b16 %v3833, %v3831
        %v3996 = vpack.c.b16 %v3836, %v3834
        %v3997 = vpack.c.b16 %v3837, %v3835
        %v3998 = vpack.c.b16 %v3840, %v3838
        %v3999 = vpack.c.b16 %v3841, %v3839
        %v4000 = vpack.c.b16 %v3844, %v3842
        %v4001 = vpack.c.b16 %v3845, %v3843
        %v4002 = vpack.c.b16 %v3848, %v3846
        %v4003 = vpack.c.b16 %v3849, %v3847
        %v4004 = vpack.c.b16 %v3852, %v3850
        %v4005 = vpack.c.b16 %v3853, %v3851
        %v4006 = vpack.c.b16 %v3856, %v3854
        %v4007 = vpack.c.b16 %v3857, %v3855
        %v4008 = vpack.c.b16 %v3860, %v3858
        %v4009 = vpack.c.b16 %v3861, %v3859
        %v4010 = vpack.c.b16 %v3864, %v3862
        %v4011 = vpack.c.b16 %v3865, %v3863
        %v4012 = vpack.c.b16 %v3868, %v3866
        %v4013 = vpack.c.b16 %v3869, %v3867
        %v4014 = vpack.c.b16 %v3872, %v3870
        %v4015 = vpack.c.b16 %v3873, %v3871
        %v4016 = vpack.c.b16 %v3876, %v3874
        %v4017 = vpack.c.b16 %v3877, %v3875
        %v4018 = vpack.c.b16 %v3880, %v3878
        %v4019 = vpack.c.b16 %v3881, %v3879
        %v4020 = vpack.c.b16 %v3884, %v3882
        %v4021 = vpack.c.b16 %v3885, %v3883
        %v4022 = vpack.c.b16 %v3888, %v3886
        %v4023 = vpack.c.b16 %v3889, %v3887
        %v4024 = vpack.c.b16 %v3892, %v3890
        %v4025 = vpack.c.b16 %v3893, %v3891
        %v4026 = vpack.c.b16 %v3896, %v3894
        %v4027 = vpack.c.b16 %v3897, %v3895
        %v4028 = vpack.c.b16 %v3900, %v3898
        %v4029 = vpack.c.b16 %v3901, %v3899
        %v4030 = vpack.c.b16 %v3904, %v3902
        %v4031 = vpack.c.b16 %v3905, %v3903
        %v4032 = vpack.c.b16 %v3908, %v3906
        %v4033 = vpack.c.b16 %v3909, %v3907
        %v4034 = vpack.c.b16 %v3912, %v3910
        %v4035 = vpack.c.b16 %v3913, %v3911
        %v4036 = vpack.c.b16 %v3916, %v3914
        %v4037 = vpack.c.b16 %v3917, %v3915
        %v4038 = vpack.c.b16 %v3920, %v3918
        %v4039 = vpack.c.b16 %v3921, %v3919
        %v4040 = vpack.c.b16 %v3924, %v3922
        %v4041 = vpack.c.b16 %v3925, %v3923
        %v4042 = vpack.c.b16 %v3928, %v3926
        %v4043 = vpack.c.b16 %v3929, %v3927
        %v4044 = vpack.c.b16 %v3932, %v3930
        %v4045 = vpack.c.b16 %v3933, %v3931
        %v4046 = vpack.c.b16 %v3936, %v3934
        %v4047 = vpack.c.b16 %v3937, %v3935
        %v4048 = vpack.c.b16 %v3940, %v3938
        %v4049 = vpack.c.b16 %v3941, %v3939
        %v4050 = vpack.c.b16 %v3944, %v3942
        %v4051 = vpack.c.b16 %v3945, %v3943
        %v4052 = vpack.c.b16 %v3948, %v3946
        %v4053 = vpack.c.b16 %v3949, %v3947
        %v4054 = vpack.c.b16 %v3952, %v3950
        %v4055 = vpack.c.b16 %v3953, %v3951
        %v4056 = vpack.c.b16 %v3956, %v3954
        %v4057 = vpack.c.b16 %v3957, %v3955
        %v4058 = vpack.c.b16 %v3960, %v3958
        %v4059 = vpack.c.b16 %v3961, %v3959
        %v4060 = vpack.c.b16 %v3964, %v3962
        %v4061 = vpack.c.b16 %v3965, %v3963
        %v4062 = vpack.c.b16 %v3966, %v3966
        %v4063 = vpack.c.b16 %v3967, %v3967
        %vm4158 = vcmask 941056
        %v4160 = vsel %vm4158, %v3581, 0
        %v4163 = vsel %vm4158, %v3587, 0
        %vm4165 = vcmask 1040384
        %vm4166 = vcmask 1041408
        %v4167 = vsel %vm4165, 4294967295, 65535
        %v4168 = vsel %vm4166, %v4167, 0
        %v4170 = vand.u32 %v4062, %v4168
        %v4173 = vand.u32 %v4063, %v4168
        %4175 = vmatprep.subr.bf16.mxu0 %v3969
        %4176 = vmatpush1.bf16.msra.mxu0 %v3968
        %4177 = vmatprep.subr.bf16.mxu0 %v3971
        %4178 = vmatpush1.bf16.msra.mxu0 %v3970
        %4179 = vmatprep.subr.bf16.mxu0 %v3973
        %4180 = vmatpush1.bf16.msra.mxu0 %v3972
        %4181 = vmatprep.subr.bf16.mxu0 %v3975
        %4182 = vmatpush1.bf16.msra.mxu0 %v3974
        %4183 = vmatprep.subr.bf16.mxu0 %v3977
        %4184 = vmatpush1.bf16.msra.mxu0 %v3976
        %4185 = vmatprep.subr.bf16.mxu0 %v3979
        %4186 = vmatpush1.bf16.msra.mxu0 %v3978
        %4187 = vmatprep.subr.bf16.mxu0 %v3981
        %4188 = vmatpush1.bf16.msra.mxu0 %v3980
        %4189 = vmatprep.subr.bf16.mxu0 %v3983
        %4190 = vmatpush1.bf16.msra.mxu0 %v3982
        %4191 = vmatprep.subr.bf16.mxu0 %v3985
        %4192 = vmatpush1.bf16.msra.mxu0 %v3984
        %4193 = vmatprep.subr.bf16.mxu0 %v3987
        %4194 = vmatpush1.bf16.msra.mxu0 %v3986
        %4195 = vmatprep.subr.bf16.mxu0 %v3989
        %4196 = vmatpush1.bf16.msra.mxu0 %v3988
        %4197 = vmatprep.subr.bf16.mxu0 %v3991
        %4198 = vmatpush1.bf16.msra.mxu0 %v3990
        %4199 = vmatprep.subr.bf16.mxu0 %v3993
        %4200 = vmatpush1.bf16.msra.mxu0 %v3992
        %4201 = vmatprep.subr.bf16.mxu0 %v3995
        %4202 = vmatpush1.bf16.msra.mxu0 %v3994
        %4203 = vmatprep.subr.bf16.mxu0 %v3997
        %4204 = vmatpush1.bf16.msra.mxu0 %v3996
        %4205 = vmatprep.subr.bf16.mxu0 %v3999
        %4206 = vmatpush1.bf16.msra.mxu0 %v3998
        %4207 = vmatprep.mubr.bf16.mxu0 %v3577
        %4208 = vmatmul.mubr.bf16.gmra.mrb[0].mxu0 %v3576
        %v4209 = vpop.f32.mrb[0].mxu0
        %v4210 = vadd.f32 0.0, %v4209
        %v4211 = vpop.f32.mrb[0].mxu0
        %v4212 = vadd.f32 0.0, %v4211
        %v4213 = vpop.f32.mrb[0].mxu0
        %v4214 = vadd.f32 0.0, %v4213
        %v4215 = vpop.f32.mrb[0].mxu0
        %v4216 = vadd.f32 0.0, %v4215
        %4217 = vmatprep.mubr.bf16.mxu0 %v3583
        %4218 = vmatmul.mubr.bf16.gmra.mrb[0].mxu0 %v3582
        %v4219 = vpop.f32.mrb[0].mxu0
        %v4220 = vadd.f32 0.0, %v4219
        %v4221 = vpop.f32.mrb[0].mxu0
        %v4222 = vadd.f32 0.0, %v4221
        %v4223 = vpop.f32.mrb[0].mxu0
        %v4224 = vpop.f32.mrb[0].mxu0
        %4225 = vdwg.mxu0
        %4226 = vmatprep.subr.bf16.mxu0 %v4001
        %4227 = vmatpush1.bf16.msra.mxu0 %v4000
        %4228 = vmatprep.subr.bf16.mxu0 %v4003
        %4229 = vmatpush1.bf16.msra.mxu0 %v4002
        %4230 = vmatprep.subr.bf16.mxu0 %v4005
        %4231 = vmatpush1.bf16.msra.mxu0 %v4004
        %4232 = vmatprep.subr.bf16.mxu0 %v4007
        %4233 = vmatpush1.bf16.msra.mxu0 %v4006
        %4234 = vmatprep.subr.bf16.mxu0 %v4009
        %4235 = vmatpush1.bf16.msra.mxu0 %v4008
        %4236 = vmatprep.subr.bf16.mxu0 %v4011
        %4237 = vmatpush1.bf16.msra.mxu0 %v4010
        %4238 = vmatprep.subr.bf16.mxu0 %v4013
        %4239 = vmatpush1.bf16.msra.mxu0 %v4012
        %4240 = vmatprep.subr.bf16.mxu0 %v4015
        %4241 = vmatpush1.bf16.msra.mxu0 %v4014
        %4242 = vmatprep.subr.bf16.mxu0 %v4017
        %4243 = vmatpush1.bf16.msra.mxu0 %v4016
        %4244 = vmatprep.subr.bf16.mxu0 %v4019
        %4245 = vmatpush1.bf16.msra.mxu0 %v4018
        %4246 = vmatprep.subr.bf16.mxu0 %v4021
        %4247 = vmatpush1.bf16.msra.mxu0 %v4020
        %4248 = vmatprep.subr.bf16.mxu0 %v4023
        %4249 = vmatpush1.bf16.msra.mxu0 %v4022
        %4250 = vmatprep.subr.bf16.mxu0 %v4025
        %4251 = vmatpush1.bf16.msra.mxu0 %v4024
        %4252 = vmatprep.subr.bf16.mxu0 %v4027
        %4253 = vmatpush1.bf16.msra.mxu0 %v4026
        %4254 = vmatprep.subr.bf16.mxu0 %v4029
        %4255 = vmatpush1.bf16.msra.mxu0 %v4028
        %4256 = vmatprep.subr.bf16.mxu0 %v4031
        %4257 = vmatpush1.bf16.msra.mxu0 %v4030
        %4258 = vmatprep.mubr.bf16.mxu0 %v3579
        %4259 = vmatmul.mubr.bf16.gmra.mrb[0].mxu0 %v3578
        %v4260 = vpop.f32.mrb[0].mxu0
        %v4261 = vadd.f32 %v4210, %v4260
        %v4262 = vpop.f32.mrb[0].mxu0
        %v4263 = vadd.f32 %v4212, %v4262
        %v4264 = vpop.f32.mrb[0].mxu0
        %v4265 = vadd.f32 %v4214, %v4264
        %v4266 = vpop.f32.mrb[0].mxu0
        %v4267 = vadd.f32 %v4216, %v4266
        %4268 = vmatprep.mubr.bf16.mxu0 %v3585
        %4269 = vmatmul.mubr.bf16.gmra.mrb[0].mxu0 %v3584
        %v4270 = vpop.f32.mrb[0].mxu0
        %v4271 = vadd.f32 %v4220, %v4270
        %v4272 = vpop.f32.mrb[0].mxu0
        %v4273 = vadd.f32 %v4222, %v4272
        %v4274 = vpop.f32.mrb[0].mxu0
        %v4275 = vpop.f32.mrb[0].mxu0
        %4276 = vdwg.mxu0
        %4277 = vmatprep.subr.bf16.mxu0 %v4033
        %4278 = vmatpush1.bf16.msra.mxu0 %v4032
        %4279 = vmatprep.subr.bf16.mxu0 %v4035
        %4280 = vmatpush1.bf16.msra.mxu0 %v4034
        %4281 = vmatprep.subr.bf16.mxu0 %v4037
        %4282 = vmatpush1.bf16.msra.mxu0 %v4036
        %4283 = vmatprep.subr.bf16.mxu0 %v4039
        %4284 = vmatpush1.bf16.msra.mxu0 %v4038
        %4285 = vmatprep.subr.bf16.mxu0 %v4041
        %4286 = vmatpush1.bf16.msra.mxu0 %v4040
        %4287 = vmatprep.subr.bf16.mxu0 %v4043
        %4288 = vmatpush1.bf16.msra.mxu0 %v4042
        %4289 = vmatprep.subr.bf16.mxu0 %v4045
        %4290 = vmatpush1.bf16.msra.mxu0 %v4044
        %4291 = vmatprep.subr.bf16.mxu0 %v4047
        %4292 = vmatpush1.bf16.msra.mxu0 %v4046
        %4293 = vmatprep.subr.bf16.mxu0 %v4049
        %4294 = vmatpush1.bf16.msra.mxu0 %v4048
        %4295 = vmatprep.subr.bf16.mxu0 %v4051
        %4296 = vmatpush1.bf16.msra.mxu0 %v4050
        %4297 = vmatprep.subr.bf16.mxu0 %v4053
        %4298 = vmatpush1.bf16.msra.mxu0 %v4052
        %4299 = vmatprep.subr.bf16.mxu0 %v4055
        %4300 = vmatpush1.bf16.msra.mxu0 %v4054
        %4301 = vmatprep.subr.bf16.mxu0 %v4057
        %4302 = vmatpush1.bf16.msra.mxu0 %v4056
        %4303 = vmatprep.subr.bf16.mxu0 %v4059
        %4304 = vmatpush1.bf16.msra.mxu0 %v4058
        %4305 = vmatprep.subr.bf16.mxu0 %v4061
        %4306 = vmatpush1.bf16.msra.mxu0 %v4060
        %4307 = vmatprep.subr.bf16.mxu0 %v4173
        %4308 = vmatpush1.bf16.msra.mxu0 %v4170
        %4309 = vmatprep.mubr.bf16.mxu0 %v4160
        %4310 = vmatmul.mubr.bf16.gmra.mrb[0].mxu0 %v3580
        %v4311 = vpop.f32.mrb[0].mxu0
        %v4312 = vadd.f32 %v4261, %v4311
        %v4313 = vpop.f32.mrb[0].mxu0
        %v4314 = vadd.f32 %v4263, %v4313
        %v4315 = vpop.f32.mrb[0].mxu0
        %v4316 = vadd.f32 %v4265, %v4315
        %v4317 = vpop.f32.mrb[0].mxu0
        %v4318 = vadd.f32 %v4267, %v4317
        %4319 = vmatprep.mubr.bf16.mxu0 %v4163
        %4320 = vmatmul.mubr.bf16.gmra.mrb[0].mxu0 %v3586
        %v4321 = vpop.f32.mrb[0].mxu0
        %v4322 = vadd.f32 %v4271, %v4321
        %v4323 = vpop.f32.mrb[0].mxu0
        %v4324 = vadd.f32 %v4273, %v4323
        %v4325 = vpop.f32.mrb[0].mxu0
        %v4326 = vpop.f32.mrb[0].mxu0
        %4327 = vdwg.mxu0
        %4334 = vrot.lane.b32.xlu0 %v4312, 114
        %v4335 = vpop.permute.xlu0 %4334
        %4336 = vrot.lane.b32.xlu0 %v4314, 114
        %v4337 = vpop.permute.xlu0 %4336
        %4338 = vrot.lane.b32.xlu0 %v4316, 114
        %v4339 = vpop.permute.xlu0 %4338
        %4340 = vrot.lane.b32.xlu0 %v4318, 114
        %v4341 = vpop.permute.xlu0 %4340
        %4342 = vrot.lane.b32.xlu0 %v4322, 114
        %v4343 = vpop.permute.xlu0 %4342
        %4344 = vrot.lane.b32.xlu0 %v4324, 114
        %v4345 = vpop.permute.xlu0 %4344
        %vm4346 = vcmask 932864
        %v4347 = vsel %vm4346, %v4335, %v4337
        %v4348 = vsel %vm4346, %v4339, %v4341
        %v4349 = vsel %vm4346, %v4343, %v4345
        %4356 = vrot.lane.b32.xlu0 %v4312, 100
        %v4357 = vpop.permute.xlu0 %4356
        %4358 = vrot.lane.b32.xlu0 %v4314, 100
        %v4359 = vpop.permute.xlu0 %4358
        %4360 = vrot.lane.b32.xlu0 %v4316, 100
        %v4361 = vpop.permute.xlu0 %4360
        %4362 = vrot.lane.b32.xlu0 %v4318, 100
        %v4363 = vpop.permute.xlu0 %4362
        %4364 = vrot.lane.b32.xlu0 %v4322, 100
        %v4365 = vpop.permute.xlu0 %4364
        %4366 = vrot.lane.b32.xlu0 %v4324, 100
        %v4367 = vpop.permute.xlu0 %4366
        %v4368 = vsel %vm804, %v4357, %v4359
        %v4369 = vsel %vm804, %v4361, %v4363
        %v4370 = vsel %vm804, %v4365, %v4367
        %v4377 = vld [vmem:[%s8] ss:$2 sm:$0x3]
        %v4379 = vlaneseq
        %v4380 = vshrl.u32 %v4379, 7
        %v4381 = vsub.s32 0, %v4380
        %v4382 = vrot.slane %v4377, %v4381
        %v4383 = vlaneseq
        %v4384 = vshrl.u32 %v4383, 7
        %v4385 = vsub.s32 1, %v4384
        %v4386 = vrot.slane %v4377, %v4385
        %v4389 = vmul.f32 %v4312, %v4382
        %v4390 = vmul.f32 %v4314, %v4386
        %v4391 = vmul.f32 %v4316, %v4382
        %v4392 = vmul.f32 %v4318, %v4386
        %v4393 = vmul.f32 %v4322, %v4382
        %v4394 = vmul.f32 %v4324, %v4386
        %v4395 = vmul.f32 %v4347, %v4382
        %v4396 = vmul.f32 %v4337, %v4386
        %v4397 = vmul.f32 %v4348, %v4382
        %v4398 = vmul.f32 %v4341, %v4386
        %v4399 = vmul.f32 %v4349, %v4382
        %v4400 = vmul.f32 %v4345, %v4386
        %v4401 = vmul.f32 %v4368, %v4382
        %v4402 = vmul.f32 %v4359, %v4386
        %v4403 = vmul.f32 %v4369, %v4382
        %v4404 = vmul.f32 %v4363, %v4386
        %v4405 = vmul.f32 %v4370, %v4382
        %v4406 = vmul.f32 %v4367, %v4386
        %v4407 = vld [vmem:[%s6] sm:$0xff]
        %s4408 = scalar_lea.vmem %s6, 8
        %v4409 = vld [vmem:[%s4408] sm:$0xff]
        %4410 = vrot.lane.b32.xlu0 %v4312, 127
        %v4411 = vpop.permute.xlu0 %4410
        %4412 = vrot.lane.b32.xlu0 %v4314, 127
        %v4413 = vpop.permute.xlu0 %4412
        %4414 = vrot.lane.b32.xlu0 %v4316, 127
        %v4415 = vpop.permute.xlu0 %4414
        %4416 = vrot.lane.b32.xlu0 %v4318, 127
        %v4417 = vpop.permute.xlu0 %4416
        %4418 = vrot.lane.b32.xlu0 %v4322, 127
        %v4419 = vpop.permute.xlu0 %4418
        %4420 = vrot.lane.b32.xlu0 %v4324, 127
        %v4421 = vpop.permute.xlu0 %4420
        %4422 = vrot.lane.b32.xlu0 %v4347, 127
        %v4423 = vpop.permute.xlu0 %4422
        %4424 = vrot.lane.b32.xlu0 %v4337, 127
        %v4425 = vpop.permute.xlu0 %4424
        %4426 = vrot.lane.b32.xlu0 %v4348, 127
        %v4427 = vpop.permute.xlu0 %4426
        %4428 = vrot.lane.b32.xlu0 %v4341, 127
        %v4429 = vpop.permute.xlu0 %4428
        %4430 = vrot.lane.b32.xlu0 %v4349, 127
        %v4431 = vpop.permute.xlu0 %4430
        %4432 = vrot.lane.b32.xlu0 %v4345, 127
        %v4433 = vpop.permute.xlu0 %4432
        %4434 = vrot.lane.b32.xlu0 %v4368, 127
        %v4435 = vpop.permute.xlu0 %4434
        %4436 = vrot.lane.b32.xlu0 %v4359, 127
        %v4437 = vpop.permute.xlu0 %4436
        %4438 = vrot.lane.b32.xlu0 %v4369, 127
        %v4439 = vpop.permute.xlu0 %4438
        %4440 = vrot.lane.b32.xlu0 %v4363, 127
        %v4441 = vpop.permute.xlu0 %4440
        %4442 = vrot.lane.b32.xlu0 %v4370, 127
        %v4443 = vpop.permute.xlu0 %4442
        %4444 = vrot.lane.b32.xlu0 %v4367, 127
        %v4445 = vpop.permute.xlu0 %4444
        %v4446 = vsel %vm1365, %v4411, %v4413
        %v4447 = vsel %vm1365, %v4415, %v4417
        %v4448 = vsel %vm1365, %v4419, %v4421
        %v4449 = vsel %vm1365, %v4423, %v4425
        %v4450 = vsel %vm1365, %v4427, %v4429
        %v4451 = vsel %vm1365, %v4431, %v4433
        %v4452 = vsel %vm1365, %v4435, %v4437
        %v4453 = vsel %vm1365, %v4439, %v4441
        %v4454 = vsel %vm1365, %v4443, %v4445
        %v4474 = vsel %vm940, %v4409, 0
        %4476 = vmatprep.subr.mxu0 %v4413
        %4477 = vmatpush1.msra.mxu0 %v4446
        %4478 = vmatprep.subr.mxu0 %v4417
        %4479 = vmatpush1.msra.mxu0 %v4447
        %4480 = vmatprep.subr.mxu0 %v4421
        %4481 = vmatpush1.msra.mxu0 %v4448
        %4482 = vmatprep.subr.mxu0 %v4425
        %4483 = vmatpush1.msra.mxu0 %v4449
        %4484 = vmatprep.subr.mxu0 %v4429
        %4485 = vmatpush1.msra.mxu0 %v4450
        %4486 = vmatprep.subr.mxu0 %v4433
        %4487 = vmatpush1.msra.mxu0 %v4451
        %4488 = vmatprep.subr.mxu0 %v4437
        %4489 = vmatpush1.msra.mxu0 %v4452
        %4490 = vmatprep.subr.mxu0 %v4441
        %4491 = vmatpush1.msra.mxu0 %v4453
        %4492 = vmatprep.subr.mxu0 %v4445
        %4493 = vmatpush1.msra.mxu0 %v4454
        %4494 = vmatprep.subr.mxu0 0.0
        %4495 = vmatpush1.msra.mxu0 0.0
        %4496 = vmatprep.subr.mxu0 0.0
        %4497 = vmatpush1.msra.mxu0 0.0
        %4498 = vmatprep.subr.mxu0 0.0
        %4499 = vmatpush1.msra.mxu0 0.0
        %4500 = vmatprep.subr.mxu0 0.0
        %4501 = vmatpush1.msra.mxu0 0.0
        %4502 = vmatprep.subr.mxu0 0.0
        %4503 = vmatpush1.msra.mxu0 0.0
        %4504 = vmatprep.subr.mxu0 0.0
        %4505 = vmatpush1.msra.mxu0 0.0
        %4506 = vmatprep.subr.mxu0 0.0
        %4507 = vmatpush1.msra.mxu0 0.0
        %4508 = vmatprep.subr.mxu0 0.0
        %4509 = vmatpush1.msra.mxu0 0.0
        %4510 = vmatprep.subr.mxu0 0.0
        %4511 = vmatpush1.msra.mxu0 0.0
        %4512 = vmatprep.subr.mxu0 0.0
        %4513 = vmatpush1.msra.mxu0 0.0
        %4514 = vmatprep.subr.mxu0 0.0
        %4515 = vmatpush1.msra.mxu0 0.0
        %4516 = vmatprep.subr.mxu0 0.0
        %4517 = vmatpush1.msra.mxu0 0.0
        %4518 = vmatprep.subr.mxu0 0.0
        %4519 = vmatpush1.msra.mxu0 0.0
        %4520 = vmatprep.subr.mxu0 0.0
        %4521 = vmatpush1.msra.mxu0 0.0
        %4522 = vmatprep.subr.mxu0 0.0
        %4523 = vmatpush1.msra.mxu0 0.0
        %4524 = vmatprep.subr.mxu0 0.0
        %4525 = vmatpush1.msra.mxu0 0.0
        %4526 = vmatprep.subr.mxu0 0.0
        %4527 = vmatpush1.msra.mxu0 0.0
        %4528 = vmatprep.subr.mxu0 0.0
        %4529 = vmatpush1.msra.mxu0 0.0
        %4530 = vmatprep.subr.mxu0 0.0
        %4531 = vmatpush1.msra.mxu0 0.0
        %4532 = vmatprep.subr.mxu0 0.0
        %4533 = vmatpush1.msra.mxu0 0.0
        %4534 = vmatprep.subr.mxu0 0.0
        %4535 = vmatpush1.msra.mxu0 0.0
        %4536 = vmatprep.subr.mxu0 0.0
        %4537 = vmatpush1.msra.mxu0 0.0
        %4538 = vmatprep.subr.mxu0 0.0
        %4539 = vmatpush1.msra.mxu0 0.0
        %4540 = vmatprep.mubr.f32.mxu0 0.0
        %4541 = vmatmul.mubr.f32.gmra.mrb[0].mxu0 %v4474
        %v4542 = vpop.f32.mrb[0].mxu0
        %v4543 = vadd.f32 0.0, %v4542
        %v4544 = vpop.f32.mrb[0].mxu0
        %v4545 = vadd.f32 0.0, %v4544
        %4546 = vdwg.mxu0
        %v4548 = vsel %vm940, %v4407, 0
        %4550 = vmatprep.subr.mxu0 %v4390
        %4551 = vmatpush1.msra.mxu0 %v4389
        %4552 = vmatprep.subr.mxu0 %v4392
        %4553 = vmatpush1.msra.mxu0 %v4391
        %4554 = vmatprep.subr.mxu0 %v4394
        %4555 = vmatpush1.msra.mxu0 %v4393
        %4556 = vmatprep.subr.mxu0 %v4396
        %4557 = vmatpush1.msra.mxu0 %v4395
        %4558 = vmatprep.subr.mxu0 %v4398
        %4559 = vmatpush1.msra.mxu0 %v4397
        %4560 = vmatprep.subr.mxu0 %v4400
        %4561 = vmatpush1.msra.mxu0 %v4399
        %4562 = vmatprep.subr.mxu0 %v4402
        %4563 = vmatpush1.msra.mxu0 %v4401
        %4564 = vmatprep.subr.mxu0 %v4404
        %4565 = vmatpush1.msra.mxu0 %v4403
        %4566 = vmatprep.subr.mxu0 %v4406
        %4567 = vmatpush1.msra.mxu0 %v4405
        %4568 = vmatprep.subr.mxu0 0.0
        %4569 = vmatpush1.msra.mxu0 0.0
        %4570 = vmatprep.subr.mxu0 0.0
        %4571 = vmatpush1.msra.mxu0 0.0
        %4572 = vmatprep.subr.mxu0 0.0
        %4573 = vmatpush1.msra.mxu0 0.0
        %4574 = vmatprep.subr.mxu0 0.0
        %4575 = vmatpush1.msra.mxu0 0.0
        %4576 = vmatprep.subr.mxu0 0.0
        %4577 = vmatpush1.msra.mxu0 0.0
        %4578 = vmatprep.subr.mxu0 0.0
        %4579 = vmatpush1.msra.mxu0 0.0
        %4580 = vmatprep.subr.mxu0 0.0
        %4581 = vmatpush1.msra.mxu0 0.0
        %4582 = vmatprep.subr.mxu0 0.0
        %4583 = vmatpush1.msra.mxu0 0.0
        %4584 = vmatprep.subr.mxu0 0.0
        %4585 = vmatpush1.msra.mxu0 0.0
        %4586 = vmatprep.subr.mxu0 0.0
        %4587 = vmatpush1.msra.mxu0 0.0
        %4588 = vmatprep.subr.mxu0 0.0
        %4589 = vmatpush1.msra.mxu0 0.0
        %4590 = vmatprep.subr.mxu0 0.0
        %4591 = vmatpush1.msra.mxu0 0.0
        %4592 = vmatprep.subr.mxu0 0.0
        %4593 = vmatpush1.msra.mxu0 0.0
        %4594 = vmatprep.subr.mxu0 0.0
        %4595 = vmatpush1.msra.mxu0 0.0
        %4596 = vmatprep.subr.mxu0 0.0
        %4597 = vmatpush1.msra.mxu0 0.0
        %4598 = vmatprep.subr.mxu0 0.0
        %4599 = vmatpush1.msra.mxu0 0.0
        %4600 = vmatprep.subr.mxu0 0.0
        %4601 = vmatpush1.msra.mxu0 0.0
        %4602 = vmatprep.subr.mxu0 0.0
        %4603 = vmatpush1.msra.mxu0 0.0
        %4604 = vmatprep.subr.mxu0 0.0
        %4605 = vmatpush1.msra.mxu0 0.0
        %4606 = vmatprep.subr.mxu0 0.0
        %4607 = vmatpush1.msra.mxu0 0.0
        %4608 = vmatprep.subr.mxu0 0.0
        %4609 = vmatpush1.msra.mxu0 0.0
        %4610 = vmatprep.subr.mxu0 0.0
        %4611 = vmatpush1.msra.mxu0 0.0
        %4612 = vmatprep.subr.mxu0 0.0
        %4613 = vmatpush1.msra.mxu0 0.0
        %4614 = vmatprep.mubr.f32.mxu0 0.0
        %4615 = vmatmul.mubr.f32.gmra.mrb[0].mxu0 %v4548
        %v4616 = vpop.f32.mrb[0].mxu0
        %v4617 = vadd.f32 %v4543, %v4616
        %v4618 = vpop.f32.mrb[0].mxu0
        %v4619 = vadd.f32 %v4545, %v4618
        %4620 = vdwg.mxu0
        %s4621 = scalar_lea.vmem %s8, 1
        %v4622 = vld [vmem:[%s4621] ss:$2 sm:$0x3]
        %v4624 = vlaneseq
        %v4625 = vshrl.u32 %v4624, 7
        %v4626 = vsub.s32 0, %v4625
        %v4627 = vrot.slane %v4622, %v4626
        %v4628 = vlaneseq
        %v4629 = vshrl.u32 %v4628, 7
        %v4630 = vsub.s32 1, %v4629
        %v4631 = vrot.slane %v4622, %v4630
        %4632 = vrot.lane.b32.xlu0 %v4627, 2
        %v4633 = vpop.permute.xlu0 %4632
        %4634 = vrot.lane.b32.xlu0 %v4631, 2
        %v4635 = vpop.permute.xlu0 %4634
        %v4636 = vsel %vm2283, %v4633, %v4635
        %v4639 = vmul.f32 %v4312, %v4633
        %v4640 = vmul.f32 %v4314, %v4636
        %v4641 = vmul.f32 %v4316, %v4633
        %v4642 = vmul.f32 %v4318, %v4636
        %v4643 = vmul.f32 %v4322, %v4633
        %v4644 = vmul.f32 %v4324, %v4636
        %v4645 = vmul.f32 %v4347, %v4633
        %v4646 = vmul.f32 %v4337, %v4636
        %v4647 = vmul.f32 %v4348, %v4633
        %v4648 = vmul.f32 %v4341, %v4636
        %v4649 = vmul.f32 %v4349, %v4633
        %v4650 = vmul.f32 %v4345, %v4636
        %v4651 = vmul.f32 %v4368, %v4633
        %v4652 = vmul.f32 %v4359, %v4636
        %v4653 = vmul.f32 %v4369, %v4633
        %v4654 = vmul.f32 %v4363, %v4636
        %v4655 = vmul.f32 %v4370, %v4633
        %v4656 = vmul.f32 %v4367, %v4636
        %s4657 = scalar_lea.vmem %s6, 16
        %v4658 = vld [vmem:[%s4657] sm:$0xff]
        %4677 = vrot.lane.b32.xlu0 %v4639, 126
        %v4678 = vpop.permute.xlu0 %4677
        %4679 = vrot.lane.b32.xlu0 %v4640, 126
        %v4680 = vpop.permute.xlu0 %4679
        %4681 = vrot.lane.b32.xlu0 %v4641, 126
        %v4682 = vpop.permute.xlu0 %4681
        %4683 = vrot.lane.b32.xlu0 %v4642, 126
        %v4684 = vpop.permute.xlu0 %4683
        %4685 = vrot.lane.b32.xlu0 %v4643, 126
        %v4686 = vpop.permute.xlu0 %4685
        %4687 = vrot.lane.b32.xlu0 %v4644, 126
        %v4688 = vpop.permute.xlu0 %4687
        %4689 = vrot.lane.b32.xlu0 %v4645, 126
        %v4690 = vpop.permute.xlu0 %4689
        %4691 = vrot.lane.b32.xlu0 %v4646, 126
        %v4692 = vpop.permute.xlu0 %4691
        %4693 = vrot.lane.b32.xlu0 %v4647, 126
        %v4694 = vpop.permute.xlu0 %4693
        %4695 = vrot.lane.b32.xlu0 %v4648, 126
        %v4696 = vpop.permute.xlu0 %4695
        %4697 = vrot.lane.b32.xlu0 %v4649, 126
        %v4698 = vpop.permute.xlu0 %4697
        %4699 = vrot.lane.b32.xlu0 %v4650, 126
        %v4700 = vpop.permute.xlu0 %4699
        %4701 = vrot.lane.b32.xlu0 %v4651, 126
        %v4702 = vpop.permute.xlu0 %4701
        %4703 = vrot.lane.b32.xlu0 %v4652, 126
        %v4704 = vpop.permute.xlu0 %4703
        %4705 = vrot.lane.b32.xlu0 %v4653, 126
        %v4706 = vpop.permute.xlu0 %4705
        %4707 = vrot.lane.b32.xlu0 %v4654, 126
        %v4708 = vpop.permute.xlu0 %4707
        %4709 = vrot.lane.b32.xlu0 %v4655, 126
        %v4710 = vpop.permute.xlu0 %4709
        %4711 = vrot.lane.b32.xlu0 %v4656, 126
        %v4712 = vpop.permute.xlu0 %4711
        %v4713 = vsel %vm2721, %v4678, %v4680
        %v4714 = vsel %vm2721, %v4682, %v4684
        %v4715 = vsel %vm2721, %v4686, %v4688
        %v4716 = vsel %vm2721, %v4690, %v4692
        %v4717 = vsel %vm2721, %v4694, %v4696
        %v4718 = vsel %vm2721, %v4698, %v4700
        %v4719 = vsel %vm2721, %v4702, %v4704
        %v4720 = vsel %vm2721, %v4706, %v4708
        %v4721 = vsel %vm2721, %v4710, %v4712
        %v4741 = vsel %vm940, %v4658, 0
        %4743 = vmatprep.subr.mxu0 %v4680
        %4744 = vmatpush1.msra.mxu0 %v4713
        %4745 = vmatprep.subr.mxu0 %v4684
        %4746 = vmatpush1.msra.mxu0 %v4714
        %4747 = vmatprep.subr.mxu0 %v4688
        %4748 = vmatpush1.msra.mxu0 %v4715
        %4749 = vmatprep.subr.mxu0 %v4692
        %4750 = vmatpush1.msra.mxu0 %v4716
        %4751 = vmatprep.subr.mxu0 %v4696
        %4752 = vmatpush1.msra.mxu0 %v4717
        %4753 = vmatprep.subr.mxu0 %v4700
        %4754 = vmatpush1.msra.mxu0 %v4718
        %4755 = vmatprep.subr.mxu0 %v4704
        %4756 = vmatpush1.msra.mxu0 %v4719
        %4757 = vmatprep.subr.mxu0 %v4708
        %4758 = vmatpush1.msra.mxu0 %v4720
        %4759 = vmatprep.subr.mxu0 %v4712
        %4760 = vmatpush1.msra.mxu0 %v4721
        %4761 = vmatprep.subr.mxu0 0.0
        %4762 = vmatpush1.msra.mxu0 0.0
        %4763 = vmatprep.subr.mxu0 0.0
        %4764 = vmatpush1.msra.mxu0 0.0
        %4765 = vmatprep.subr.mxu0 0.0
        %4766 = vmatpush1.msra.mxu0 0.0
        %4767 = vmatprep.subr.mxu0 0.0
        %4768 = vmatpush1.msra.mxu0 0.0
        %4769 = vmatprep.subr.mxu0 0.0
        %4770 = vmatpush1.msra.mxu0 0.0
        %4771 = vmatprep.subr.mxu0 0.0
        %4772 = vmatpush1.msra.mxu0 0.0
        %4773 = vmatprep.subr.mxu0 0.0
        %4774 = vmatpush1.msra.mxu0 0.0
        %4775 = vmatprep.subr.mxu0 0.0
        %4776 = vmatpush1.msra.mxu0 0.0
        %4777 = vmatprep.subr.mxu0 0.0
        %4778 = vmatpush1.msra.mxu0 0.0
        %4779 = vmatprep.subr.mxu0 0.0
        %4780 = vmatpush1.msra.mxu0 0.0
        %4781 = vmatprep.subr.mxu0 0.0
        %4782 = vmatpush1.msra.mxu0 0.0
        %4783 = vmatprep.subr.mxu0 0.0
        %4784 = vmatpush1.msra.mxu0 0.0
        %4785 = vmatprep.subr.mxu0 0.0
        %4786 = vmatpush1.msra.mxu0 0.0
        %4787 = vmatprep.subr.mxu0 0.0
        %4788 = vmatpush1.msra.mxu0 0.0
        %4789 = vmatprep.subr.mxu0 0.0
        %4790 = vmatpush1.msra.mxu0 0.0
        %4791 = vmatprep.subr.mxu0 0.0
        %4792 = vmatpush1.msra.mxu0 0.0
        %4793 = vmatprep.subr.mxu0 0.0
        %4794 = vmatpush1.msra.mxu0 0.0
        %4795 = vmatprep.subr.mxu0 0.0
        %4796 = vmatpush1.msra.mxu0 0.0
        %4797 = vmatprep.subr.mxu0 0.0
        %4798 = vmatpush1.msra.mxu0 0.0
        %4799 = vmatprep.subr.mxu0 0.0
        %4800 = vmatpush1.msra.mxu0 0.0
        %4801 = vmatprep.subr.mxu0 0.0
        %4802 = vmatpush1.msra.mxu0 0.0
        %4803 = vmatprep.subr.mxu0 0.0
        %4804 = vmatpush1.msra.mxu0 0.0
        %4805 = vmatprep.subr.mxu0 0.0
        %4806 = vmatpush1.msra.mxu0 0.0
        %4807 = vmatprep.mubr.f32.mxu0 0.0
        %4808 = vmatmul.mubr.f32.gmra.mrb[0].mxu0 %v4741
        %v4809 = vpop.f32.mrb[0].mxu0
        %v4810 = vadd.f32 0.0, %v4809
        %v4811 = vpop.f32.mrb[0].mxu0
        %v4812 = vadd.f32 0.0, %v4811
        %4813 = vdwg.mxu0
        %v4814 = vadd.f32 %v4617, %v4810
        %v4815 = vadd.f32 %v4619, %v4812
        %v4816 = vld [vmem:[%s7] sm:$0xff]
        %4818 = vset.pattern.permute.xlu0 0
        %4819 = vperm.xlu0 %4818, %v4816
        %v4820 = vpop.permute.xlu0 %4819
        %v4822 = vadd.f32 %v4814, %v4820
        %v4823 = vadd.f32 %v4815, %v4820
        %v4824 = vmax.f32 %v4822, 0.0
        %v4825 = vmax.f32 %v4823, 0.0
        %4828 = vrot.lane.b32.xlu0 %v4824, 127
        %v4829 = vpop.permute.xlu0 %4828
        %4830 = vrot.lane.b32.xlu0 %v4825, 127
        %v4831 = vpop.permute.xlu0 %4830
        %v4832 = vsel %vm1365, %v4829, %v4831
        %v4835 = vmax.f32 %v4824, %v4832
        %v4836 = vmax.f32 %v4825, %v4831
        %4839 = vrot.lane.b32.xlu0 %v4835, 114
        %v4840 = vpop.permute.xlu0 %4839
        %4841 = vrot.lane.b32.xlu0 %v4836, 114
        %v4842 = vpop.permute.xlu0 %4841
        %v4843 = vsel %vm4346, %v4840, %v4842
        %v4846 = vmax.f32 %v4835, %v4843
        %v4847 = vmax.f32 %v4836, %v4842
        %v4848 = vpack.c.bf16 %v4846, %v4846
        %v4849 = vpack.c.bf16 %v4847, %v4847
        %v4850 = vld [vmem:[%s9] sm:$0xf]
        %v4851 = vld [vmem:[%s9 + $0x4] sm:$0xf]
        %v4852 = vld [vmem:[%s9 + $0x8] sm:$0xf]
        %v4853 = vld [vmem:[%s9 + $0xc] sm:$0xf]
        %v4854 = vld [vmem:[%s9 + $0x10] sm:$0xf]
        %v4855 = vld [vmem:[%s9 + $0x14] sm:$0xf]
        %v4856 = vld [vmem:[%s9 + $0x18] sm:$0xf]
        %v4857 = vld [vmem:[%s9 + $0x1c] sm:$0xf]
        %v4858 = vld [vmem:[%s9 + $0x20] sm:$0xf]
        %v4859 = vld [vmem:[%s9 + $0x24] sm:$0xf]
        %v4860 = vld [vmem:[%s9 + $0x28] sm:$0xf]
        %v4861 = vld [vmem:[%s9 + $0x2c] sm:$0xf]
        %v4862 = vld [vmem:[%s9 + $0x30] sm:$0xf]
        %v4863 = vld [vmem:[%s9 + $0x34] sm:$0xf]
        %v4864 = vld [vmem:[%s9 + $0x38] sm:$0xf]
        %v4865 = vld [vmem:[%s9 + $0x3c] sm:$0xf]
        %v4866 = vld [vmem:[%s9 + $0x40] sm:$0xf]
        %v4867 = vld [vmem:[%s9 + $0x44] sm:$0xf]
        %v4868 = vld [vmem:[%s9 + $0x48] sm:$0xf]
        %v4869 = vld [vmem:[%s9 + $0x4c] sm:$0xf]
        %v4870 = vld [vmem:[%s9 + $0x50] sm:$0xf]
        %v4871 = vld [vmem:[%s9 + $0x54] sm:$0xf]
        %v4872 = vld [vmem:[%s9 + $0x58] sm:$0x7]
        %v4896 = vunpack.c.l.b16 %v4850
        %v4897 = vunpack.c.l.b16 %v4851
        %v4898 = vunpack.c.l.b16 %v4852
        %v4899 = vunpack.c.l.b16 %v4853
        %v4900 = vunpack.c.l.b16 %v4854
        %v4901 = vunpack.c.l.b16 %v4855
        %v4902 = vunpack.c.l.b16 %v4856
        %v4903 = vunpack.c.l.b16 %v4857
        %v4904 = vunpack.c.l.b16 %v4858
        %v4905 = vunpack.c.l.b16 %v4859
        %v4906 = vunpack.c.l.b16 %v4860
        %v4907 = vunpack.c.l.b16 %v4861
        %v4908 = vunpack.c.l.b16 %v4862
        %v4909 = vunpack.c.l.b16 %v4863
        %v4910 = vunpack.c.l.b16 %v4864
        %v4911 = vunpack.c.l.b16 %v4865
        %v4912 = vunpack.c.l.b16 %v4866
        %v4913 = vunpack.c.l.b16 %v4867
        %v4914 = vunpack.c.l.b16 %v4868
        %v4915 = vunpack.c.l.b16 %v4869
        %v4916 = vunpack.c.l.b16 %v4870
        %v4917 = vunpack.c.l.b16 %v4871
        %v4918 = vunpack.c.l.b16 %v4872
        %v4919 = vpack.c.b16 %v4897, %v4896
        %v4920 = vpack.c.b16 %v4899, %v4898
        %v4921 = vpack.c.b16 %v4901, %v4900
        %v4922 = vpack.c.b16 %v4903, %v4902
        %v4923 = vpack.c.b16 %v4905, %v4904
        %v4924 = vpack.c.b16 %v4907, %v4906
        %v4925 = vpack.c.b16 %v4909, %v4908
        %v4926 = vpack.c.b16 %v4911, %v4910
        %v4927 = vpack.c.b16 %v4913, %v4912
        %v4928 = vpack.c.b16 %v4915, %v4914
        %v4929 = vpack.c.b16 %v4917, %v4916
        %v4930 = vpack.c.b16 %v4918, %v4918
        %vm4942 = vcmask 433152
        %v4944 = vsel %vm4942, %v4849, 0
        %vm4946 = vcmask 1042432
        %v4947 = vsel %vm4166, 4294967295, 65535
        %v4948 = vsel %vm4946, %v4947, 0
        %v4950 = vand.u32 %v4930, %v4948
        %4952 = vmatprep.subr.bf16.mxu0 0
        %4953 = vmatpush1.bf16.msra.mxu0 %v4919
        %4954 = vmatprep.subr.bf16.mxu0 0
        %4955 = vmatpush1.bf16.msra.mxu0 %v4920
        %4956 = vmatprep.subr.bf16.mxu0 0
        %4957 = vmatpush1.bf16.msra.mxu0 %v4921
        %4958 = vmatprep.subr.bf16.mxu0 0
        %4959 = vmatpush1.bf16.msra.mxu0 %v4922
        %4960 = vmatprep.subr.bf16.mxu0 0
        %4961 = vmatpush1.bf16.msra.mxu0 %v4923
        %4962 = vmatprep.subr.bf16.mxu0 0
        %4963 = vmatpush1.bf16.msra.mxu0 %v4924
        %4964 = vmatprep.subr.bf16.mxu0 0
        %4965 = vmatpush1.bf16.msra.mxu0 %v4925
        %4966 = vmatprep.subr.bf16.mxu0 0
        %4967 = vmatpush1.bf16.msra.mxu0 %v4926
        %4968 = vmatprep.subr.bf16.mxu0 0
        %4969 = vmatpush1.bf16.msra.mxu0 %v4927
        %4970 = vmatprep.subr.bf16.mxu0 0
        %4971 = vmatpush1.bf16.msra.mxu0 %v4928
        %4972 = vmatprep.subr.bf16.mxu0 0
        %4973 = vmatpush1.bf16.msra.mxu0 %v4929
        %4974 = vmatprep.subr.bf16.mxu0 0
        %4975 = vmatpush1.bf16.msra.mxu0 %v4950
        %4976 = vmatprep.subr.bf16.mxu0 0
        %4977 = vmatpush1.bf16.msra.mxu0 0
        %4978 = vmatprep.subr.bf16.mxu0 0
        %4979 = vmatpush1.bf16.msra.mxu0 0
        %4980 = vmatprep.subr.bf16.mxu0 0
        %4981 = vmatpush1.bf16.msra.mxu0 0
        %4982 = vmatprep.subr.bf16.mxu0 0
        %4983 = vmatpush1.bf16.msra.mxu0 0
        %4984 = vmatprep.mubr.bf16.mxu0 %v4944
        %4985 = vmatmul.mubr.bf16.gmra.mrb[0].mxu0 %v4848
        %v4986 = vpop.f32.mrb[0].mxu0
        %v4987 = vadd.f32 0.0, %v4986
        %v4988 = vpop.f32.mrb[0].mxu0
        %v4989 = vpop.f32.mrb[0].mxu0
        %v4990 = vpop.f32.mrb[0].mxu0
        %4991 = vdwg.mxu0
        %v4992 = vld [vmem:[%s11] sm:$0x1]
        %v4993 = vld [vmem:[%s10] sm:$0xff]
        %v4994 = vld [vmem:[%s10 + $0x8] sm:$0xff]
        %v4995 = vld [vmem:[%s10 + $0x10] sm:$0xff]
        %v4996 = vld [vmem:[%s10 + $0x18] sm:$0xff]
        %v4997 = vld [vmem:[%s10 + $0x20] sm:$0xff]
        %v4998 = vld [vmem:[%s10 + $0x28] sm:$0xff]
        %v4999 = vld [vmem:[%s10 + $0x30] sm:$0x1]
        %vm5000 = vcmask 400384
        %v5002 = vsel %vm5000, %v4987, 0
        %v5005 = vsel %vm4165, %v4999, 0
        %5007 = vmatprep.subr.mxu0 0.0
        %5008 = vmatpush1.msra.mxu0 %v4993
        %5009 = vmatprep.subr.mxu0 0.0
        %5010 = vmatpush1.msra.mxu0 %v4994
        %5011 = vmatprep.subr.mxu0 0.0
        %5012 = vmatpush1.msra.mxu0 %v4995
        %5013 = vmatprep.subr.mxu0 0.0
        %5014 = vmatpush1.msra.mxu0 %v4996
        %5015 = vmatprep.subr.mxu0 0.0
        %5016 = vmatpush1.msra.mxu0 %v4997
        %5017 = vmatprep.subr.mxu0 0.0
        %5018 = vmatpush1.msra.mxu0 %v4998
        %5019 = vmatprep.subr.mxu0 0.0
        %5020 = vmatpush1.msra.mxu0 %v5005
        %5021 = vmatprep.subr.mxu0 0.0
        %5022 = vmatpush1.msra.mxu0 0.0
        %5023 = vmatprep.subr.mxu0 0.0
        %5024 = vmatpush1.msra.mxu0 0.0
        %5025 = vmatprep.subr.mxu0 0.0
        %5026 = vmatpush1.msra.mxu0 0.0
        %5027 = vmatprep.subr.mxu0 0.0
        %5028 = vmatpush1.msra.mxu0 0.0
        %5029 = vmatprep.subr.mxu0 0.0
        %5030 = vmatpush1.msra.mxu0 0.0
        %5031 = vmatprep.subr.mxu0 0.0
        %5032 = vmatpush1.msra.mxu0 0.0
        %5033 = vmatprep.subr.mxu0 0.0
        %5034 = vmatpush1.msra.mxu0 0.0
        %5035 = vmatprep.subr.mxu0 0.0
        %5036 = vmatpush1.msra.mxu0 0.0
        %5037 = vmatprep.subr.mxu0 0.0
        %5038 = vmatpush1.msra.mxu0 0.0
        %5039 = vmatprep.subr.mxu0 0.0
        %5040 = vmatpush1.msra.mxu0 0.0
        %5041 = vmatprep.subr.mxu0 0.0
        %5042 = vmatpush1.msra.mxu0 0.0
        %5043 = vmatprep.subr.mxu0 0.0
        %5044 = vmatpush1.msra.mxu0 0.0
        %5045 = vmatprep.subr.mxu0 0.0
        %5046 = vmatpush1.msra.mxu0 0.0
        %5047 = vmatprep.subr.mxu0 0.0
        %5048 = vmatpush1.msra.mxu0 0.0
        %5049 = vmatprep.subr.mxu0 0.0
        %5050 = vmatpush1.msra.mxu0 0.0
        %5051 = vmatprep.subr.mxu0 0.0
        %5052 = vmatpush1.msra.mxu0 0.0
        %5053 = vmatprep.subr.mxu0 0.0
        %5054 = vmatpush1.msra.mxu0 0.0
        %5055 = vmatprep.subr.mxu0 0.0
        %5056 = vmatpush1.msra.mxu0 0.0
        %5057 = vmatprep.subr.mxu0 0.0
        %5058 = vmatpush1.msra.mxu0 0.0
        %5059 = vmatprep.subr.mxu0 0.0
        %5060 = vmatpush1.msra.mxu0 0.0
        %5061 = vmatprep.subr.mxu0 0.0
        %5062 = vmatpush1.msra.mxu0 0.0
        %5063 = vmatprep.subr.mxu0 0.0
        %5064 = vmatpush1.msra.mxu0 0.0
        %5065 = vmatprep.subr.mxu0 0.0
        %5066 = vmatpush1.msra.mxu0 0.0
        %5067 = vmatprep.subr.mxu0 0.0
        %5068 = vmatpush1.msra.mxu0 0.0
        %5069 = vmatprep.subr.mxu0 0.0
        %5070 = vmatpush1.msra.mxu0 0.0
        %5071 = vmatprep.mubr.f32.mxu0 0.0
        %5072 = vmatmul.mubr.f32.gmra.mrb[0].mxu0 %v5002
        %v5073 = vpop.f32.mrb[0].mxu0
        %v5074 = vadd.f32 0.0, %v5073
        %v5075 = vpop.f32.mrb[0].mxu0
        %5076 = vdwg.mxu0
        %v5077 = vadd.f32 %v4992, %v5074
        %s5078 = scalar_lea.vmem %s10, 56
        %v5079 = vld [vmem:[%s5078] sm:$0xff]
        %v5080 = vld [vmem:[%s5078 + $0x8] sm:$0xff]
        %v5081 = vld [vmem:[%s5078 + $0x10] sm:$0xff]
        %v5082 = vld [vmem:[%s5078 + $0x18] sm:$0xff]
        %v5083 = vld [vmem:[%s5078 + $0x20] sm:$0xff]
        %v5084 = vld [vmem:[%s5078 + $0x28] sm:$0xff]
        %v5085 = vld [vmem:[%s5078 + $0x30] sm:$0x1]
        %v5086 = vrot.slane %v4987, 1
        %v5087 = vsel %vm5000, %v5086, 0
        %v5090 = vsel %vm4165, %v5085, 0
        %5092 = vmatprep.subr.mxu0 0.0
        %5093 = vmatpush1.msra.mxu0 %v5079
        %5094 = vmatprep.subr.mxu0 0.0
        %5095 = vmatpush1.msra.mxu0 %v5080
        %5096 = vmatprep.subr.mxu0 0.0
        %5097 = vmatpush1.msra.mxu0 %v5081
        %5098 = vmatprep.subr.mxu0 0.0
        %5099 = vmatpush1.msra.mxu0 %v5082
        %5100 = vmatprep.subr.mxu0 0.0
        %5101 = vmatpush1.msra.mxu0 %v5083
        %5102 = vmatprep.subr.mxu0 0.0
        %5103 = vmatpush1.msra.mxu0 %v5084
        %5104 = vmatprep.subr.mxu0 0.0
        %5105 = vmatpush1.msra.mxu0 %v5090
        %5106 = vmatprep.subr.mxu0 0.0
        %5107 = vmatpush1.msra.mxu0 0.0
        %5108 = vmatprep.subr.mxu0 0.0
        %5109 = vmatpush1.msra.mxu0 0.0
        %5110 = vmatprep.subr.mxu0 0.0
        %5111 = vmatpush1.msra.mxu0 0.0
        %5112 = vmatprep.subr.mxu0 0.0
        %5113 = vmatpush1.msra.mxu0 0.0
        %5114 = vmatprep.subr.mxu0 0.0
        %5115 = vmatpush1.msra.mxu0 0.0
        %5116 = vmatprep.subr.mxu0 0.0
        %5117 = vmatpush1.msra.mxu0 0.0
        %5118 = vmatprep.subr.mxu0 0.0
        %5119 = vmatpush1.msra.mxu0 0.0
        %5120 = vmatprep.subr.mxu0 0.0
        %5121 = vmatpush1.msra.mxu0 0.0
        %5122 = vmatprep.subr.mxu0 0.0
        %5123 = vmatpush1.msra.mxu0 0.0
        %5124 = vmatprep.subr.mxu0 0.0
        %5125 = vmatpush1.msra.mxu0 0.0
        %5126 = vmatprep.subr.mxu0 0.0
        %5127 = vmatpush1.msra.mxu0 0.0
        %5128 = vmatprep.subr.mxu0 0.0
        %5129 = vmatpush1.msra.mxu0 0.0
        %5130 = vmatprep.subr.mxu0 0.0
        %5131 = vmatpush1.msra.mxu0 0.0
        %5132 = vmatprep.subr.mxu0 0.0
        %5133 = vmatpush1.msra.mxu0 0.0
        %5134 = vmatprep.subr.mxu0 0.0
        %5135 = vmatpush1.msra.mxu0 0.0
        %5136 = vmatprep.subr.mxu0 0.0
        %5137 = vmatpush1.msra.mxu0 0.0
        %5138 = vmatprep.subr.mxu0 0.0
        %5139 = vmatpush1.msra.mxu0 0.0
        %5140 = vmatprep.subr.mxu0 0.0
        %5141 = vmatpush1.msra.mxu0 0.0
        %5142 = vmatprep.subr.mxu0 0.0
        %5143 = vmatpush1.msra.mxu0 0.0
        %5144 = vmatprep.subr.mxu0 0.0
        %5145 = vmatpush1.msra.mxu0 0.0
        %5146 = vmatprep.subr.mxu0 0.0
        %5147 = vmatpush1.msra.mxu0 0.0
        %5148 = vmatprep.subr.mxu0 0.0
        %5149 = vmatpush1.msra.mxu0 0.0
        %5150 = vmatprep.subr.mxu0 0.0
        %5151 = vmatpush1.msra.mxu0 0.0
        %5152 = vmatprep.subr.mxu0 0.0
        %5153 = vmatpush1.msra.mxu0 0.0
        %5154 = vmatprep.subr.mxu0 0.0
        %5155 = vmatpush1.msra.mxu0 0.0
        %5156 = vmatprep.mubr.f32.mxu0 0.0
        %5157 = vmatmul.mubr.f32.gmra.mrb[0].mxu0 %v5087
        %v5158 = vpop.f32.mrb[0].mxu0
        %v5159 = vadd.f32 0.0, %v5158
        %v5160 = vpop.f32.mrb[0].mxu0
        %5161 = vdwg.mxu0
        %v5162 = vadd.f32 %v5077, %v5159
        %s5163 = scalar_lea.vmem %s10, 112
        %v5164 = vld [vmem:[%s5163] sm:$0xff]
        %v5165 = vld [vmem:[%s5163 + $0x8] sm:$0xff]
        %v5166 = vld [vmem:[%s5163 + $0x10] sm:$0xff]
        %v5167 = vld [vmem:[%s5163 + $0x18] sm:$0xff]
        %v5168 = vld [vmem:[%s5163 + $0x20] sm:$0xff]
        %v5169 = vld [vmem:[%s5163 + $0x28] sm:$0xff]
        %v5170 = vld [vmem:[%s5163 + $0x30] sm:$0x1]
        %v5171 = vrot.slane %v4987, 2
        %v5172 = vsel %vm5000, %v5171, 0
        %v5175 = vsel %vm4165, %v5170, 0
        %5177 = vmatprep.subr.mxu0 0.0
        %5178 = vmatpush1.msra.mxu0 %v5164
        %5179 = vmatprep.subr.mxu0 0.0
        %5180 = vmatpush1.msra.mxu0 %v5165
        %5181 = vmatprep.subr.mxu0 0.0
        %5182 = vmatpush1.msra.mxu0 %v5166
        %5183 = vmatprep.subr.mxu0 0.0
        %5184 = vmatpush1.msra.mxu0 %v5167
        %5185 = vmatprep.subr.mxu0 0.0
        %5186 = vmatpush1.msra.mxu0 %v5168
        %5187 = vmatprep.subr.mxu0 0.0
        %5188 = vmatpush1.msra.mxu0 %v5169
        %5189 = vmatprep.subr.mxu0 0.0
        %5190 = vmatpush1.msra.mxu0 %v5175
        %5191 = vmatprep.subr.mxu0 0.0
        %5192 = vmatpush1.msra.mxu0 0.0
        %5193 = vmatprep.subr.mxu0 0.0
        %5194 = vmatpush1.msra.mxu0 0.0
        %5195 = vmatprep.subr.mxu0 0.0
        %5196 = vmatpush1.msra.mxu0 0.0
        %5197 = vmatprep.subr.mxu0 0.0
        %5198 = vmatpush1.msra.mxu0 0.0
        %5199 = vmatprep.subr.mxu0 0.0
        %5200 = vmatpush1.msra.mxu0 0.0
        %5201 = vmatprep.subr.mxu0 0.0
        %5202 = vmatpush1.msra.mxu0 0.0
        %5203 = vmatprep.subr.mxu0 0.0
        %5204 = vmatpush1.msra.mxu0 0.0
        %5205 = vmatprep.subr.mxu0 0.0
        %5206 = vmatpush1.msra.mxu0 0.0
        %5207 = vmatprep.subr.mxu0 0.0
        %5208 = vmatpush1.msra.mxu0 0.0
        %5209 = vmatprep.subr.mxu0 0.0
        %5210 = vmatpush1.msra.mxu0 0.0
        %5211 = vmatprep.subr.mxu0 0.0
        %5212 = vmatpush1.msra.mxu0 0.0
        %5213 = vmatprep.subr.mxu0 0.0
        %5214 = vmatpush1.msra.mxu0 0.0
        %5215 = vmatprep.subr.mxu0 0.0
        %5216 = vmatpush1.msra.mxu0 0.0
        %5217 = vmatprep.subr.mxu0 0.0
        %5218 = vmatpush1.msra.mxu0 0.0
        %5219 = vmatprep.subr.mxu0 0.0
        %5220 = vmatpush1.msra.mxu0 0.0
        %5221 = vmatprep.subr.mxu0 0.0
        %5222 = vmatpush1.msra.mxu0 0.0
        %5223 = vmatprep.subr.mxu0 0.0
        %5224 = vmatpush1.msra.mxu0 0.0
        %5225 = vmatprep.subr.mxu0 0.0
        %5226 = vmatpush1.msra.mxu0 0.0
        %5227 = vmatprep.subr.mxu0 0.0
        %5228 = vmatpush1.msra.mxu0 0.0
        %5229 = vmatprep.subr.mxu0 0.0
        %5230 = vmatpush1.msra.mxu0 0.0
        %5231 = vmatprep.subr.mxu0 0.0
        %5232 = vmatpush1.msra.mxu0 0.0
        %5233 = vmatprep.subr.mxu0 0.0
        %5234 = vmatpush1.msra.mxu0 0.0
        %5235 = vmatprep.subr.mxu0 0.0
        %5236 = vmatpush1.msra.mxu0 0.0
        %5237 = vmatprep.subr.mxu0 0.0
        %5238 = vmatpush1.msra.mxu0 0.0
        %5239 = vmatprep.subr.mxu0 0.0
        %5240 = vmatpush1.msra.mxu0 0.0
        %5241 = vmatprep.mubr.f32.mxu0 0.0
        %5242 = vmatmul.mubr.f32.gmra.mrb[0].mxu0 %v5172
        %v5243 = vpop.f32.mrb[0].mxu0
        %v5244 = vadd.f32 0.0, %v5243
        %v5245 = vpop.f32.mrb[0].mxu0
        %5246 = vdwg.mxu0
        %v5247 = vadd.f32 %v5162, %v5244
        %s5248 = scalar_lea.vmem %s10, 168
        %v5249 = vld [vmem:[%s5248] sm:$0xff]
        %v5250 = vld [vmem:[%s5248 + $0x8] sm:$0xff]
        %v5251 = vld [vmem:[%s5248 + $0x10] sm:$0xff]
        %v5252 = vld [vmem:[%s5248 + $0x18] sm:$0xff]
        %v5253 = vld [vmem:[%s5248 + $0x20] sm:$0xff]
        %v5254 = vld [vmem:[%s5248 + $0x28] sm:$0xff]
        %v5255 = vld [vmem:[%s5248 + $0x30] sm:$0x1]
        %v5256 = vrot.slane %v4987, 3
        %v5257 = vsel %vm5000, %v5256, 0
        %v5260 = vsel %vm4165, %v5255, 0
        %5262 = vmatprep.subr.mxu0 0.0
        %5263 = vmatpush1.msra.mxu0 %v5249
        %5264 = vmatprep.subr.mxu0 0.0
        %5265 = vmatpush1.msra.mxu0 %v5250
        %5266 = vmatprep.subr.mxu0 0.0
        %5267 = vmatpush1.msra.mxu0 %v5251
        %5268 = vmatprep.subr.mxu0 0.0
        %5269 = vmatpush1.msra.mxu0 %v5252
        %5270 = vmatprep.subr.mxu0 0.0
        %5271 = vmatpush1.msra.mxu0 %v5253
        %5272 = vmatprep.subr.mxu0 0.0
        %5273 = vmatpush1.msra.mxu0 %v5254
        %5274 = vmatprep.subr.mxu0 0.0
        %5275 = vmatpush1.msra.mxu0 %v5260
        %5276 = vmatprep.subr.mxu0 0.0
        %5277 = vmatpush1.msra.mxu0 0.0
        %5278 = vmatprep.subr.mxu0 0.0
        %5279 = vmatpush1.msra.mxu0 0.0
        %5280 = vmatprep.subr.mxu0 0.0
        %5281 = vmatpush1.msra.mxu0 0.0
        %5282 = vmatprep.subr.mxu0 0.0
        %5283 = vmatpush1.msra.mxu0 0.0
        %5284 = vmatprep.subr.mxu0 0.0
        %5285 = vmatpush1.msra.mxu0 0.0
        %5286 = vmatprep.subr.mxu0 0.0
        %5287 = vmatpush1.msra.mxu0 0.0
        %5288 = vmatprep.subr.mxu0 0.0
        %5289 = vmatpush1.msra.mxu0 0.0
        %5290 = vmatprep.subr.mxu0 0.0
        %5291 = vmatpush1.msra.mxu0 0.0
        %5292 = vmatprep.subr.mxu0 0.0
        %5293 = vmatpush1.msra.mxu0 0.0
        %5294 = vmatprep.subr.mxu0 0.0
        %5295 = vmatpush1.msra.mxu0 0.0
        %5296 = vmatprep.subr.mxu0 0.0
        %5297 = vmatpush1.msra.mxu0 0.0
        %5298 = vmatprep.subr.mxu0 0.0
        %5299 = vmatpush1.msra.mxu0 0.0
        %5300 = vmatprep.subr.mxu0 0.0
        %5301 = vmatpush1.msra.mxu0 0.0
        %5302 = vmatprep.subr.mxu0 0.0
        %5303 = vmatpush1.msra.mxu0 0.0
        %5304 = vmatprep.subr.mxu0 0.0
        %5305 = vmatpush1.msra.mxu0 0.0
        %5306 = vmatprep.subr.mxu0 0.0
        %5307 = vmatpush1.msra.mxu0 0.0
        %5308 = vmatprep.subr.mxu0 0.0
        %5309 = vmatpush1.msra.mxu0 0.0
        %5310 = vmatprep.subr.mxu0 0.0
        %5311 = vmatpush1.msra.mxu0 0.0
        %5312 = vmatprep.subr.mxu0 0.0
        %5313 = vmatpush1.msra.mxu0 0.0
        %5314 = vmatprep.subr.mxu0 0.0
        %5315 = vmatpush1.msra.mxu0 0.0
        %5316 = vmatprep.subr.mxu0 0.0
        %5317 = vmatpush1.msra.mxu0 0.0
        %5318 = vmatprep.subr.mxu0 0.0
        %5319 = vmatpush1.msra.mxu0 0.0
        %5320 = vmatprep.subr.mxu0 0.0
        %5321 = vmatpush1.msra.mxu0 0.0
        %5322 = vmatprep.subr.mxu0 0.0
        %5323 = vmatpush1.msra.mxu0 0.0
        %5324 = vmatprep.subr.mxu0 0.0
        %5325 = vmatpush1.msra.mxu0 0.0
        %5326 = vmatprep.mubr.f32.mxu0 0.0
        %5327 = vmatmul.mubr.f32.gmra.mrb[0].mxu0 %v5257
        %v5328 = vpop.f32.mrb[0].mxu0
        %v5329 = vadd.f32 0.0, %v5328
        %v5330 = vpop.f32.mrb[0].mxu0
        %5331 = vdwg.mxu0
        %v5332 = vadd.f32 %v5247, %v5329
        %s5333 = scalar_lea.vmem %s10, 224
        %v5334 = vld [vmem:[%s5333] sm:$0xff]
        %v5335 = vld [vmem:[%s5333 + $0x8] sm:$0xff]
        %v5336 = vld [vmem:[%s5333 + $0x10] sm:$0xff]
        %v5337 = vld [vmem:[%s5333 + $0x18] sm:$0xff]
        %v5338 = vld [vmem:[%s5333 + $0x20] sm:$0xff]
        %v5339 = vld [vmem:[%s5333 + $0x28] sm:$0xff]
        %v5340 = vld [vmem:[%s5333 + $0x30] sm:$0x1]
        %v5341 = vrot.slane %v4987, 4
        %v5342 = vsel %vm5000, %v5341, 0
        %v5345 = vsel %vm4165, %v5340, 0
        %5347 = vmatprep.subr.mxu0 0.0
        %5348 = vmatpush1.msra.mxu0 %v5334
        %5349 = vmatprep.subr.mxu0 0.0
        %5350 = vmatpush1.msra.mxu0 %v5335
        %5351 = vmatprep.subr.mxu0 0.0
        %5352 = vmatpush1.msra.mxu0 %v5336
        %5353 = vmatprep.subr.mxu0 0.0
        %5354 = vmatpush1.msra.mxu0 %v5337
        %5355 = vmatprep.subr.mxu0 0.0
        %5356 = vmatpush1.msra.mxu0 %v5338
        %5357 = vmatprep.subr.mxu0 0.0
        %5358 = vmatpush1.msra.mxu0 %v5339
        %5359 = vmatprep.subr.mxu0 0.0
        %5360 = vmatpush1.msra.mxu0 %v5345
        %5361 = vmatprep.subr.mxu0 0.0
        %5362 = vmatpush1.msra.mxu0 0.0
        %5363 = vmatprep.subr.mxu0 0.0
        %5364 = vmatpush1.msra.mxu0 0.0
        %5365 = vmatprep.subr.mxu0 0.0
        %5366 = vmatpush1.msra.mxu0 0.0
        %5367 = vmatprep.subr.mxu0 0.0
        %5368 = vmatpush1.msra.mxu0 0.0
        %5369 = vmatprep.subr.mxu0 0.0
        %5370 = vmatpush1.msra.mxu0 0.0
        %5371 = vmatprep.subr.mxu0 0.0
        %5372 = vmatpush1.msra.mxu0 0.0
        %5373 = vmatprep.subr.mxu0 0.0
        %5374 = vmatpush1.msra.mxu0 0.0
        %5375 = vmatprep.subr.mxu0 0.0
        %5376 = vmatpush1.msra.mxu0 0.0
        %5377 = vmatprep.subr.mxu0 0.0
        %5378 = vmatpush1.msra.mxu0 0.0
        %5379 = vmatprep.subr.mxu0 0.0
        %5380 = vmatpush1.msra.mxu0 0.0
        %5381 = vmatprep.subr.mxu0 0.0
        %5382 = vmatpush1.msra.mxu0 0.0
        %5383 = vmatprep.subr.mxu0 0.0
        %5384 = vmatpush1.msra.mxu0 0.0
        %5385 = vmatprep.subr.mxu0 0.0
        %5386 = vmatpush1.msra.mxu0 0.0
        %5387 = vmatprep.subr.mxu0 0.0
        %5388 = vmatpush1.msra.mxu0 0.0
        %5389 = vmatprep.subr.mxu0 0.0
        %5390 = vmatpush1.msra.mxu0 0.0
        %5391 = vmatprep.subr.mxu0 0.0
        %5392 = vmatpush1.msra.mxu0 0.0
        %5393 = vmatprep.subr.mxu0 0.0
        %5394 = vmatpush1.msra.mxu0 0.0
        %5395 = vmatprep.subr.mxu0 0.0
        %5396 = vmatpush1.msra.mxu0 0.0
        %5397 = vmatprep.subr.mxu0 0.0
        %5398 = vmatpush1.msra.mxu0 0.0
        %5399 = vmatprep.subr.mxu0 0.0
        %5400 = vmatpush1.msra.mxu0 0.0
        %5401 = vmatprep.subr.mxu0 0.0
        %5402 = vmatpush1.msra.mxu0 0.0
        %5403 = vmatprep.subr.mxu0 0.0
        %5404 = vmatpush1.msra.mxu0 0.0
        %5405 = vmatprep.subr.mxu0 0.0
        %5406 = vmatpush1.msra.mxu0 0.0
        %5407 = vmatprep.subr.mxu0 0.0
        %5408 = vmatpush1.msra.mxu0 0.0
        %5409 = vmatprep.subr.mxu0 0.0
        %5410 = vmatpush1.msra.mxu0 0.0
        %5411 = vmatprep.mubr.f32.mxu0 0.0
        %5412 = vmatmul.mubr.f32.gmra.mrb[0].mxu0 %v5342
        %v5413 = vpop.f32.mrb[0].mxu0
        %v5414 = vadd.f32 0.0, %v5413
        %v5415 = vpop.f32.mrb[0].mxu0
        %5416 = vdwg.mxu0
        %v5417 = vadd.f32 %v5332, %v5414
        %s5418 = scalar_lea.vmem %s10, 280
        %v5419 = vld [vmem:[%s5418] sm:$0xff]
        %v5420 = vld [vmem:[%s5418 + $0x8] sm:$0xff]
        %v5421 = vld [vmem:[%s5418 + $0x10] sm:$0xff]
        %v5422 = vld [vmem:[%s5418 + $0x18] sm:$0xff]
        %v5423 = vld [vmem:[%s5418 + $0x20] sm:$0xff]
        %v5424 = vld [vmem:[%s5418 + $0x28] sm:$0xff]
        %v5425 = vld [vmem:[%s5418 + $0x30] sm:$0x1]
        %v5426 = vrot.slane %v4987, 5
        %v5427 = vsel %vm5000, %v5426, 0
        %v5430 = vsel %vm4165, %v5425, 0
        %5432 = vmatprep.subr.mxu0 0.0
        %5433 = vmatpush1.msra.mxu0 %v5419
        %5434 = vmatprep.subr.mxu0 0.0
        %5435 = vmatpush1.msra.mxu0 %v5420
        %5436 = vmatprep.subr.mxu0 0.0
        %5437 = vmatpush1.msra.mxu0 %v5421
        %5438 = vmatprep.subr.mxu0 0.0
        %5439 = vmatpush1.msra.mxu0 %v5422
        %5440 = vmatprep.subr.mxu0 0.0
        %5441 = vmatpush1.msra.mxu0 %v5423
        %5442 = vmatprep.subr.mxu0 0.0
        %5443 = vmatpush1.msra.mxu0 %v5424
        %5444 = vmatprep.subr.mxu0 0.0
        %5445 = vmatpush1.msra.mxu0 %v5430
        %5446 = vmatprep.subr.mxu0 0.0
        %5447 = vmatpush1.msra.mxu0 0.0
        %5448 = vmatprep.subr.mxu0 0.0
        %5449 = vmatpush1.msra.mxu0 0.0
        %5450 = vmatprep.subr.mxu0 0.0
        %5451 = vmatpush1.msra.mxu0 0.0
        %5452 = vmatprep.subr.mxu0 0.0
        %5453 = vmatpush1.msra.mxu0 0.0
        %5454 = vmatprep.subr.mxu0 0.0
        %5455 = vmatpush1.msra.mxu0 0.0
        %5456 = vmatprep.subr.mxu0 0.0
        %5457 = vmatpush1.msra.mxu0 0.0
        %5458 = vmatprep.subr.mxu0 0.0
        %5459 = vmatpush1.msra.mxu0 0.0
        %5460 = vmatprep.subr.mxu0 0.0
        %5461 = vmatpush1.msra.mxu0 0.0
        %5462 = vmatprep.subr.mxu0 0.0
        %5463 = vmatpush1.msra.mxu0 0.0
        %5464 = vmatprep.subr.mxu0 0.0
        %5465 = vmatpush1.msra.mxu0 0.0
        %5466 = vmatprep.subr.mxu0 0.0
        %5467 = vmatpush1.msra.mxu0 0.0
        %5468 = vmatprep.subr.mxu0 0.0
        %5469 = vmatpush1.msra.mxu0 0.0
        %5470 = vmatprep.subr.mxu0 0.0
        %5471 = vmatpush1.msra.mxu0 0.0
        %5472 = vmatprep.subr.mxu0 0.0
        %5473 = vmatpush1.msra.mxu0 0.0
        %5474 = vmatprep.subr.mxu0 0.0
        %5475 = vmatpush1.msra.mxu0 0.0
        %5476 = vmatprep.subr.mxu0 0.0
        %5477 = vmatpush1.msra.mxu0 0.0
        %5478 = vmatprep.subr.mxu0 0.0
        %5479 = vmatpush1.msra.mxu0 0.0
        %5480 = vmatprep.subr.mxu0 0.0
        %5481 = vmatpush1.msra.mxu0 0.0
        %5482 = vmatprep.subr.mxu0 0.0
        %5483 = vmatpush1.msra.mxu0 0.0
        %5484 = vmatprep.subr.mxu0 0.0
        %5485 = vmatpush1.msra.mxu0 0.0
        %5486 = vmatprep.subr.mxu0 0.0
        %5487 = vmatpush1.msra.mxu0 0.0
        %5488 = vmatprep.subr.mxu0 0.0
        %5489 = vmatpush1.msra.mxu0 0.0
        %5490 = vmatprep.subr.mxu0 0.0
        %5491 = vmatpush1.msra.mxu0 0.0
        %5492 = vmatprep.subr.mxu0 0.0
        %5493 = vmatpush1.msra.mxu0 0.0
        %5494 = vmatprep.subr.mxu0 0.0
        %5495 = vmatpush1.msra.mxu0 0.0
        %5496 = vmatprep.mubr.f32.mxu0 0.0
        %5497 = vmatmul.mubr.f32.gmra.mrb[0].mxu0 %v5427
        %v5498 = vpop.f32.mrb[0].mxu0
        %v5499 = vadd.f32 0.0, %v5498
        %v5500 = vpop.f32.mrb[0].mxu0
        %5501 = vdwg.mxu0
        %v5502 = vadd.f32 %v5417, %v5499
        %s5503 = scalar_lea.vmem %s10, 336
        %v5504 = vld [vmem:[%s5503] sm:$0xff]
        %v5505 = vld [vmem:[%s5503 + $0x8] sm:$0xff]
        %v5506 = vld [vmem:[%s5503 + $0x10] sm:$0xff]
        %v5507 = vld [vmem:[%s5503 + $0x18] sm:$0xff]
        %v5508 = vld [vmem:[%s5503 + $0x20] sm:$0xff]
        %v5509 = vld [vmem:[%s5503 + $0x28] sm:$0xff]
        %v5510 = vld [vmem:[%s5503 + $0x30] sm:$0x1]
        %v5511 = vrot.slane %v4987, 6
        %v5512 = vsel %vm5000, %v5511, 0
        %v5515 = vsel %vm4165, %v5510, 0
        %5517 = vmatprep.subr.mxu0 0.0
        %5518 = vmatpush1.msra.mxu0 %v5504
        %5519 = vmatprep.subr.mxu0 0.0
        %5520 = vmatpush1.msra.mxu0 %v5505
        %5521 = vmatprep.subr.mxu0 0.0
        %5522 = vmatpush1.msra.mxu0 %v5506
        %5523 = vmatprep.subr.mxu0 0.0
        %5524 = vmatpush1.msra.mxu0 %v5507
        %5525 = vmatprep.subr.mxu0 0.0
        %5526 = vmatpush1.msra.mxu0 %v5508
        %5527 = vmatprep.subr.mxu0 0.0
        %5528 = vmatpush1.msra.mxu0 %v5509
        %5529 = vmatprep.subr.mxu0 0.0
        %5530 = vmatpush1.msra.mxu0 %v5515
        %5531 = vmatprep.subr.mxu0 0.0
        %5532 = vmatpush1.msra.mxu0 0.0
        %5533 = vmatprep.subr.mxu0 0.0
        %5534 = vmatpush1.msra.mxu0 0.0
        %5535 = vmatprep.subr.mxu0 0.0
        %5536 = vmatpush1.msra.mxu0 0.0
        %5537 = vmatprep.subr.mxu0 0.0
        %5538 = vmatpush1.msra.mxu0 0.0
        %5539 = vmatprep.subr.mxu0 0.0
        %5540 = vmatpush1.msra.mxu0 0.0
        %5541 = vmatprep.subr.mxu0 0.0
        %5542 = vmatpush1.msra.mxu0 0.0
        %5543 = vmatprep.subr.mxu0 0.0
        %5544 = vmatpush1.msra.mxu0 0.0
        %5545 = vmatprep.subr.mxu0 0.0
        %5546 = vmatpush1.msra.mxu0 0.0
        %5547 = vmatprep.subr.mxu0 0.0
        %5548 = vmatpush1.msra.mxu0 0.0
        %5549 = vmatprep.subr.mxu0 0.0
        %5550 = vmatpush1.msra.mxu0 0.0
        %5551 = vmatprep.subr.mxu0 0.0
        %5552 = vmatpush1.msra.mxu0 0.0
        %5553 = vmatprep.subr.mxu0 0.0
        %5554 = vmatpush1.msra.mxu0 0.0
        %5555 = vmatprep.subr.mxu0 0.0
        %5556 = vmatpush1.msra.mxu0 0.0
        %5557 = vmatprep.subr.mxu0 0.0
        %5558 = vmatpush1.msra.mxu0 0.0
        %5559 = vmatprep.subr.mxu0 0.0
        %5560 = vmatpush1.msra.mxu0 0.0
        %5561 = vmatprep.subr.mxu0 0.0
        %5562 = vmatpush1.msra.mxu0 0.0
        %5563 = vmatprep.subr.mxu0 0.0
        %5564 = vmatpush1.msra.mxu0 0.0
        %5565 = vmatprep.subr.mxu0 0.0
        %5566 = vmatpush1.msra.mxu0 0.0
        %5567 = vmatprep.subr.mxu0 0.0
        %5568 = vmatpush1.msra.mxu0 0.0
        %5569 = vmatprep.subr.mxu0 0.0
        %5570 = vmatpush1.msra.mxu0 0.0
        %5571 = vmatprep.subr.mxu0 0.0
        %5572 = vmatpush1.msra.mxu0 0.0
        %5573 = vmatprep.subr.mxu0 0.0
        %5574 = vmatpush1.msra.mxu0 0.0
        %5575 = vmatprep.subr.mxu0 0.0
        %5576 = vmatpush1.msra.mxu0 0.0
        %5577 = vmatprep.subr.mxu0 0.0
        %5578 = vmatpush1.msra.mxu0 0.0
        %5579 = vmatprep.subr.mxu0 0.0
        %5580 = vmatpush1.msra.mxu0 0.0
        %5581 = vmatprep.mubr.f32.mxu0 0.0
        %5582 = vmatmul.mubr.f32.gmra.mrb[0].mxu0 %v5512
        %v5583 = vpop.f32.mrb[0].mxu0
        %v5584 = vadd.f32 0.0, %v5583
        %v5585 = vpop.f32.mrb[0].mxu0
        %5586 = vdwg.mxu0
        %v5587 = vadd.f32 %v5502, %v5584
        %s5588 = scalar_lea.vmem %s10, 392
        %v5589 = vld [vmem:[%s5588] sm:$0xff]
        %v5590 = vld [vmem:[%s5588 + $0x8] sm:$0xff]
        %v5591 = vld [vmem:[%s5588 + $0x10] sm:$0xff]
        %v5592 = vld [vmem:[%s5588 + $0x18] sm:$0xff]
        %v5593 = vld [vmem:[%s5588 + $0x20] sm:$0xff]
        %v5594 = vld [vmem:[%s5588 + $0x28] sm:$0xff]
        %v5595 = vld [vmem:[%s5588 + $0x30] sm:$0x1]
        %v5596 = vrot.slane %v4987, 7
        %v5597 = vsel %vm5000, %v5596, 0
        %v5600 = vsel %vm4165, %v5595, 0
        %5602 = vmatprep.subr.mxu0 0.0
        %5603 = vmatpush1.msra.mxu0 %v5589
        %5604 = vmatprep.subr.mxu0 0.0
        %5605 = vmatpush1.msra.mxu0 %v5590
        %5606 = vmatprep.subr.mxu0 0.0
        %5607 = vmatpush1.msra.mxu0 %v5591
        %5608 = vmatprep.subr.mxu0 0.0
        %5609 = vmatpush1.msra.mxu0 %v5592
        %5610 = vmatprep.subr.mxu0 0.0
        %5611 = vmatpush1.msra.mxu0 %v5593
        %5612 = vmatprep.subr.mxu0 0.0
        %5613 = vmatpush1.msra.mxu0 %v5594
        %5614 = vmatprep.subr.mxu0 0.0
        %5615 = vmatpush1.msra.mxu0 %v5600
        %5616 = vmatprep.subr.mxu0 0.0
        %5617 = vmatpush1.msra.mxu0 0.0
        %5618 = vmatprep.subr.mxu0 0.0
        %5619 = vmatpush1.msra.mxu0 0.0
        %5620 = vmatprep.subr.mxu0 0.0
        %5621 = vmatpush1.msra.mxu0 0.0
        %5622 = vmatprep.subr.mxu0 0.0
        %5623 = vmatpush1.msra.mxu0 0.0
        %5624 = vmatprep.subr.mxu0 0.0
        %5625 = vmatpush1.msra.mxu0 0.0
        %5626 = vmatprep.subr.mxu0 0.0
        %5627 = vmatpush1.msra.mxu0 0.0
        %5628 = vmatprep.subr.mxu0 0.0
        %5629 = vmatpush1.msra.mxu0 0.0
        %5630 = vmatprep.subr.mxu0 0.0
        %5631 = vmatpush1.msra.mxu0 0.0
        %5632 = vmatprep.subr.mxu0 0.0
        %5633 = vmatpush1.msra.mxu0 0.0
        %5634 = vmatprep.subr.mxu0 0.0
        %5635 = vmatpush1.msra.mxu0 0.0
        %5636 = vmatprep.subr.mxu0 0.0
        %5637 = vmatpush1.msra.mxu0 0.0
        %5638 = vmatprep.subr.mxu0 0.0
        %5639 = vmatpush1.msra.mxu0 0.0
        %5640 = vmatprep.subr.mxu0 0.0
        %5641 = vmatpush1.msra.mxu0 0.0
        %5642 = vmatprep.subr.mxu0 0.0
        %5643 = vmatpush1.msra.mxu0 0.0
        %5644 = vmatprep.subr.mxu0 0.0
        %5645 = vmatpush1.msra.mxu0 0.0
        %5646 = vmatprep.subr.mxu0 0.0
        %5647 = vmatpush1.msra.mxu0 0.0
        %5648 = vmatprep.subr.mxu0 0.0
        %5649 = vmatpush1.msra.mxu0 0.0
        %5650 = vmatprep.subr.mxu0 0.0
        %5651 = vmatpush1.msra.mxu0 0.0
        %5652 = vmatprep.subr.mxu0 0.0
        %5653 = vmatpush1.msra.mxu0 0.0
        %5654 = vmatprep.subr.mxu0 0.0
        %5655 = vmatpush1.msra.mxu0 0.0
        %5656 = vmatprep.subr.mxu0 0.0
        %5657 = vmatpush1.msra.mxu0 0.0
        %5658 = vmatprep.subr.mxu0 0.0
        %5659 = vmatpush1.msra.mxu0 0.0
        %5660 = vmatprep.subr.mxu0 0.0
        %5661 = vmatpush1.msra.mxu0 0.0
        %5662 = vmatprep.subr.mxu0 0.0
        %5663 = vmatpush1.msra.mxu0 0.0
        %5664 = vmatprep.subr.mxu0 0.0
        %5665 = vmatpush1.msra.mxu0 0.0
        %5666 = vmatprep.mubr.f32.mxu0 0.0
        %5667 = vmatmul.mubr.f32.gmra.mrb[0].mxu0 %v5597
        %v5668 = vpop.f32.mrb[0].mxu0
        %v5669 = vadd.f32 0.0, %v5668
        %v5670 = vpop.f32.mrb[0].mxu0
        %5671 = vdwg.mxu0
        %v5672 = vadd.f32 %v5587, %v5669
        %v5673 = vld [vmem:[%s657] sm:$0x1]
        %v5674 = vmul.f32 %v5672, 0.5
        %v5675 = vmul.f32 %v5674, 1.442695
        %v5676 = vpow.pop %v5675
        %5678 = vrot.lane.b32.xlu0 %v5676, 118
        %v5679 = vpop.permute.xlu0 %5678
        %v5681 = vmul.f32 %v5673, %v5679
        %v5682 = vadd.f32 %v5672, %v5681
        %vm5683 = vcmask 73728
        %5684 = vst.msk [vmem:[%s643] sm:$0x1] %vm5683, %v5672
        %v5686 = vlaneseq
        %v5687 = vshrl.u32 %v5686, 7
        %v5688 = vsub.s32 0, %v5687
        %v5689 = vrot.slane %v5672, %v5688
        %5690 = vrot.lane.b32.xlu0 %v5689, 118
        %v5691 = vpop.permute.xlu0 %5690
        %5693 = vst.msk [vmem:[%s649] sm:$0x1] %vm5683, %v5691
        %v5694 = vld [vmem:[%s12] sm:$0xff]
        %v5695 = vld [vmem:[%s12 + $0x8] sm:$0xff]
        %v5696 = vld [vmem:[%s12 + $0x10] sm:$0xff]
        %v5697 = vld [vmem:[%s12 + $0x18] sm:$0x3]
        %v5698 = vld [vmem:[%s12 + $0x20] sm:$0x3]
        %v5699 = vld [vmem:[%s12 + $0x28] sm:$0x3]
        %vm5700 = vcmask 80896
        %v5702 = vsel %vm5700, %v5682, 0
        %v5705 = vsel %vm4166, %v5697, 0
        %v5708 = vsel %vm4166, %v5698, 0
        %v5711 = vsel %vm4166, %v5699, 0
        %5713 = vmatprep.subr.mxu0 %v5695
        %5714 = vmatpush1.msra.mxu0 %v5694
        %5715 = vmatprep.subr.mxu0 %v5708
        %5716 = vmatpush1.msra.mxu0 %v5705
        %5717 = vmatprep.subr.mxu0 0.0
        %5718 = vmatpush1.msra.mxu0 0.0
        %5719 = vmatprep.subr.mxu0 0.0
        %5720 = vmatpush1.msra.mxu0 0.0
        %5721 = vmatprep.subr.mxu0 0.0
        %5722 = vmatpush1.msra.mxu0 0.0
        %5723 = vmatprep.subr.mxu0 0.0
        %5724 = vmatpush1.msra.mxu0 0.0
        %5725 = vmatprep.subr.mxu0 0.0
        %5726 = vmatpush1.msra.mxu0 0.0
        %5727 = vmatprep.subr.mxu0 0.0
        %5728 = vmatpush1.msra.mxu0 0.0
        %5729 = vmatprep.subr.mxu0 0.0
        %5730 = vmatpush1.msra.mxu0 0.0
        %5731 = vmatprep.subr.mxu0 0.0
        %5732 = vmatpush1.msra.mxu0 0.0
        %5733 = vmatprep.subr.mxu0 0.0
        %5734 = vmatpush1.msra.mxu0 0.0
        %5735 = vmatprep.subr.mxu0 0.0
        %5736 = vmatpush1.msra.mxu0 0.0
        %5737 = vmatprep.subr.mxu0 0.0
        %5738 = vmatpush1.msra.mxu0 0.0
        %5739 = vmatprep.subr.mxu0 0.0
        %5740 = vmatpush1.msra.mxu0 0.0
        %5741 = vmatprep.subr.mxu0 0.0
        %5742 = vmatpush1.msra.mxu0 0.0
        %5743 = vmatprep.subr.mxu0 0.0
        %5744 = vmatpush1.msra.mxu0 0.0
        %5745 = vmatprep.subr.mxu0 0.0
        %5746 = vmatpush1.msra.mxu0 0.0
        %5747 = vmatprep.subr.mxu0 0.0
        %5748 = vmatpush1.msra.mxu0 0.0
        %5749 = vmatprep.subr.mxu0 0.0
        %5750 = vmatpush1.msra.mxu0 0.0
        %5751 = vmatprep.subr.mxu0 0.0
        %5752 = vmatpush1.msra.mxu0 0.0
        %5753 = vmatprep.subr.mxu0 0.0
        %5754 = vmatpush1.msra.mxu0 0.0
        %5755 = vmatprep.subr.mxu0 0.0
        %5756 = vmatpush1.msra.mxu0 0.0
        %5757 = vmatprep.subr.mxu0 0.0
        %5758 = vmatpush1.msra.mxu0 0.0
        %5759 = vmatprep.subr.mxu0 0.0
        %5760 = vmatpush1.msra.mxu0 0.0
        %5761 = vmatprep.subr.mxu0 0.0
        %5762 = vmatpush1.msra.mxu0 0.0
        %5763 = vmatprep.subr.mxu0 0.0
        %5764 = vmatpush1.msra.mxu0 0.0
        %5765 = vmatprep.subr.mxu0 0.0
        %5766 = vmatpush1.msra.mxu0 0.0
        %5767 = vmatprep.subr.mxu0 0.0
        %5768 = vmatpush1.msra.mxu0 0.0
        %5769 = vmatprep.subr.mxu0 0.0
        %5770 = vmatpush1.msra.mxu0 0.0
        %5771 = vmatprep.subr.mxu0 0.0
        %5772 = vmatpush1.msra.mxu0 0.0
        %5773 = vmatprep.subr.mxu0 0.0
        %5774 = vmatpush1.msra.mxu0 0.0
        %5775 = vmatprep.subr.mxu0 0.0
        %5776 = vmatpush1.msra.mxu0 0.0
        %5777 = vmatprep.mubr.f32.mxu0 0.0
        %5778 = vmatmul.mubr.f32.gmra.mrb[0].mxu0 %v5702
        %v5779 = vpop.f32.mrb[0].mxu0
        %v5780 = vadd.f32 0.0, %v5779
        %v5781 = vpop.f32.mrb[0].mxu0
        %v5782 = vadd.f32 0.0, %v5781
        %5783 = vdwg.mxu0
        %5784 = vmatprep.subr.mxu0 0.0
        %5785 = vmatpush1.msra.mxu0 %v5696
        %5786 = vmatprep.subr.mxu0 0.0
        %5787 = vmatpush1.msra.mxu0 %v5711
        %5788 = vmatprep.subr.mxu0 0.0
        %5789 = vmatpush1.msra.mxu0 0.0
        %5790 = vmatprep.subr.mxu0 0.0
        %5791 = vmatpush1.msra.mxu0 0.0
        %5792 = vmatprep.subr.mxu0 0.0
        %5793 = vmatpush1.msra.mxu0 0.0
        %5794 = vmatprep.subr.mxu0 0.0
        %5795 = vmatpush1.msra.mxu0 0.0
        %5796 = vmatprep.subr.mxu0 0.0
        %5797 = vmatpush1.msra.mxu0 0.0
        %5798 = vmatprep.subr.mxu0 0.0
        %5799 = vmatpush1.msra.mxu0 0.0
        %5800 = vmatprep.subr.mxu0 0.0
        %5801 = vmatpush1.msra.mxu0 0.0
        %5802 = vmatprep.subr.mxu0 0.0
        %5803 = vmatpush1.msra.mxu0 0.0
        %5804 = vmatprep.subr.mxu0 0.0
        %5805 = vmatpush1.msra.mxu0 0.0
        %5806 = vmatprep.subr.mxu0 0.0
        %5807 = vmatpush1.msra.mxu0 0.0
        %5808 = vmatprep.subr.mxu0 0.0
        %5809 = vmatpush1.msra.mxu0 0.0
        %5810 = vmatprep.subr.mxu0 0.0
        %5811 = vmatpush1.msra.mxu0 0.0
        %5812 = vmatprep.subr.mxu0 0.0
        %5813 = vmatpush1.msra.mxu0 0.0
        %5814 = vmatprep.subr.mxu0 0.0
        %5815 = vmatpush1.msra.mxu0 0.0
        %5816 = vmatprep.subr.mxu0 0.0
        %5817 = vmatpush1.msra.mxu0 0.0
        %5818 = vmatprep.subr.mxu0 0.0
        %5819 = vmatpush1.msra.mxu0 0.0
        %5820 = vmatprep.subr.mxu0 0.0
        %5821 = vmatpush1.msra.mxu0 0.0
        %5822 = vmatprep.subr.mxu0 0.0
        %5823 = vmatpush1.msra.mxu0 0.0
        %5824 = vmatprep.subr.mxu0 0.0
        %5825 = vmatpush1.msra.mxu0 0.0
        %5826 = vmatprep.subr.mxu0 0.0
        %5827 = vmatpush1.msra.mxu0 0.0
        %5828 = vmatprep.subr.mxu0 0.0
        %5829 = vmatpush1.msra.mxu0 0.0
        %5830 = vmatprep.subr.mxu0 0.0
        %5831 = vmatpush1.msra.mxu0 0.0
        %5832 = vmatprep.subr.mxu0 0.0
        %5833 = vmatpush1.msra.mxu0 0.0
        %5834 = vmatprep.subr.mxu0 0.0
        %5835 = vmatpush1.msra.mxu0 0.0
        %5836 = vmatprep.subr.mxu0 0.0
        %5837 = vmatpush1.msra.mxu0 0.0
        %5838 = vmatprep.subr.mxu0 0.0
        %5839 = vmatpush1.msra.mxu0 0.0
        %5840 = vmatprep.subr.mxu0 0.0
        %5841 = vmatpush1.msra.mxu0 0.0
        %5842 = vmatprep.subr.mxu0 0.0
        %5843 = vmatpush1.msra.mxu0 0.0
        %5844 = vmatprep.subr.mxu0 0.0
        %5845 = vmatpush1.msra.mxu0 0.0
        %5846 = vmatprep.subr.mxu0 0.0
        %5847 = vmatpush1.msra.mxu0 0.0
        %5848 = vmatprep.mubr.f32.mxu0 0.0
        %5849 = vmatmul.mubr.f32.gmra.mrb[0].mxu0 %v5702
        %v5850 = vpop.f32.mrb[0].mxu0
        %v5851 = vadd.f32 0.0, %v5850
        %v5852 = vpop.f32.mrb[0].mxu0
        %5853 = vdwg.mxu0
        %s5854 = scalar_lea.vmem %s12, 48
        %v5855 = vld [vmem:[%s5854] sm:$0xff]
        %v5856 = vld [vmem:[%s5854 + $0x8] sm:$0xff]
        %v5857 = vld [vmem:[%s5854 + $0x10] sm:$0xff]
        %v5858 = vld [vmem:[%s5854 + $0x18] sm:$0x3]
        %v5859 = vld [vmem:[%s5854 + $0x20] sm:$0x3]
        %v5860 = vld [vmem:[%s5854 + $0x28] sm:$0x3]
        %v5862 = vsel %vm4166, %v5858, 0
        %v5865 = vsel %vm4166, %v5859, 0
        %v5868 = vsel %vm4166, %v5860, 0
        %5870 = vmatprep.subr.mxu0 %v5856
        %5871 = vmatpush1.msra.mxu0 %v5855
        %5872 = vmatprep.subr.mxu0 %v5865
        %5873 = vmatpush1.msra.mxu0 %v5862
        %5874 = vmatprep.subr.mxu0 0.0
        %5875 = vmatpush1.msra.mxu0 0.0
        %5876 = vmatprep.subr.mxu0 0.0
        %5877 = vmatpush1.msra.mxu0 0.0
        %5878 = vmatprep.subr.mxu0 0.0
        %5879 = vmatpush1.msra.mxu0 0.0
        %5880 = vmatprep.subr.mxu0 0.0
        %5881 = vmatpush1.msra.mxu0 0.0
        %5882 = vmatprep.subr.mxu0 0.0
        %5883 = vmatpush1.msra.mxu0 0.0
        %5884 = vmatprep.subr.mxu0 0.0
        %5885 = vmatpush1.msra.mxu0 0.0
        %5886 = vmatprep.subr.mxu0 0.0
        %5887 = vmatpush1.msra.mxu0 0.0
        %5888 = vmatprep.subr.mxu0 0.0
        %5889 = vmatpush1.msra.mxu0 0.0
        %5890 = vmatprep.subr.mxu0 0.0
        %5891 = vmatpush1.msra.mxu0 0.0
        %5892 = vmatprep.subr.mxu0 0.0
        %5893 = vmatpush1.msra.mxu0 0.0
        %5894 = vmatprep.subr.mxu0 0.0
        %5895 = vmatpush1.msra.mxu0 0.0
        %5896 = vmatprep.subr.mxu0 0.0
        %5897 = vmatpush1.msra.mxu0 0.0
        %5898 = vmatprep.subr.mxu0 0.0
        %5899 = vmatpush1.msra.mxu0 0.0
        %5900 = vmatprep.subr.mxu0 0.0
        %5901 = vmatpush1.msra.mxu0 0.0
        %5902 = vmatprep.subr.mxu0 0.0
        %5903 = vmatpush1.msra.mxu0 0.0
        %5904 = vmatprep.subr.mxu0 0.0
        %5905 = vmatpush1.msra.mxu0 0.0
        %5906 = vmatprep.subr.mxu0 0.0
        %5907 = vmatpush1.msra.mxu0 0.0
        %5908 = vmatprep.subr.mxu0 0.0
        %5909 = vmatpush1.msra.mxu0 0.0
        %5910 = vmatprep.subr.mxu0 0.0
        %5911 = vmatpush1.msra.mxu0 0.0
        %5912 = vmatprep.subr.mxu0 0.0
        %5913 = vmatpush1.msra.mxu0 0.0
        %5914 = vmatprep.subr.mxu0 0.0
        %5915 = vmatpush1.msra.mxu0 0.0
        %5916 = vmatprep.subr.mxu0 0.0
        %5917 = vmatpush1.msra.mxu0 0.0
        %5918 = vmatprep.subr.mxu0 0.0
        %5919 = vmatpush1.msra.mxu0 0.0
        %5920 = vmatprep.subr.mxu0 0.0
        %5921 = vmatpush1.msra.mxu0 0.0
        %5922 = vmatprep.subr.mxu0 0.0
        %5923 = vmatpush1.msra.mxu0 0.0
        %5924 = vmatprep.subr.mxu0 0.0
        %5925 = vmatpush1.msra.mxu0 0.0
        %5926 = vmatprep.subr.mxu0 0.0
        %5927 = vmatpush1.msra.mxu0 0.0
        %5928 = vmatprep.subr.mxu0 0.0
        %5929 = vmatpush1.msra.mxu0 0.0
        %5930 = vmatprep.subr.mxu0 0.0
        %5931 = vmatpush1.msra.mxu0 0.0
        %5932 = vmatprep.subr.mxu0 0.0
        %5933 = vmatpush1.msra.mxu0 0.0
        %5934 = vmatprep.mubr.f32.mxu0 0.0
        %5935 = vmatmul.mubr.f32.gmra.mrb[0].mxu0 %v5702
        %v5936 = vpop.f32.mrb[0].mxu0
        %v5937 = vadd.f32 0.0, %v5936
        %v5938 = vpop.f32.mrb[0].mxu0
        %v5939 = vadd.f32 0.0, %v5938
        %5940 = vdwg.mxu0
        %5941 = vmatprep.subr.mxu0 0.0
        %5942 = vmatpush1.msra.mxu0 %v5857
        %5943 = vmatprep.subr.mxu0 0.0
        %5944 = vmatpush1.msra.mxu0 %v5868
        %5945 = vmatprep.subr.mxu0 0.0
        %5946 = vmatpush1.msra.mxu0 0.0
        %5947 = vmatprep.subr.mxu0 0.0
        %5948 = vmatpush1.msra.mxu0 0.0
        %5949 = vmatprep.subr.mxu0 0.0
        %5950 = vmatpush1.msra.mxu0 0.0
        %5951 = vmatprep.subr.mxu0 0.0
        %5952 = vmatpush1.msra.mxu0 0.0
        %5953 = vmatprep.subr.mxu0 0.0
        %5954 = vmatpush1.msra.mxu0 0.0
        %5955 = vmatprep.subr.mxu0 0.0
        %5956 = vmatpush1.msra.mxu0 0.0
        %5957 = vmatprep.subr.mxu0 0.0
        %5958 = vmatpush1.msra.mxu0 0.0
        %5959 = vmatprep.subr.mxu0 0.0
        %5960 = vmatpush1.msra.mxu0 0.0
        %5961 = vmatprep.subr.mxu0 0.0
        %5962 = vmatpush1.msra.mxu0 0.0
        %5963 = vmatprep.subr.mxu0 0.0
        %5964 = vmatpush1.msra.mxu0 0.0
        %5965 = vmatprep.subr.mxu0 0.0
        %5966 = vmatpush1.msra.mxu0 0.0
        %5967 = vmatprep.subr.mxu0 0.0
        %5968 = vmatpush1.msra.mxu0 0.0
        %5969 = vmatprep.subr.mxu0 0.0
        %5970 = vmatpush1.msra.mxu0 0.0
        %5971 = vmatprep.subr.mxu0 0.0
        %5972 = vmatpush1.msra.mxu0 0.0
        %5973 = vmatprep.subr.mxu0 0.0
        %5974 = vmatpush1.msra.mxu0 0.0
        %5975 = vmatprep.subr.mxu0 0.0
        %5976 = vmatpush1.msra.mxu0 0.0
        %5977 = vmatprep.subr.mxu0 0.0
        %5978 = vmatpush1.msra.mxu0 0.0
        %5979 = vmatprep.subr.mxu0 0.0
        %5980 = vmatpush1.msra.mxu0 0.0
        %5981 = vmatprep.subr.mxu0 0.0
        %5982 = vmatpush1.msra.mxu0 0.0
        %5983 = vmatprep.subr.mxu0 0.0
        %5984 = vmatpush1.msra.mxu0 0.0
        %5985 = vmatprep.subr.mxu0 0.0
        %5986 = vmatpush1.msra.mxu0 0.0
        %5987 = vmatprep.subr.mxu0 0.0
        %5988 = vmatpush1.msra.mxu0 0.0
        %5989 = vmatprep.subr.mxu0 0.0
        %5990 = vmatpush1.msra.mxu0 0.0
        %5991 = vmatprep.subr.mxu0 0.0
        %5992 = vmatpush1.msra.mxu0 0.0
        %5993 = vmatprep.subr.mxu0 0.0
        %5994 = vmatpush1.msra.mxu0 0.0
        %5995 = vmatprep.subr.mxu0 0.0
        %5996 = vmatpush1.msra.mxu0 0.0
        %5997 = vmatprep.subr.mxu0 0.0
        %5998 = vmatpush1.msra.mxu0 0.0
        %5999 = vmatprep.subr.mxu0 0.0
        %6000 = vmatpush1.msra.mxu0 0.0
        %6001 = vmatprep.subr.mxu0 0.0
        %6002 = vmatpush1.msra.mxu0 0.0
        %6003 = vmatprep.subr.mxu0 0.0
        %6004 = vmatpush1.msra.mxu0 0.0
        %6005 = vmatprep.mubr.f32.mxu0 0.0
        %6006 = vmatmul.mubr.f32.gmra.mrb[0].mxu0 %v5702
        %v6007 = vpop.f32.mrb[0].mxu0
        %v6008 = vadd.f32 0.0, %v6007
        %v6009 = vpop.f32.mrb[0].mxu0
        %6010 = vdwg.mxu0
        %s6011 = scalar_lea.vmem %s12, 96
        %v6012 = vld [vmem:[%s6011] sm:$0xff]
        %v6013 = vld [vmem:[%s6011 + $0x8] sm:$0xff]
        %v6014 = vld [vmem:[%s6011 + $0x10] sm:$0xff]
        %v6015 = vld [vmem:[%s6011 + $0x18] sm:$0x3]
        %v6016 = vld [vmem:[%s6011 + $0x20] sm:$0x3]
        %v6017 = vld [vmem:[%s6011 + $0x28] sm:$0x3]
        %v6019 = vsel %vm4166, %v6015, 0
        %v6022 = vsel %vm4166, %v6016, 0
        %v6025 = vsel %vm4166, %v6017, 0
        %6027 = vmatprep.subr.mxu0 %v6013
        %6028 = vmatpush1.msra.mxu0 %v6012
        %6029 = vmatprep.subr.mxu0 %v6022
        %6030 = vmatpush1.msra.mxu0 %v6019
        %6031 = vmatprep.subr.mxu0 0.0
        %6032 = vmatpush1.msra.mxu0 0.0
        %6033 = vmatprep.subr.mxu0 0.0
        %6034 = vmatpush1.msra.mxu0 0.0
        %6035 = vmatprep.subr.mxu0 0.0
        %6036 = vmatpush1.msra.mxu0 0.0
        %6037 = vmatprep.subr.mxu0 0.0
        %6038 = vmatpush1.msra.mxu0 0.0
        %6039 = vmatprep.subr.mxu0 0.0
        %6040 = vmatpush1.msra.mxu0 0.0
        %6041 = vmatprep.subr.mxu0 0.0
        %6042 = vmatpush1.msra.mxu0 0.0
        %6043 = vmatprep.subr.mxu0 0.0
        %6044 = vmatpush1.msra.mxu0 0.0
        %6045 = vmatprep.subr.mxu0 0.0
        %6046 = vmatpush1.msra.mxu0 0.0
        %6047 = vmatprep.subr.mxu0 0.0
        %6048 = vmatpush1.msra.mxu0 0.0
        %6049 = vmatprep.subr.mxu0 0.0
        %6050 = vmatpush1.msra.mxu0 0.0
        %6051 = vmatprep.subr.mxu0 0.0
        %6052 = vmatpush1.msra.mxu0 0.0
        %6053 = vmatprep.subr.mxu0 0.0
        %6054 = vmatpush1.msra.mxu0 0.0
        %6055 = vmatprep.subr.mxu0 0.0
        %6056 = vmatpush1.msra.mxu0 0.0
        %6057 = vmatprep.subr.mxu0 0.0
        %6058 = vmatpush1.msra.mxu0 0.0
        %6059 = vmatprep.subr.mxu0 0.0
        %6060 = vmatpush1.msra.mxu0 0.0
        %6061 = vmatprep.subr.mxu0 0.0
        %6062 = vmatpush1.msra.mxu0 0.0
        %6063 = vmatprep.subr.mxu0 0.0
        %6064 = vmatpush1.msra.mxu0 0.0
        %6065 = vmatprep.subr.mxu0 0.0
        %6066 = vmatpush1.msra.mxu0 0.0
        %6067 = vmatprep.subr.mxu0 0.0
        %6068 = vmatpush1.msra.mxu0 0.0
        %6069 = vmatprep.subr.mxu0 0.0
        %6070 = vmatpush1.msra.mxu0 0.0
        %6071 = vmatprep.subr.mxu0 0.0
        %6072 = vmatpush1.msra.mxu0 0.0
        %6073 = vmatprep.subr.mxu0 0.0
        %6074 = vmatpush1.msra.mxu0 0.0
        %6075 = vmatprep.subr.mxu0 0.0
        %6076 = vmatpush1.msra.mxu0 0.0
        %6077 = vmatprep.subr.mxu0 0.0
        %6078 = vmatpush1.msra.mxu0 0.0
        %6079 = vmatprep.subr.mxu0 0.0
        %6080 = vmatpush1.msra.mxu0 0.0
        %6081 = vmatprep.subr.mxu0 0.0
        %6082 = vmatpush1.msra.mxu0 0.0
        %6083 = vmatprep.subr.mxu0 0.0
        %6084 = vmatpush1.msra.mxu0 0.0
        %6085 = vmatprep.subr.mxu0 0.0
        %6086 = vmatpush1.msra.mxu0 0.0
        %6087 = vmatprep.subr.mxu0 0.0
        %6088 = vmatpush1.msra.mxu0 0.0
        %6089 = vmatprep.subr.mxu0 0.0
        %6090 = vmatpush1.msra.mxu0 0.0
        %6091 = vmatprep.mubr.f32.mxu0 0.0
        %6092 = vmatmul.mubr.f32.gmra.mrb[0].mxu0 %v5702
        %v6093 = vpop.f32.mrb[0].mxu0
        %v6094 = vadd.f32 0.0, %v6093
        %v6095 = vpop.f32.mrb[0].mxu0
        %v6096 = vadd.f32 0.0, %v6095
        %6097 = vdwg.mxu0
        %6098 = vmatprep.subr.mxu0 0.0
        %6099 = vmatpush1.msra.mxu0 %v6014
        %6100 = vmatprep.subr.mxu0 0.0
        %6101 = vmatpush1.msra.mxu0 %v6025
        %6102 = vmatprep.subr.mxu0 0.0
        %6103 = vmatpush1.msra.mxu0 0.0
        %6104 = vmatprep.subr.mxu0 0.0
        %6105 = vmatpush1.msra.mxu0 0.0
        %6106 = vmatprep.subr.mxu0 0.0
        %6107 = vmatpush1.msra.mxu0 0.0
        %6108 = vmatprep.subr.mxu0 0.0
        %6109 = vmatpush1.msra.mxu0 0.0
        %6110 = vmatprep.subr.mxu0 0.0
        %6111 = vmatpush1.msra.mxu0 0.0
        %6112 = vmatprep.subr.mxu0 0.0
        %6113 = vmatpush1.msra.mxu0 0.0
        %6114 = vmatprep.subr.mxu0 0.0
        %6115 = vmatpush1.msra.mxu0 0.0
        %6116 = vmatprep.subr.mxu0 0.0
        %6117 = vmatpush1.msra.mxu0 0.0
        %6118 = vmatprep.subr.mxu0 0.0
        %6119 = vmatpush1.msra.mxu0 0.0
        %6120 = vmatprep.subr.mxu0 0.0
        %6121 = vmatpush1.msra.mxu0 0.0
        %6122 = vmatprep.subr.mxu0 0.0
        %6123 = vmatpush1.msra.mxu0 0.0
        %6124 = vmatprep.subr.mxu0 0.0
        %6125 = vmatpush1.msra.mxu0 0.0
        %6126 = vmatprep.subr.mxu0 0.0
        %6127 = vmatpush1.msra.mxu0 0.0
        %6128 = vmatprep.subr.mxu0 0.0
        %6129 = vmatpush1.msra.mxu0 0.0
        %6130 = vmatprep.subr.mxu0 0.0
        %6131 = vmatpush1.msra.mxu0 0.0
        %6132 = vmatprep.subr.mxu0 0.0
        %6133 = vmatpush1.msra.mxu0 0.0
        %6134 = vmatprep.subr.mxu0 0.0
        %6135 = vmatpush1.msra.mxu0 0.0
        %6136 = vmatprep.subr.mxu0 0.0
        %6137 = vmatpush1.msra.mxu0 0.0
        %6138 = vmatprep.subr.mxu0 0.0
        %6139 = vmatpush1.msra.mxu0 0.0
        %6140 = vmatprep.subr.mxu0 0.0
        %6141 = vmatpush1.msra.mxu0 0.0
        %6142 = vmatprep.subr.mxu0 0.0
        %6143 = vmatpush1.msra.mxu0 0.0
        %6144 = vmatprep.subr.mxu0 0.0
        %6145 = vmatpush1.msra.mxu0 0.0
        %6146 = vmatprep.subr.mxu0 0.0
        %6147 = vmatpush1.msra.mxu0 0.0
        %6148 = vmatprep.subr.mxu0 0.0
        %6149 = vmatpush1.msra.mxu0 0.0
        %6150 = vmatprep.subr.mxu0 0.0
        %6151 = vmatpush1.msra.mxu0 0.0
        %6152 = vmatprep.subr.mxu0 0.0
        %6153 = vmatpush1.msra.mxu0 0.0
        %6154 = vmatprep.subr.mxu0 0.0
        %6155 = vmatpush1.msra.mxu0 0.0
        %6156 = vmatprep.subr.mxu0 0.0
        %6157 = vmatpush1.msra.mxu0 0.0
        %6158 = vmatprep.subr.mxu0 0.0
        %6159 = vmatpush1.msra.mxu0 0.0
        %6160 = vmatprep.subr.mxu0 0.0
        %6161 = vmatpush1.msra.mxu0 0.0
        %6162 = vmatprep.mubr.f32.mxu0 0.0
        %6163 = vmatmul.mubr.f32.gmra.mrb[0].mxu0 %v5702
        %v6164 = vpop.f32.mrb[0].mxu0
        %v6165 = vadd.f32 0.0, %v6164
        %v6166 = vpop.f32.mrb[0].mxu0
        %6167 = vdwg.mxu0
        %s6168 = scalar_lea.vmem %s12, 144
        %v6169 = vld [vmem:[%s6168] sm:$0xff]
        %v6170 = vld [vmem:[%s6168 + $0x8] sm:$0xff]
        %v6171 = vld [vmem:[%s6168 + $0x10] sm:$0xff]
        %v6172 = vld [vmem:[%s6168 + $0x18] sm:$0x3]
        %v6173 = vld [vmem:[%s6168 + $0x20] sm:$0x3]
        %v6174 = vld [vmem:[%s6168 + $0x28] sm:$0x3]
        %v6176 = vsel %vm4166, %v6172, 0
        %v6179 = vsel %vm4166, %v6173, 0
        %v6182 = vsel %vm4166, %v6174, 0
        %6184 = vmatprep.subr.mxu0 %v6170
        %6185 = vmatpush1.msra.mxu0 %v6169
        %6186 = vmatprep.subr.mxu0 %v6179
        %6187 = vmatpush1.msra.mxu0 %v6176
        %6188 = vmatprep.subr.mxu0 0.0
        %6189 = vmatpush1.msra.mxu0 0.0
        %6190 = vmatprep.subr.mxu0 0.0
        %6191 = vmatpush1.msra.mxu0 0.0
        %6192 = vmatprep.subr.mxu0 0.0
        %6193 = vmatpush1.msra.mxu0 0.0
        %6194 = vmatprep.subr.mxu0 0.0
        %6195 = vmatpush1.msra.mxu0 0.0
        %6196 = vmatprep.subr.mxu0 0.0
        %6197 = vmatpush1.msra.mxu0 0.0
        %6198 = vmatprep.subr.mxu0 0.0
        %6199 = vmatpush1.msra.mxu0 0.0
        %6200 = vmatprep.subr.mxu0 0.0
        %6201 = vmatpush1.msra.mxu0 0.0
        %6202 = vmatprep.subr.mxu0 0.0
        %6203 = vmatpush1.msra.mxu0 0.0
        %6204 = vmatprep.subr.mxu0 0.0
        %6205 = vmatpush1.msra.mxu0 0.0
        %6206 = vmatprep.subr.mxu0 0.0
        %6207 = vmatpush1.msra.mxu0 0.0
        %6208 = vmatprep.subr.mxu0 0.0
        %6209 = vmatpush1.msra.mxu0 0.0
        %6210 = vmatprep.subr.mxu0 0.0
        %6211 = vmatpush1.msra.mxu0 0.0
        %6212 = vmatprep.subr.mxu0 0.0
        %6213 = vmatpush1.msra.mxu0 0.0
        %6214 = vmatprep.subr.mxu0 0.0
        %6215 = vmatpush1.msra.mxu0 0.0
        %6216 = vmatprep.subr.mxu0 0.0
        %6217 = vmatpush1.msra.mxu0 0.0
        %6218 = vmatprep.subr.mxu0 0.0
        %6219 = vmatpush1.msra.mxu0 0.0
        %6220 = vmatprep.subr.mxu0 0.0
        %6221 = vmatpush1.msra.mxu0 0.0
        %6222 = vmatprep.subr.mxu0 0.0
        %6223 = vmatpush1.msra.mxu0 0.0
        %6224 = vmatprep.subr.mxu0 0.0
        %6225 = vmatpush1.msra.mxu0 0.0
        %6226 = vmatprep.subr.mxu0 0.0
        %6227 = vmatpush1.msra.mxu0 0.0
        %6228 = vmatprep.subr.mxu0 0.0
        %6229 = vmatpush1.msra.mxu0 0.0
        %6230 = vmatprep.subr.mxu0 0.0
        %6231 = vmatpush1.msra.mxu0 0.0
        %6232 = vmatprep.subr.mxu0 0.0
        %6233 = vmatpush1.msra.mxu0 0.0
        %6234 = vmatprep.subr.mxu0 0.0
        %6235 = vmatpush1.msra.mxu0 0.0
        %6236 = vmatprep.subr.mxu0 0.0
        %6237 = vmatpush1.msra.mxu0 0.0
        %6238 = vmatprep.subr.mxu0 0.0
        %6239 = vmatpush1.msra.mxu0 0.0
        %6240 = vmatprep.subr.mxu0 0.0
        %6241 = vmatpush1.msra.mxu0 0.0
        %6242 = vmatprep.subr.mxu0 0.0
        %6243 = vmatpush1.msra.mxu0 0.0
        %6244 = vmatprep.subr.mxu0 0.0
        %6245 = vmatpush1.msra.mxu0 0.0
        %6246 = vmatprep.subr.mxu0 0.0
        %6247 = vmatpush1.msra.mxu0 0.0
        %6248 = vmatprep.mubr.f32.mxu0 0.0
        %6249 = vmatmul.mubr.f32.gmra.mrb[0].mxu0 %v5702
        %v6250 = vpop.f32.mrb[0].mxu0
        %v6251 = vadd.f32 0.0, %v6250
        %v6252 = vpop.f32.mrb[0].mxu0
        %v6253 = vadd.f32 0.0, %v6252
        %6254 = vdwg.mxu0
        %6255 = vmatprep.subr.mxu0 0.0
        %6256 = vmatpush1.msra.mxu0 %v6171
        %6257 = vmatprep.subr.mxu0 0.0
        %6258 = vmatpush1.msra.mxu0 %v6182
        %6259 = vmatprep.subr.mxu0 0.0
        %6260 = vmatpush1.msra.mxu0 0.0
        %6261 = vmatprep.subr.mxu0 0.0
        %6262 = vmatpush1.msra.mxu0 0.0
        %6263 = vmatprep.subr.mxu0 0.0
        %6264 = vmatpush1.msra.mxu0 0.0
        %6265 = vmatprep.subr.mxu0 0.0
        %6266 = vmatpush1.msra.mxu0 0.0
        %6267 = vmatprep.subr.mxu0 0.0
        %6268 = vmatpush1.msra.mxu0 0.0
        %6269 = vmatprep.subr.mxu0 0.0
        %6270 = vmatpush1.msra.mxu0 0.0
        %6271 = vmatprep.subr.mxu0 0.0
        %6272 = vmatpush1.msra.mxu0 0.0
        %6273 = vmatprep.subr.mxu0 0.0
        %6274 = vmatpush1.msra.mxu0 0.0
        %6275 = vmatprep.subr.mxu0 0.0
        %6276 = vmatpush1.msra.mxu0 0.0
        %6277 = vmatprep.subr.mxu0 0.0
        %6278 = vmatpush1.msra.mxu0 0.0
        %6279 = vmatprep.subr.mxu0 0.0
        %6280 = vmatpush1.msra.mxu0 0.0
        %6281 = vmatprep.subr.mxu0 0.0
        %6282 = vmatpush1.msra.mxu0 0.0
        %6283 = vmatprep.subr.mxu0 0.0
        %6284 = vmatpush1.msra.mxu0 0.0
        %6285 = vmatprep.subr.mxu0 0.0
        %6286 = vmatpush1.msra.mxu0 0.0
        %6287 = vmatprep.subr.mxu0 0.0
        %6288 = vmatpush1.msra.mxu0 0.0
        %6289 = vmatprep.subr.mxu0 0.0
        %6290 = vmatpush1.msra.mxu0 0.0
        %6291 = vmatprep.subr.mxu0 0.0
        %6292 = vmatpush1.msra.mxu0 0.0
        %6293 = vmatprep.subr.mxu0 0.0
        %6294 = vmatpush1.msra.mxu0 0.0
        %6295 = vmatprep.subr.mxu0 0.0
        %6296 = vmatpush1.msra.mxu0 0.0
        %6297 = vmatprep.subr.mxu0 0.0
        %6298 = vmatpush1.msra.mxu0 0.0
        %6299 = vmatprep.subr.mxu0 0.0
        %6300 = vmatpush1.msra.mxu0 0.0
        %6301 = vmatprep.subr.mxu0 0.0
        %6302 = vmatpush1.msra.mxu0 0.0
        %6303 = vmatprep.subr.mxu0 0.0
        %6304 = vmatpush1.msra.mxu0 0.0
        %6305 = vmatprep.subr.mxu0 0.0
        %6306 = vmatpush1.msra.mxu0 0.0
        %6307 = vmatprep.subr.mxu0 0.0
        %6308 = vmatpush1.msra.mxu0 0.0
        %6309 = vmatprep.subr.mxu0 0.0
        %6310 = vmatpush1.msra.mxu0 0.0
        %6311 = vmatprep.subr.mxu0 0.0
        %6312 = vmatpush1.msra.mxu0 0.0
        %6313 = vmatprep.subr.mxu0 0.0
        %6314 = vmatpush1.msra.mxu0 0.0
        %6315 = vmatprep.subr.mxu0 0.0
        %6316 = vmatpush1.msra.mxu0 0.0
        %6317 = vmatprep.subr.mxu0 0.0
        %6318 = vmatpush1.msra.mxu0 0.0
        %6319 = vmatprep.mubr.f32.mxu0 0.0
        %6320 = vmatmul.mubr.f32.gmra.mrb[0].mxu0 %v5702
        %v6321 = vpop.f32.mrb[0].mxu0
        %v6322 = vadd.f32 0.0, %v6321
        %v6323 = vpop.f32.mrb[0].mxu0
        %6324 = vdwg.mxu0
        %s6325 = scalar_lea.vmem %s12, 192
        %v6326 = vld [vmem:[%s6325] sm:$0xff]
        %v6327 = vld [vmem:[%s6325 + $0x8] sm:$0xff]
        %v6328 = vld [vmem:[%s6325 + $0x10] sm:$0xff]
        %v6329 = vld [vmem:[%s6325 + $0x18] sm:$0x3]
        %v6330 = vld [vmem:[%s6325 + $0x20] sm:$0x3]
        %v6331 = vld [vmem:[%s6325 + $0x28] sm:$0x3]
        %v6333 = vsel %vm4166, %v6329, 0
        %v6336 = vsel %vm4166, %v6330, 0
        %v6339 = vsel %vm4166, %v6331, 0
        %6341 = vmatprep.subr.mxu0 %v6327
        %6342 = vmatpush1.msra.mxu0 %v6326
        %6343 = vmatprep.subr.mxu0 %v6336
        %6344 = vmatpush1.msra.mxu0 %v6333
        %6345 = vmatprep.subr.mxu0 0.0
        %6346 = vmatpush1.msra.mxu0 0.0
        %6347 = vmatprep.subr.mxu0 0.0
        %6348 = vmatpush1.msra.mxu0 0.0
        %6349 = vmatprep.subr.mxu0 0.0
        %6350 = vmatpush1.msra.mxu0 0.0
        %6351 = vmatprep.subr.mxu0 0.0
        %6352 = vmatpush1.msra.mxu0 0.0
        %6353 = vmatprep.subr.mxu0 0.0
        %6354 = vmatpush1.msra.mxu0 0.0
        %6355 = vmatprep.subr.mxu0 0.0
        %6356 = vmatpush1.msra.mxu0 0.0
        %6357 = vmatprep.subr.mxu0 0.0
        %6358 = vmatpush1.msra.mxu0 0.0
        %6359 = vmatprep.subr.mxu0 0.0
        %6360 = vmatpush1.msra.mxu0 0.0
        %6361 = vmatprep.subr.mxu0 0.0
        %6362 = vmatpush1.msra.mxu0 0.0
        %6363 = vmatprep.subr.mxu0 0.0
        %6364 = vmatpush1.msra.mxu0 0.0
        %6365 = vmatprep.subr.mxu0 0.0
        %6366 = vmatpush1.msra.mxu0 0.0
        %6367 = vmatprep.subr.mxu0 0.0
        %6368 = vmatpush1.msra.mxu0 0.0
        %6369 = vmatprep.subr.mxu0 0.0
        %6370 = vmatpush1.msra.mxu0 0.0
        %6371 = vmatprep.subr.mxu0 0.0
        %6372 = vmatpush1.msra.mxu0 0.0
        %6373 = vmatprep.subr.mxu0 0.0
        %6374 = vmatpush1.msra.mxu0 0.0
        %6375 = vmatprep.subr.mxu0 0.0
        %6376 = vmatpush1.msra.mxu0 0.0
        %6377 = vmatprep.subr.mxu0 0.0
        %6378 = vmatpush1.msra.mxu0 0.0
        %6379 = vmatprep.subr.mxu0 0.0
        %6380 = vmatpush1.msra.mxu0 0.0
        %6381 = vmatprep.subr.mxu0 0.0
        %6382 = vmatpush1.msra.mxu0 0.0
        %6383 = vmatprep.subr.mxu0 0.0
        %6384 = vmatpush1.msra.mxu0 0.0
        %6385 = vmatprep.subr.mxu0 0.0
        %6386 = vmatpush1.msra.mxu0 0.0
        %6387 = vmatprep.subr.mxu0 0.0
        %6388 = vmatpush1.msra.mxu0 0.0
        %6389 = vmatprep.subr.mxu0 0.0
        %6390 = vmatpush1.msra.mxu0 0.0
        %6391 = vmatprep.subr.mxu0 0.0
        %6392 = vmatpush1.msra.mxu0 0.0
        %6393 = vmatprep.subr.mxu0 0.0
        %6394 = vmatpush1.msra.mxu0 0.0
        %6395 = vmatprep.subr.mxu0 0.0
        %6396 = vmatpush1.msra.mxu0 0.0
        %6397 = vmatprep.subr.mxu0 0.0
        %6398 = vmatpush1.msra.mxu0 0.0
        %6399 = vmatprep.subr.mxu0 0.0
        %6400 = vmatpush1.msra.mxu0 0.0
        %6401 = vmatprep.subr.mxu0 0.0
        %6402 = vmatpush1.msra.mxu0 0.0
        %6403 = vmatprep.subr.mxu0 0.0
        %6404 = vmatpush1.msra.mxu0 0.0
        %6405 = vmatprep.mubr.f32.mxu0 0.0
        %6406 = vmatmul.mubr.f32.gmra.mrb[0].mxu0 %v5702
        %v6407 = vpop.f32.mrb[0].mxu0
        %v6408 = vadd.f32 0.0, %v6407
        %v6409 = vpop.f32.mrb[0].mxu0
        %v6410 = vadd.f32 0.0, %v6409
        %6411 = vdwg.mxu0
        %6412 = vmatprep.subr.mxu0 0.0
        %6413 = vmatpush1.msra.mxu0 %v6328
        %6414 = vmatprep.subr.mxu0 0.0
        %6415 = vmatpush1.msra.mxu0 %v6339
        %6416 = vmatprep.subr.mxu0 0.0
        %6417 = vmatpush1.msra.mxu0 0.0
        %6418 = vmatprep.subr.mxu0 0.0
        %6419 = vmatpush1.msra.mxu0 0.0
        %6420 = vmatprep.subr.mxu0 0.0
        %6421 = vmatpush1.msra.mxu0 0.0
        %6422 = vmatprep.subr.mxu0 0.0
        %6423 = vmatpush1.msra.mxu0 0.0
        %6424 = vmatprep.subr.mxu0 0.0
        %6425 = vmatpush1.msra.mxu0 0.0
        %6426 = vmatprep.subr.mxu0 0.0
        %6427 = vmatpush1.msra.mxu0 0.0
        %6428 = vmatprep.subr.mxu0 0.0
        %6429 = vmatpush1.msra.mxu0 0.0
        %6430 = vmatprep.subr.mxu0 0.0
        %6431 = vmatpush1.msra.mxu0 0.0
        %6432 = vmatprep.subr.mxu0 0.0
        %6433 = vmatpush1.msra.mxu0 0.0
        %6434 = vmatprep.subr.mxu0 0.0
        %6435 = vmatpush1.msra.mxu0 0.0
        %6436 = vmatprep.subr.mxu0 0.0
        %6437 = vmatpush1.msra.mxu0 0.0
        %6438 = vmatprep.subr.mxu0 0.0
        %6439 = vmatpush1.msra.mxu0 0.0
        %6440 = vmatprep.subr.mxu0 0.0
        %6441 = vmatpush1.msra.mxu0 0.0
        %6442 = vmatprep.subr.mxu0 0.0
        %6443 = vmatpush1.msra.mxu0 0.0
        %6444 = vmatprep.subr.mxu0 0.0
        %6445 = vmatpush1.msra.mxu0 0.0
        %6446 = vmatprep.subr.mxu0 0.0
        %6447 = vmatpush1.msra.mxu0 0.0
        %6448 = vmatprep.subr.mxu0 0.0
        %6449 = vmatpush1.msra.mxu0 0.0
        %6450 = vmatprep.subr.mxu0 0.0
        %6451 = vmatpush1.msra.mxu0 0.0
        %6452 = vmatprep.subr.mxu0 0.0
        %6453 = vmatpush1.msra.mxu0 0.0
        %6454 = vmatprep.subr.mxu0 0.0
        %6455 = vmatpush1.msra.mxu0 0.0
        %6456 = vmatprep.subr.mxu0 0.0
        %6457 = vmatpush1.msra.mxu0 0.0
        %6458 = vmatprep.subr.mxu0 0.0
        %6459 = vmatpush1.msra.mxu0 0.0
        %6460 = vmatprep.subr.mxu0 0.0
        %6461 = vmatpush1.msra.mxu0 0.0
        %6462 = vmatprep.subr.mxu0 0.0
        %6463 = vmatpush1.msra.mxu0 0.0
        %6464 = vmatprep.subr.mxu0 0.0
        %6465 = vmatpush1.msra.mxu0 0.0
        %6466 = vmatprep.subr.mxu0 0.0
        %6467 = vmatpush1.msra.mxu0 0.0
        %6468 = vmatprep.subr.mxu0 0.0
        %6469 = vmatpush1.msra.mxu0 0.0
        %6470 = vmatprep.subr.mxu0 0.0
        %6471 = vmatpush1.msra.mxu0 0.0
        %6472 = vmatprep.subr.mxu0 0.0
        %6473 = vmatpush1.msra.mxu0 0.0
        %6474 = vmatprep.subr.mxu0 0.0
        %6475 = vmatpush1.msra.mxu0 0.0
        %6476 = vmatprep.mubr.f32.mxu0 0.0
        %6477 = vmatmul.mubr.f32.gmra.mrb[0].mxu0 %v5702
        %v6478 = vpop.f32.mrb[0].mxu0
        %v6479 = vadd.f32 0.0, %v6478
        %v6480 = vpop.f32.mrb[0].mxu0
        %6481 = vdwg.mxu0
        %s6482 = scalar_lea.vmem %s12, 240
        %v6483 = vld [vmem:[%s6482] sm:$0xff]
        %v6484 = vld [vmem:[%s6482 + $0x8] sm:$0xff]
        %v6485 = vld [vmem:[%s6482 + $0x10] sm:$0xff]
        %v6486 = vld [vmem:[%s6482 + $0x18] sm:$0x3]
        %v6487 = vld [vmem:[%s6482 + $0x20] sm:$0x3]
        %v6488 = vld [vmem:[%s6482 + $0x28] sm:$0x3]
        %v6490 = vsel %vm4166, %v6486, 0
        %v6493 = vsel %vm4166, %v6487, 0
        %v6496 = vsel %vm4166, %v6488, 0
        %6498 = vmatprep.subr.mxu0 %v6484
        %6499 = vmatpush1.msra.mxu0 %v6483
        %6500 = vmatprep.subr.mxu0 %v6493
        %6501 = vmatpush1.msra.mxu0 %v6490
        %6502 = vmatprep.subr.mxu0 0.0
        %6503 = vmatpush1.msra.mxu0 0.0
        %6504 = vmatprep.subr.mxu0 0.0
        %6505 = vmatpush1.msra.mxu0 0.0
        %6506 = vmatprep.subr.mxu0 0.0
        %6507 = vmatpush1.msra.mxu0 0.0
        %6508 = vmatprep.subr.mxu0 0.0
        %6509 = vmatpush1.msra.mxu0 0.0
        %6510 = vmatprep.subr.mxu0 0.0
        %6511 = vmatpush1.msra.mxu0 0.0
        %6512 = vmatprep.subr.mxu0 0.0
        %6513 = vmatpush1.msra.mxu0 0.0
        %6514 = vmatprep.subr.mxu0 0.0
        %6515 = vmatpush1.msra.mxu0 0.0
        %6516 = vmatprep.subr.mxu0 0.0
        %6517 = vmatpush1.msra.mxu0 0.0
        %6518 = vmatprep.subr.mxu0 0.0
        %6519 = vmatpush1.msra.mxu0 0.0
        %6520 = vmatprep.subr.mxu0 0.0
        %6521 = vmatpush1.msra.mxu0 0.0
        %6522 = vmatprep.subr.mxu0 0.0
        %6523 = vmatpush1.msra.mxu0 0.0
        %6524 = vmatprep.subr.mxu0 0.0
        %6525 = vmatpush1.msra.mxu0 0.0
        %6526 = vmatprep.subr.mxu0 0.0
        %6527 = vmatpush1.msra.mxu0 0.0
        %6528 = vmatprep.subr.mxu0 0.0
        %6529 = vmatpush1.msra.mxu0 0.0
        %6530 = vmatprep.subr.mxu0 0.0
        %6531 = vmatpush1.msra.mxu0 0.0
        %6532 = vmatprep.subr.mxu0 0.0
        %6533 = vmatpush1.msra.mxu0 0.0
        %6534 = vmatprep.subr.mxu0 0.0
        %6535 = vmatpush1.msra.mxu0 0.0
        %6536 = vmatprep.subr.mxu0 0.0
        %6537 = vmatpush1.msra.mxu0 0.0
        %6538 = vmatprep.subr.mxu0 0.0
        %6539 = vmatpush1.msra.mxu0 0.0
        %6540 = vmatprep.subr.mxu0 0.0
        %6541 = vmatpush1.msra.mxu0 0.0
        %6542 = vmatprep.subr.mxu0 0.0
        %6543 = vmatpush1.msra.mxu0 0.0
        %6544 = vmatprep.subr.mxu0 0.0
        %6545 = vmatpush1.msra.mxu0 0.0
        %6546 = vmatprep.subr.mxu0 0.0
        %6547 = vmatpush1.msra.mxu0 0.0
        %6548 = vmatprep.subr.mxu0 0.0
        %6549 = vmatpush1.msra.mxu0 0.0
        %6550 = vmatprep.subr.mxu0 0.0
        %6551 = vmatpush1.msra.mxu0 0.0
        %6552 = vmatprep.subr.mxu0 0.0
        %6553 = vmatpush1.msra.mxu0 0.0
        %6554 = vmatprep.subr.mxu0 0.0
        %6555 = vmatpush1.msra.mxu0 0.0
        %6556 = vmatprep.subr.mxu0 0.0
        %6557 = vmatpush1.msra.mxu0 0.0
        %6558 = vmatprep.subr.mxu0 0.0
        %6559 = vmatpush1.msra.mxu0 0.0
        %6560 = vmatprep.subr.mxu0 0.0
        %6561 = vmatpush1.msra.mxu0 0.0
        %6562 = vmatprep.mubr.f32.mxu0 0.0
        %6563 = vmatmul.mubr.f32.gmra.mrb[0].mxu0 %v5702
        %v6564 = vpop.f32.mrb[0].mxu0
        %v6565 = vadd.f32 0.0, %v6564
        %v6566 = vpop.f32.mrb[0].mxu0
        %v6567 = vadd.f32 0.0, %v6566
        %6568 = vdwg.mxu0
        %6569 = vmatprep.subr.mxu0 0.0
        %6570 = vmatpush1.msra.mxu0 %v6485
        %6571 = vmatprep.subr.mxu0 0.0
        %6572 = vmatpush1.msra.mxu0 %v6496
        %6573 = vmatprep.subr.mxu0 0.0
        %6574 = vmatpush1.msra.mxu0 0.0
        %6575 = vmatprep.subr.mxu0 0.0
        %6576 = vmatpush1.msra.mxu0 0.0
        %6577 = vmatprep.subr.mxu0 0.0
        %6578 = vmatpush1.msra.mxu0 0.0
        %6579 = vmatprep.subr.mxu0 0.0
        %6580 = vmatpush1.msra.mxu0 0.0
        %6581 = vmatprep.subr.mxu0 0.0
        %6582 = vmatpush1.msra.mxu0 0.0
        %6583 = vmatprep.subr.mxu0 0.0
        %6584 = vmatpush1.msra.mxu0 0.0
        %6585 = vmatprep.subr.mxu0 0.0
        %6586 = vmatpush1.msra.mxu0 0.0
        %6587 = vmatprep.subr.mxu0 0.0
        %6588 = vmatpush1.msra.mxu0 0.0
        %6589 = vmatprep.subr.mxu0 0.0
        %6590 = vmatpush1.msra.mxu0 0.0
        %6591 = vmatprep.subr.mxu0 0.0
        %6592 = vmatpush1.msra.mxu0 0.0
        %6593 = vmatprep.subr.mxu0 0.0
        %6594 = vmatpush1.msra.mxu0 0.0
        %6595 = vmatprep.subr.mxu0 0.0
        %6596 = vmatpush1.msra.mxu0 0.0
        %6597 = vmatprep.subr.mxu0 0.0
        %6598 = vmatpush1.msra.mxu0 0.0
        %6599 = vmatprep.subr.mxu0 0.0
        %6600 = vmatpush1.msra.mxu0 0.0
        %6601 = vmatprep.subr.mxu0 0.0
        %6602 = vmatpush1.msra.mxu0 0.0
        %6603 = vmatprep.subr.mxu0 0.0
        %6604 = vmatpush1.msra.mxu0 0.0
        %6605 = vmatprep.subr.mxu0 0.0
        %6606 = vmatpush1.msra.mxu0 0.0
        %6607 = vmatprep.subr.mxu0 0.0
        %6608 = vmatpush1.msra.mxu0 0.0
        %6609 = vmatprep.subr.mxu0 0.0
        %6610 = vmatpush1.msra.mxu0 0.0
        %6611 = vmatprep.subr.mxu0 0.0
        %6612 = vmatpush1.msra.mxu0 0.0
        %6613 = vmatprep.subr.mxu0 0.0
        %6614 = vmatpush1.msra.mxu0 0.0
        %6615 = vmatprep.subr.mxu0 0.0
        %6616 = vmatpush1.msra.mxu0 0.0
        %6617 = vmatprep.subr.mxu0 0.0
        %6618 = vmatpush1.msra.mxu0 0.0
        %6619 = vmatprep.subr.mxu0 0.0
        %6620 = vmatpush1.msra.mxu0 0.0
        %6621 = vmatprep.subr.mxu0 0.0
        %6622 = vmatpush1.msra.mxu0 0.0
        %6623 = vmatprep.subr.mxu0 0.0
        %6624 = vmatpush1.msra.mxu0 0.0
        %6625 = vmatprep.subr.mxu0 0.0
        %6626 = vmatpush1.msra.mxu0 0.0
        %6627 = vmatprep.subr.mxu0 0.0
        %6628 = vmatpush1.msra.mxu0 0.0
        %6629 = vmatprep.subr.mxu0 0.0
        %6630 = vmatpush1.msra.mxu0 0.0
        %6631 = vmatprep.subr.mxu0 0.0
        %6632 = vmatpush1.msra.mxu0 0.0
        %6633 = vmatprep.mubr.f32.mxu0 0.0
        %6634 = vmatmul.mubr.f32.gmra.mrb[0].mxu0 %v5702
        %v6635 = vpop.f32.mrb[0].mxu0
        %v6636 = vadd.f32 0.0, %v6635
        %v6637 = vpop.f32.mrb[0].mxu0
        %6638 = vdwg.mxu0
        %s6639 = scalar_lea.vmem %s12, 288
        %v6640 = vld [vmem:[%s6639] sm:$0xff]
        %v6641 = vld [vmem:[%s6639 + $0x8] sm:$0xff]
        %v6642 = vld [vmem:[%s6639 + $0x10] sm:$0xff]
        %v6643 = vld [vmem:[%s6639 + $0x18] sm:$0x3]
        %v6644 = vld [vmem:[%s6639 + $0x20] sm:$0x3]
        %v6645 = vld [vmem:[%s6639 + $0x28] sm:$0x3]
        %v6647 = vsel %vm4166, %v6643, 0
        %v6650 = vsel %vm4166, %v6644, 0
        %v6653 = vsel %vm4166, %v6645, 0
        %6655 = vmatprep.subr.mxu0 %v6641
        %6656 = vmatpush1.msra.mxu0 %v6640
        %6657 = vmatprep.subr.mxu0 %v6650
        %6658 = vmatpush1.msra.mxu0 %v6647
        %6659 = vmatprep.subr.mxu0 0.0
        %6660 = vmatpush1.msra.mxu0 0.0
        %6661 = vmatprep.subr.mxu0 0.0
        %6662 = vmatpush1.msra.mxu0 0.0
        %6663 = vmatprep.subr.mxu0 0.0
        %6664 = vmatpush1.msra.mxu0 0.0
        %6665 = vmatprep.subr.mxu0 0.0
        %6666 = vmatpush1.msra.mxu0 0.0
        %6667 = vmatprep.subr.mxu0 0.0
        %6668 = vmatpush1.msra.mxu0 0.0
        %6669 = vmatprep.subr.mxu0 0.0
        %6670 = vmatpush1.msra.mxu0 0.0
        %6671 = vmatprep.subr.mxu0 0.0
        %6672 = vmatpush1.msra.mxu0 0.0
        %6673 = vmatprep.subr.mxu0 0.0
        %6674 = vmatpush1.msra.mxu0 0.0
        %6675 = vmatprep.subr.mxu0 0.0
        %6676 = vmatpush1.msra.mxu0 0.0
        %6677 = vmatprep.subr.mxu0 0.0
        %6678 = vmatpush1.msra.mxu0 0.0
        %6679 = vmatprep.subr.mxu0 0.0
        %6680 = vmatpush1.msra.mxu0 0.0
        %6681 = vmatprep.subr.mxu0 0.0
        %6682 = vmatpush1.msra.mxu0 0.0
        %6683 = vmatprep.subr.mxu0 0.0
        %6684 = vmatpush1.msra.mxu0 0.0
        %6685 = vmatprep.subr.mxu0 0.0
        %6686 = vmatpush1.msra.mxu0 0.0
        %6687 = vmatprep.subr.mxu0 0.0
        %6688 = vmatpush1.msra.mxu0 0.0
        %6689 = vmatprep.subr.mxu0 0.0
        %6690 = vmatpush1.msra.mxu0 0.0
        %6691 = vmatprep.subr.mxu0 0.0
        %6692 = vmatpush1.msra.mxu0 0.0
        %6693 = vmatprep.subr.mxu0 0.0
        %6694 = vmatpush1.msra.mxu0 0.0
        %6695 = vmatprep.subr.mxu0 0.0
        %6696 = vmatpush1.msra.mxu0 0.0
        %6697 = vmatprep.subr.mxu0 0.0
        %6698 = vmatpush1.msra.mxu0 0.0
        %6699 = vmatprep.subr.mxu0 0.0
        %6700 = vmatpush1.msra.mxu0 0.0
        %6701 = vmatprep.subr.mxu0 0.0
        %6702 = vmatpush1.msra.mxu0 0.0
        %6703 = vmatprep.subr.mxu0 0.0
        %6704 = vmatpush1.msra.mxu0 0.0
        %6705 = vmatprep.subr.mxu0 0.0
        %6706 = vmatpush1.msra.mxu0 0.0
        %6707 = vmatprep.subr.mxu0 0.0
        %6708 = vmatpush1.msra.mxu0 0.0
        %6709 = vmatprep.subr.mxu0 0.0
        %6710 = vmatpush1.msra.mxu0 0.0
        %6711 = vmatprep.subr.mxu0 0.0
        %6712 = vmatpush1.msra.mxu0 0.0
        %6713 = vmatprep.subr.mxu0 0.0
        %6714 = vmatpush1.msra.mxu0 0.0
        %6715 = vmatprep.subr.mxu0 0.0
        %6716 = vmatpush1.msra.mxu0 0.0
        %6717 = vmatprep.subr.mxu0 0.0
        %6718 = vmatpush1.msra.mxu0 0.0
        %6719 = vmatprep.mubr.f32.mxu0 0.0
        %6720 = vmatmul.mubr.f32.gmra.mrb[0].mxu0 %v5702
        %v6721 = vpop.f32.mrb[0].mxu0
        %v6722 = vadd.f32 0.0, %v6721
        %v6723 = vpop.f32.mrb[0].mxu0
        %v6724 = vadd.f32 0.0, %v6723
        %6725 = vdwg.mxu0
        %6726 = vmatprep.subr.mxu0 0.0
        %6727 = vmatpush1.msra.mxu0 %v6642
        %6728 = vmatprep.subr.mxu0 0.0
        %6729 = vmatpush1.msra.mxu0 %v6653
        %6730 = vmatprep.subr.mxu0 0.0
        %6731 = vmatpush1.msra.mxu0 0.0
        %6732 = vmatprep.subr.mxu0 0.0
        %6733 = vmatpush1.msra.mxu0 0.0
        %6734 = vmatprep.subr.mxu0 0.0
        %6735 = vmatpush1.msra.mxu0 0.0
        %6736 = vmatprep.subr.mxu0 0.0
        %6737 = vmatpush1.msra.mxu0 0.0
        %6738 = vmatprep.subr.mxu0 0.0
        %6739 = vmatpush1.msra.mxu0 0.0
        %6740 = vmatprep.subr.mxu0 0.0
        %6741 = vmatpush1.msra.mxu0 0.0
        %6742 = vmatprep.subr.mxu0 0.0
        %6743 = vmatpush1.msra.mxu0 0.0
        %6744 = vmatprep.subr.mxu0 0.0
        %6745 = vmatpush1.msra.mxu0 0.0
        %6746 = vmatprep.subr.mxu0 0.0
        %6747 = vmatpush1.msra.mxu0 0.0
        %6748 = vmatprep.subr.mxu0 0.0
        %6749 = vmatpush1.msra.mxu0 0.0
        %6750 = vmatprep.subr.mxu0 0.0
        %6751 = vmatpush1.msra.mxu0 0.0
        %6752 = vmatprep.subr.mxu0 0.0
        %6753 = vmatpush1.msra.mxu0 0.0
        %6754 = vmatprep.subr.mxu0 0.0
        %6755 = vmatpush1.msra.mxu0 0.0
        %6756 = vmatprep.subr.mxu0 0.0
        %6757 = vmatpush1.msra.mxu0 0.0
        %6758 = vmatprep.subr.mxu0 0.0
        %6759 = vmatpush1.msra.mxu0 0.0
        %6760 = vmatprep.subr.mxu0 0.0
        %6761 = vmatpush1.msra.mxu0 0.0
        %6762 = vmatprep.subr.mxu0 0.0
        %6763 = vmatpush1.msra.mxu0 0.0
        %6764 = vmatprep.subr.mxu0 0.0
        %6765 = vmatpush1.msra.mxu0 0.0
        %6766 = vmatprep.subr.mxu0 0.0
        %6767 = vmatpush1.msra.mxu0 0.0
        %6768 = vmatprep.subr.mxu0 0.0
        %6769 = vmatpush1.msra.mxu0 0.0
        %6770 = vmatprep.subr.mxu0 0.0
        %6771 = vmatpush1.msra.mxu0 0.0
        %6772 = vmatprep.subr.mxu0 0.0
        %6773 = vmatpush1.msra.mxu0 0.0
        %6774 = vmatprep.subr.mxu0 0.0
        %6775 = vmatpush1.msra.mxu0 0.0
        %6776 = vmatprep.subr.mxu0 0.0
        %6777 = vmatpush1.msra.mxu0 0.0
        %6778 = vmatprep.subr.mxu0 0.0
        %6779 = vmatpush1.msra.mxu0 0.0
        %6780 = vmatprep.subr.mxu0 0.0
        %6781 = vmatpush1.msra.mxu0 0.0
        %6782 = vmatprep.subr.mxu0 0.0
        %6783 = vmatpush1.msra.mxu0 0.0
        %6784 = vmatprep.subr.mxu0 0.0
        %6785 = vmatpush1.msra.mxu0 0.0
        %6786 = vmatprep.subr.mxu0 0.0
        %6787 = vmatpush1.msra.mxu0 0.0
        %6788 = vmatprep.subr.mxu0 0.0
        %6789 = vmatpush1.msra.mxu0 0.0
        %6790 = vmatprep.mubr.f32.mxu0 0.0
        %6791 = vmatmul.mubr.f32.gmra.mrb[0].mxu0 %v5702
        %v6792 = vpop.f32.mrb[0].mxu0
        %v6793 = vadd.f32 0.0, %v6792
        %v6794 = vpop.f32.mrb[0].mxu0
        %6795 = vdwg.mxu0
        %s6796 = scalar_lea.vmem %s12, 336
        %v6797 = vld [vmem:[%s6796] sm:$0xff]
        %v6798 = vld [vmem:[%s6796 + $0x8] sm:$0xff]
        %v6799 = vld [vmem:[%s6796 + $0x10] sm:$0xff]
        %v6800 = vld [vmem:[%s6796 + $0x18] sm:$0x3]
        %v6801 = vld [vmem:[%s6796 + $0x20] sm:$0x3]
        %v6802 = vld [vmem:[%s6796 + $0x28] sm:$0x3]
        %v6804 = vsel %vm4166, %v6800, 0
        %v6807 = vsel %vm4166, %v6801, 0
        %v6810 = vsel %vm4166, %v6802, 0
        %6812 = vmatprep.subr.mxu0 %v6798
        %6813 = vmatpush1.msra.mxu0 %v6797
        %6814 = vmatprep.subr.mxu0 %v6807
        %6815 = vmatpush1.msra.mxu0 %v6804
        %6816 = vmatprep.subr.mxu0 0.0
        %6817 = vmatpush1.msra.mxu0 0.0
        %6818 = vmatprep.subr.mxu0 0.0
        %6819 = vmatpush1.msra.mxu0 0.0
        %6820 = vmatprep.subr.mxu0 0.0
        %6821 = vmatpush1.msra.mxu0 0.0
        %6822 = vmatprep.subr.mxu0 0.0
        %6823 = vmatpush1.msra.mxu0 0.0
        %6824 = vmatprep.subr.mxu0 0.0
        %6825 = vmatpush1.msra.mxu0 0.0
        %6826 = vmatprep.subr.mxu0 0.0
        %6827 = vmatpush1.msra.mxu0 0.0
        %6828 = vmatprep.subr.mxu0 0.0
        %6829 = vmatpush1.msra.mxu0 0.0
        %6830 = vmatprep.subr.mxu0 0.0
        %6831 = vmatpush1.msra.mxu0 0.0
        %6832 = vmatprep.subr.mxu0 0.0
        %6833 = vmatpush1.msra.mxu0 0.0
        %6834 = vmatprep.subr.mxu0 0.0
        %6835 = vmatpush1.msra.mxu0 0.0
        %6836 = vmatprep.subr.mxu0 0.0
        %6837 = vmatpush1.msra.mxu0 0.0
        %6838 = vmatprep.subr.mxu0 0.0
        %6839 = vmatpush1.msra.mxu0 0.0
        %6840 = vmatprep.subr.mxu0 0.0
        %6841 = vmatpush1.msra.mxu0 0.0
        %6842 = vmatprep.subr.mxu0 0.0
        %6843 = vmatpush1.msra.mxu0 0.0
        %6844 = vmatprep.subr.mxu0 0.0
        %6845 = vmatpush1.msra.mxu0 0.0
        %6846 = vmatprep.subr.mxu0 0.0
        %6847 = vmatpush1.msra.mxu0 0.0
        %6848 = vmatprep.subr.mxu0 0.0
        %6849 = vmatpush1.msra.mxu0 0.0
        %6850 = vmatprep.subr.mxu0 0.0
        %6851 = vmatpush1.msra.mxu0 0.0
        %6852 = vmatprep.subr.mxu0 0.0
        %6853 = vmatpush1.msra.mxu0 0.0
        %6854 = vmatprep.subr.mxu0 0.0
        %6855 = vmatpush1.msra.mxu0 0.0
        %6856 = vmatprep.subr.mxu0 0.0
        %6857 = vmatpush1.msra.mxu0 0.0
        %6858 = vmatprep.subr.mxu0 0.0
        %6859 = vmatpush1.msra.mxu0 0.0
        %6860 = vmatprep.subr.mxu0 0.0
        %6861 = vmatpush1.msra.mxu0 0.0
        %6862 = vmatprep.subr.mxu0 0.0
        %6863 = vmatpush1.msra.mxu0 0.0
        %6864 = vmatprep.subr.mxu0 0.0
        %6865 = vmatpush1.msra.mxu0 0.0
        %6866 = vmatprep.subr.mxu0 0.0
        %6867 = vmatpush1.msra.mxu0 0.0
        %6868 = vmatprep.subr.mxu0 0.0
        %6869 = vmatpush1.msra.mxu0 0.0
        %6870 = vmatprep.subr.mxu0 0.0
        %6871 = vmatpush1.msra.mxu0 0.0
        %6872 = vmatprep.subr.mxu0 0.0
        %6873 = vmatpush1.msra.mxu0 0.0
        %6874 = vmatprep.subr.mxu0 0.0
        %6875 = vmatpush1.msra.mxu0 0.0
        %6876 = vmatprep.mubr.f32.mxu0 0.0
        %6877 = vmatmul.mubr.f32.gmra.mrb[0].mxu0 %v5702
        %v6878 = vpop.f32.mrb[0].mxu0
        %v6879 = vadd.f32 0.0, %v6878
        %v6880 = vpop.f32.mrb[0].mxu0
        %v6881 = vadd.f32 0.0, %v6880
        %6882 = vdwg.mxu0
        %6883 = vmatprep.subr.mxu0 0.0
        %6884 = vmatpush1.msra.mxu0 %v6799
        %6885 = vmatprep.subr.mxu0 0.0
        %6886 = vmatpush1.msra.mxu0 %v6810
        %6887 = vmatprep.subr.mxu0 0.0
        %6888 = vmatpush1.msra.mxu0 0.0
        %6889 = vmatprep.subr.mxu0 0.0
        %6890 = vmatpush1.msra.mxu0 0.0
        %6891 = vmatprep.subr.mxu0 0.0
        %6892 = vmatpush1.msra.mxu0 0.0
        %6893 = vmatprep.subr.mxu0 0.0
        %6894 = vmatpush1.msra.mxu0 0.0
        %6895 = vmatprep.subr.mxu0 0.0
        %6896 = vmatpush1.msra.mxu0 0.0
        %6897 = vmatprep.subr.mxu0 0.0
        %6898 = vmatpush1.msra.mxu0 0.0
        %6899 = vmatprep.subr.mxu0 0.0
        %6900 = vmatpush1.msra.mxu0 0.0
        %6901 = vmatprep.subr.mxu0 0.0
        %6902 = vmatpush1.msra.mxu0 0.0
        %6903 = vmatprep.subr.mxu0 0.0
        %6904 = vmatpush1.msra.mxu0 0.0
        %6905 = vmatprep.subr.mxu0 0.0
        %6906 = vmatpush1.msra.mxu0 0.0
        %6907 = vmatprep.subr.mxu0 0.0
        %6908 = vmatpush1.msra.mxu0 0.0
        %6909 = vmatprep.subr.mxu0 0.0
        %6910 = vmatpush1.msra.mxu0 0.0
        %6911 = vmatprep.subr.mxu0 0.0
        %6912 = vmatpush1.msra.mxu0 0.0
        %6913 = vmatprep.subr.mxu0 0.0
        %6914 = vmatpush1.msra.mxu0 0.0
        %6915 = vmatprep.subr.mxu0 0.0
        %6916 = vmatpush1.msra.mxu0 0.0
        %6917 = vmatprep.subr.mxu0 0.0
        %6918 = vmatpush1.msra.mxu0 0.0
        %6919 = vmatprep.subr.mxu0 0.0
        %6920 = vmatpush1.msra.mxu0 0.0
        %6921 = vmatprep.subr.mxu0 0.0
        %6922 = vmatpush1.msra.mxu0 0.0
        %6923 = vmatprep.subr.mxu0 0.0
        %6924 = vmatpush1.msra.mxu0 0.0
        %6925 = vmatprep.subr.mxu0 0.0
        %6926 = vmatpush1.msra.mxu0 0.0
        %6927 = vmatprep.subr.mxu0 0.0
        %6928 = vmatpush1.msra.mxu0 0.0
        %6929 = vmatprep.subr.mxu0 0.0
        %6930 = vmatpush1.msra.mxu0 0.0
        %6931 = vmatprep.subr.mxu0 0.0
        %6932 = vmatpush1.msra.mxu0 0.0
        %6933 = vmatprep.subr.mxu0 0.0
        %6934 = vmatpush1.msra.mxu0 0.0
        %6935 = vmatprep.subr.mxu0 0.0
        %6936 = vmatpush1.msra.mxu0 0.0
        %6937 = vmatprep.subr.mxu0 0.0
        %6938 = vmatpush1.msra.mxu0 0.0
        %6939 = vmatprep.subr.mxu0 0.0
        %6940 = vmatpush1.msra.mxu0 0.0
        %6941 = vmatprep.subr.mxu0 0.0
        %6942 = vmatpush1.msra.mxu0 0.0
        %6943 = vmatprep.subr.mxu0 0.0
        %6944 = vmatpush1.msra.mxu0 0.0
        %6945 = vmatprep.subr.mxu0 0.0
        %6946 = vmatpush1.msra.mxu0 0.0
        %6947 = vmatprep.mubr.f32.mxu0 0.0
        %6948 = vmatmul.mubr.f32.gmra.mrb[0].mxu0 %v5702
        %v6949 = vpop.f32.mrb[0].mxu0
        %v6950 = vadd.f32 0.0, %v6949
        %v6951 = vpop.f32.mrb[0].mxu0
        %6952 = vdwg.mxu0
        %v6956 = vrot.slane %v5937, 7
        %v6957 = vrot.slane %v5939, 7
        %v6958 = vrot.slane %v6008, 7
        %v6965 = vrot.slane %v6094, 6
        %v6966 = vrot.slane %v6096, 6
        %v6967 = vrot.slane %v6165, 6
        %v6974 = vrot.slane %v6251, 5
        %v6975 = vrot.slane %v6253, 5
        %v6976 = vrot.slane %v6322, 5
        %v6983 = vrot.slane %v6408, 4
        %v6984 = vrot.slane %v6410, 4
        %v6985 = vrot.slane %v6479, 4
        %v6992 = vrot.slane %v6565, 3
        %v6993 = vrot.slane %v6567, 3
        %v6994 = vrot.slane %v6636, 3
        %v7001 = vrot.slane %v6722, 2
        %v7002 = vrot.slane %v6724, 2
        %v7003 = vrot.slane %v6793, 2
        %v7010 = vrot.slane %v6879, 1
        %v7011 = vrot.slane %v6881, 1
        %v7012 = vrot.slane %v6950, 1
        %v7016 = vsel %vm4165, %v5780, %v6956
        %v7017 = vsel %vm4165, %v5782, %v6957
        %v7018 = vsel %vm4165, %v5851, %v6958
        %v7019 = vsel %vm4166, %v7016, %v6965
        %v7020 = vsel %vm4166, %v7017, %v6966
        %v7021 = vsel %vm4166, %v7018, %v6967
        %v7022 = vsel %vm4946, %v7019, %v6974
        %v7023 = vsel %vm4946, %v7020, %v6975
        %v7024 = vsel %vm4946, %v7021, %v6976
        %vm7025 = vcmask 1043456
        %v7026 = vsel %vm7025, %v7022, %v6983
        %v7027 = vsel %vm7025, %v7023, %v6984
        %v7028 = vsel %vm7025, %v7024, %v6985
        %vm7029 = vcmask 1044480
        %v7030 = vsel %vm7029, %v7026, %v6992
        %v7031 = vsel %vm7029, %v7027, %v6993
        %v7032 = vsel %vm7029, %v7028, %v6994
        %vm7033 = vcmask 1045504
        %v7034 = vsel %vm7033, %v7030, %v7001
        %v7035 = vsel %vm7033, %v7031, %v7002
        %v7036 = vsel %vm7033, %v7032, %v7003
        %vm7037 = vcmask 1046528
        %v7038 = vsel %vm7037, %v7034, %v7010
        %v7039 = vsel %vm7037, %v7035, %v7011
        %v7040 = vsel %vm7037, %v7036, %v7012
        %v7041 = vld [vmem:[%s13] sm:$0xff]
        %v7042 = vld [vmem:[%s13 + $0x8] sm:$0xff]
        %v7043 = vld [vmem:[%s13 + $0x10] sm:$0xff]
        %v7044 = vadd.f32 %v7038, %v7041
        %v7045 = vadd.f32 %v7039, %v7042
        %v7046 = vadd.f32 %v7040, %v7043
        %v7047 = vmax.f32 %v7044, 0.0
        %v7048 = vmax.f32 %v7045, 0.0
        %v7049 = vmax.f32 %v7046, 0.0
        %v7050 = vld [vmem:[%s14] sm:$0xff]
        %v7051 = vld [vmem:[%s14 + $0x8] sm:$0xff]
        %v7052 = vld [vmem:[%s14 + $0x10] sm:$0xff]
        %s7053 = scalar_lea.vmem %s14, 24
        %v7054 = vld [vmem:[%s7053] sm:$0xff]
        %v7055 = vld [vmem:[%s7053 + $0x8] sm:$0xff]
        %v7056 = vld [vmem:[%s7053 + $0x10] sm:$0xff]
        %7060 = vrot.lane.b32.xlu0 %v7047, 127
        %v7061 = vpop.permute.xlu0 %7060
        %7062 = vrot.lane.b32.xlu0 %v7048, 127
        %v7063 = vpop.permute.xlu0 %7062
        %7064 = vrot.lane.b32.xlu0 %v7049, 127
        %v7065 = vpop.permute.xlu0 %7064
        %v7066 = vsel %vm1365, %v7061, %v7063
        %v7067 = vsel %vm1365, %v7063, %v7065
        %vm7070 = vcmask 64512
        %v7072 = vsel %vm7070, %v7054, 0
        %v7075 = vsel %vm7070, %v7055, 0
        %v7078 = vsel %vm7070, %v7056, 0
        %7080 = vmatprep.subr.mxu0 %v7067
        %7081 = vmatpush1.msra.mxu0 %v7066
        %7082 = vmatprep.subr.mxu0 0.0
        %7083 = vmatpush1.msra.mxu0 0.0
        %7084 = vmatprep.subr.mxu0 0.0
        %7085 = vmatpush1.msra.mxu0 0.0
        %7086 = vmatprep.subr.mxu0 0.0
        %7087 = vmatpush1.msra.mxu0 0.0
        %7088 = vmatprep.subr.mxu0 0.0
        %7089 = vmatpush1.msra.mxu0 0.0
        %7090 = vmatprep.subr.mxu0 0.0
        %7091 = vmatpush1.msra.mxu0 0.0
        %7092 = vmatprep.subr.mxu0 0.0
        %7093 = vmatpush1.msra.mxu0 0.0
        %7094 = vmatprep.subr.mxu0 0.0
        %7095 = vmatpush1.msra.mxu0 0.0
        %7096 = vmatprep.subr.mxu0 0.0
        %7097 = vmatpush1.msra.mxu0 0.0
        %7098 = vmatprep.subr.mxu0 0.0
        %7099 = vmatpush1.msra.mxu0 0.0
        %7100 = vmatprep.subr.mxu0 0.0
        %7101 = vmatpush1.msra.mxu0 0.0
        %7102 = vmatprep.subr.mxu0 0.0
        %7103 = vmatpush1.msra.mxu0 0.0
        %7104 = vmatprep.subr.mxu0 0.0
        %7105 = vmatpush1.msra.mxu0 0.0
        %7106 = vmatprep.subr.mxu0 0.0
        %7107 = vmatpush1.msra.mxu0 0.0
        %7108 = vmatprep.subr.mxu0 0.0
        %7109 = vmatpush1.msra.mxu0 0.0
        %7110 = vmatprep.subr.mxu0 0.0
        %7111 = vmatpush1.msra.mxu0 0.0
        %7112 = vmatprep.subr.mxu0 0.0
        %7113 = vmatpush1.msra.mxu0 0.0
        %7114 = vmatprep.subr.mxu0 0.0
        %7115 = vmatpush1.msra.mxu0 0.0
        %7116 = vmatprep.subr.mxu0 0.0
        %7117 = vmatpush1.msra.mxu0 0.0
        %7118 = vmatprep.subr.mxu0 0.0
        %7119 = vmatpush1.msra.mxu0 0.0
        %7120 = vmatprep.subr.mxu0 0.0
        %7121 = vmatpush1.msra.mxu0 0.0
        %7122 = vmatprep.subr.mxu0 0.0
        %7123 = vmatpush1.msra.mxu0 0.0
        %7124 = vmatprep.subr.mxu0 0.0
        %7125 = vmatpush1.msra.mxu0 0.0
        %7126 = vmatprep.subr.mxu0 0.0
        %7127 = vmatpush1.msra.mxu0 0.0
        %7128 = vmatprep.subr.mxu0 0.0
        %7129 = vmatpush1.msra.mxu0 0.0
        %7130 = vmatprep.subr.mxu0 0.0
        %7131 = vmatpush1.msra.mxu0 0.0
        %7132 = vmatprep.subr.mxu0 0.0
        %7133 = vmatpush1.msra.mxu0 0.0
        %7134 = vmatprep.subr.mxu0 0.0
        %7135 = vmatpush1.msra.mxu0 0.0
        %7136 = vmatprep.subr.mxu0 0.0
        %7137 = vmatpush1.msra.mxu0 0.0
        %7138 = vmatprep.subr.mxu0 0.0
        %7139 = vmatpush1.msra.mxu0 0.0
        %7140 = vmatprep.subr.mxu0 0.0
        %7141 = vmatpush1.msra.mxu0 0.0
        %7142 = vmatprep.subr.mxu0 0.0
        %7143 = vmatpush1.msra.mxu0 0.0
        %7144 = vmatprep.mubr.f32.mxu0 0.0
        %7145 = vmatmul.mubr.f32.gmra.mrb[0].mxu0 %v7072
        %v7146 = vpop.f32.mrb[0].mxu0
        %v7147 = vadd.f32 0.0, %v7146
        %v7148 = vpop.f32.mrb[0].mxu0
        %v7149 = vadd.f32 0.0, %v7148
        %7150 = vmatprep.mubr.f32.mxu0 0.0
        %7151 = vmatmul.mubr.f32.gmra.mrb[0].mxu0 %v7075
        %v7152 = vpop.f32.mrb[0].mxu0
        %v7153 = vadd.f32 0.0, %v7152
        %v7154 = vpop.f32.mrb[0].mxu0
        %v7155 = vadd.f32 0.0, %v7154
        %7156 = vmatprep.mubr.f32.mxu0 0.0
        %7157 = vmatmul.mubr.f32.gmra.mrb[0].mxu0 %v7078
        %v7158 = vpop.f32.mrb[0].mxu0
        %v7159 = vadd.f32 0.0, %v7158
        %v7160 = vpop.f32.mrb[0].mxu0
        %v7161 = vadd.f32 0.0, %v7160
        %7162 = vdwg.mxu0
        %v7164 = vsel %vm7070, %v7050, 0
        %v7167 = vsel %vm7070, %v7051, 0
        %v7170 = vsel %vm7070, %v7052, 0
        %7172 = vmatprep.subr.mxu0 %v7048
        %7173 = vmatpush1.msra.mxu0 %v7047
        %7174 = vmatprep.subr.mxu0 0.0
        %7175 = vmatpush1.msra.mxu0 0.0
        %7176 = vmatprep.subr.mxu0 0.0
        %7177 = vmatpush1.msra.mxu0 0.0
        %7178 = vmatprep.subr.mxu0 0.0
        %7179 = vmatpush1.msra.mxu0 0.0
        %7180 = vmatprep.subr.mxu0 0.0
        %7181 = vmatpush1.msra.mxu0 0.0
        %7182 = vmatprep.subr.mxu0 0.0
        %7183 = vmatpush1.msra.mxu0 0.0
        %7184 = vmatprep.subr.mxu0 0.0
        %7185 = vmatpush1.msra.mxu0 0.0
        %7186 = vmatprep.subr.mxu0 0.0
        %7187 = vmatpush1.msra.mxu0 0.0
        %7188 = vmatprep.subr.mxu0 0.0
        %7189 = vmatpush1.msra.mxu0 0.0
        %7190 = vmatprep.subr.mxu0 0.0
        %7191 = vmatpush1.msra.mxu0 0.0
        %7192 = vmatprep.subr.mxu0 0.0
        %7193 = vmatpush1.msra.mxu0 0.0
        %7194 = vmatprep.subr.mxu0 0.0
        %7195 = vmatpush1.msra.mxu0 0.0
        %7196 = vmatprep.subr.mxu0 0.0
        %7197 = vmatpush1.msra.mxu0 0.0
        %7198 = vmatprep.subr.mxu0 0.0
        %7199 = vmatpush1.msra.mxu0 0.0
        %7200 = vmatprep.subr.mxu0 0.0
        %7201 = vmatpush1.msra.mxu0 0.0
        %7202 = vmatprep.subr.mxu0 0.0
        %7203 = vmatpush1.msra.mxu0 0.0
        %7204 = vmatprep.subr.mxu0 0.0
        %7205 = vmatpush1.msra.mxu0 0.0
        %7206 = vmatprep.subr.mxu0 0.0
        %7207 = vmatpush1.msra.mxu0 0.0
        %7208 = vmatprep.subr.mxu0 0.0
        %7209 = vmatpush1.msra.mxu0 0.0
        %7210 = vmatprep.subr.mxu0 0.0
        %7211 = vmatpush1.msra.mxu0 0.0
        %7212 = vmatprep.subr.mxu0 0.0
        %7213 = vmatpush1.msra.mxu0 0.0
        %7214 = vmatprep.subr.mxu0 0.0
        %7215 = vmatpush1.msra.mxu0 0.0
        %7216 = vmatprep.subr.mxu0 0.0
        %7217 = vmatpush1.msra.mxu0 0.0
        %7218 = vmatprep.subr.mxu0 0.0
        %7219 = vmatpush1.msra.mxu0 0.0
        %7220 = vmatprep.subr.mxu0 0.0
        %7221 = vmatpush1.msra.mxu0 0.0
        %7222 = vmatprep.subr.mxu0 0.0
        %7223 = vmatpush1.msra.mxu0 0.0
        %7224 = vmatprep.subr.mxu0 0.0
        %7225 = vmatpush1.msra.mxu0 0.0
        %7226 = vmatprep.subr.mxu0 0.0
        %7227 = vmatpush1.msra.mxu0 0.0
        %7228 = vmatprep.subr.mxu0 0.0
        %7229 = vmatpush1.msra.mxu0 0.0
        %7230 = vmatprep.subr.mxu0 0.0
        %7231 = vmatpush1.msra.mxu0 0.0
        %7232 = vmatprep.subr.mxu0 0.0
        %7233 = vmatpush1.msra.mxu0 0.0
        %7234 = vmatprep.subr.mxu0 0.0
        %7235 = vmatpush1.msra.mxu0 0.0
        %7236 = vmatprep.mubr.f32.mxu0 0.0
        %7237 = vmatmul.mubr.f32.gmra.mrb[0].mxu0 %v7164
        %v7238 = vpop.f32.mrb[0].mxu0
        %v7239 = vadd.f32 %v7147, %v7238
        %v7240 = vpop.f32.mrb[0].mxu0
        %v7241 = vadd.f32 %v7149, %v7240
        %7242 = vmatprep.mubr.f32.mxu0 0.0
        %7243 = vmatmul.mubr.f32.gmra.mrb[0].mxu0 %v7167
        %v7244 = vpop.f32.mrb[0].mxu0
        %v7245 = vadd.f32 %v7153, %v7244
        %v7246 = vpop.f32.mrb[0].mxu0
        %v7247 = vadd.f32 %v7155, %v7246
        %7248 = vmatprep.mubr.f32.mxu0 0.0
        %7249 = vmatmul.mubr.f32.gmra.mrb[0].mxu0 %v7170
        %v7250 = vpop.f32.mrb[0].mxu0
        %v7251 = vadd.f32 %v7159, %v7250
        %v7252 = vpop.f32.mrb[0].mxu0
        %v7253 = vadd.f32 %v7161, %v7252
        %7254 = vdwg.mxu0
        %s7255 = scalar_lea.vmem %s14, 48
        %v7256 = vld [vmem:[%s7255] sm:$0xff]
        %v7257 = vld [vmem:[%s7255 + $0x8] sm:$0xff]
        %v7258 = vld [vmem:[%s7255 + $0x10] sm:$0xff]
        %7259 = vrot.lane.b32.xlu0 %v7047, 126
        %v7260 = vpop.permute.xlu0 %7259
        %7261 = vrot.lane.b32.xlu0 %v7048, 126
        %v7262 = vpop.permute.xlu0 %7261
        %7263 = vrot.lane.b32.xlu0 %v7049, 126
        %v7264 = vpop.permute.xlu0 %7263
        %v7265 = vsel %vm2721, %v7260, %v7262
        %v7266 = vsel %vm2721, %v7262, %v7264
        %v7270 = vsel %vm7070, %v7256, 0
        %v7273 = vsel %vm7070, %v7257, 0
        %v7276 = vsel %vm7070, %v7258, 0
        %7278 = vmatprep.subr.mxu0 %v7266
        %7279 = vmatpush1.msra.mxu0 %v7265
        %7280 = vmatprep.subr.mxu0 0.0
        %7281 = vmatpush1.msra.mxu0 0.0
        %7282 = vmatprep.subr.mxu0 0.0
        %7283 = vmatpush1.msra.mxu0 0.0
        %7284 = vmatprep.subr.mxu0 0.0
        %7285 = vmatpush1.msra.mxu0 0.0
        %7286 = vmatprep.subr.mxu0 0.0
        %7287 = vmatpush1.msra.mxu0 0.0
        %7288 = vmatprep.subr.mxu0 0.0
        %7289 = vmatpush1.msra.mxu0 0.0
        %7290 = vmatprep.subr.mxu0 0.0
        %7291 = vmatpush1.msra.mxu0 0.0
        %7292 = vmatprep.subr.mxu0 0.0
        %7293 = vmatpush1.msra.mxu0 0.0
        %7294 = vmatprep.subr.mxu0 0.0
        %7295 = vmatpush1.msra.mxu0 0.0
        %7296 = vmatprep.subr.mxu0 0.0
        %7297 = vmatpush1.msra.mxu0 0.0
        %7298 = vmatprep.subr.mxu0 0.0
        %7299 = vmatpush1.msra.mxu0 0.0
        %7300 = vmatprep.subr.mxu0 0.0
        %7301 = vmatpush1.msra.mxu0 0.0
        %7302 = vmatprep.subr.mxu0 0.0
        %7303 = vmatpush1.msra.mxu0 0.0
        %7304 = vmatprep.subr.mxu0 0.0
        %7305 = vmatpush1.msra.mxu0 0.0
        %7306 = vmatprep.subr.mxu0 0.0
        %7307 = vmatpush1.msra.mxu0 0.0
        %7308 = vmatprep.subr.mxu0 0.0
        %7309 = vmatpush1.msra.mxu0 0.0
        %7310 = vmatprep.subr.mxu0 0.0
        %7311 = vmatpush1.msra.mxu0 0.0
        %7312 = vmatprep.subr.mxu0 0.0
        %7313 = vmatpush1.msra.mxu0 0.0
        %7314 = vmatprep.subr.mxu0 0.0
        %7315 = vmatpush1.msra.mxu0 0.0
        %7316 = vmatprep.subr.mxu0 0.0
        %7317 = vmatpush1.msra.mxu0 0.0
        %7318 = vmatprep.subr.mxu0 0.0
        %7319 = vmatpush1.msra.mxu0 0.0
        %7320 = vmatprep.subr.mxu0 0.0
        %7321 = vmatpush1.msra.mxu0 0.0
        %7322 = vmatprep.subr.mxu0 0.0
        %7323 = vmatpush1.msra.mxu0 0.0
        %7324 = vmatprep.subr.mxu0 0.0
        %7325 = vmatpush1.msra.mxu0 0.0
        %7326 = vmatprep.subr.mxu0 0.0
        %7327 = vmatpush1.msra.mxu0 0.0
        %7328 = vmatprep.subr.mxu0 0.0
        %7329 = vmatpush1.msra.mxu0 0.0
        %7330 = vmatprep.subr.mxu0 0.0
        %7331 = vmatpush1.msra.mxu0 0.0
        %7332 = vmatprep.subr.mxu0 0.0
        %7333 = vmatpush1.msra.mxu0 0.0
        %7334 = vmatprep.subr.mxu0 0.0
        %7335 = vmatpush1.msra.mxu0 0.0
        %7336 = vmatprep.subr.mxu0 0.0
        %7337 = vmatpush1.msra.mxu0 0.0
        %7338 = vmatprep.subr.mxu0 0.0
        %7339 = vmatpush1.msra.mxu0 0.0
        %7340 = vmatprep.subr.mxu0 0.0
        %7341 = vmatpush1.msra.mxu0 0.0
        %7342 = vmatprep.mubr.f32.mxu0 0.0
        %7343 = vmatmul.mubr.f32.gmra.mrb[0].mxu0 %v7270
        %v7344 = vpop.f32.mrb[0].mxu0
        %v7345 = vadd.f32 0.0, %v7344
        %v7346 = vpop.f32.mrb[0].mxu0
        %v7347 = vadd.f32 0.0, %v7346
        %7348 = vmatprep.mubr.f32.mxu0 0.0
        %7349 = vmatmul.mubr.f32.gmra.mrb[0].mxu0 %v7273
        %v7350 = vpop.f32.mrb[0].mxu0
        %v7351 = vadd.f32 0.0, %v7350
        %v7352 = vpop.f32.mrb[0].mxu0
        %v7353 = vadd.f32 0.0, %v7352
        %7354 = vmatprep.mubr.f32.mxu0 0.0
        %7355 = vmatmul.mubr.f32.gmra.mrb[0].mxu0 %v7276
        %v7356 = vpop.f32.mrb[0].mxu0
        %v7357 = vadd.f32 0.0, %v7356
        %v7358 = vpop.f32.mrb[0].mxu0
        %v7359 = vadd.f32 0.0, %v7358
        %7360 = vdwg.mxu0
        %v7361 = vadd.f32 %v7239, %v7345
        %v7362 = vadd.f32 %v7241, %v7347
        %v7363 = vadd.f32 %v7245, %v7351
        %v7364 = vadd.f32 %v7247, %v7353
        %v7365 = vadd.f32 %v7251, %v7357
        %v7366 = vadd.f32 %v7253, %v7359
        %s7367 = scalar_lea.vmem %s14, 72
        %v7368 = vld [vmem:[%s7367] sm:$0xff]
        %v7369 = vld [vmem:[%s7367 + $0x8] sm:$0xff]
        %v7370 = vld [vmem:[%s7367 + $0x10] sm:$0xff]
        %7371 = vrot.lane.b32.xlu0 %v7047, 111
        %v7372 = vpop.permute.xlu0 %7371
        %7373 = vrot.lane.b32.xlu0 %v7048, 111
        %v7374 = vpop.permute.xlu0 %7373
        %7375 = vrot.lane.b32.xlu0 %v7049, 111
        %v7376 = vpop.permute.xlu0 %7375
        %vm7377 = vcmask 908288
        %v7378 = vsel %vm7377, %v7372, %v7374
        %v7379 = vsel %vm7377, %v7374, %v7376
        %v7383 = vsel %vm7070, %v7368, 0
        %v7386 = vsel %vm7070, %v7369, 0
        %v7389 = vsel %vm7070, %v7370, 0
        %7391 = vmatprep.subr.mxu0 %v7379
        %7392 = vmatpush1.msra.mxu0 %v7378
        %7393 = vmatprep.subr.mxu0 0.0
        %7394 = vmatpush1.msra.mxu0 0.0
        %7395 = vmatprep.subr.mxu0 0.0
        %7396 = vmatpush1.msra.mxu0 0.0
        %7397 = vmatprep.subr.mxu0 0.0
        %7398 = vmatpush1.msra.mxu0 0.0
        %7399 = vmatprep.subr.mxu0 0.0
        %7400 = vmatpush1.msra.mxu0 0.0
        %7401 = vmatprep.subr.mxu0 0.0
        %7402 = vmatpush1.msra.mxu0 0.0
        %7403 = vmatprep.subr.mxu0 0.0
        %7404 = vmatpush1.msra.mxu0 0.0
        %7405 = vmatprep.subr.mxu0 0.0
        %7406 = vmatpush1.msra.mxu0 0.0
        %7407 = vmatprep.subr.mxu0 0.0
        %7408 = vmatpush1.msra.mxu0 0.0
        %7409 = vmatprep.subr.mxu0 0.0
        %7410 = vmatpush1.msra.mxu0 0.0
        %7411 = vmatprep.subr.mxu0 0.0
        %7412 = vmatpush1.msra.mxu0 0.0
        %7413 = vmatprep.subr.mxu0 0.0
        %7414 = vmatpush1.msra.mxu0 0.0
        %7415 = vmatprep.subr.mxu0 0.0
        %7416 = vmatpush1.msra.mxu0 0.0
        %7417 = vmatprep.subr.mxu0 0.0
        %7418 = vmatpush1.msra.mxu0 0.0
        %7419 = vmatprep.subr.mxu0 0.0
        %7420 = vmatpush1.msra.mxu0 0.0
        %7421 = vmatprep.subr.mxu0 0.0
        %7422 = vmatpush1.msra.mxu0 0.0
        %7423 = vmatprep.subr.mxu0 0.0
        %7424 = vmatpush1.msra.mxu0 0.0
        %7425 = vmatprep.subr.mxu0 0.0
        %7426 = vmatpush1.msra.mxu0 0.0
        %7427 = vmatprep.subr.mxu0 0.0
        %7428 = vmatpush1.msra.mxu0 0.0
        %7429 = vmatprep.subr.mxu0 0.0
        %7430 = vmatpush1.msra.mxu0 0.0
        %7431 = vmatprep.subr.mxu0 0.0
        %7432 = vmatpush1.msra.mxu0 0.0
        %7433 = vmatprep.subr.mxu0 0.0
        %7434 = vmatpush1.msra.mxu0 0.0
        %7435 = vmatprep.subr.mxu0 0.0
        %7436 = vmatpush1.msra.mxu0 0.0
        %7437 = vmatprep.subr.mxu0 0.0
        %7438 = vmatpush1.msra.mxu0 0.0
        %7439 = vmatprep.subr.mxu0 0.0
        %7440 = vmatpush1.msra.mxu0 0.0
        %7441 = vmatprep.subr.mxu0 0.0
        %7442 = vmatpush1.msra.mxu0 0.0
        %7443 = vmatprep.subr.mxu0 0.0
        %7444 = vmatpush1.msra.mxu0 0.0
        %7445 = vmatprep.subr.mxu0 0.0
        %7446 = vmatpush1.msra.mxu0 0.0
        %7447 = vmatprep.subr.mxu0 0.0
        %7448 = vmatpush1.msra.mxu0 0.0
        %7449 = vmatprep.subr.mxu0 0.0
        %7450 = vmatpush1.msra.mxu0 0.0
        %7451 = vmatprep.subr.mxu0 0.0
        %7452 = vmatpush1.msra.mxu0 0.0
        %7453 = vmatprep.subr.mxu0 0.0
        %7454 = vmatpush1.msra.mxu0 0.0
        %7455 = vmatprep.mubr.f32.mxu0 0.0
        %7456 = vmatmul.mubr.f32.gmra.mrb[0].mxu0 %v7383
        %v7457 = vpop.f32.mrb[0].mxu0
        %v7458 = vadd.f32 0.0, %v7457
        %v7459 = vpop.f32.mrb[0].mxu0
        %v7460 = vadd.f32 0.0, %v7459
        %7461 = vmatprep.mubr.f32.mxu0 0.0
        %7462 = vmatmul.mubr.f32.gmra.mrb[0].mxu0 %v7386
        %v7463 = vpop.f32.mrb[0].mxu0
        %v7464 = vadd.f32 0.0, %v7463
        %v7465 = vpop.f32.mrb[0].mxu0
        %v7466 = vadd.f32 0.0, %v7465
        %7467 = vmatprep.mubr.f32.mxu0 0.0
        %7468 = vmatmul.mubr.f32.gmra.mrb[0].mxu0 %v7389
        %v7469 = vpop.f32.mrb[0].mxu0
        %v7470 = vadd.f32 0.0, %v7469
        %v7471 = vpop.f32.mrb[0].mxu0
        %v7472 = vadd.f32 0.0, %v7471
        %7473 = vdwg.mxu0
        %v7474 = vadd.f32 %v7361, %v7458
        %v7475 = vadd.f32 %v7362, %v7460
        %v7476 = vadd.f32 %v7363, %v7464
        %v7477 = vadd.f32 %v7364, %v7466
        %v7478 = vadd.f32 %v7365, %v7470
        %v7479 = vadd.f32 %v7366, %v7472
        %s7480 = scalar_lea.vmem %s14, 96
        %v7481 = vld [vmem:[%s7480] sm:$0xff]
        %v7482 = vld [vmem:[%s7480 + $0x8] sm:$0xff]
        %v7483 = vld [vmem:[%s7480 + $0x10] sm:$0xff]
        %7484 = vrot.lane.b32.xlu0 %v7047, 110
        %v7485 = vpop.permute.xlu0 %7484
        %7486 = vrot.lane.b32.xlu0 %v7048, 110
        %v7487 = vpop.permute.xlu0 %7486
        %7488 = vrot.lane.b32.xlu0 %v7049, 110
        %v7489 = vpop.permute.xlu0 %7488
        %vm7490 = vcmask 900096
        %v7491 = vsel %vm7490, %v7485, %v7487
        %v7492 = vsel %vm7490, %v7487, %v7489
        %v7496 = vsel %vm7070, %v7481, 0
        %v7499 = vsel %vm7070, %v7482, 0
        %v7502 = vsel %vm7070, %v7483, 0
        %7504 = vmatprep.subr.mxu0 %v7492
        %7505 = vmatpush1.msra.mxu0 %v7491
        %7506 = vmatprep.subr.mxu0 0.0
        %7507 = vmatpush1.msra.mxu0 0.0
        %7508 = vmatprep.subr.mxu0 0.0
        %7509 = vmatpush1.msra.mxu0 0.0
        %7510 = vmatprep.subr.mxu0 0.0
        %7511 = vmatpush1.msra.mxu0 0.0
        %7512 = vmatprep.subr.mxu0 0.0
        %7513 = vmatpush1.msra.mxu0 0.0
        %7514 = vmatprep.subr.mxu0 0.0
        %7515 = vmatpush1.msra.mxu0 0.0
        %7516 = vmatprep.subr.mxu0 0.0
        %7517 = vmatpush1.msra.mxu0 0.0
        %7518 = vmatprep.subr.mxu0 0.0
        %7519 = vmatpush1.msra.mxu0 0.0
        %7520 = vmatprep.subr.mxu0 0.0
        %7521 = vmatpush1.msra.mxu0 0.0
        %7522 = vmatprep.subr.mxu0 0.0
        %7523 = vmatpush1.msra.mxu0 0.0
        %7524 = vmatprep.subr.mxu0 0.0
        %7525 = vmatpush1.msra.mxu0 0.0
        %7526 = vmatprep.subr.mxu0 0.0
        %7527 = vmatpush1.msra.mxu0 0.0
        %7528 = vmatprep.subr.mxu0 0.0
        %7529 = vmatpush1.msra.mxu0 0.0
        %7530 = vmatprep.subr.mxu0 0.0
        %7531 = vmatpush1.msra.mxu0 0.0
        %7532 = vmatprep.subr.mxu0 0.0
        %7533 = vmatpush1.msra.mxu0 0.0
        %7534 = vmatprep.subr.mxu0 0.0
        %7535 = vmatpush1.msra.mxu0 0.0
        %7536 = vmatprep.subr.mxu0 0.0
        %7537 = vmatpush1.msra.mxu0 0.0
        %7538 = vmatprep.subr.mxu0 0.0
        %7539 = vmatpush1.msra.mxu0 0.0
        %7540 = vmatprep.subr.mxu0 0.0
        %7541 = vmatpush1.msra.mxu0 0.0
        %7542 = vmatprep.subr.mxu0 0.0
        %7543 = vmatpush1.msra.mxu0 0.0
        %7544 = vmatprep.subr.mxu0 0.0
        %7545 = vmatpush1.msra.mxu0 0.0
        %7546 = vmatprep.subr.mxu0 0.0
        %7547 = vmatpush1.msra.mxu0 0.0
        %7548 = vmatprep.subr.mxu0 0.0
        %7549 = vmatpush1.msra.mxu0 0.0
        %7550 = vmatprep.subr.mxu0 0.0
        %7551 = vmatpush1.msra.mxu0 0.0
        %7552 = vmatprep.subr.mxu0 0.0
        %7553 = vmatpush1.msra.mxu0 0.0
        %7554 = vmatprep.subr.mxu0 0.0
        %7555 = vmatpush1.msra.mxu0 0.0
        %7556 = vmatprep.subr.mxu0 0.0
        %7557 = vmatpush1.msra.mxu0 0.0
        %7558 = vmatprep.subr.mxu0 0.0
        %7559 = vmatpush1.msra.mxu0 0.0
        %7560 = vmatprep.subr.mxu0 0.0
        %7561 = vmatpush1.msra.mxu0 0.0
        %7562 = vmatprep.subr.mxu0 0.0
        %7563 = vmatpush1.msra.mxu0 0.0
        %7564 = vmatprep.subr.mxu0 0.0
        %7565 = vmatpush1.msra.mxu0 0.0
        %7566 = vmatprep.subr.mxu0 0.0
        %7567 = vmatpush1.msra.mxu0 0.0
        %7568 = vmatprep.mubr.f32.mxu0 0.0
        %7569 = vmatmul.mubr.f32.gmra.mrb[0].mxu0 %v7496
        %v7570 = vpop.f32.mrb[0].mxu0
        %v7571 = vadd.f32 0.0, %v7570
        %v7572 = vpop.f32.mrb[0].mxu0
        %v7573 = vadd.f32 0.0, %v7572
        %7574 = vmatprep.mubr.f32.mxu0 0.0
        %7575 = vmatmul.mubr.f32.gmra.mrb[0].mxu0 %v7499
        %v7576 = vpop.f32.mrb[0].mxu0
        %v7577 = vadd.f32 0.0, %v7576
        %v7578 = vpop.f32.mrb[0].mxu0
        %v7579 = vadd.f32 0.0, %v7578
        %7580 = vmatprep.mubr.f32.mxu0 0.0
        %7581 = vmatmul.mubr.f32.gmra.mrb[0].mxu0 %v7502
        %v7582 = vpop.f32.mrb[0].mxu0
        %v7583 = vadd.f32 0.0, %v7582
        %v7584 = vpop.f32.mrb[0].mxu0
        %v7585 = vadd.f32 0.0, %v7584
        %7586 = vdwg.mxu0
        %v7587 = vadd.f32 %v7474, %v7571
        %v7588 = vadd.f32 %v7475, %v7573
        %v7589 = vadd.f32 %v7476, %v7577
        %v7590 = vadd.f32 %v7477, %v7579
        %v7591 = vadd.f32 %v7478, %v7583
        %v7592 = vadd.f32 %v7479, %v7585
        %s7593 = scalar_lea.vmem %s14, 120
        %v7594 = vld [vmem:[%s7593] sm:$0xff]
        %v7595 = vld [vmem:[%s7593 + $0x8] sm:$0xff]
        %v7596 = vld [vmem:[%s7593 + $0x10] sm:$0xff]
        %7597 = vrot.lane.b32.xlu0 %v7047, 109
        %v7598 = vpop.permute.xlu0 %7597
        %7599 = vrot.lane.b32.xlu0 %v7048, 109
        %v7600 = vpop.permute.xlu0 %7599
        %7601 = vrot.lane.b32.xlu0 %v7049, 109
        %v7602 = vpop.permute.xlu0 %7601
        %vm7603 = vcmask 891904
        %v7604 = vsel %vm7603, %v7598, %v7600
        %v7605 = vsel %vm7603, %v7600, %v7602
        %v7609 = vsel %vm7070, %v7594, 0
        %v7612 = vsel %vm7070, %v7595, 0
        %v7615 = vsel %vm7070, %v7596, 0
        %7617 = vmatprep.subr.mxu0 %v7605
        %7618 = vmatpush1.msra.mxu0 %v7604
        %7619 = vmatprep.subr.mxu0 0.0
        %7620 = vmatpush1.msra.mxu0 0.0
        %7621 = vmatprep.subr.mxu0 0.0
        %7622 = vmatpush1.msra.mxu0 0.0
        %7623 = vmatprep.subr.mxu0 0.0
        %7624 = vmatpush1.msra.mxu0 0.0
        %7625 = vmatprep.subr.mxu0 0.0
        %7626 = vmatpush1.msra.mxu0 0.0
        %7627 = vmatprep.subr.mxu0 0.0
        %7628 = vmatpush1.msra.mxu0 0.0
        %7629 = vmatprep.subr.mxu0 0.0
        %7630 = vmatpush1.msra.mxu0 0.0
        %7631 = vmatprep.subr.mxu0 0.0
        %7632 = vmatpush1.msra.mxu0 0.0
        %7633 = vmatprep.subr.mxu0 0.0
        %7634 = vmatpush1.msra.mxu0 0.0
        %7635 = vmatprep.subr.mxu0 0.0
        %7636 = vmatpush1.msra.mxu0 0.0
        %7637 = vmatprep.subr.mxu0 0.0
        %7638 = vmatpush1.msra.mxu0 0.0
        %7639 = vmatprep.subr.mxu0 0.0
        %7640 = vmatpush1.msra.mxu0 0.0
        %7641 = vmatprep.subr.mxu0 0.0
        %7642 = vmatpush1.msra.mxu0 0.0
        %7643 = vmatprep.subr.mxu0 0.0
        %7644 = vmatpush1.msra.mxu0 0.0
        %7645 = vmatprep.subr.mxu0 0.0
        %7646 = vmatpush1.msra.mxu0 0.0
        %7647 = vmatprep.subr.mxu0 0.0
        %7648 = vmatpush1.msra.mxu0 0.0
        %7649 = vmatprep.subr.mxu0 0.0
        %7650 = vmatpush1.msra.mxu0 0.0
        %7651 = vmatprep.subr.mxu0 0.0
        %7652 = vmatpush1.msra.mxu0 0.0
        %7653 = vmatprep.subr.mxu0 0.0
        %7654 = vmatpush1.msra.mxu0 0.0
        %7655 = vmatprep.subr.mxu0 0.0
        %7656 = vmatpush1.msra.mxu0 0.0
        %7657 = vmatprep.subr.mxu0 0.0
        %7658 = vmatpush1.msra.mxu0 0.0
        %7659 = vmatprep.subr.mxu0 0.0
        %7660 = vmatpush1.msra.mxu0 0.0
        %7661 = vmatprep.subr.mxu0 0.0
        %7662 = vmatpush1.msra.mxu0 0.0
        %7663 = vmatprep.subr.mxu0 0.0
        %7664 = vmatpush1.msra.mxu0 0.0
        %7665 = vmatprep.subr.mxu0 0.0
        %7666 = vmatpush1.msra.mxu0 0.0
        %7667 = vmatprep.subr.mxu0 0.0
        %7668 = vmatpush1.msra.mxu0 0.0
        %7669 = vmatprep.subr.mxu0 0.0
        %7670 = vmatpush1.msra.mxu0 0.0
        %7671 = vmatprep.subr.mxu0 0.0
        %7672 = vmatpush1.msra.mxu0 0.0
        %7673 = vmatprep.subr.mxu0 0.0
        %7674 = vmatpush1.msra.mxu0 0.0
        %7675 = vmatprep.subr.mxu0 0.0
        %7676 = vmatpush1.msra.mxu0 0.0
        %7677 = vmatprep.subr.mxu0 0.0
        %7678 = vmatpush1.msra.mxu0 0.0
        %7679 = vmatprep.subr.mxu0 0.0
        %7680 = vmatpush1.msra.mxu0 0.0
        %7681 = vmatprep.mubr.f32.mxu0 0.0
        %7682 = vmatmul.mubr.f32.gmra.mrb[0].mxu0 %v7609
        %v7683 = vpop.f32.mrb[0].mxu0
        %v7684 = vadd.f32 0.0, %v7683
        %v7685 = vpop.f32.mrb[0].mxu0
        %v7686 = vadd.f32 0.0, %v7685
        %7687 = vmatprep.mubr.f32.mxu0 0.0
        %7688 = vmatmul.mubr.f32.gmra.mrb[0].mxu0 %v7612
        %v7689 = vpop.f32.mrb[0].mxu0
        %v7690 = vadd.f32 0.0, %v7689
        %v7691 = vpop.f32.mrb[0].mxu0
        %v7692 = vadd.f32 0.0, %v7691
        %7693 = vmatprep.mubr.f32.mxu0 0.0
        %7694 = vmatmul.mubr.f32.gmra.mrb[0].mxu0 %v7615
        %v7695 = vpop.f32.mrb[0].mxu0
        %v7696 = vadd.f32 0.0, %v7695
        %v7697 = vpop.f32.mrb[0].mxu0
        %v7698 = vadd.f32 0.0, %v7697
        %7699 = vdwg.mxu0
        %v7700 = vadd.f32 %v7587, %v7684
        %v7701 = vadd.f32 %v7588, %v7686
        %v7702 = vadd.f32 %v7589, %v7690
        %v7703 = vadd.f32 %v7590, %v7692
        %v7704 = vadd.f32 %v7591, %v7696
        %v7705 = vadd.f32 %v7592, %v7698
        %s7706 = scalar_lea.vmem %s14, 144
        %v7707 = vld [vmem:[%s7706] sm:$0xff]
        %v7708 = vld [vmem:[%s7706 + $0x8] sm:$0xff]
        %v7709 = vld [vmem:[%s7706 + $0x10] sm:$0xff]
        %7710 = vrot.lane.b32.xlu0 %v7047, 94
        %v7711 = vpop.permute.xlu0 %7710
        %7712 = vrot.lane.b32.xlu0 %v7048, 94
        %v7713 = vpop.permute.xlu0 %7712
        %7714 = vrot.lane.b32.xlu0 %v7049, 94
        %v7715 = vpop.permute.xlu0 %7714
        %vm7716 = vcmask 769024
        %v7717 = vsel %vm7716, %v7711, %v7713
        %v7718 = vsel %vm7716, %v7713, %v7715
        %v7722 = vsel %vm7070, %v7707, 0
        %v7725 = vsel %vm7070, %v7708, 0
        %v7728 = vsel %vm7070, %v7709, 0
        %7730 = vmatprep.subr.mxu0 %v7718
        %7731 = vmatpush1.msra.mxu0 %v7717
        %7732 = vmatprep.subr.mxu0 0.0
        %7733 = vmatpush1.msra.mxu0 0.0
        %7734 = vmatprep.subr.mxu0 0.0
        %7735 = vmatpush1.msra.mxu0 0.0
        %7736 = vmatprep.subr.mxu0 0.0
        %7737 = vmatpush1.msra.mxu0 0.0
        %7738 = vmatprep.subr.mxu0 0.0
        %7739 = vmatpush1.msra.mxu0 0.0
        %7740 = vmatprep.subr.mxu0 0.0
        %7741 = vmatpush1.msra.mxu0 0.0
        %7742 = vmatprep.subr.mxu0 0.0
        %7743 = vmatpush1.msra.mxu0 0.0
        %7744 = vmatprep.subr.mxu0 0.0
        %7745 = vmatpush1.msra.mxu0 0.0
        %7746 = vmatprep.subr.mxu0 0.0
        %7747 = vmatpush1.msra.mxu0 0.0
        %7748 = vmatprep.subr.mxu0 0.0
        %7749 = vmatpush1.msra.mxu0 0.0
        %7750 = vmatprep.subr.mxu0 0.0
        %7751 = vmatpush1.msra.mxu0 0.0
        %7752 = vmatprep.subr.mxu0 0.0
        %7753 = vmatpush1.msra.mxu0 0.0
        %7754 = vmatprep.subr.mxu0 0.0
        %7755 = vmatpush1.msra.mxu0 0.0
        %7756 = vmatprep.subr.mxu0 0.0
        %7757 = vmatpush1.msra.mxu0 0.0
        %7758 = vmatprep.subr.mxu0 0.0
        %7759 = vmatpush1.msra.mxu0 0.0
        %7760 = vmatprep.subr.mxu0 0.0
        %7761 = vmatpush1.msra.mxu0 0.0
        %7762 = vmatprep.subr.mxu0 0.0
        %7763 = vmatpush1.msra.mxu0 0.0
        %7764 = vmatprep.subr.mxu0 0.0
        %7765 = vmatpush1.msra.mxu0 0.0
        %7766 = vmatprep.subr.mxu0 0.0
        %7767 = vmatpush1.msra.mxu0 0.0
        %7768 = vmatprep.subr.mxu0 0.0
        %7769 = vmatpush1.msra.mxu0 0.0
        %7770 = vmatprep.subr.mxu0 0.0
        %7771 = vmatpush1.msra.mxu0 0.0
        %7772 = vmatprep.subr.mxu0 0.0
        %7773 = vmatpush1.msra.mxu0 0.0
        %7774 = vmatprep.subr.mxu0 0.0
        %7775 = vmatpush1.msra.mxu0 0.0
        %7776 = vmatprep.subr.mxu0 0.0
        %7777 = vmatpush1.msra.mxu0 0.0
        %7778 = vmatprep.subr.mxu0 0.0
        %7779 = vmatpush1.msra.mxu0 0.0
        %7780 = vmatprep.subr.mxu0 0.0
        %7781 = vmatpush1.msra.mxu0 0.0
        %7782 = vmatprep.subr.mxu0 0.0
        %7783 = vmatpush1.msra.mxu0 0.0
        %7784 = vmatprep.subr.mxu0 0.0
        %7785 = vmatpush1.msra.mxu0 0.0
        %7786 = vmatprep.subr.mxu0 0.0
        %7787 = vmatpush1.msra.mxu0 0.0
        %7788 = vmatprep.subr.mxu0 0.0
        %7789 = vmatpush1.msra.mxu0 0.0
        %7790 = vmatprep.subr.mxu0 0.0
        %7791 = vmatpush1.msra.mxu0 0.0
        %7792 = vmatprep.subr.mxu0 0.0
        %7793 = vmatpush1.msra.mxu0 0.0
        %7794 = vmatprep.mubr.f32.mxu0 0.0
        %7795 = vmatmul.mubr.f32.gmra.mrb[0].mxu0 %v7722
        %v7796 = vpop.f32.mrb[0].mxu0
        %v7797 = vadd.f32 0.0, %v7796
        %v7798 = vpop.f32.mrb[0].mxu0
        %v7799 = vadd.f32 0.0, %v7798
        %7800 = vmatprep.mubr.f32.mxu0 0.0
        %7801 = vmatmul.mubr.f32.gmra.mrb[0].mxu0 %v7725
        %v7802 = vpop.f32.mrb[0].mxu0
        %v7803 = vadd.f32 0.0, %v7802
        %v7804 = vpop.f32.mrb[0].mxu0
        %v7805 = vadd.f32 0.0, %v7804
        %7806 = vmatprep.mubr.f32.mxu0 0.0
        %7807 = vmatmul.mubr.f32.gmra.mrb[0].mxu0 %v7728
        %v7808 = vpop.f32.mrb[0].mxu0
        %v7809 = vadd.f32 0.0, %v7808
        %v7810 = vpop.f32.mrb[0].mxu0
        %v7811 = vadd.f32 0.0, %v7810
        %7812 = vdwg.mxu0
        %v7813 = vadd.f32 %v7700, %v7797
        %v7814 = vadd.f32 %v7701, %v7799
        %v7815 = vadd.f32 %v7702, %v7803
        %v7816 = vadd.f32 %v7703, %v7805
        %v7817 = vadd.f32 %v7704, %v7809
        %v7818 = vadd.f32 %v7705, %v7811
        %s7819 = scalar_lea.vmem %s14, 168
        %v7820 = vld [vmem:[%s7819] sm:$0xff]
        %v7821 = vld [vmem:[%s7819 + $0x8] sm:$0xff]
        %v7822 = vld [vmem:[%s7819 + $0x10] sm:$0xff]
        %7823 = vrot.lane.b32.xlu0 %v7047, 93
        %v7824 = vpop.permute.xlu0 %7823
        %7825 = vrot.lane.b32.xlu0 %v7048, 93
        %v7826 = vpop.permute.xlu0 %7825
        %7827 = vrot.lane.b32.xlu0 %v7049, 93
        %v7828 = vpop.permute.xlu0 %7827
        %vm7829 = vcmask 760832
        %v7830 = vsel %vm7829, %v7824, %v7826
        %v7831 = vsel %vm7829, %v7826, %v7828
        %v7835 = vsel %vm7070, %v7820, 0
        %v7838 = vsel %vm7070, %v7821, 0
        %v7841 = vsel %vm7070, %v7822, 0
        %7843 = vmatprep.subr.mxu0 %v7831
        %7844 = vmatpush1.msra.mxu0 %v7830
        %7845 = vmatprep.subr.mxu0 0.0
        %7846 = vmatpush1.msra.mxu0 0.0
        %7847 = vmatprep.subr.mxu0 0.0
        %7848 = vmatpush1.msra.mxu0 0.0
        %7849 = vmatprep.subr.mxu0 0.0
        %7850 = vmatpush1.msra.mxu0 0.0
        %7851 = vmatprep.subr.mxu0 0.0
        %7852 = vmatpush1.msra.mxu0 0.0
        %7853 = vmatprep.subr.mxu0 0.0
        %7854 = vmatpush1.msra.mxu0 0.0
        %7855 = vmatprep.subr.mxu0 0.0
        %7856 = vmatpush1.msra.mxu0 0.0
        %7857 = vmatprep.subr.mxu0 0.0
        %7858 = vmatpush1.msra.mxu0 0.0
        %7859 = vmatprep.subr.mxu0 0.0
        %7860 = vmatpush1.msra.mxu0 0.0
        %7861 = vmatprep.subr.mxu0 0.0
        %7862 = vmatpush1.msra.mxu0 0.0
        %7863 = vmatprep.subr.mxu0 0.0
        %7864 = vmatpush1.msra.mxu0 0.0
        %7865 = vmatprep.subr.mxu0 0.0
        %7866 = vmatpush1.msra.mxu0 0.0
        %7867 = vmatprep.subr.mxu0 0.0
        %7868 = vmatpush1.msra.mxu0 0.0
        %7869 = vmatprep.subr.mxu0 0.0
        %7870 = vmatpush1.msra.mxu0 0.0
        %7871 = vmatprep.subr.mxu0 0.0
        %7872 = vmatpush1.msra.mxu0 0.0
        %7873 = vmatprep.subr.mxu0 0.0
        %7874 = vmatpush1.msra.mxu0 0.0
        %7875 = vmatprep.subr.mxu0 0.0
        %7876 = vmatpush1.msra.mxu0 0.0
        %7877 = vmatprep.subr.mxu0 0.0
        %7878 = vmatpush1.msra.mxu0 0.0
        %7879 = vmatprep.subr.mxu0 0.0
        %7880 = vmatpush1.msra.mxu0 0.0
        %7881 = vmatprep.subr.mxu0 0.0
        %7882 = vmatpush1.msra.mxu0 0.0
        %7883 = vmatprep.subr.mxu0 0.0
        %7884 = vmatpush1.msra.mxu0 0.0
        %7885 = vmatprep.subr.mxu0 0.0
        %7886 = vmatpush1.msra.mxu0 0.0
        %7887 = vmatprep.subr.mxu0 0.0
        %7888 = vmatpush1.msra.mxu0 0.0
        %7889 = vmatprep.subr.mxu0 0.0
        %7890 = vmatpush1.msra.mxu0 0.0
        %7891 = vmatprep.subr.mxu0 0.0
        %7892 = vmatpush1.msra.mxu0 0.0
        %7893 = vmatprep.subr.mxu0 0.0
        %7894 = vmatpush1.msra.mxu0 0.0
        %7895 = vmatprep.subr.mxu0 0.0
        %7896 = vmatpush1.msra.mxu0 0.0
        %7897 = vmatprep.subr.mxu0 0.0
        %7898 = vmatpush1.msra.mxu0 0.0
        %7899 = vmatprep.subr.mxu0 0.0
        %7900 = vmatpush1.msra.mxu0 0.0
        %7901 = vmatprep.subr.mxu0 0.0
        %7902 = vmatpush1.msra.mxu0 0.0
        %7903 = vmatprep.subr.mxu0 0.0
        %7904 = vmatpush1.msra.mxu0 0.0
        %7905 = vmatprep.subr.mxu0 0.0
        %7906 = vmatpush1.msra.mxu0 0.0
        %7907 = vmatprep.mubr.f32.mxu0 0.0
        %7908 = vmatmul.mubr.f32.gmra.mrb[0].mxu0 %v7835
        %v7909 = vpop.f32.mrb[0].mxu0
        %v7910 = vadd.f32 0.0, %v7909
        %v7911 = vpop.f32.mrb[0].mxu0
        %v7912 = vadd.f32 0.0, %v7911
        %7913 = vmatprep.mubr.f32.mxu0 0.0
        %7914 = vmatmul.mubr.f32.gmra.mrb[0].mxu0 %v7838
        %v7915 = vpop.f32.mrb[0].mxu0
        %v7916 = vadd.f32 0.0, %v7915
        %v7917 = vpop.f32.mrb[0].mxu0
        %v7918 = vadd.f32 0.0, %v7917
        %7919 = vmatprep.mubr.f32.mxu0 0.0
        %7920 = vmatmul.mubr.f32.gmra.mrb[0].mxu0 %v7841
        %v7921 = vpop.f32.mrb[0].mxu0
        %v7922 = vadd.f32 0.0, %v7921
        %v7923 = vpop.f32.mrb[0].mxu0
        %v7924 = vadd.f32 0.0, %v7923
        %7925 = vdwg.mxu0
        %v7926 = vadd.f32 %v7813, %v7910
        %v7927 = vadd.f32 %v7814, %v7912
        %v7928 = vadd.f32 %v7815, %v7916
        %v7929 = vadd.f32 %v7816, %v7918
        %v7930 = vadd.f32 %v7817, %v7922
        %v7931 = vadd.f32 %v7818, %v7924
        %s7932 = scalar_lea.vmem %s14, 192
        %v7933 = vld [vmem:[%s7932] sm:$0xff]
        %v7934 = vld [vmem:[%s7932 + $0x8] sm:$0xff]
        %v7935 = vld [vmem:[%s7932 + $0x10] sm:$0xff]
        %7936 = vrot.lane.b32.xlu0 %v7047, 92
        %v7937 = vpop.permute.xlu0 %7936
        %7938 = vrot.lane.b32.xlu0 %v7048, 92
        %v7939 = vpop.permute.xlu0 %7938
        %7940 = vrot.lane.b32.xlu0 %v7049, 92
        %v7941 = vpop.permute.xlu0 %7940
        %vm7942 = vcmask 752640
        %v7943 = vsel %vm7942, %v7937, %v7939
        %v7944 = vsel %vm7942, %v7939, %v7941
        %v7948 = vsel %vm7070, %v7933, 0
        %v7951 = vsel %vm7070, %v7934, 0
        %v7954 = vsel %vm7070, %v7935, 0
        %7956 = vmatprep.subr.mxu0 %v7944
        %7957 = vmatpush1.msra.mxu0 %v7943
        %7958 = vmatprep.subr.mxu0 0.0
        %7959 = vmatpush1.msra.mxu0 0.0
        %7960 = vmatprep.subr.mxu0 0.0
        %7961 = vmatpush1.msra.mxu0 0.0
        %7962 = vmatprep.subr.mxu0 0.0
        %7963 = vmatpush1.msra.mxu0 0.0
        %7964 = vmatprep.subr.mxu0 0.0
        %7965 = vmatpush1.msra.mxu0 0.0
        %7966 = vmatprep.subr.mxu0 0.0
        %7967 = vmatpush1.msra.mxu0 0.0
        %7968 = vmatprep.subr.mxu0 0.0
        %7969 = vmatpush1.msra.mxu0 0.0
        %7970 = vmatprep.subr.mxu0 0.0
        %7971 = vmatpush1.msra.mxu0 0.0
        %7972 = vmatprep.subr.mxu0 0.0
        %7973 = vmatpush1.msra.mxu0 0.0
        %7974 = vmatprep.subr.mxu0 0.0
        %7975 = vmatpush1.msra.mxu0 0.0
        %7976 = vmatprep.subr.mxu0 0.0
        %7977 = vmatpush1.msra.mxu0 0.0
        %7978 = vmatprep.subr.mxu0 0.0
        %7979 = vmatpush1.msra.mxu0 0.0
        %7980 = vmatprep.subr.mxu0 0.0
        %7981 = vmatpush1.msra.mxu0 0.0
        %7982 = vmatprep.subr.mxu0 0.0
        %7983 = vmatpush1.msra.mxu0 0.0
        %7984 = vmatprep.subr.mxu0 0.0
        %7985 = vmatpush1.msra.mxu0 0.0
        %7986 = vmatprep.subr.mxu0 0.0
        %7987 = vmatpush1.msra.mxu0 0.0
        %7988 = vmatprep.subr.mxu0 0.0
        %7989 = vmatpush1.msra.mxu0 0.0
        %7990 = vmatprep.subr.mxu0 0.0
        %7991 = vmatpush1.msra.mxu0 0.0
        %7992 = vmatprep.subr.mxu0 0.0
        %7993 = vmatpush1.msra.mxu0 0.0
        %7994 = vmatprep.subr.mxu0 0.0
        %7995 = vmatpush1.msra.mxu0 0.0
        %7996 = vmatprep.subr.mxu0 0.0
        %7997 = vmatpush1.msra.mxu0 0.0
        %7998 = vmatprep.subr.mxu0 0.0
        %7999 = vmatpush1.msra.mxu0 0.0
        %8000 = vmatprep.subr.mxu0 0.0
        %8001 = vmatpush1.msra.mxu0 0.0
        %8002 = vmatprep.subr.mxu0 0.0
        %8003 = vmatpush1.msra.mxu0 0.0
        %8004 = vmatprep.subr.mxu0 0.0
        %8005 = vmatpush1.msra.mxu0 0.0
        %8006 = vmatprep.subr.mxu0 0.0
        %8007 = vmatpush1.msra.mxu0 0.0
        %8008 = vmatprep.subr.mxu0 0.0
        %8009 = vmatpush1.msra.mxu0 0.0
        %8010 = vmatprep.subr.mxu0 0.0
        %8011 = vmatpush1.msra.mxu0 0.0
        %8012 = vmatprep.subr.mxu0 0.0
        %8013 = vmatpush1.msra.mxu0 0.0
        %8014 = vmatprep.subr.mxu0 0.0
        %8015 = vmatpush1.msra.mxu0 0.0
        %8016 = vmatprep.subr.mxu0 0.0
        %8017 = vmatpush1.msra.mxu0 0.0
        %8018 = vmatprep.subr.mxu0 0.0
        %8019 = vmatpush1.msra.mxu0 0.0
        %8020 = vmatprep.mubr.f32.mxu0 0.0
        %8021 = vmatmul.mubr.f32.gmra.mrb[0].mxu0 %v7948
        %v8022 = vpop.f32.mrb[0].mxu0
        %v8023 = vadd.f32 0.0, %v8022
        %v8024 = vpop.f32.mrb[0].mxu0
        %v8025 = vadd.f32 0.0, %v8024
        %8026 = vmatprep.mubr.f32.mxu0 0.0
        %8027 = vmatmul.mubr.f32.gmra.mrb[0].mxu0 %v7951
        %v8028 = vpop.f32.mrb[0].mxu0
        %v8029 = vadd.f32 0.0, %v8028
        %v8030 = vpop.f32.mrb[0].mxu0
        %v8031 = vadd.f32 0.0, %v8030
        %8032 = vmatprep.mubr.f32.mxu0 0.0
        %8033 = vmatmul.mubr.f32.gmra.mrb[0].mxu0 %v7954
        %v8034 = vpop.f32.mrb[0].mxu0
        %v8035 = vadd.f32 0.0, %v8034
        %v8036 = vpop.f32.mrb[0].mxu0
        %v8037 = vadd.f32 0.0, %v8036
        %8038 = vdwg.mxu0
        %v8039 = vadd.f32 %v7926, %v8023
        %v8040 = vadd.f32 %v7927, %v8025
        %v8041 = vadd.f32 %v7928, %v8029
        %v8042 = vadd.f32 %v7929, %v8031
        %v8043 = vadd.f32 %v7930, %v8035
        %v8044 = vadd.f32 %v7931, %v8037
        %v8045 = vld [vmem:[%s15] sm:$0xff]
        %v8046 = vld [vmem:[%s15 + $0x8] sm:$0xff]
        %v8047 = vld [vmem:[%s15 + $0x10] sm:$0xff]
        %8049 = vset.pattern.permute.xlu0 0
        %8050 = vperm.xlu0 %8049, %v8045
        %v8051 = vpop.permute.xlu0 %8050
        %8054 = vset.pattern.permute.xlu0 0
        %8055 = vperm.xlu0 %8054, %v8046
        %v8056 = vpop.permute.xlu0 %8055
        %8059 = vset.pattern.permute.xlu0 0
        %8060 = vperm.xlu0 %8059, %v8047
        %v8061 = vpop.permute.xlu0 %8060
        %v8063 = vadd.f32 %v8039, %v8051
        %v8064 = vadd.f32 %v8040, %v8051
        %v8065 = vadd.f32 %v8041, %v8056
        %v8066 = vadd.f32 %v8042, %v8056
        %v8067 = vadd.f32 %v8043, %v8061
        %v8068 = vadd.f32 %v8044, %v8061
        %v8069 = vmax.f32 %v8063, 0.0
        %v8070 = vmax.f32 %v8064, 0.0
        %v8071 = vmax.f32 %v8065, 0.0
        %v8072 = vmax.f32 %v8066, 0.0
        %v8073 = vmax.f32 %v8067, 0.0
        %v8074 = vmax.f32 %v8068, 0.0
        %v8075 = vld [vmem:[%s16] sm:$0xff]
        %v8076 = vld [vmem:[%s16 + $0x8] sm:$0xff]
        %v8077 = vld [vmem:[%s16 + $0x10] sm:$0xff]
        %v8078 = vld [vmem:[%s16 + $0x18] sm:$0xff]
        %v8079 = vld [vmem:[%s16 + $0x20] sm:$0xff]
        %v8080 = vld [vmem:[%s17] sm:$0xff]
        %v8081 = vld [vmem:[%s17 + $0x8] sm:$0xff]
        %v8082 = vld [vmem:[%s17 + $0x10] sm:$0xff]
        %v8083 = vld [vmem:[%s17 + $0x18] sm:$0xff]
        %v8084 = vld [vmem:[%s17 + $0x20] sm:$0xff]
        %8086 = vset.pattern.permute.xlu0 0
        %8087 = vperm.xlu0 %8086, %v8080
        %v8088 = vpop.permute.xlu0 %8087
        %8091 = vset.pattern.permute.xlu0 0
        %8092 = vperm.xlu0 %8091, %v8081
        %v8093 = vpop.permute.xlu0 %8092
        %8096 = vset.pattern.permute.xlu0 0
        %8097 = vperm.xlu0 %8096, %v8082
        %v8098 = vpop.permute.xlu0 %8097
        %8101 = vset.pattern.permute.xlu0 0
        %8102 = vperm.xlu0 %8101, %v8083
        %v8103 = vpop.permute.xlu0 %8102
        %8106 = vset.pattern.permute.xlu0 0
        %8107 = vperm.xlu0 %8106, %v8084
        %v8108 = vpop.permute.xlu0 %8107
        %vm8110 = vcmask 195584
        %v8112 = vsel %vm8110, %v8075, 0
        %v8115 = vsel %vm8110, %v8076, 0
        %v8118 = vsel %vm8110, %v8077, 0
        %v8121 = vsel %vm8110, %v8078, 0
        %v8124 = vsel %vm8110, %v8079, 0
        %8126 = vmatprep.subr.mxu0 %v8070
        %8127 = vmatpush1.msra.mxu0 %v8069
        %8128 = vmatprep.subr.mxu0 %v8072
        %8129 = vmatpush1.msra.mxu0 %v8071
        %8130 = vmatprep.subr.mxu0 %v8074
        %8131 = vmatpush1.msra.mxu0 %v8073
        %8132 = vmatprep.subr.mxu0 0.0
        %8133 = vmatpush1.msra.mxu0 0.0
        %8134 = vmatprep.subr.mxu0 0.0
        %8135 = vmatpush1.msra.mxu0 0.0
        %8136 = vmatprep.subr.mxu0 0.0
        %8137 = vmatpush1.msra.mxu0 0.0
        %8138 = vmatprep.subr.mxu0 0.0
        %8139 = vmatpush1.msra.mxu0 0.0
        %8140 = vmatprep.subr.mxu0 0.0
        %8141 = vmatpush1.msra.mxu0 0.0
        %8142 = vmatprep.subr.mxu0 0.0
        %8143 = vmatpush1.msra.mxu0 0.0
        %8144 = vmatprep.subr.mxu0 0.0
        %8145 = vmatpush1.msra.mxu0 0.0
        %8146 = vmatprep.subr.mxu0 0.0
        %8147 = vmatpush1.msra.mxu0 0.0
        %8148 = vmatprep.subr.mxu0 0.0
        %8149 = vmatpush1.msra.mxu0 0.0
        %8150 = vmatprep.subr.mxu0 0.0
        %8151 = vmatpush1.msra.mxu0 0.0
        %8152 = vmatprep.subr.mxu0 0.0
        %8153 = vmatpush1.msra.mxu0 0.0
        %8154 = vmatprep.subr.mxu0 0.0
        %8155 = vmatpush1.msra.mxu0 0.0
        %8156 = vmatprep.subr.mxu0 0.0
        %8157 = vmatpush1.msra.mxu0 0.0
        %8158 = vmatprep.subr.mxu0 0.0
        %8159 = vmatpush1.msra.mxu0 0.0
        %8160 = vmatprep.subr.mxu0 0.0
        %8161 = vmatpush1.msra.mxu0 0.0
        %8162 = vmatprep.subr.mxu0 0.0
        %8163 = vmatpush1.msra.mxu0 0.0
        %8164 = vmatprep.subr.mxu0 0.0
        %8165 = vmatpush1.msra.mxu0 0.0
        %8166 = vmatprep.subr.mxu0 0.0
        %8167 = vmatpush1.msra.mxu0 0.0
        %8168 = vmatprep.subr.mxu0 0.0
        %8169 = vmatpush1.msra.mxu0 0.0
        %8170 = vmatprep.subr.mxu0 0.0
        %8171 = vmatpush1.msra.mxu0 0.0
        %8172 = vmatprep.subr.mxu0 0.0
        %8173 = vmatpush1.msra.mxu0 0.0
        %8174 = vmatprep.subr.mxu0 0.0
        %8175 = vmatpush1.msra.mxu0 0.0
        %8176 = vmatprep.subr.mxu0 0.0
        %8177 = vmatpush1.msra.mxu0 0.0
        %8178 = vmatprep.subr.mxu0 0.0
        %8179 = vmatpush1.msra.mxu0 0.0
        %8180 = vmatprep.subr.mxu0 0.0
        %8181 = vmatpush1.msra.mxu0 0.0
        %8182 = vmatprep.subr.mxu0 0.0
        %8183 = vmatpush1.msra.mxu0 0.0
        %8184 = vmatprep.subr.mxu0 0.0
        %8185 = vmatpush1.msra.mxu0 0.0
        %8186 = vmatprep.subr.mxu0 0.0
        %8187 = vmatpush1.msra.mxu0 0.0
        %8188 = vmatprep.subr.mxu0 0.0
        %8189 = vmatpush1.msra.mxu0 0.0
        %8190 = vmatprep.mubr.f32.mxu0 0.0
        %8191 = vmatmul.mubr.f32.gmra.mrb[0].mxu0 %v8112
        %v8192 = vpop.f32.mrb[0].mxu0
        %v8193 = vadd.f32 %v8088, %v8192
        %v8194 = vpop.f32.mrb[0].mxu0
        %v8195 = vadd.f32 %v8088, %v8194
        %8196 = vmatprep.mubr.f32.mxu0 0.0
        %8197 = vmatmul.mubr.f32.gmra.mrb[0].mxu0 %v8115
        %v8198 = vpop.f32.mrb[0].mxu0
        %v8199 = vadd.f32 %v8093, %v8198
        %v8200 = vpop.f32.mrb[0].mxu0
        %v8201 = vadd.f32 %v8093, %v8200
        %8202 = vmatprep.mubr.f32.mxu0 0.0
        %8203 = vmatmul.mubr.f32.gmra.mrb[0].mxu0 %v8118
        %v8204 = vpop.f32.mrb[0].mxu0
        %v8205 = vadd.f32 %v8098, %v8204
        %v8206 = vpop.f32.mrb[0].mxu0
        %v8207 = vadd.f32 %v8098, %v8206
        %8208 = vmatprep.mubr.f32.mxu0 0.0
        %8209 = vmatmul.mubr.f32.gmra.mrb[0].mxu0 %v8121
        %v8210 = vpop.f32.mrb[0].mxu0
        %v8211 = vadd.f32 %v8103, %v8210
        %v8212 = vpop.f32.mrb[0].mxu0
        %v8213 = vadd.f32 %v8103, %v8212
        %8214 = vmatprep.mubr.f32.mxu0 0.0
        %8215 = vmatmul.mubr.f32.gmra.mrb[0].mxu0 %v8124
        %v8216 = vpop.f32.mrb[0].mxu0
        %v8217 = vadd.f32 %v8108, %v8216
        %v8218 = vpop.f32.mrb[0].mxu0
        %v8219 = vadd.f32 %v8108, %v8218
        %8220 = vdwg.mxu0
        %s8221 = scalar_lea.vmem %s16, 40
        %v8222 = vld [vmem:[%s8221] sm:$0xff]
        %v8223 = vld [vmem:[%s8221 + $0x8] sm:$0xff]
        %v8224 = vld [vmem:[%s8221 + $0x10] sm:$0xff]
        %v8225 = vld [vmem:[%s8221 + $0x18] sm:$0xff]
        %v8226 = vld [vmem:[%s8221 + $0x20] sm:$0xff]
        %v8228 = vsel %vm8110, %v8222, 0
        %v8231 = vsel %vm8110, %v8223, 0
        %v8234 = vsel %vm8110, %v8224, 0
        %v8237 = vsel %vm8110, %v8225, 0
        %v8240 = vsel %vm8110, %v8226, 0
        %8242 = vmatprep.subr.mxu0 %v8070
        %8243 = vmatpush1.msra.mxu0 %v8069
        %8244 = vmatprep.subr.mxu0 %v8072
        %8245 = vmatpush1.msra.mxu0 %v8071
        %8246 = vmatprep.subr.mxu0 %v8074
        %8247 = vmatpush1.msra.mxu0 %v8073
        %8248 = vmatprep.subr.mxu0 0.0
        %8249 = vmatpush1.msra.mxu0 0.0
        %8250 = vmatprep.subr.mxu0 0.0
        %8251 = vmatpush1.msra.mxu0 0.0
        %8252 = vmatprep.subr.mxu0 0.0
        %8253 = vmatpush1.msra.mxu0 0.0
        %8254 = vmatprep.subr.mxu0 0.0
        %8255 = vmatpush1.msra.mxu0 0.0
        %8256 = vmatprep.subr.mxu0 0.0
        %8257 = vmatpush1.msra.mxu0 0.0
        %8258 = vmatprep.subr.mxu0 0.0
        %8259 = vmatpush1.msra.mxu0 0.0
        %8260 = vmatprep.subr.mxu0 0.0
        %8261 = vmatpush1.msra.mxu0 0.0
        %8262 = vmatprep.subr.mxu0 0.0
        %8263 = vmatpush1.msra.mxu0 0.0
        %8264 = vmatprep.subr.mxu0 0.0
        %8265 = vmatpush1.msra.mxu0 0.0
        %8266 = vmatprep.subr.mxu0 0.0
        %8267 = vmatpush1.msra.mxu0 0.0
        %8268 = vmatprep.subr.mxu0 0.0
        %8269 = vmatpush1.msra.mxu0 0.0
        %8270 = vmatprep.subr.mxu0 0.0
        %8271 = vmatpush1.msra.mxu0 0.0
        %8272 = vmatprep.subr.mxu0 0.0
        %8273 = vmatpush1.msra.mxu0 0.0
        %8274 = vmatprep.subr.mxu0 0.0
        %8275 = vmatpush1.msra.mxu0 0.0
        %8276 = vmatprep.subr.mxu0 0.0
        %8277 = vmatpush1.msra.mxu0 0.0
        %8278 = vmatprep.subr.mxu0 0.0
        %8279 = vmatpush1.msra.mxu0 0.0
        %8280 = vmatprep.subr.mxu0 0.0
        %8281 = vmatpush1.msra.mxu0 0.0
        %8282 = vmatprep.subr.mxu0 0.0
        %8283 = vmatpush1.msra.mxu0 0.0
        %8284 = vmatprep.subr.mxu0 0.0
        %8285 = vmatpush1.msra.mxu0 0.0
        %8286 = vmatprep.subr.mxu0 0.0
        %8287 = vmatpush1.msra.mxu0 0.0
        %8288 = vmatprep.subr.mxu0 0.0
        %8289 = vmatpush1.msra.mxu0 0.0
        %8290 = vmatprep.subr.mxu0 0.0
        %8291 = vmatpush1.msra.mxu0 0.0
        %8292 = vmatprep.subr.mxu0 0.0
        %8293 = vmatpush1.msra.mxu0 0.0
        %8294 = vmatprep.subr.mxu0 0.0
        %8295 = vmatpush1.msra.mxu0 0.0
        %8296 = vmatprep.subr.mxu0 0.0
        %8297 = vmatpush1.msra.mxu0 0.0
        %8298 = vmatprep.subr.mxu0 0.0
        %8299 = vmatpush1.msra.mxu0 0.0
        %8300 = vmatprep.subr.mxu0 0.0
        %8301 = vmatpush1.msra.mxu0 0.0
        %8302 = vmatprep.subr.mxu0 0.0
        %8303 = vmatpush1.msra.mxu0 0.0
        %8304 = vmatprep.subr.mxu0 0.0
        %8305 = vmatpush1.msra.mxu0 0.0
        %8306 = vmatprep.mubr.f32.mxu0 0.0
        %8307 = vmatmul.mubr.f32.gmra.mrb[0].mxu0 %v8228
        %v8308 = vpop.f32.mrb[0].mxu0
        %v8309 = vadd.f32 %v8088, %v8308
        %v8310 = vpop.f32.mrb[0].mxu0
        %v8311 = vadd.f32 %v8088, %v8310
        %8312 = vmatprep.mubr.f32.mxu0 0.0
        %8313 = vmatmul.mubr.f32.gmra.mrb[0].mxu0 %v8231
        %v8314 = vpop.f32.mrb[0].mxu0
        %v8315 = vadd.f32 %v8093, %v8314
        %v8316 = vpop.f32.mrb[0].mxu0
        %v8317 = vadd.f32 %v8093, %v8316
        %8318 = vmatprep.mubr.f32.mxu0 0.0
        %8319 = vmatmul.mubr.f32.gmra.mrb[0].mxu0 %v8234
        %v8320 = vpop.f32.mrb[0].mxu0
        %v8321 = vadd.f32 %v8098, %v8320
        %v8322 = vpop.f32.mrb[0].mxu0
        %v8323 = vadd.f32 %v8098, %v8322
        %8324 = vmatprep.mubr.f32.mxu0 0.0
        %8325 = vmatmul.mubr.f32.gmra.mrb[0].mxu0 %v8237
        %v8326 = vpop.f32.mrb[0].mxu0
        %v8327 = vadd.f32 %v8103, %v8326
        %v8328 = vpop.f32.mrb[0].mxu0
        %v8329 = vadd.f32 %v8103, %v8328
        %8330 = vmatprep.mubr.f32.mxu0 0.0
        %8331 = vmatmul.mubr.f32.gmra.mrb[0].mxu0 %v8240
        %v8332 = vpop.f32.mrb[0].mxu0
        %v8333 = vadd.f32 %v8108, %v8332
        %v8334 = vpop.f32.mrb[0].mxu0
        %v8335 = vadd.f32 %v8108, %v8334
        %8336 = vdwg.mxu0
        %s8337 = scalar_lea.vmem %s16, 80
        %v8338 = vld [vmem:[%s8337] sm:$0xff]
        %v8339 = vld [vmem:[%s8337 + $0x8] sm:$0xff]
        %v8340 = vld [vmem:[%s8337 + $0x10] sm:$0xff]
        %v8341 = vld [vmem:[%s8337 + $0x18] sm:$0xff]
        %v8342 = vld [vmem:[%s8337 + $0x20] sm:$0xff]
        %v8344 = vsel %vm8110, %v8338, 0
        %v8347 = vsel %vm8110, %v8339, 0
        %v8350 = vsel %vm8110, %v8340, 0
        %v8353 = vsel %vm8110, %v8341, 0
        %v8356 = vsel %vm8110, %v8342, 0
        %8358 = vmatprep.subr.mxu0 %v8070
        %8359 = vmatpush1.msra.mxu0 %v8069
        %8360 = vmatprep.subr.mxu0 %v8072
        %8361 = vmatpush1.msra.mxu0 %v8071
        %8362 = vmatprep.subr.mxu0 %v8074
        %8363 = vmatpush1.msra.mxu0 %v8073
        %8364 = vmatprep.subr.mxu0 0.0
        %8365 = vmatpush1.msra.mxu0 0.0
        %8366 = vmatprep.subr.mxu0 0.0
        %8367 = vmatpush1.msra.mxu0 0.0
        %8368 = vmatprep.subr.mxu0 0.0
        %8369 = vmatpush1.msra.mxu0 0.0
        %8370 = vmatprep.subr.mxu0 0.0
        %8371 = vmatpush1.msra.mxu0 0.0
        %8372 = vmatprep.subr.mxu0 0.0
        %8373 = vmatpush1.msra.mxu0 0.0
        %8374 = vmatprep.subr.mxu0 0.0
        %8375 = vmatpush1.msra.mxu0 0.0
        %8376 = vmatprep.subr.mxu0 0.0
        %8377 = vmatpush1.msra.mxu0 0.0
        %8378 = vmatprep.subr.mxu0 0.0
        %8379 = vmatpush1.msra.mxu0 0.0
        %8380 = vmatprep.subr.mxu0 0.0
        %8381 = vmatpush1.msra.mxu0 0.0
        %8382 = vmatprep.subr.mxu0 0.0
        %8383 = vmatpush1.msra.mxu0 0.0
        %8384 = vmatprep.subr.mxu0 0.0
        %8385 = vmatpush1.msra.mxu0 0.0
        %8386 = vmatprep.subr.mxu0 0.0
        %8387 = vmatpush1.msra.mxu0 0.0
        %8388 = vmatprep.subr.mxu0 0.0
        %8389 = vmatpush1.msra.mxu0 0.0
        %8390 = vmatprep.subr.mxu0 0.0
        %8391 = vmatpush1.msra.mxu0 0.0
        %8392 = vmatprep.subr.mxu0 0.0
        %8393 = vmatpush1.msra.mxu0 0.0
        %8394 = vmatprep.subr.mxu0 0.0
        %8395 = vmatpush1.msra.mxu0 0.0
        %8396 = vmatprep.subr.mxu0 0.0
        %8397 = vmatpush1.msra.mxu0 0.0
        %8398 = vmatprep.subr.mxu0 0.0
        %8399 = vmatpush1.msra.mxu0 0.0
        %8400 = vmatprep.subr.mxu0 0.0
        %8401 = vmatpush1.msra.mxu0 0.0
        %8402 = vmatprep.subr.mxu0 0.0
        %8403 = vmatpush1.msra.mxu0 0.0
        %8404 = vmatprep.subr.mxu0 0.0
        %8405 = vmatpush1.msra.mxu0 0.0
        %8406 = vmatprep.subr.mxu0 0.0
        %8407 = vmatpush1.msra.mxu0 0.0
        %8408 = vmatprep.subr.mxu0 0.0
        %8409 = vmatpush1.msra.mxu0 0.0
        %8410 = vmatprep.subr.mxu0 0.0
        %8411 = vmatpush1.msra.mxu0 0.0
        %8412 = vmatprep.subr.mxu0 0.0
        %8413 = vmatpush1.msra.mxu0 0.0
        %8414 = vmatprep.subr.mxu0 0.0
        %8415 = vmatpush1.msra.mxu0 0.0
        %8416 = vmatprep.subr.mxu0 0.0
        %8417 = vmatpush1.msra.mxu0 0.0
        %8418 = vmatprep.subr.mxu0 0.0
        %8419 = vmatpush1.msra.mxu0 0.0
        %8420 = vmatprep.subr.mxu0 0.0
        %8421 = vmatpush1.msra.mxu0 0.0
        %8422 = vmatprep.mubr.f32.mxu0 0.0
        %8423 = vmatmul.mubr.f32.gmra.mrb[0].mxu0 %v8344
        %v8424 = vpop.f32.mrb[0].mxu0
        %v8425 = vadd.f32 %v8088, %v8424
        %v8426 = vpop.f32.mrb[0].mxu0
        %v8427 = vadd.f32 %v8088, %v8426
        %8428 = vmatprep.mubr.f32.mxu0 0.0
        %8429 = vmatmul.mubr.f32.gmra.mrb[0].mxu0 %v8347
        %v8430 = vpop.f32.mrb[0].mxu0
        %v8431 = vadd.f32 %v8093, %v8430
        %v8432 = vpop.f32.mrb[0].mxu0
        %v8433 = vadd.f32 %v8093, %v8432
        %8434 = vmatprep.mubr.f32.mxu0 0.0
        %8435 = vmatmul.mubr.f32.gmra.mrb[0].mxu0 %v8350
        %v8436 = vpop.f32.mrb[0].mxu0
        %v8437 = vadd.f32 %v8098, %v8436
        %v8438 = vpop.f32.mrb[0].mxu0
        %v8439 = vadd.f32 %v8098, %v8438
        %8440 = vmatprep.mubr.f32.mxu0 0.0
        %8441 = vmatmul.mubr.f32.gmra.mrb[0].mxu0 %v8353
        %v8442 = vpop.f32.mrb[0].mxu0
        %v8443 = vadd.f32 %v8103, %v8442
        %v8444 = vpop.f32.mrb[0].mxu0
        %v8445 = vadd.f32 %v8103, %v8444
        %8446 = vmatprep.mubr.f32.mxu0 0.0
        %8447 = vmatmul.mubr.f32.gmra.mrb[0].mxu0 %v8356
        %v8448 = vpop.f32.mrb[0].mxu0
        %v8449 = vadd.f32 %v8108, %v8448
        %v8450 = vpop.f32.mrb[0].mxu0
        %v8451 = vadd.f32 %v8108, %v8450
        %8452 = vdwg.mxu0
        %s8453 = scalar_lea.vmem %s16, 120
        %v8454 = vld [vmem:[%s8453] sm:$0xff]
        %v8455 = vld [vmem:[%s8453 + $0x8] sm:$0xff]
        %v8456 = vld [vmem:[%s8453 + $0x10] sm:$0xff]
        %v8457 = vld [vmem:[%s8453 + $0x18] sm:$0xff]
        %v8458 = vld [vmem:[%s8453 + $0x20] sm:$0xff]
        %v8460 = vsel %vm8110, %v8454, 0
        %v8463 = vsel %vm8110, %v8455, 0
        %v8466 = vsel %vm8110, %v8456, 0
        %v8469 = vsel %vm8110, %v8457, 0
        %v8472 = vsel %vm8110, %v8458, 0
        %8474 = vmatprep.subr.mxu0 %v8070
        %8475 = vmatpush1.msra.mxu0 %v8069
        %8476 = vmatprep.subr.mxu0 %v8072
        %8477 = vmatpush1.msra.mxu0 %v8071
        %8478 = vmatprep.subr.mxu0 %v8074
        %8479 = vmatpush1.msra.mxu0 %v8073
        %8480 = vmatprep.subr.mxu0 0.0
        %8481 = vmatpush1.msra.mxu0 0.0
        %8482 = vmatprep.subr.mxu0 0.0
        %8483 = vmatpush1.msra.mxu0 0.0
        %8484 = vmatprep.subr.mxu0 0.0
        %8485 = vmatpush1.msra.mxu0 0.0
        %8486 = vmatprep.subr.mxu0 0.0
        %8487 = vmatpush1.msra.mxu0 0.0
        %8488 = vmatprep.subr.mxu0 0.0
        %8489 = vmatpush1.msra.mxu0 0.0
        %8490 = vmatprep.subr.mxu0 0.0
        %8491 = vmatpush1.msra.mxu0 0.0
        %8492 = vmatprep.subr.mxu0 0.0
        %8493 = vmatpush1.msra.mxu0 0.0
        %8494 = vmatprep.subr.mxu0 0.0
        %8495 = vmatpush1.msra.mxu0 0.0
        %8496 = vmatprep.subr.mxu0 0.0
        %8497 = vmatpush1.msra.mxu0 0.0
        %8498 = vmatprep.subr.mxu0 0.0
        %8499 = vmatpush1.msra.mxu0 0.0
        %8500 = vmatprep.subr.mxu0 0.0
        %8501 = vmatpush1.msra.mxu0 0.0
        %8502 = vmatprep.subr.mxu0 0.0
        %8503 = vmatpush1.msra.mxu0 0.0
        %8504 = vmatprep.subr.mxu0 0.0
        %8505 = vmatpush1.msra.mxu0 0.0
        %8506 = vmatprep.subr.mxu0 0.0
        %8507 = vmatpush1.msra.mxu0 0.0
        %8508 = vmatprep.subr.mxu0 0.0
        %8509 = vmatpush1.msra.mxu0 0.0
        %8510 = vmatprep.subr.mxu0 0.0
        %8511 = vmatpush1.msra.mxu0 0.0
        %8512 = vmatprep.subr.mxu0 0.0
        %8513 = vmatpush1.msra.mxu0 0.0
        %8514 = vmatprep.subr.mxu0 0.0
        %8515 = vmatpush1.msra.mxu0 0.0
        %8516 = vmatprep.subr.mxu0 0.0
        %8517 = vmatpush1.msra.mxu0 0.0
        %8518 = vmatprep.subr.mxu0 0.0
        %8519 = vmatpush1.msra.mxu0 0.0
        %8520 = vmatprep.subr.mxu0 0.0
        %8521 = vmatpush1.msra.mxu0 0.0
        %8522 = vmatprep.subr.mxu0 0.0
        %8523 = vmatpush1.msra.mxu0 0.0
        %8524 = vmatprep.subr.mxu0 0.0
        %8525 = vmatpush1.msra.mxu0 0.0
        %8526 = vmatprep.subr.mxu0 0.0
        %8527 = vmatpush1.msra.mxu0 0.0
        %8528 = vmatprep.subr.mxu0 0.0
        %8529 = vmatpush1.msra.mxu0 0.0
        %8530 = vmatprep.subr.mxu0 0.0
        %8531 = vmatpush1.msra.mxu0 0.0
        %8532 = vmatprep.subr.mxu0 0.0
        %8533 = vmatpush1.msra.mxu0 0.0
        %8534 = vmatprep.subr.mxu0 0.0
        %8535 = vmatpush1.msra.mxu0 0.0
        %8536 = vmatprep.subr.mxu0 0.0
        %8537 = vmatpush1.msra.mxu0 0.0
        %8538 = vmatprep.mubr.f32.mxu0 0.0
        %8539 = vmatmul.mubr.f32.gmra.mrb[0].mxu0 %v8460
        %v8540 = vpop.f32.mrb[0].mxu0
        %v8541 = vadd.f32 %v8088, %v8540
        %v8542 = vpop.f32.mrb[0].mxu0
        %v8543 = vadd.f32 %v8088, %v8542
        %8544 = vmatprep.mubr.f32.mxu0 0.0
        %8545 = vmatmul.mubr.f32.gmra.mrb[0].mxu0 %v8463
        %v8546 = vpop.f32.mrb[0].mxu0
        %v8547 = vadd.f32 %v8093, %v8546
        %v8548 = vpop.f32.mrb[0].mxu0
        %v8549 = vadd.f32 %v8093, %v8548
        %8550 = vmatprep.mubr.f32.mxu0 0.0
        %8551 = vmatmul.mubr.f32.gmra.mrb[0].mxu0 %v8466
        %v8552 = vpop.f32.mrb[0].mxu0
        %v8553 = vadd.f32 %v8098, %v8552
        %v8554 = vpop.f32.mrb[0].mxu0
        %v8555 = vadd.f32 %v8098, %v8554
        %8556 = vmatprep.mubr.f32.mxu0 0.0
        %8557 = vmatmul.mubr.f32.gmra.mrb[0].mxu0 %v8469
        %v8558 = vpop.f32.mrb[0].mxu0
        %v8559 = vadd.f32 %v8103, %v8558
        %v8560 = vpop.f32.mrb[0].mxu0
        %v8561 = vadd.f32 %v8103, %v8560
        %8562 = vmatprep.mubr.f32.mxu0 0.0
        %8563 = vmatmul.mubr.f32.gmra.mrb[0].mxu0 %v8472
        %v8564 = vpop.f32.mrb[0].mxu0
        %v8565 = vadd.f32 %v8108, %v8564
        %v8566 = vpop.f32.mrb[0].mxu0
        %v8567 = vadd.f32 %v8108, %v8566
        %8568 = vdwg.mxu0
        %v8569 = vsub.f32 0.0, %v8193
        %v8570 = vsub.f32 0.0, %v8195
        %v8571 = vsub.f32 0.0, %v8309
        %v8572 = vsub.f32 0.0, %v8311
        %v8573 = vsub.f32 0.0, %v8425
        %v8574 = vsub.f32 0.0, %v8427
        %v8575 = vsub.f32 0.0, %v8541
        %v8576 = vsub.f32 0.0, %v8543
        %v8577 = vsub.f32 0.0, %v8199
        %v8578 = vsub.f32 0.0, %v8201
        %v8579 = vsub.f32 0.0, %v8315
        %v8580 = vsub.f32 0.0, %v8317
        %v8581 = vsub.f32 0.0, %v8431
        %v8582 = vsub.f32 0.0, %v8433
        %v8583 = vsub.f32 0.0, %v8547
        %v8584 = vsub.f32 0.0, %v8549
        %v8585 = vsub.f32 0.0, %v8205
        %v8586 = vsub.f32 0.0, %v8207
        %v8587 = vsub.f32 0.0, %v8321
        %v8588 = vsub.f32 0.0, %v8323
        %v8589 = vsub.f32 0.0, %v8437
        %v8590 = vsub.f32 0.0, %v8439
        %v8591 = vsub.f32 0.0, %v8553
        %v8592 = vsub.f32 0.0, %v8555
        %v8593 = vsub.f32 0.0, %v8211
        %v8594 = vsub.f32 0.0, %v8213
        %v8595 = vsub.f32 0.0, %v8327
        %v8596 = vsub.f32 0.0, %v8329
        %v8597 = vsub.f32 0.0, %v8443
        %v8598 = vsub.f32 0.0, %v8445
        %v8599 = vsub.f32 0.0, %v8559
        %v8600 = vsub.f32 0.0, %v8561
        %v8601 = vsub.f32 0.0, %v8217
        %v8602 = vsub.f32 0.0, %v8219
        %v8603 = vsub.f32 0.0, %v8333
        %v8604 = vsub.f32 0.0, %v8335
        %v8605 = vsub.f32 0.0, %v8449
        %v8606 = vsub.f32 0.0, %v8451
        %v8607 = vsub.f32 0.0, %v8565
        %v8608 = vsub.f32 0.0, %v8567
        %v8609 = vmul.f32 %v8569, 1.442695
        %v8610 = vpow.pop %v8609
        %v8611 = vmul.f32 %v8570, 1.442695
        %v8612 = vpow.pop %v8611
        %v8613 = vmul.f32 %v8571, 1.442695
        %v8614 = vpow.pop %v8613
        %v8615 = vmul.f32 %v8572, 1.442695
        %v8616 = vpow.pop %v8615
        %v8617 = vmul.f32 %v8573, 1.442695
        %v8618 = vpow.pop %v8617
        %v8619 = vmul.f32 %v8574, 1.442695
        %v8620 = vpow.pop %v8619
        %v8621 = vmul.f32 %v8575, 1.442695
        %v8622 = vpow.pop %v8621
        %v8623 = vmul.f32 %v8576, 1.442695
        %v8624 = vpow.pop %v8623
        %v8625 = vmul.f32 %v8577, 1.442695
        %v8626 = vpow.pop %v8625
        %v8627 = vmul.f32 %v8578, 1.442695
        %v8628 = vpow.pop %v8627
        %v8629 = vmul.f32 %v8579, 1.442695
        %v8630 = vpow.pop %v8629
        %v8631 = vmul.f32 %v8580, 1.442695
        %v8632 = vpow.pop %v8631
        %v8633 = vmul.f32 %v8581, 1.442695
        %v8634 = vpow.pop %v8633
        %v8635 = vmul.f32 %v8582, 1.442695
        %v8636 = vpow.pop %v8635
        %v8637 = vmul.f32 %v8583, 1.442695
        %v8638 = vpow.pop %v8637
        %v8639 = vmul.f32 %v8584, 1.442695
        %v8640 = vpow.pop %v8639
        %v8641 = vmul.f32 %v8585, 1.442695
        %v8642 = vpow.pop %v8641
        %v8643 = vmul.f32 %v8586, 1.442695
        %v8644 = vpow.pop %v8643
        %v8645 = vmul.f32 %v8587, 1.442695
        %v8646 = vpow.pop %v8645
        %v8647 = vmul.f32 %v8588, 1.442695
        %v8648 = vpow.pop %v8647
        %v8649 = vmul.f32 %v8589, 1.442695
        %v8650 = vpow.pop %v8649
        %v8651 = vmul.f32 %v8590, 1.442695
        %v8652 = vpow.pop %v8651
        %v8653 = vmul.f32 %v8591, 1.442695
        %v8654 = vpow.pop %v8653
        %v8655 = vmul.f32 %v8592, 1.442695
        %v8656 = vpow.pop %v8655
        %v8657 = vmul.f32 %v8593, 1.442695
        %v8658 = vpow.pop %v8657
        %v8659 = vmul.f32 %v8594, 1.442695
        %v8660 = vpow.pop %v8659
        %v8661 = vmul.f32 %v8595, 1.442695
        %v8662 = vpow.pop %v8661
        %v8663 = vmul.f32 %v8596, 1.442695
        %v8664 = vpow.pop %v8663
        %v8665 = vmul.f32 %v8597, 1.442695
        %v8666 = vpow.pop %v8665
        %v8667 = vmul.f32 %v8598, 1.442695
        %v8668 = vpow.pop %v8667
        %v8669 = vmul.f32 %v8599, 1.442695
        %v8670 = vpow.pop %v8669
        %v8671 = vmul.f32 %v8600, 1.442695
        %v8672 = vpow.pop %v8671
        %v8673 = vmul.f32 %v8601, 1.442695
        %v8674 = vpow.pop %v8673
        %v8675 = vmul.f32 %v8602, 1.442695
        %v8676 = vpow.pop %v8675
        %v8677 = vmul.f32 %v8603, 1.442695
        %v8678 = vpow.pop %v8677
        %v8679 = vmul.f32 %v8604, 1.442695
        %v8680 = vpow.pop %v8679
        %v8681 = vmul.f32 %v8605, 1.442695
        %v8682 = vpow.pop %v8681
        %v8683 = vmul.f32 %v8606, 1.442695
        %v8684 = vpow.pop %v8683
        %v8685 = vmul.f32 %v8607, 1.442695
        %v8686 = vpow.pop %v8685
        %v8687 = vmul.f32 %v8608, 1.442695
        %v8688 = vpow.pop %v8687
        %v8689 = vadd.f32 %v8610, 1.0
        %v8690 = vadd.f32 %v8612, 1.0
        %v8691 = vadd.f32 %v8614, 1.0
        %v8692 = vadd.f32 %v8616, 1.0
        %v8693 = vadd.f32 %v8618, 1.0
        %v8694 = vadd.f32 %v8620, 1.0
        %v8695 = vadd.f32 %v8622, 1.0
        %v8696 = vadd.f32 %v8624, 1.0
        %v8697 = vadd.f32 %v8626, 1.0
        %v8698 = vadd.f32 %v8628, 1.0
        %v8699 = vadd.f32 %v8630, 1.0
        %v8700 = vadd.f32 %v8632, 1.0
        %v8701 = vadd.f32 %v8634, 1.0
        %v8702 = vadd.f32 %v8636, 1.0
        %v8703 = vadd.f32 %v8638, 1.0
        %v8704 = vadd.f32 %v8640, 1.0
        %v8705 = vadd.f32 %v8642, 1.0
        %v8706 = vadd.f32 %v8644, 1.0
        %v8707 = vadd.f32 %v8646, 1.0
        %v8708 = vadd.f32 %v8648, 1.0
        %v8709 = vadd.f32 %v8650, 1.0
        %v8710 = vadd.f32 %v8652, 1.0
        %v8711 = vadd.f32 %v8654, 1.0
        %v8712 = vadd.f32 %v8656, 1.0
        %v8713 = vadd.f32 %v8658, 1.0
        %v8714 = vadd.f32 %v8660, 1.0
        %v8715 = vadd.f32 %v8662, 1.0
        %v8716 = vadd.f32 %v8664, 1.0
        %v8717 = vadd.f32 %v8666, 1.0
        %v8718 = vadd.f32 %v8668, 1.0
        %v8719 = vadd.f32 %v8670, 1.0
        %v8720 = vadd.f32 %v8672, 1.0
        %v8721 = vadd.f32 %v8674, 1.0
        %v8722 = vadd.f32 %v8676, 1.0
        %v8723 = vadd.f32 %v8678, 1.0
        %v8724 = vadd.f32 %v8680, 1.0
        %v8725 = vadd.f32 %v8682, 1.0
        %v8726 = vadd.f32 %v8684, 1.0
        %v8727 = vadd.f32 %v8686, 1.0
        %v8728 = vadd.f32 %v8688, 1.0
        %v8729 = vrcp.pop %v8689
        %v8730 = vrcp.pop %v8690
        %v8731 = vrcp.pop %v8691
        %v8732 = vrcp.pop %v8692
        %v8733 = vrcp.pop %v8693
        %v8734 = vrcp.pop %v8694
        %v8735 = vrcp.pop %v8695
        %v8736 = vrcp.pop %v8696
        %v8737 = vrcp.pop %v8697
        %v8738 = vrcp.pop %v8698
        %v8739 = vrcp.pop %v8699
        %v8740 = vrcp.pop %v8700
        %v8741 = vrcp.pop %v8701
        %v8742 = vrcp.pop %v8702
        %v8743 = vrcp.pop %v8703
        %v8744 = vrcp.pop %v8704
        %v8745 = vrcp.pop %v8705
        %v8746 = vrcp.pop %v8706
        %v8747 = vrcp.pop %v8707
        %v8748 = vrcp.pop %v8708
        %v8749 = vrcp.pop %v8709
        %v8750 = vrcp.pop %v8710
        %v8751 = vrcp.pop %v8711
        %v8752 = vrcp.pop %v8712
        %v8753 = vrcp.pop %v8713
        %v8754 = vrcp.pop %v8714
        %v8755 = vrcp.pop %v8715
        %v8756 = vrcp.pop %v8716
        %v8757 = vrcp.pop %v8717
        %v8758 = vrcp.pop %v8718
        %v8759 = vrcp.pop %v8719
        %v8760 = vrcp.pop %v8720
        %v8761 = vrcp.pop %v8721
        %v8762 = vrcp.pop %v8722
        %v8763 = vrcp.pop %v8723
        %v8764 = vrcp.pop %v8724
        %v8765 = vrcp.pop %v8725
        %v8766 = vrcp.pop %v8726
        %v8767 = vrcp.pop %v8727
        %v8768 = vrcp.pop %v8728
        %8769 = vst [vmem:[%s662] sm:$0xff] %v8729
        %8770 = vst [vmem:[%s662 + $0x8] sm:$0xff] %v8730
        %8771 = vst [vmem:[%s662 + $0x10] sm:$0xff] %v8731
        %8772 = vst [vmem:[%s662 + $0x18] sm:$0xff] %v8732
        %8773 = vst [vmem:[%s662 + $0x20] sm:$0xff] %v8733
        %8774 = vst [vmem:[%s662 + $0x28] sm:$0xff] %v8734
        %8775 = vst [vmem:[%s662 + $0x30] sm:$0xff] %v8735
        %8776 = vst [vmem:[%s662 + $0x38] sm:$0xff] %v8736
        %8777 = vst [vmem:[%s662 + $0x40] sm:$0xff] %v8737
        %8778 = vst [vmem:[%s662 + $0x48] sm:$0xff] %v8738
        %8779 = vst [vmem:[%s662 + $0x50] sm:$0xff] %v8739
        %8780 = vst [vmem:[%s662 + $0x58] sm:$0xff] %v8740
        %8781 = vst [vmem:[%s662 + $0x60] sm:$0xff] %v8741
        %8782 = vst [vmem:[%s662 + $0x68] sm:$0xff] %v8742
        %8783 = vst [vmem:[%s662 + $0x70] sm:$0xff] %v8743
        %8784 = vst [vmem:[%s662 + $0x78] sm:$0xff] %v8744
        %8785 = vst [vmem:[%s662 + $0x80] sm:$0xff] %v8745
        %8786 = vst [vmem:[%s662 + $0x88] sm:$0xff] %v8746
        %8787 = vst [vmem:[%s662 + $0x90] sm:$0xff] %v8747
        %8788 = vst [vmem:[%s662 + $0x98] sm:$0xff] %v8748
        %8789 = vst [vmem:[%s662 + $0xa0] sm:$0xff] %v8749
        %8790 = vst [vmem:[%s662 + $0xa8] sm:$0xff] %v8750
        %8791 = vst [vmem:[%s662 + $0xb0] sm:$0xff] %v8751
        %8792 = vst [vmem:[%s662 + $0xb8] sm:$0xff] %v8752
        %8793 = vst [vmem:[%s662 + $0xc0] sm:$0xff] %v8753
        %8794 = vst [vmem:[%s662 + $0xc8] sm:$0xff] %v8754
        %8795 = vst [vmem:[%s662 + $0xd0] sm:$0xff] %v8755
        %8796 = vst [vmem:[%s662 + $0xd8] sm:$0xff] %v8756
        %8797 = vst [vmem:[%s662 + $0xe0] sm:$0xff] %v8757
        %8798 = vst [vmem:[%s662 + $0xe8] sm:$0xff] %v8758
        %8799 = vst [vmem:[%s662 + $0xf0] sm:$0xff] %v8759
        %8800 = vst [vmem:[%s662 + $0xf8] sm:$0xff] %v8760
        %8801 = vst [vmem:[%s662 + $0x100] sm:$0xff] %v8761
        %8802 = vst [vmem:[%s662 + $0x108] sm:$0xff] %v8762
        %8803 = vst [vmem:[%s662 + $0x110] sm:$0xff] %v8763
        %8804 = vst [vmem:[%s662 + $0x118] sm:$0xff] %v8764
        %8805 = vst [vmem:[%s662 + $0x120] sm:$0xff] %v8765
        %8806 = vst [vmem:[%s662 + $0x128] sm:$0xff] %v8766
        %8807 = vst [vmem:[%s662 + $0x130] sm:$0xff] %v8767
        %8808 = vst [vmem:[%s662 + $0x138] sm:$0xff] %v8768
        %p8809 = scmp.lt.s32.totalorder %s38, 1
        %s8810 = scalar_select %p8809, %s38, 1
        %s8811 = smul.addr %s8810, 40
        %s8812 = smul.addr %s8811, 8
        %s8813 = scalar_lea.vmem %s18, %s8812
        %s8814 = sand.u32 %s460, 1
        %s8815 = scalar_lea.sflag [#allocation3], %s8814
        %s8816 = sand.u32 %s460, 1
        %s8817 = scalar_lea.vmem [#allocation2], %s8816
        %s8818 = sand.u32 %s486, 1
        %s8819 = scalar_lea.sflag [#allocation5], %s8818
        %s8820 = sand.u32 %s486, 1
        %s8821 = scalar_lea.vmem [#allocation4], %s8820
        // Predicated region
        $region93: #{autoencoder_charge_forward.1} parent=91 // pred_check
          %p8822 = pneg %p444
        $region94: #{autoencoder_charge_forward.1} parent=91 // pred_check_branch
          %8824 = sbr.rel (%p8822) target = $region96
        $region95: #{autoencoder_charge_forward.1} parent=91 // pred_region
          _
        $region96: #{autoencoder_charge_forward.1} parent=91 // pred_fallthru
          _
        // Predicated region
        $region97: #{autoencoder_charge_forward.1} parent=91 // pred_check
          %p8825 = pneg %p470
        $region98: #{autoencoder_charge_forward.1} parent=91 // pred_check_branch
          %8827 = sbr.rel (%p8825) target = $region100
        $region99: #{autoencoder_charge_forward.1} parent=91 // pred_region
          %s8829 = ssub.s32 16, 16
          %8830 = vsyncadd %s8815, %s8829
          %s8831 = smul.addr %s38, 16
          %s8832 = scalar_lea.hbm %s19, %s8831
          %s8834 = sshll.u32 %s8817, 4
          %s8835 = int_to_ptr.vmem [resolvable:$true] %s8834
          %8837 = dma.vmem_to_hbm [thread:$0]  %s8835, 16, %s8832, %s8815
        $region100: #{autoencoder_charge_forward.1} parent=91 // pred_fallthru
          _
        // Predicated region
        $region101: #{autoencoder_charge_forward.1} parent=91 // pred_check
          %p8838 = pneg %p496
        $region102: #{autoencoder_charge_forward.1} parent=91 // pred_check_branch
          %8840 = sbr.rel (%p8838) target = $region104
        $region103: #{autoencoder_charge_forward.1} parent=91 // pred_region
          %s8842 = ssub.s32 16, 16
          %8843 = vsyncadd %s8819, %s8842
          %s8844 = smul.addr %s38, 16
          %s8845 = scalar_lea.hbm %s20, %s8844
          %s8847 = sshll.u32 %s8821, 4
          %s8848 = int_to_ptr.vmem [resolvable:$true] %s8847
          %8850 = dma.vmem_to_hbm [thread:$0]  %s8848, 16, %s8845, %s8819
        $region104: #{autoencoder_charge_forward.1} parent=91 // pred_fallthru
          _
      $region92: #{autoencoder_charge_forward.1} parent=5 // pred_fallthru
        _
      %p8851 = scmp.le.s32.totalorder 2, %s33
      // Predicated region
      $region105: #{autoencoder_charge_forward.1} parent=5 // pred_check
        %p8852 = pneg %p8851
      $region106: #{autoencoder_charge_forward.1} parent=5 // pred_check_branch
        %8854 = sbr.rel (%p8852) target = $region108
      $region107: #{autoencoder_charge_forward.1} parent=5 // pred_region
        %s8855 = ssub.s32 %s33, 2
        // Predicated region
        $region109: #{autoencoder_charge_forward.1} parent=107 // pred_check
          %p8856 = pneg %p450
        $region110: #{autoencoder_charge_forward.1} parent=107 // pred_check_branch
          %8858 = sbr.rel (%p8856) target = $region112
        $region111: #{autoencoder_charge_forward.1} parent=107 // pred_region
          %p8859 = scmp.lt.s32.totalorder %s39, 1
          %s8860 = scalar_select %p8859, %s39, 1
          %s8861 = smul.addr %s8860, 40
          %s8862 = smul.addr %s8861, 8
          %s8863 = scalar_lea.vmem %s18, %s8862
        $region112: #{autoencoder_charge_forward.1} parent=107 // pred_fallthru
          _
        // Predicated region
        $region113: #{autoencoder_charge_forward.1} parent=107 // pred_check
          %p8864 = pneg %p476
        $region114: #{autoencoder_charge_forward.1} parent=107 // pred_check_branch
          %8866 = sbr.rel (%p8864) target = $region116
        $region115: #{autoencoder_charge_forward.1} parent=107 // pred_region
          %s8867 = sand.u32 %s461, 1
          %s8868 = scalar_lea.sflag [#allocation3], %s8867
          %s8869 = sand.u32 %s461, 1
          %s8870 = scalar_lea.vmem [#allocation2], %s8869
          %8871 = dma.done %s8868, 16
        $region116: #{autoencoder_charge_forward.1} parent=107 // pred_fallthru
          _
        // Predicated region
        $region117: #{autoencoder_charge_forward.1} parent=107 // pred_check
          %p8872 = pneg %p502
        $region118: #{autoencoder_charge_forward.1} parent=107 // pred_check_branch
          %8874 = sbr.rel (%p8872) target = $region120
        $region119: #{autoencoder_charge_forward.1} parent=107 // pred_region
          %s8875 = sand.u32 %s487, 1
          %s8876 = scalar_lea.sflag [#allocation5], %s8875
          %s8877 = sand.u32 %s487, 1
          %s8878 = scalar_lea.vmem [#allocation4], %s8877
          %8879 = dma.done %s8876, 16
        $region120: #{autoencoder_charge_forward.1} parent=107 // pred_fallthru
          _
      $region108: #{autoencoder_charge_forward.1} parent=5 // pred_fallthru
        _
    $region6: #{autoencoder_charge_forward.1} parent=1 // loop_footer
      %s37 = sadd.s32 1, %s33
    $region7: #{autoencoder_charge_forward.1} parent=1 // loop_footer_branch
      %32 = sbr.rel target = $region3
    $region8: #{autoencoder_charge_forward.1} parent=1 // loop_exit
      _
    %8880 = vsyncpa [#allocation3], 1
    %s8881 = scalar_lea.sflag [#allocation3], 1
    %8882 = vsyncpa %s8881, 1
    %8883 = vsyncpa [#allocation5], 1
    %s8884 = scalar_lea.sflag [#allocation5], 1
    %8885 = vsyncpa %s8884, 1

</llo_original>
